<compile_context>
chip_gen: v7x
topology: tpu7x:2x2x1
jax: 0.10.0
libtpu: 0.0.40
codegen_flags: <defaults>
</compile_context>

<pallas_src>
import functools

import jax
import jax.numpy as jnp
from jax.experimental import pallas as pl
from jax.experimental.pallas import tpu as pltpu

CLASS_NUM = 1000
CLASS_PAD = 1024          # lane-dense padding of the class dimension
HIDDEN_CHANNEL = 2048
INPUT_CHANNEL = 512
BN_EPS = 1e-5


def training_model_kernel(x_ref, wc_ref, gamma_ref, beta_ref, wf_ref, o_ref,
                          *, batch, hw):
    # x_ref:     (B*H*W, Cin)         bf16  -- same block every grid step
    # wc_ref:    (TC, Cin)            bf16  -- 1x1 conv weight row-chunk (contiguous)
    # gamma/beta:(1, TC)              f32   -- BatchNorm affine chunk
    # wf_ref:    (TC, CLASS_PAD)      bf16  -- FC weight row-chunk (contiguous)
    # o_ref:     (1, B, CLASS_PAD)    f32   -- per-chunk partial FC output
    n_rows = batch * hw

    # --- 1x1 conv for this Cout chunk: (N, Cin) x (TC, Cin)^T -> (N, TC)  [MXU]
    y = jax.lax.dot_general(
        x_ref[...], wc_ref[...],
        dimension_numbers=(((1,), (1,)), ((), ())),
        preferred_element_type=jnp.float32)

    # --- BatchNorm2d (training): per-channel batch stats over all N*H*W rows,
    #     one pass (sum, sum-of-squares), folded into scale/shift; then ReLU.
    inv_n = 1.0 / n_rows
    mean = jnp.sum(y, axis=0, keepdims=True) * inv_n
    ey2 = jnp.sum(y * y, axis=0, keepdims=True) * inv_n
    var = ey2 - mean * mean
    scale = jax.lax.rsqrt(var + BN_EPS) * gamma_ref[...]
    shift = beta_ref[...] - mean * scale
    y = jnp.maximum(y * scale + shift, 0.0)

    # --- AvgPool2d(7) on a 7x7 map == per-sample mean over hw rows:
    #     pooling-matrix matmul (B, n_rows) x (n_rows, TC) on the MXU.
    r = jax.lax.broadcasted_iota(jnp.int32, (batch, n_rows), 1)
    b = jax.lax.broadcasted_iota(jnp.int32, (batch, n_rows), 0)
    in_sample = jnp.logical_and(r >= b * hw, r < (b + 1) * hw)
    pool = jnp.where(in_sample, 1.0 / hw, 0.0)                # (B, n_rows) f32
    pooled = jax.lax.dot_general(
        pool, y,
        dimension_numbers=(((1,), (0,)), ((), ())),
        preferred_element_type=jnp.float32)                    # (B, TC) f32

    # --- FC partial product for this Cout chunk:
    #     (B, TC) x (TC, CLASS_PAD) -> (B, CLASS_PAD); summed outside the kernel.
    part = jax.lax.dot_general(
        pooled.astype(jnp.bfloat16), wf_ref[...],
        dimension_numbers=(((1,), (0,)), ((), ())),
        preferred_element_type=jnp.float32)

    o_ref[0] = part


def prepare_params(conv_w, bn_gamma, bn_beta, fc_w, fc_b):
    """One-time parameter repack (outside the hot path): bf16 weights,
    DMA-friendly layouts, class dimension zero-padded to CLASS_PAD."""
    wc = conv_w.reshape(HIDDEN_CHANNEL, INPUT_CHANNEL).astype(jnp.bfloat16)
    gamma = bn_gamma.reshape(1, HIDDEN_CHANNEL).astype(jnp.float32)
    beta = bn_beta.reshape(1, HIDDEN_CHANNEL).astype(jnp.float32)
    # FC weight stored as (HIDDEN_CHANNEL, CLASS_PAD): row-chunk DMAs are
    # contiguous slabs and the in-kernel dot is plain k-major orientation.
    wf = jnp.zeros((HIDDEN_CHANNEL, CLASS_PAD), jnp.bfloat16)
    wf = wf.at[:, :CLASS_NUM].set(fc_w.T.astype(jnp.bfloat16))
    bfc = jnp.zeros((1, CLASS_PAD), jnp.float32)
    bfc = bfc.at[0, :CLASS_NUM].set(fc_b.astype(jnp.float32))
    return wc, gamma, beta, wf, bfc


def training_model_forward(x_nchw, params, *, cout_tile=1024):
    """x_nchw: (B, 512, 7, 7) float32 (PyTorch NCHW). params: prepare_params(...)."""
    wc, gamma, beta, wf, bfc = params
    B, Cin, H, W = x_nchw.shape
    assert Cin == INPUT_CHANNEL and H == 7 and W == 7
    assert HIDDEN_CHANNEL % cout_tile == 0
    hw = H * W
    n_rows = B * hw
    n_chunks = HIDDEN_CHANNEL // cout_tile

    # NCHW -> (B*H*W, Cin); activations are tiny (~100 KB) next to the weights.
    x_mat = jnp.transpose(x_nchw, (0, 2, 3, 1)).reshape(n_rows, Cin)
    x_mat = x_mat.astype(jnp.bfloat16)

    kernel = functools.partial(training_model_kernel, batch=B, hw=hw)

    partials = pl.pallas_call(
        kernel,
        out_shape=jax.ShapeDtypeStruct((n_chunks, B, CLASS_PAD), jnp.float32),
        grid_spec=pltpu.PrefetchScalarGridSpec(
            num_scalar_prefetch=0,
            grid=(n_chunks,),
            in_specs=[
                pl.BlockSpec((n_rows, Cin), lambda k: (0, 0)),            # x
                pl.BlockSpec((cout_tile, Cin), lambda k: (k, 0)),         # conv w
                pl.BlockSpec((1, cout_tile), lambda k: (0, k)),           # gamma
                pl.BlockSpec((1, cout_tile), lambda k: (0, k)),           # beta
                pl.BlockSpec((cout_tile, CLASS_PAD), lambda k: (k, 0)),   # fc w
            ],
            out_specs=pl.BlockSpec((1, B, CLASS_PAD), lambda k: (k, 0, 0)),
        ),
        compiler_params=pltpu.CompilerParams(
            dimension_semantics=("parallel",)),
    )(x_mat, wc, gamma, beta, wf)

    # Tiny cross-chunk reduction + bias add outside the kernel.
    out = jnp.sum(partials, axis=0) + bfc
    return out[:, :CLASS_NUM]


def _reference(x_nchw, params):
    """Pure-JAX reference using the same (bf16-rounded) inputs, f32 math."""
    wc, gamma, beta, wf, bfc = params
    B, Cin, H, W = x_nchw.shape
    hw = H * W
    x_mat = jnp.transpose(x_nchw, (0, 2, 3, 1)).reshape(B * hw, Cin)
    x_mat = x_mat.astype(jnp.bfloat16).astype(jnp.float32)
    y = x_mat @ wc.astype(jnp.float32).T
    mean = y.mean(axis=0, keepdims=True)
    var = ((y - mean) ** 2).mean(axis=0, keepdims=True)
    y = (y - mean) / jnp.sqrt(var + BN_EPS) * gamma + beta
    y = jnp.maximum(y, 0.0)
    pooled = y.reshape(B, hw, HIDDEN_CHANNEL).mean(axis=1)
    out = pooled @ wf.astype(jnp.float32) + bfc
    return out[:, :CLASS_NUM]


if __name__ == "__main__":
    key = jax.random.PRNGKey(0)
    k_x, k_cw, k_fw, k_fb = jax.random.split(key, 4)

    B, H, W = 2, 7, 7  # AvgPool(kernel=7, stride=1) -> forward implies 7x7 maps
    x = jax.random.normal(k_x, (B, INPUT_CHANNEL, H, W), dtype=jnp.float32)

    conv_bound = (1.0 / INPUT_CHANNEL) ** 0.5
    conv_w = jax.random.uniform(
        k_cw, (HIDDEN_CHANNEL, INPUT_CHANNEL, 1, 1),
        minval=-conv_bound, maxval=conv_bound, dtype=jnp.float32)
    bn_gamma = jnp.ones((HIDDEN_CHANNEL,), jnp.float32)
    bn_beta = jnp.zeros((HIDDEN_CHANNEL,), jnp.float32)
    fc_bound = (1.0 / HIDDEN_CHANNEL) ** 0.5
    fc_w = jax.random.uniform(
        k_fw, (CLASS_NUM, HIDDEN_CHANNEL),
        minval=-fc_bound, maxval=fc_bound, dtype=jnp.float32)
    fc_b = jax.random.uniform(
        k_fb, (CLASS_NUM,), minval=-fc_bound, maxval=fc_bound, dtype=jnp.float32)

    # One-time repack outside the hot path (bf16 weights, DMA-friendly layouts).
    params = prepare_params(conv_w, bn_gamma, bn_beta, fc_w, fc_b)

    out = jax.block_until_ready(training_model_forward(x, params))
    assert out.shape == (B, CLASS_NUM)

    ref = jax.block_until_ready(_reference(x, params))
    max_err = float(jnp.abs(out - ref).max())
    assert jnp.allclose(out, ref, atol=1e-2, rtol=1e-2), max_err

    print("KERNEL_OK")
</pallas_src>

<mosaic_0001>
module attributes {stable_mosaic.version = 11 : i64} {
  func.func @training_model_kernel(%arg0: i32, %arg1: memref<98x512xbf16, #tpu.memory_space<vmem>>, %arg2: memref<1024x512xbf16, #tpu.memory_space<vmem>>, %arg3: memref<1x1024xf32, #tpu.memory_space<vmem>>, %arg4: memref<1x1024xf32, #tpu.memory_space<vmem>>, %arg5: memref<1024x1024xbf16, #tpu.memory_space<vmem>>, %arg6: memref<1x2x1024xf32, #tpu.memory_space<vmem>>) attributes {dimension_semantics = [#tpu.dimension_semantics<parallel>], iteration_bounds = array<i64: 2>, scalar_prefetch = 0 : i64, scratch_operands = 0 : i64, tpu.core_type = #tpu.core_type<tc>, window_params = [{pipeline_mode = #tpu.pipeline_mode<synchronous>, transform_indices = @transform_0, window_bounds = array<i64: 98, 512>}, {transform_indices = @transform_1, window_bounds = array<i64: 1024, 512>}, {transform_indices = @transform_2, window_bounds = array<i64: 1, 1024>}, {transform_indices = @transform_3, window_bounds = array<i64: 1, 1024>}, {transform_indices = @transform_4, window_bounds = array<i64: 1024, 1024>}, {transform_indices = @transform_5, window_bounds = array<i64: 1, 2, 1024>}]} {
    %c0 = arith.constant 0 : index
    %c0_0 = arith.constant 0 : index
    %0 = vector.load %arg1[%c0, %c0_0] : memref<98x512xbf16, #tpu.memory_space<vmem>>, vector<98x512xbf16>
    %c0_1 = arith.constant 0 : index
    %c0_2 = arith.constant 0 : index
    %1 = vector.load %arg2[%c0_1, %c0_2] : memref<1024x512xbf16, #tpu.memory_space<vmem>>, vector<1024x512xbf16>
    %cst = arith.constant dense<0.000000e+00> : vector<98x1024xf32>
    %2 = tpu.matmul %0, %1, %cst {dimension_numbers = #tpu.dot_dimension_numbers<[1], [1], [0], [0], [0, 0, 1, 0], [], []>} : vector<98x512xbf16>, vector<1024x512xbf16>, vector<98x1024xf32> -> vector<98x1024xf32>
    %cst_3 = arith.constant dense<0.000000e+00> : vector<1024xf32>
    %3 = vector.multi_reduction <add>, %2, %cst_3 [0] : vector<98x1024xf32> to vector<1024xf32>
    %4 = vector.shape_cast %3 : vector<1024xf32> to vector<1x1024xf32>
    %cst_4 = arith.constant 0.0102040814 : f32
    %5 = vector.broadcast %cst_4 : f32 to vector<1x1024xf32>
    %6 = arith.mulf %4, %5 : vector<1x1024xf32>
    %7 = arith.mulf %2, %2 : vector<98x1024xf32>
    %cst_5 = arith.constant dense<0.000000e+00> : vector<1024xf32>
    %8 = vector.multi_reduction <add>, %7, %cst_5 [0] : vector<98x1024xf32> to vector<1024xf32>
    %9 = vector.shape_cast %8 : vector<1024xf32> to vector<1x1024xf32>
    %cst_6 = arith.constant 0.0102040814 : f32
    %10 = vector.broadcast %cst_6 : f32 to vector<1x1024xf32>
    %11 = arith.mulf %9, %10 : vector<1x1024xf32>
    %12 = arith.mulf %6, %6 : vector<1x1024xf32>
    %13 = arith.subf %11, %12 : vector<1x1024xf32>
    %cst_7 = arith.constant 9.99999974E-6 : f32
    %14 = vector.broadcast %cst_7 : f32 to vector<1x1024xf32>
    %15 = arith.addf %13, %14 : vector<1x1024xf32>
    %16 = math.rsqrt %15 : vector<1x1024xf32>
    %c0_8 = arith.constant 0 : index
    %c0_9 = arith.constant 0 : index
    %17 = vector.load %arg3[%c0_8, %c0_9] : memref<1x1024xf32, #tpu.memory_space<vmem>>, vector<1x1024xf32>
    %18 = arith.mulf %16, %17 : vector<1x1024xf32>
    %c0_10 = arith.constant 0 : index
    %c0_11 = arith.constant 0 : index
    %19 = vector.load %arg4[%c0_10, %c0_11] : memref<1x1024xf32, #tpu.memory_space<vmem>>, vector<1x1024xf32>
    %20 = arith.mulf %6, %18 : vector<1x1024xf32>
    %21 = arith.subf %19, %20 : vector<1x1024xf32>
    %22 = vector.broadcast %18 : vector<1x1024xf32> to vector<98x1024xf32>
    %23 = arith.mulf %2, %22 : vector<98x1024xf32>
    %24 = vector.broadcast %21 : vector<1x1024xf32> to vector<98x1024xf32>
    %25 = arith.addf %23, %24 : vector<98x1024xf32>
    %cst_12 = arith.constant 0.000000e+00 : f32
    %26 = vector.broadcast %cst_12 : f32 to vector<98x1024xf32>
    %27 = arith.maximumf %25, %26 : vector<98x1024xf32>
    %28 = tpu.iota {dimensions = array<i32: 1>} : vector<2x98xi32>
    %29 = tpu.iota {dimensions = array<i32: 0>} : vector<2x98xi32>
    %c49_i32 = arith.constant 49 : i32
    %30 = vector.broadcast %c49_i32 : i32 to vector<2x98xi32>
    %31 = arith.muli %29, %30 : vector<2x98xi32>
    %32 = arith.cmpi sge, %28, %31 : vector<2x98xi32>
    %c1_i32 = arith.constant 1 : i32
    %33 = vector.broadcast %c1_i32 : i32 to vector<2x98xi32>
    %34 = arith.addi %29, %33 : vector<2x98xi32>
    %c49_i32_13 = arith.constant 49 : i32
    %35 = vector.broadcast %c49_i32_13 : i32 to vector<2x98xi32>
    %36 = arith.muli %34, %35 : vector<2x98xi32>
    %37 = arith.cmpi slt, %28, %36 : vector<2x98xi32>
    %38 = arith.andi %32, %37 : vector<2x98xi1>
    %cst_14 = arith.constant 0.0204081628 : f32
    %cst_15 = arith.constant 0.000000e+00 : f32
    %39 = vector.broadcast %cst_14 : f32 to vector<2x98xf32>
    %40 = vector.broadcast %cst_15 : f32 to vector<2x98xf32>
    %41 = arith.select %38, %39, %40 : vector<2x98xi1>, vector<2x98xf32>
    %cst_16 = arith.constant dense<0.000000e+00> : vector<2x1024xf32>
    %42 = tpu.matmul %41, %27, %cst_16 {dimension_numbers = #tpu.dot_dimension_numbers<[1], [0], [0], [1], [0, 0, 1, 1], [], []>} : vector<2x98xf32>, vector<98x1024xf32>, vector<2x1024xf32> -> vector<2x1024xf32>
    %43 = arith.truncf %42 : vector<2x1024xf32> to vector<2x1024xbf16>
    %c0_17 = arith.constant 0 : index
    %c0_18 = arith.constant 0 : index
    %44 = vector.load %arg5[%c0_17, %c0_18] : memref<1024x1024xbf16, #tpu.memory_space<vmem>>, vector<1024x1024xbf16>
    %cst_19 = arith.constant dense<0.000000e+00> : vector<2x1024xf32>
    %45 = tpu.matmul %43, %44, %cst_19 {dimension_numbers = #tpu.dot_dimension_numbers<[1], [0], [0], [1], [0, 0, 1, 1], [], []>} : vector<2x1024xbf16>, vector<1024x1024xbf16>, vector<2x1024xf32> -> vector<2x1024xf32>
    %c0_20 = arith.constant 0 : index
    %c0_21 = arith.constant 0 : index
    %c0_22 = arith.constant 0 : index
    %46 = vector.load %arg6[%c0_20, %c0_21, %c0_22] : memref<1x2x1024xf32, #tpu.memory_space<vmem>>, vector<1x2x1024xf32>
    %47 = vector.shape_cast %46 : vector<1x2x1024xf32> to vector<2x1024xf32>
    %48 = vector.shape_cast %45 : vector<2x1024xf32> to vector<1x2x1024xf32>
    tpu.vector_store %arg6[%c0_20, %c0_21, %c0_22], %48 {strides = array<i32>} : memref<1x2x1024xf32, #tpu.memory_space<vmem>>, vector<1x2x1024xf32>,
    return
  }
  func.func @transform_0(%arg0: i32) -> (i32, i32) {
    %c0_i32 = arith.constant 0 : i32
    %c0_i32_0 = arith.constant 0 : i32
    %c0_i32_1 = arith.constant 0 : i32
    return %c0_i32, %c0_i32_0 : i32, i32
  }
  func.func @transform_1(%arg0: i32) -> (i32, i32) {
    %c0_i32 = arith.constant 0 : i32
    %c0_i32_0 = arith.constant 0 : i32
    return %arg0, %c0_i32 : i32, i32
  }
  func.func @transform_2(%arg0: i32) -> (i32, i32) {
    %c0_i32 = arith.constant 0 : i32
    %c0_i32_0 = arith.constant 0 : i32
    return %c0_i32, %arg0 : i32, i32
  }
  func.func @transform_3(%arg0: i32) -> (i32, i32) {
    %c0_i32 = arith.constant 0 : i32
    %c0_i32_0 = arith.constant 0 : i32
    return %c0_i32, %arg0 : i32, i32
  }
  func.func @transform_4(%arg0: i32) -> (i32, i32) {
    %c0_i32 = arith.constant 0 : i32
    %c0_i32_0 = arith.constant 0 : i32
    return %arg0, %c0_i32 : i32, i32
  }
  func.func @transform_5(%arg0: i32) -> (i32, i32, i32) {
    %c0_i32 = arith.constant 0 : i32
    %c0_i32_0 = arith.constant 0 : i32
    %c0_i32_1 = arith.constant 0 : i32
    return %arg0, %c0_i32, %c0_i32_0 : i32, i32, i32
  }
}

</mosaic_0001>

<llo_original>
// kernel: tpu_custom_call.1
$region0: #{tpu_custom_call.1}
  #allocation0 [shape = 'u32[]', space=smem, size = 0x4, offset = 0x4, fixed_abs, tag = 'smem constant byte address 0x4 - core index']
  #allocation1 [shape = 'u32[144,128]{1,0:T(1,128)}', space=vmem, size = 0x12000, scoped, tag = 'internal scratch']
  %s0 = inlined_call_operand.hbm [shape: bf16[98,512], index: 0, kind: input, shape index: {}]
  %s1 = inlined_call_operand.hbm [shape: bf16[2048,512], index: 1, kind: input, shape index: {}]
  %s2 = inlined_call_operand.hbm [shape: f32[1,2048], index: 2, kind: input, shape index: {}]
  %s3 = inlined_call_operand.hbm [shape: f32[1,2048], index: 3, kind: input, shape index: {}]
  %s4 = inlined_call_operand.hbm [shape: bf16[2048,1024], index: 4, kind: input, shape index: {}]
  %s5 = inlined_call_operand.hbm [shape: f32[2,2,1024], index: 5, kind: output, shape index: {}]
  %s6 = sld [smem:[#allocation0]]
  $region73: #{tpu_custom_call.1} parent=0
    _
  %s8 = ssub.s32 1, %s6
  %s9 = scalar_select 0, %s8, %s6
  $region1: #{tpu_custom_call.1} parent=0
    #allocation2 [shape = 'u8[106496]{0}', space=vmem, size = 0x1a000, scoped, tag = 'input window, operand 0, single buffered']
    #allocation3 [shape = 's32[2]{0}', space=sflag, size = 0x8, scoped, tag = 'scoped memory for tpu_custom_call.1']
    #allocation4 [shape = 's32[2]{0}', space=sflag, size = 0x8, scoped, tag = 'scoped memory for tpu_custom_call.1']
    #allocation5 [shape = 'u8[2097152]{0}', space=vmem, size = 0x200000, scoped, tag = 'input window, operand 1']
    #allocation6 [shape = 's32[2]{0}', space=sflag, size = 0x8, scoped, tag = 'scoped memory for tpu_custom_call.1']
    #allocation7 [shape = 'u8[8192]{0}', space=vmem, size = 0x2000, scoped, tag = 'input window, operand 2']
    #allocation8 [shape = 'u8[8192]{0}', space=vmem, size = 0x2000, scoped, tag = 'input window, operand 3']
    #allocation9 [shape = 's32[2]{0}', space=sflag, size = 0x8, scoped, tag = 'scoped memory for tpu_custom_call.1']
    #allocation10 [shape = 'u8[4194304]{0}', space=vmem, size = 0x400000, scoped, tag = 'input window, operand 4']
    #allocation11 [shape = 'u8[16384]{0}', space=vmem, size = 0x4000, scoped, tag = 'output window, operand 0']
    %10 = vsyncpa [#allocation3], 0
    %11 = vsyncpa [#allocation6], 0
    %s12 = scalar_lea.sflag [#allocation6], 1
    %13 = vsyncpa %s12, 0
    %14 = vsyncpa [#allocation9], 0
    %s15 = scalar_lea.sflag [#allocation9], 1
    %16 = vsyncpa %s15, 0
    %17 = vsyncpa [#allocation4], 0
    %s18 = scalar_lea.sflag [#allocation4], 1
    %19 = vsyncpa %s18, 0
    loop: start=0, step=1, limit=4
    $region2: #{tpu_custom_call.1} parent=1 // loop_pre_header
      _
    $region3: #{tpu_custom_call.1} parent=1 // loop_header
      %s21 = sphi 0, %s25
      %p22 = scmp.ge.s32.totalorder %s21, 4
      %s29 = sphi 0, %s29
      %s31 = sphi 0, %s29
      %s32 = sphi 0, %s31
      %s46 = sphi 0, %s32
      %s52 = sphi 0, %s54
      %s55 = sphi 0, %s52
      %s56 = sphi 0, %s55
      %s72 = sphi 0, %s56
      %s78 = sphi 0, %s80
      %s81 = sphi 0, %s78
      %s82 = sphi 0, %s81
      %s98 = sphi 0, %s82
      %s104 = sphi 0, %s106
      %s107 = sphi 0, %s104
      %s108 = sphi 0, %s107
      %s124 = sphi 0, %s108
      %s130 = sphi 0, %s132
      %s133 = sphi 0, %s130
      %s134 = sphi 0, %s133
      %s150 = sphi 0, %s134
      %s156 = sphi 0, %s158
      %s159 = sphi 0, %s156
      %s160 = sphi 0, %s159
      %s176 = sphi 0, %s160
    $region4: #{tpu_custom_call.1} parent=1 // loop_header_branch
      %24 = sbr.rel (%p22) target = $region8
    $region5: #{tpu_custom_call.1} parent=1 // loop_body
      %s26 = ssub.s32 %s21, 1
      %s27 = ssub.s32 %s21, 2
      %s28 = sadd.s32 %s21, 1
      %s30 = sadd.s32 %s29, 1
      %p33 = scmp.eq.s32.totalorder %s21, 1
      %p34 = scmp.ne.s32.totalorder %s29, %s31
      %p35 = scmp.eq.s32.totalorder %s21, 0
      %p36 = por %p34, %p35
      %p37 = scmp.ne.s32.totalorder %s29, %s31
      %p38 = scmp.eq.s32.totalorder %s26, 1
      %p39 = por %p37, %p38
      %p40 = scmp.ne.s32.totalorder %s31, %s32
      %p41 = scmp.eq.s32.totalorder %s26, 0
      %p42 = por %p40, %p41
      %p43 = scmp.ne.s32.totalorder %s31, %s32
      %p44 = scmp.eq.s32.totalorder %s27, 1
      %p45 = por %p43, %p44
      %p47 = scmp.ne.s32.totalorder %s32, %s46
      %p48 = scmp.eq.s32.totalorder %s27, 0
      %p49 = por %p47, %p48
      %s50 = ssub.s32 %s21, %s28
      %p51 = scmp.eq.s32.totalorder %s50, 0
      %s53 = sadd.s32 %s52, 1
      %s54 = scalar_select %p51, %s52, %s53
      %p57 = pneg %p51
      %p58 = scmp.eq.s32.totalorder %s21, 1
      %p59 = por %p57, %p58
      %p60 = scmp.ne.s32.totalorder %s52, %s55
      %p61 = scmp.eq.s32.totalorder %s21, 0
      %p62 = por %p60, %p61
      %p63 = scmp.ne.s32.totalorder %s52, %s55
      %p64 = scmp.eq.s32.totalorder %s26, 1
      %p65 = por %p63, %p64
      %p66 = scmp.ne.s32.totalorder %s55, %s56
      %p67 = scmp.eq.s32.totalorder %s26, 0
      %p68 = por %p66, %p67
      %p69 = scmp.ne.s32.totalorder %s55, %s56
      %p70 = scmp.eq.s32.totalorder %s27, 1
      %p71 = por %p69, %p70
      %p73 = scmp.ne.s32.totalorder %s56, %s72
      %p74 = scmp.eq.s32.totalorder %s27, 0
      %p75 = por %p73, %p74
      %s76 = ssub.s32 %s21, %s28
      %p77 = scmp.eq.s32.totalorder %s76, 0
      %s79 = sadd.s32 %s78, 1
      %s80 = scalar_select %p77, %s78, %s79
      %p83 = pneg %p77
      %p84 = scmp.eq.s32.totalorder %s21, 1
      %p85 = por %p83, %p84
      %p86 = scmp.ne.s32.totalorder %s78, %s81
      %p87 = scmp.eq.s32.totalorder %s21, 0
      %p88 = por %p86, %p87
      %p89 = scmp.ne.s32.totalorder %s78, %s81
      %p90 = scmp.eq.s32.totalorder %s26, 1
      %p91 = por %p89, %p90
      %p92 = scmp.ne.s32.totalorder %s81, %s82
      %p93 = scmp.eq.s32.totalorder %s26, 0
      %p94 = por %p92, %p93
      %p95 = scmp.ne.s32.totalorder %s81, %s82
      %p96 = scmp.eq.s32.totalorder %s27, 1
      %p97 = por %p95, %p96
      %p99 = scmp.ne.s32.totalorder %s82, %s98
      %p100 = scmp.eq.s32.totalorder %s27, 0
      %p101 = por %p99, %p100
      %s102 = ssub.s32 %s21, %s28
      %p103 = scmp.eq.s32.totalorder %s102, 0
      %s105 = sadd.s32 %s104, 1
      %s106 = scalar_select %p103, %s104, %s105
      %p109 = pneg %p103
      %p110 = scmp.eq.s32.totalorder %s21, 1
      %p111 = por %p109, %p110
      %p112 = scmp.ne.s32.totalorder %s104, %s107
      %p113 = scmp.eq.s32.totalorder %s21, 0
      %p114 = por %p112, %p113
      %p115 = scmp.ne.s32.totalorder %s104, %s107
      %p116 = scmp.eq.s32.totalorder %s26, 1
      %p117 = por %p115, %p116
      %p118 = scmp.ne.s32.totalorder %s107, %s108
      %p119 = scmp.eq.s32.totalorder %s26, 0
      %p120 = por %p118, %p119
      %p121 = scmp.ne.s32.totalorder %s107, %s108
      %p122 = scmp.eq.s32.totalorder %s27, 1
      %p123 = por %p121, %p122
      %p125 = scmp.ne.s32.totalorder %s108, %s124
      %p126 = scmp.eq.s32.totalorder %s27, 0
      %p127 = por %p125, %p126
      %s128 = ssub.s32 %s21, %s28
      %p129 = scmp.eq.s32.totalorder %s128, 0
      %s131 = sadd.s32 %s130, 1
      %s132 = scalar_select %p129, %s130, %s131
      %p135 = pneg %p129
      %p136 = scmp.eq.s32.totalorder %s21, 1
      %p137 = por %p135, %p136
      %p138 = scmp.ne.s32.totalorder %s130, %s133
      %p139 = scmp.eq.s32.totalorder %s21, 0
      %p140 = por %p138, %p139
      %p141 = scmp.ne.s32.totalorder %s130, %s133
      %p142 = scmp.eq.s32.totalorder %s26, 1
      %p143 = por %p141, %p142
      %p144 = scmp.ne.s32.totalorder %s133, %s134
      %p145 = scmp.eq.s32.totalorder %s26, 0
      %p146 = por %p144, %p145
      %p147 = scmp.ne.s32.totalorder %s133, %s134
      %p148 = scmp.eq.s32.totalorder %s27, 1
      %p149 = por %p147, %p148
      %p151 = scmp.ne.s32.totalorder %s134, %s150
      %p152 = scmp.eq.s32.totalorder %s27, 0
      %p153 = por %p151, %p152
      %s154 = ssub.s32 %s21, %s28
      %p155 = scmp.eq.s32.totalorder %s154, 0
      %s157 = sadd.s32 %s156, 1
      %s158 = scalar_select %p155, %s156, %s157
      %p161 = pneg %p155
      %p162 = scmp.eq.s32.totalorder %s21, 1
      %p163 = por %p161, %p162
      %p164 = scmp.ne.s32.totalorder %s156, %s159
      %p165 = scmp.eq.s32.totalorder %s21, 0
      %p166 = por %p164, %p165
      %p167 = scmp.ne.s32.totalorder %s156, %s159
      %p168 = scmp.eq.s32.totalorder %s26, 1
      %p169 = por %p167, %p168
      %p170 = scmp.ne.s32.totalorder %s159, %s160
      %p171 = scmp.eq.s32.totalorder %s26, 0
      %p172 = por %p170, %p171
      %p173 = scmp.ne.s32.totalorder %s159, %s160
      %p174 = scmp.eq.s32.totalorder %s27, 1
      %p175 = por %p173, %p174
      %p177 = scmp.ne.s32.totalorder %s160, %s176
      %p178 = scmp.eq.s32.totalorder %s27, 0
      %p179 = por %p177, %p178
      %p180 = scmp.le.s32.totalorder 1, %s21
      %p181 = scmp.lt.s32.totalorder %s21, 3
      %p182 = pnand %p180, %p181
      %p183 = pneg %p182
      // Predicated region
      $region9: #{tpu_custom_call.1} parent=5 // pred_check
        _
      $region10: #{tpu_custom_call.1} parent=5 // pred_check_branch
        %185 = sbr.rel (%p182) target = $region12
      $region11: #{tpu_custom_call.1} parent=5 // pred_region
        %s186 = ssub.s32 %s21, 1
        // Predicated region
        $region13: #{tpu_custom_call.1} parent=11 // pred_check
          %p187 = pneg %p42
        $region14: #{tpu_custom_call.1} parent=11 // pred_check_branch
          %189 = sbr.rel (%p187) target = $region16
        $region15: #{tpu_custom_call.1} parent=11 // pred_region
          %s191 = ssub.s32 3328, 3328
          %192 = vsyncadd [#allocation3], %s191
          %s193 = sshll.u32 [#allocation2], 4
          %s194 = int_to_ptr.vmem [resolvable:$true] %s193
          %199 = dma.hbm_to_vmem [thread:$0]  %s0, 3328, %s194, [#allocation3], 256, 256, 16
        $region16: #{tpu_custom_call.1} parent=11 // pred_fallthru
          _
      $region12: #{tpu_custom_call.1} parent=5 // pred_fallthru
        _
      %p200 = scmp.lt.s32.totalorder %s21, 2
      // Predicated region
      $region17: #{tpu_custom_call.1} parent=5 // pred_check
        %p201 = pneg %p200
      $region18: #{tpu_custom_call.1} parent=5 // pred_check_branch
        %203 = sbr.rel (%p201) target = $region20
      $region19: #{tpu_custom_call.1} parent=5 // pred_region
        // Predicated region
        $region21: #{tpu_custom_call.1} parent=19 // pred_check
          %p204 = pneg %p62
        $region22: #{tpu_custom_call.1} parent=19 // pred_check_branch
          %206 = sbr.rel (%p204) target = $region24
        $region23: #{tpu_custom_call.1} parent=19 // pred_region
          %s207 = sand.u32 %s21, 1
          %s208 = scalar_lea.sflag [#allocation6], %s207
          %s209 = sand.u32 %s52, 1
          %s210 = smul.addr %s209, 2048
          %s211 = scalar_lea.vmem [#allocation5], %s210
          %s212 = smul.u32 128, %s21
          %s214 = ssub.s32 32768, 32768
          %215 = vsyncadd %s208, %s214
          %s216 = smul.addr %s212, 4
          %s217 = smul.addr %s216, 64
          %s218 = scalar_lea.hbm %s1, %s217
          %s219 = sshll.u32 %s211, 4
          %s220 = int_to_ptr.vmem [resolvable:$true] %s219
          %225 = dma.hbm_to_vmem [thread:$0]  %s218, 32768, %s220, %s208, 256, 256, 16
        $region24: #{tpu_custom_call.1} parent=19 // pred_fallthru
          _
        // Predicated region
        $region25: #{tpu_custom_call.1} parent=19 // pred_check
          %p226 = pneg %p88
        $region26: #{tpu_custom_call.1} parent=19 // pred_check_branch
          %228 = sbr.rel (%p226) target = $region28
        $region27: #{tpu_custom_call.1} parent=19 // pred_region
          %s229 = sand.u32 %s21, 1
          %s230 = scalar_lea.sflag [#allocation6], %s229
          %s231 = sand.u32 %s78, 1
          %s232 = smul.addr %s231, 8
          %s233 = scalar_lea.vmem [#allocation7], %s232
          %s234 = smul.u32 8, %s21
          %s236 = ssub.s32 128, 128
          %237 = vsyncadd %s230, %s236
          %s238 = smul.addr %s234, 16
          %s239 = scalar_lea.hbm %s2, %s238
          %s241 = sshll.u32 %s233, 4
          %s242 = int_to_ptr.vmem [resolvable:$true] %s241
          %244 = dma.hbm_to_vmem [thread:$0]  %s239, 128, %s242, %s230
        $region28: #{tpu_custom_call.1} parent=19 // pred_fallthru
          _
        // Predicated region
        $region29: #{tpu_custom_call.1} parent=19 // pred_check
          %p245 = pneg %p114
        $region30: #{tpu_custom_call.1} parent=19 // pred_check_branch
          %247 = sbr.rel (%p245) target = $region32
        $region31: #{tpu_custom_call.1} parent=19 // pred_region
          %s248 = sand.u32 %s21, 1
          %s249 = scalar_lea.sflag [#allocation9], %s248
          %s250 = sand.u32 %s104, 1
          %s251 = smul.addr %s250, 8
          %s252 = scalar_lea.vmem [#allocation8], %s251
          %s253 = smul.u32 8, %s21
          %s255 = ssub.s32 128, 128
          %256 = vsyncadd %s249, %s255
          %s257 = smul.addr %s253, 16
          %s258 = scalar_lea.hbm %s3, %s257
          %s260 = sshll.u32 %s252, 4
          %s261 = int_to_ptr.vmem [resolvable:$true] %s260
          %263 = dma.hbm_to_vmem [thread:$0]  %s258, 128, %s261, %s249
        $region32: #{tpu_custom_call.1} parent=19 // pred_fallthru
          _
        // Predicated region
        $region33: #{tpu_custom_call.1} parent=19 // pred_check
          %p264 = pneg %p140
        $region34: #{tpu_custom_call.1} parent=19 // pred_check_branch
          %266 = sbr.rel (%p264) target = $region36
        $region35: #{tpu_custom_call.1} parent=19 // pred_region
          %s267 = sand.u32 %s21, 1
          %s268 = scalar_lea.sflag [#allocation9], %s267
          %s269 = sand.u32 %s130, 1
          %s270 = smul.addr %s269, 4096
          %s271 = scalar_lea.vmem [#allocation10], %s270
          %s272 = smul.u32 128, %s21
          %s274 = ssub.s32 65536, 65536
          %275 = vsyncadd %s268, %s274
          %s276 = smul.addr %s272, 8
          %s277 = smul.addr %s276, 64
          %s278 = scalar_lea.hbm %s4, %s277
          %s279 = sshll.u32 %s271, 4
          %s280 = int_to_ptr.vmem [resolvable:$true] %s279
          %285 = dma.hbm_to_vmem [thread:$0]  %s278, 65536, %s280, %s268, 512, 512, 32
        $region36: #{tpu_custom_call.1} parent=19 // pred_fallthru
          _
      $region20: #{tpu_custom_call.1} parent=5 // pred_fallthru
        _
      %p286 = scmp.le.s32.totalorder 1, %s21
      %p287 = scmp.lt.s32.totalorder %s21, 3
      %p288 = pnand %p286, %p287
      %p289 = pneg %p288
      // Predicated region
      $region37: #{tpu_custom_call.1} parent=5 // pred_check
        _
      $region38: #{tpu_custom_call.1} parent=5 // pred_check_branch
        %291 = sbr.rel (%p288) target = $region40
      $region39: #{tpu_custom_call.1} parent=5 // pred_region
        %s292 = ssub.s32 %s21, 1
        // Predicated region
        $region41: #{tpu_custom_call.1} parent=39 // pred_check
          %p293 = pneg %p42
        $region42: #{tpu_custom_call.1} parent=39 // pred_check_branch
          %295 = sbr.rel (%p293) target = $region44
        $region43: #{tpu_custom_call.1} parent=39 // pred_region
          %296 = dma.done [#allocation3], 3328
        $region44: #{tpu_custom_call.1} parent=39 // pred_fallthru
          _
        %s297 = sand.u32 %s26, 1
        %s298 = scalar_lea.sflag [#allocation6], %s297
        %s299 = sand.u32 %s55, 1
        %s300 = smul.addr %s299, 2048
        %s301 = scalar_lea.vmem [#allocation5], %s300
        // Predicated region
        $region45: #{tpu_custom_call.1} parent=39 // pred_check
          %p302 = pneg %p68
        $region46: #{tpu_custom_call.1} parent=39 // pred_check_branch
          %304 = sbr.rel (%p302) target = $region48
        $region47: #{tpu_custom_call.1} parent=39 // pred_region
          %305 = dma.done %s298, 32768
        $region48: #{tpu_custom_call.1} parent=39 // pred_fallthru
          _
        %s306 = sand.u32 %s26, 1
        %s307 = scalar_lea.sflag [#allocation6], %s306
        %s308 = sand.u32 %s81, 1
        %s309 = smul.addr %s308, 8
        %s310 = scalar_lea.vmem [#allocation7], %s309
        // Predicated region
        $region49: #{tpu_custom_call.1} parent=39 // pred_check
          %p311 = pneg %p94
        $region50: #{tpu_custom_call.1} parent=39 // pred_check_branch
          %313 = sbr.rel (%p311) target = $region52
        $region51: #{tpu_custom_call.1} parent=39 // pred_region
          %314 = dma.done %s307, 128
        $region52: #{tpu_custom_call.1} parent=39 // pred_fallthru
          _
        %s315 = sand.u32 %s26, 1
        %s316 = scalar_lea.sflag [#allocation9], %s315
        %s317 = sand.u32 %s107, 1
        %s318 = smul.addr %s317, 8
        %s319 = scalar_lea.vmem [#allocation8], %s318
        // Predicated region
        $region53: #{tpu_custom_call.1} parent=39 // pred_check
          %p320 = pneg %p120
        $region54: #{tpu_custom_call.1} parent=39 // pred_check_branch
          %322 = sbr.rel (%p320) target = $region56
        $region55: #{tpu_custom_call.1} parent=39 // pred_region
          %323 = dma.done %s316, 128
        $region56: #{tpu_custom_call.1} parent=39 // pred_fallthru
          _
        %s324 = sand.u32 %s26, 1
        %s325 = scalar_lea.sflag [#allocation9], %s324
        %s326 = sand.u32 %s133, 1
        %s327 = smul.addr %s326, 4096
        %s328 = scalar_lea.vmem [#allocation10], %s327
        // Predicated region
        $region57: #{tpu_custom_call.1} parent=39 // pred_check
          %p329 = pneg %p146
        $region58: #{tpu_custom_call.1} parent=39 // pred_check_branch
          %331 = sbr.rel (%p329) target = $region60
        $region59: #{tpu_custom_call.1} parent=39 // pred_region
          %332 = dma.done %s325, 65536
        $region60: #{tpu_custom_call.1} parent=39 // pred_fallthru
          _
        %p333 = pneg %p42
        %p334 = pneg %p39
        %s335 = sand.u32 %s26, 1
        %s336 = scalar_lea.sflag [#allocation6], %s335
        %s337 = sand.u32 %s55, 1
        %s338 = smul.addr %s337, 2048
        %s339 = scalar_lea.vmem [#allocation5], %s338
        %p340 = pneg %p68
        %p341 = pneg %p65
        %s342 = sand.u32 %s26, 1
        %s343 = scalar_lea.sflag [#allocation6], %s342
        %s344 = sand.u32 %s81, 1
        %s345 = smul.addr %s344, 8
        %s346 = scalar_lea.vmem [#allocation7], %s345
        %p347 = pneg %p94
        %p348 = pneg %p91
        %s349 = sand.u32 %s26, 1
        %s350 = scalar_lea.sflag [#allocation9], %s349
        %s351 = sand.u32 %s107, 1
        %s352 = smul.addr %s351, 8
        %s353 = scalar_lea.vmem [#allocation8], %s352
        %p354 = pneg %p120
        %p355 = pneg %p117
        %s356 = sand.u32 %s26, 1
        %s357 = scalar_lea.sflag [#allocation9], %s356
        %s358 = sand.u32 %s133, 1
        %s359 = smul.addr %s358, 4096
        %s360 = scalar_lea.vmem [#allocation10], %s359
        %p361 = pneg %p146
        %p362 = pneg %p143
        %p363 = pneg %p172
        %p364 = pneg %p169
        %s365 = sand.u32 %s159, 1
        %s366 = scalar_lea.sflag [#allocation4], %s365
        %s367 = sand.u32 %s159, 1
        %s368 = smul.addr %s367, 16
        %s369 = scalar_lea.vmem [#allocation11], %s368
        %s370 = smul.u32 128, %s26
        %s371 = smul.u32 8, %s26
        %s372 = smul.u32 8, %s26
        %s373 = smul.u32 128, %s26
        %v374 = vld [vmem:[#allocation2] sm:$0xff]
        %v375 = vld [vmem:[#allocation2 + $0x8] sm:$0xff]
        %v376 = vld [vmem:[#allocation2 + $0x10] sm:$0xff]
        %v377 = vld [vmem:[#allocation2 + $0x18] sm:$0xff]
        %v378 = vld [vmem:[#allocation2 + $0x20] sm:$0xff]
        %v379 = vld [vmem:[#allocation2 + $0x28] sm:$0xff]
        %v380 = vld [vmem:[#allocation2 + $0x30] sm:$0xff]
        %v381 = vld [vmem:[#allocation2 + $0x38] sm:$0xff]
        %v382 = vld [vmem:[#allocation2 + $0x40] sm:$0xff]
        %v383 = vld [vmem:[#allocation2 + $0x48] sm:$0xff]
        %v384 = vld [vmem:[#allocation2 + $0x50] sm:$0xff]
        %v385 = vld [vmem:[#allocation2 + $0x58] sm:$0xff]
        %v386 = vld [vmem:[#allocation2 + $0x60] sm:$0xff]
        %v387 = vld [vmem:[#allocation2 + $0x68] sm:$0xff]
        %v388 = vld [vmem:[#allocation2 + $0x70] sm:$0xff]
        %v389 = vld [vmem:[#allocation2 + $0x78] sm:$0xff]
        %v390 = vld [vmem:[#allocation2 + $0x80] sm:$0xff]
        %v391 = vld [vmem:[#allocation2 + $0x88] sm:$0xff]
        %v392 = vld [vmem:[#allocation2 + $0x90] sm:$0xff]
        %v393 = vld [vmem:[#allocation2 + $0x98] sm:$0xff]
        %v394 = vld [vmem:[#allocation2 + $0xa0] sm:$0xff]
        %v395 = vld [vmem:[#allocation2 + $0xa8] sm:$0xff]
        %v396 = vld [vmem:[#allocation2 + $0xb0] sm:$0xff]
        %v397 = vld [vmem:[#allocation2 + $0xb8] sm:$0xff]
        %v398 = vld [vmem:[#allocation2 + $0xc0] sm:$0x11]
        %v399 = vld [vmem:[#allocation2 + $0xc8] sm:$0x11]
        %v400 = vld [vmem:[%s301] sm:$0xff]
        %v401 = vld [vmem:[%s301 + $0x8] sm:$0xff]
        %v402 = vld [vmem:[%s301 + $0x10] sm:$0xff]
        %v403 = vld [vmem:[%s301 + $0x18] sm:$0xff]
        %v404 = vld [vmem:[%s301 + $0x20] sm:$0xff]
        %v405 = vld [vmem:[%s301 + $0x28] sm:$0xff]
        %v406 = vld [vmem:[%s301 + $0x30] sm:$0xff]
        %v407 = vld [vmem:[%s301 + $0x38] sm:$0xff]
        %v408 = vld [vmem:[%s301 + $0x40] sm:$0xff]
        %v409 = vld [vmem:[%s301 + $0x48] sm:$0xff]
        %v410 = vld [vmem:[%s301 + $0x50] sm:$0xff]
        %v411 = vld [vmem:[%s301 + $0x58] sm:$0xff]
        %v412 = vld [vmem:[%s301 + $0x60] sm:$0xff]
        %v413 = vld [vmem:[%s301 + $0x68] sm:$0xff]
        %v414 = vld [vmem:[%s301 + $0x70] sm:$0xff]
        %v415 = vld [vmem:[%s301 + $0x78] sm:$0xff]
        %v416 = vld [vmem:[%s301 + $0x80] sm:$0xff]
        %v417 = vld [vmem:[%s301 + $0x88] sm:$0xff]
        %v418 = vld [vmem:[%s301 + $0x90] sm:$0xff]
        %v419 = vld [vmem:[%s301 + $0x98] sm:$0xff]
        %v420 = vld [vmem:[%s301 + $0xa0] sm:$0xff]
        %v421 = vld [vmem:[%s301 + $0xa8] sm:$0xff]
        %v422 = vld [vmem:[%s301 + $0xb0] sm:$0xff]
        %v423 = vld [vmem:[%s301 + $0xb8] sm:$0xff]
        %v424 = vld [vmem:[%s301 + $0xc0] sm:$0xff]
        %v425 = vld [vmem:[%s301 + $0xc8] sm:$0xff]
        %v426 = vld [vmem:[%s301 + $0xd0] sm:$0xff]
        %v427 = vld [vmem:[%s301 + $0xd8] sm:$0xff]
        %v428 = vld [vmem:[%s301 + $0xe0] sm:$0xff]
        %v429 = vld [vmem:[%s301 + $0xe8] sm:$0xff]
        %v430 = vld [vmem:[%s301 + $0xf0] sm:$0xff]
        %v431 = vld [vmem:[%s301 + $0xf8] sm:$0xff]
        %v432 = vld [vmem:[%s301 + $0x100] sm:$0xff]
        %v433 = vld [vmem:[%s301 + $0x108] sm:$0xff]
        %v434 = vld [vmem:[%s301 + $0x110] sm:$0xff]
        %v435 = vld [vmem:[%s301 + $0x118] sm:$0xff]
        %v436 = vld [vmem:[%s301 + $0x120] sm:$0xff]
        %v437 = vld [vmem:[%s301 + $0x128] sm:$0xff]
        %v438 = vld [vmem:[%s301 + $0x130] sm:$0xff]
        %v439 = vld [vmem:[%s301 + $0x138] sm:$0xff]
        %v440 = vld [vmem:[%s301 + $0x140] sm:$0xff]
        %v441 = vld [vmem:[%s301 + $0x148] sm:$0xff]
        %v442 = vld [vmem:[%s301 + $0x150] sm:$0xff]
        %v443 = vld [vmem:[%s301 + $0x158] sm:$0xff]
        %v444 = vld [vmem:[%s301 + $0x160] sm:$0xff]
        %v445 = vld [vmem:[%s301 + $0x168] sm:$0xff]
        %v446 = vld [vmem:[%s301 + $0x170] sm:$0xff]
        %v447 = vld [vmem:[%s301 + $0x178] sm:$0xff]
        %v448 = vld [vmem:[%s301 + $0x180] sm:$0xff]
        %v449 = vld [vmem:[%s301 + $0x188] sm:$0xff]
        %v450 = vld [vmem:[%s301 + $0x190] sm:$0xff]
        %v451 = vld [vmem:[%s301 + $0x198] sm:$0xff]
        %v452 = vld [vmem:[%s301 + $0x1a0] sm:$0xff]
        %v453 = vld [vmem:[%s301 + $0x1a8] sm:$0xff]
        %v454 = vld [vmem:[%s301 + $0x1b0] sm:$0xff]
        %v455 = vld [vmem:[%s301 + $0x1b8] sm:$0xff]
        %v456 = vld [vmem:[%s301 + $0x1c0] sm:$0xff]
        %v457 = vld [vmem:[%s301 + $0x1c8] sm:$0xff]
        %v458 = vld [vmem:[%s301 + $0x1d0] sm:$0xff]
        %v459 = vld [vmem:[%s301 + $0x1d8] sm:$0xff]
        %v460 = vld [vmem:[%s301 + $0x1e0] sm:$0xff]
        %v461 = vld [vmem:[%s301 + $0x1e8] sm:$0xff]
        %v462 = vld [vmem:[%s301 + $0x1f0] sm:$0xff]
        %v463 = vld [vmem:[%s301 + $0x1f8] sm:$0xff]
        %v464 = vld [vmem:[%s301 + $0x200] sm:$0xff]
        %v465 = vld [vmem:[%s301 + $0x208] sm:$0xff]
        %v466 = vld [vmem:[%s301 + $0x210] sm:$0xff]
        %v467 = vld [vmem:[%s301 + $0x218] sm:$0xff]
        %v468 = vld [vmem:[%s301 + $0x220] sm:$0xff]
        %v469 = vld [vmem:[%s301 + $0x228] sm:$0xff]
        %v470 = vld [vmem:[%s301 + $0x230] sm:$0xff]
        %v471 = vld [vmem:[%s301 + $0x238] sm:$0xff]
        %v472 = vld [vmem:[%s301 + $0x240] sm:$0xff]
        %v473 = vld [vmem:[%s301 + $0x248] sm:$0xff]
        %v474 = vld [vmem:[%s301 + $0x250] sm:$0xff]
        %v475 = vld [vmem:[%s301 + $0x258] sm:$0xff]
        %v476 = vld [vmem:[%s301 + $0x260] sm:$0xff]
        %v477 = vld [vmem:[%s301 + $0x268] sm:$0xff]
        %v478 = vld [vmem:[%s301 + $0x270] sm:$0xff]
        %v479 = vld [vmem:[%s301 + $0x278] sm:$0xff]
        %v480 = vld [vmem:[%s301 + $0x280] sm:$0xff]
        %v481 = vld [vmem:[%s301 + $0x288] sm:$0xff]
        %v482 = vld [vmem:[%s301 + $0x290] sm:$0xff]
        %v483 = vld [vmem:[%s301 + $0x298] sm:$0xff]
        %v484 = vld [vmem:[%s301 + $0x2a0] sm:$0xff]
        %v485 = vld [vmem:[%s301 + $0x2a8] sm:$0xff]
        %v486 = vld [vmem:[%s301 + $0x2b0] sm:$0xff]
        %v487 = vld [vmem:[%s301 + $0x2b8] sm:$0xff]
        %v488 = vld [vmem:[%s301 + $0x2c0] sm:$0xff]
        %v489 = vld [vmem:[%s301 + $0x2c8] sm:$0xff]
        %v490 = vld [vmem:[%s301 + $0x2d0] sm:$0xff]
        %v491 = vld [vmem:[%s301 + $0x2d8] sm:$0xff]
        %v492 = vld [vmem:[%s301 + $0x2e0] sm:$0xff]
        %v493 = vld [vmem:[%s301 + $0x2e8] sm:$0xff]
        %v494 = vld [vmem:[%s301 + $0x2f0] sm:$0xff]
        %v495 = vld [vmem:[%s301 + $0x2f8] sm:$0xff]
        %v496 = vld [vmem:[%s301 + $0x300] sm:$0xff]
        %v497 = vld [vmem:[%s301 + $0x308] sm:$0xff]
        %v498 = vld [vmem:[%s301 + $0x310] sm:$0xff]
        %v499 = vld [vmem:[%s301 + $0x318] sm:$0xff]
        %v500 = vld [vmem:[%s301 + $0x320] sm:$0xff]
        %v501 = vld [vmem:[%s301 + $0x328] sm:$0xff]
        %v502 = vld [vmem:[%s301 + $0x330] sm:$0xff]
        %v503 = vld [vmem:[%s301 + $0x338] sm:$0xff]
        %v504 = vld [vmem:[%s301 + $0x340] sm:$0xff]
        %v505 = vld [vmem:[%s301 + $0x348] sm:$0xff]
        %v506 = vld [vmem:[%s301 + $0x350] sm:$0xff]
        %v507 = vld [vmem:[%s301 + $0x358] sm:$0xff]
        %v508 = vld [vmem:[%s301 + $0x360] sm:$0xff]
        %v509 = vld [vmem:[%s301 + $0x368] sm:$0xff]
        %v510 = vld [vmem:[%s301 + $0x370] sm:$0xff]
        %v511 = vld [vmem:[%s301 + $0x378] sm:$0xff]
        %v512 = vld [vmem:[%s301 + $0x380] sm:$0xff]
        %v513 = vld [vmem:[%s301 + $0x388] sm:$0xff]
        %v514 = vld [vmem:[%s301 + $0x390] sm:$0xff]
        %v515 = vld [vmem:[%s301 + $0x398] sm:$0xff]
        %v516 = vld [vmem:[%s301 + $0x3a0] sm:$0xff]
        %v517 = vld [vmem:[%s301 + $0x3a8] sm:$0xff]
        %v518 = vld [vmem:[%s301 + $0x3b0] sm:$0xff]
        %v519 = vld [vmem:[%s301 + $0x3b8] sm:$0xff]
        %v520 = vld [vmem:[%s301 + $0x3c0] sm:$0xff]
        %v521 = vld [vmem:[%s301 + $0x3c8] sm:$0xff]
        %v522 = vld [vmem:[%s301 + $0x3d0] sm:$0xff]
        %v523 = vld [vmem:[%s301 + $0x3d8] sm:$0xff]
        %v524 = vld [vmem:[%s301 + $0x3e0] sm:$0xff]
        %v525 = vld [vmem:[%s301 + $0x3e8] sm:$0xff]
        %v526 = vld [vmem:[%s301 + $0x3f0] sm:$0xff]
        %v527 = vld [vmem:[%s301 + $0x3f8] sm:$0xff]
        %v528 = vld [vmem:[%s301 + $0x400] sm:$0xff]
        %v529 = vld [vmem:[%s301 + $0x408] sm:$0xff]
        %v530 = vld [vmem:[%s301 + $0x410] sm:$0xff]
        %v531 = vld [vmem:[%s301 + $0x418] sm:$0xff]
        %v532 = vld [vmem:[%s301 + $0x420] sm:$0xff]
        %v533 = vld [vmem:[%s301 + $0x428] sm:$0xff]
        %v534 = vld [vmem:[%s301 + $0x430] sm:$0xff]
        %v535 = vld [vmem:[%s301 + $0x438] sm:$0xff]
        %v536 = vld [vmem:[%s301 + $0x440] sm:$0xff]
        %v537 = vld [vmem:[%s301 + $0x448] sm:$0xff]
        %v538 = vld [vmem:[%s301 + $0x450] sm:$0xff]
        %v539 = vld [vmem:[%s301 + $0x458] sm:$0xff]
        %v540 = vld [vmem:[%s301 + $0x460] sm:$0xff]
        %v541 = vld [vmem:[%s301 + $0x468] sm:$0xff]
        %v542 = vld [vmem:[%s301 + $0x470] sm:$0xff]
        %v543 = vld [vmem:[%s301 + $0x478] sm:$0xff]
        %v544 = vld [vmem:[%s301 + $0x480] sm:$0xff]
        %v545 = vld [vmem:[%s301 + $0x488] sm:$0xff]
        %v546 = vld [vmem:[%s301 + $0x490] sm:$0xff]
        %v547 = vld [vmem:[%s301 + $0x498] sm:$0xff]
        %v548 = vld [vmem:[%s301 + $0x4a0] sm:$0xff]
        %v549 = vld [vmem:[%s301 + $0x4a8] sm:$0xff]
        %v550 = vld [vmem:[%s301 + $0x4b0] sm:$0xff]
        %v551 = vld [vmem:[%s301 + $0x4b8] sm:$0xff]
        %v552 = vld [vmem:[%s301 + $0x4c0] sm:$0xff]
        %v553 = vld [vmem:[%s301 + $0x4c8] sm:$0xff]
        %v554 = vld [vmem:[%s301 + $0x4d0] sm:$0xff]
        %v555 = vld [vmem:[%s301 + $0x4d8] sm:$0xff]
        %v556 = vld [vmem:[%s301 + $0x4e0] sm:$0xff]
        %v557 = vld [vmem:[%s301 + $0x4e8] sm:$0xff]
        %v558 = vld [vmem:[%s301 + $0x4f0] sm:$0xff]
        %v559 = vld [vmem:[%s301 + $0x4f8] sm:$0xff]
        %v560 = vld [vmem:[%s301 + $0x500] sm:$0xff]
        %v561 = vld [vmem:[%s301 + $0x508] sm:$0xff]
        %v562 = vld [vmem:[%s301 + $0x510] sm:$0xff]
        %v563 = vld [vmem:[%s301 + $0x518] sm:$0xff]
        %v564 = vld [vmem:[%s301 + $0x520] sm:$0xff]
        %v565 = vld [vmem:[%s301 + $0x528] sm:$0xff]
        %v566 = vld [vmem:[%s301 + $0x530] sm:$0xff]
        %v567 = vld [vmem:[%s301 + $0x538] sm:$0xff]
        %v568 = vld [vmem:[%s301 + $0x540] sm:$0xff]
        %v569 = vld [vmem:[%s301 + $0x548] sm:$0xff]
        %v570 = vld [vmem:[%s301 + $0x550] sm:$0xff]
        %v571 = vld [vmem:[%s301 + $0x558] sm:$0xff]
        %v572 = vld [vmem:[%s301 + $0x560] sm:$0xff]
        %v573 = vld [vmem:[%s301 + $0x568] sm:$0xff]
        %v574 = vld [vmem:[%s301 + $0x570] sm:$0xff]
        %v575 = vld [vmem:[%s301 + $0x578] sm:$0xff]
        %v576 = vld [vmem:[%s301 + $0x580] sm:$0xff]
        %v577 = vld [vmem:[%s301 + $0x588] sm:$0xff]
        %v578 = vld [vmem:[%s301 + $0x590] sm:$0xff]
        %v579 = vld [vmem:[%s301 + $0x598] sm:$0xff]
        %v580 = vld [vmem:[%s301 + $0x5a0] sm:$0xff]
        %v581 = vld [vmem:[%s301 + $0x5a8] sm:$0xff]
        %v582 = vld [vmem:[%s301 + $0x5b0] sm:$0xff]
        %v583 = vld [vmem:[%s301 + $0x5b8] sm:$0xff]
        %v584 = vld [vmem:[%s301 + $0x5c0] sm:$0xff]
        %v585 = vld [vmem:[%s301 + $0x5c8] sm:$0xff]
        %v586 = vld [vmem:[%s301 + $0x5d0] sm:$0xff]
        %v587 = vld [vmem:[%s301 + $0x5d8] sm:$0xff]
        %v588 = vld [vmem:[%s301 + $0x5e0] sm:$0xff]
        %v589 = vld [vmem:[%s301 + $0x5e8] sm:$0xff]
        %v590 = vld [vmem:[%s301 + $0x5f0] sm:$0xff]
        %v591 = vld [vmem:[%s301 + $0x5f8] sm:$0xff]
        %v592 = vld [vmem:[%s301 + $0x600] sm:$0xff]
        %v593 = vld [vmem:[%s301 + $0x608] sm:$0xff]
        %v594 = vld [vmem:[%s301 + $0x610] sm:$0xff]
        %v595 = vld [vmem:[%s301 + $0x618] sm:$0xff]
        %v596 = vld [vmem:[%s301 + $0x620] sm:$0xff]
        %v597 = vld [vmem:[%s301 + $0x628] sm:$0xff]
        %v598 = vld [vmem:[%s301 + $0x630] sm:$0xff]
        %v599 = vld [vmem:[%s301 + $0x638] sm:$0xff]
        %v600 = vld [vmem:[%s301 + $0x640] sm:$0xff]
        %v601 = vld [vmem:[%s301 + $0x648] sm:$0xff]
        %v602 = vld [vmem:[%s301 + $0x650] sm:$0xff]
        %v603 = vld [vmem:[%s301 + $0x658] sm:$0xff]
        %v604 = vld [vmem:[%s301 + $0x660] sm:$0xff]
        %v605 = vld [vmem:[%s301 + $0x668] sm:$0xff]
        %v606 = vld [vmem:[%s301 + $0x670] sm:$0xff]
        %v607 = vld [vmem:[%s301 + $0x678] sm:$0xff]
        %v608 = vld [vmem:[%s301 + $0x680] sm:$0xff]
        %v609 = vld [vmem:[%s301 + $0x688] sm:$0xff]
        %v610 = vld [vmem:[%s301 + $0x690] sm:$0xff]
        %v611 = vld [vmem:[%s301 + $0x698] sm:$0xff]
        %v612 = vld [vmem:[%s301 + $0x6a0] sm:$0xff]
        %v613 = vld [vmem:[%s301 + $0x6a8] sm:$0xff]
        %v614 = vld [vmem:[%s301 + $0x6b0] sm:$0xff]
        %v615 = vld [vmem:[%s301 + $0x6b8] sm:$0xff]
        %v616 = vld [vmem:[%s301 + $0x6c0] sm:$0xff]
        %v617 = vld [vmem:[%s301 + $0x6c8] sm:$0xff]
        %v618 = vld [vmem:[%s301 + $0x6d0] sm:$0xff]
        %v619 = vld [vmem:[%s301 + $0x6d8] sm:$0xff]
        %v620 = vld [vmem:[%s301 + $0x6e0] sm:$0xff]
        %v621 = vld [vmem:[%s301 + $0x6e8] sm:$0xff]
        %v622 = vld [vmem:[%s301 + $0x6f0] sm:$0xff]
        %v623 = vld [vmem:[%s301 + $0x6f8] sm:$0xff]
        %v624 = vld [vmem:[%s301 + $0x700] sm:$0xff]
        %v625 = vld [vmem:[%s301 + $0x708] sm:$0xff]
        %v626 = vld [vmem:[%s301 + $0x710] sm:$0xff]
        %v627 = vld [vmem:[%s301 + $0x718] sm:$0xff]
        %v628 = vld [vmem:[%s301 + $0x720] sm:$0xff]
        %v629 = vld [vmem:[%s301 + $0x728] sm:$0xff]
        %v630 = vld [vmem:[%s301 + $0x730] sm:$0xff]
        %v631 = vld [vmem:[%s301 + $0x738] sm:$0xff]
        %v632 = vld [vmem:[%s301 + $0x740] sm:$0xff]
        %v633 = vld [vmem:[%s301 + $0x748] sm:$0xff]
        %v634 = vld [vmem:[%s301 + $0x750] sm:$0xff]
        %v635 = vld [vmem:[%s301 + $0x758] sm:$0xff]
        %v636 = vld [vmem:[%s301 + $0x760] sm:$0xff]
        %v637 = vld [vmem:[%s301 + $0x768] sm:$0xff]
        %v638 = vld [vmem:[%s301 + $0x770] sm:$0xff]
        %v639 = vld [vmem:[%s301 + $0x778] sm:$0xff]
        %v640 = vld [vmem:[%s301 + $0x780] sm:$0xff]
        %v641 = vld [vmem:[%s301 + $0x788] sm:$0xff]
        %v642 = vld [vmem:[%s301 + $0x790] sm:$0xff]
        %v643 = vld [vmem:[%s301 + $0x798] sm:$0xff]
        %v644 = vld [vmem:[%s301 + $0x7a0] sm:$0xff]
        %v645 = vld [vmem:[%s301 + $0x7a8] sm:$0xff]
        %v646 = vld [vmem:[%s301 + $0x7b0] sm:$0xff]
        %v647 = vld [vmem:[%s301 + $0x7b8] sm:$0xff]
        %v648 = vld [vmem:[%s301 + $0x7c0] sm:$0xff]
        %v649 = vld [vmem:[%s301 + $0x7c8] sm:$0xff]
        %v650 = vld [vmem:[%s301 + $0x7d0] sm:$0xff]
        %v651 = vld [vmem:[%s301 + $0x7d8] sm:$0xff]
        %v652 = vld [vmem:[%s301 + $0x7e0] sm:$0xff]
        %v653 = vld [vmem:[%s301 + $0x7e8] sm:$0xff]
        %v654 = vld [vmem:[%s301 + $0x7f0] sm:$0xff]
        %v655 = vld [vmem:[%s301 + $0x7f8] sm:$0xff]
        %v682 = vunpack.c.l.b16 %v374
        %v683 = vunpack.c.h.b16 %v374
        %v684 = vunpack.c.l.b16 %v375
        %v685 = vunpack.c.h.b16 %v375
        %v686 = vunpack.c.l.b16 %v376
        %v687 = vunpack.c.h.b16 %v376
        %v688 = vunpack.c.l.b16 %v377
        %v689 = vunpack.c.h.b16 %v377
        %v690 = vunpack.c.l.b16 %v378
        %v691 = vunpack.c.h.b16 %v378
        %v692 = vunpack.c.l.b16 %v379
        %v693 = vunpack.c.h.b16 %v379
        %v694 = vunpack.c.l.b16 %v380
        %v695 = vunpack.c.h.b16 %v380
        %v696 = vunpack.c.l.b16 %v381
        %v697 = vunpack.c.h.b16 %v381
        %v698 = vunpack.c.l.b16 %v382
        %v699 = vunpack.c.h.b16 %v382
        %v700 = vunpack.c.l.b16 %v383
        %v701 = vunpack.c.h.b16 %v383
        %v702 = vunpack.c.l.b16 %v384
        %v703 = vunpack.c.h.b16 %v384
        %v704 = vunpack.c.l.b16 %v385
        %v705 = vunpack.c.h.b16 %v385
        %v706 = vunpack.c.l.b16 %v386
        %v707 = vunpack.c.h.b16 %v386
        %v708 = vunpack.c.l.b16 %v387
        %v709 = vunpack.c.h.b16 %v387
        %v710 = vunpack.c.l.b16 %v388
        %v711 = vunpack.c.h.b16 %v388
        %v712 = vunpack.c.l.b16 %v389
        %v713 = vunpack.c.h.b16 %v389
        %v714 = vunpack.c.l.b16 %v390
        %v715 = vunpack.c.h.b16 %v390
        %v716 = vunpack.c.l.b16 %v391
        %v717 = vunpack.c.h.b16 %v391
        %v718 = vunpack.c.l.b16 %v392
        %v719 = vunpack.c.h.b16 %v392
        %v720 = vunpack.c.l.b16 %v393
        %v721 = vunpack.c.h.b16 %v393
        %v722 = vunpack.c.l.b16 %v394
        %v723 = vunpack.c.h.b16 %v394
        %v724 = vunpack.c.l.b16 %v395
        %v725 = vunpack.c.h.b16 %v395
        %v726 = vunpack.c.l.b16 %v396
        %v727 = vunpack.c.h.b16 %v396
        %v728 = vunpack.c.l.b16 %v397
        %v729 = vunpack.c.h.b16 %v397
        %v730 = vunpack.c.l.b16 %v398
        %v731 = vunpack.c.h.b16 %v398
        %v732 = vunpack.c.l.b16 %v399
        %v733 = vunpack.c.h.b16 %v399
        %v734 = vpack.c.b16 %v686, %v682
        %v735 = vpack.c.b16 %v687, %v683
        %v736 = vpack.c.b16 %v688, %v684
        %v737 = vpack.c.b16 %v689, %v685
        %v738 = vpack.c.b16 %v694, %v690
        %v739 = vpack.c.b16 %v695, %v691
        %v740 = vpack.c.b16 %v696, %v692
        %v741 = vpack.c.b16 %v697, %v693
        %v742 = vpack.c.b16 %v702, %v698
        %v743 = vpack.c.b16 %v703, %v699
        %v744 = vpack.c.b16 %v704, %v700
        %v745 = vpack.c.b16 %v705, %v701
        %v746 = vpack.c.b16 %v710, %v706
        %v747 = vpack.c.b16 %v711, %v707
        %v748 = vpack.c.b16 %v712, %v708
        %v749 = vpack.c.b16 %v713, %v709
        %v750 = vpack.c.b16 %v718, %v714
        %v751 = vpack.c.b16 %v719, %v715
        %v752 = vpack.c.b16 %v720, %v716
        %v753 = vpack.c.b16 %v721, %v717
        %v754 = vpack.c.b16 %v726, %v722
        %v755 = vpack.c.b16 %v727, %v723
        %v756 = vpack.c.b16 %v728, %v724
        %v757 = vpack.c.b16 %v729, %v725
        %v758 = vpack.c.b16 %v730, %v730
        %v759 = vpack.c.b16 %v731, %v731
        %v760 = vpack.c.b16 %v732, %v732
        %v761 = vpack.c.b16 %v733, %v733
        %v1046 = vunpack.c.l.b16 %v400
        %v1047 = vunpack.c.h.b16 %v400
        %v1048 = vunpack.c.l.b16 %v401
        %v1049 = vunpack.c.h.b16 %v401
        %v1050 = vunpack.c.l.b16 %v402
        %v1051 = vunpack.c.h.b16 %v402
        %v1052 = vunpack.c.l.b16 %v403
        %v1053 = vunpack.c.h.b16 %v403
        %v1054 = vunpack.c.l.b16 %v404
        %v1055 = vunpack.c.h.b16 %v404
        %v1056 = vunpack.c.l.b16 %v405
        %v1057 = vunpack.c.h.b16 %v405
        %v1058 = vunpack.c.l.b16 %v406
        %v1059 = vunpack.c.h.b16 %v406
        %v1060 = vunpack.c.l.b16 %v407
        %v1061 = vunpack.c.h.b16 %v407
        %v1062 = vunpack.c.l.b16 %v408
        %v1063 = vunpack.c.h.b16 %v408
        %v1064 = vunpack.c.l.b16 %v409
        %v1065 = vunpack.c.h.b16 %v409
        %v1066 = vunpack.c.l.b16 %v410
        %v1067 = vunpack.c.h.b16 %v410
        %v1068 = vunpack.c.l.b16 %v411
        %v1069 = vunpack.c.h.b16 %v411
        %v1070 = vunpack.c.l.b16 %v412
        %v1071 = vunpack.c.h.b16 %v412
        %v1072 = vunpack.c.l.b16 %v413
        %v1073 = vunpack.c.h.b16 %v413
        %v1074 = vunpack.c.l.b16 %v414
        %v1075 = vunpack.c.h.b16 %v414
        %v1076 = vunpack.c.l.b16 %v415
        %v1077 = vunpack.c.h.b16 %v415
        %v1078 = vunpack.c.l.b16 %v416
        %v1079 = vunpack.c.h.b16 %v416
        %v1080 = vunpack.c.l.b16 %v417
        %v1081 = vunpack.c.h.b16 %v417
        %v1082 = vunpack.c.l.b16 %v418
        %v1083 = vunpack.c.h.b16 %v418
        %v1084 = vunpack.c.l.b16 %v419
        %v1085 = vunpack.c.h.b16 %v419
        %v1086 = vunpack.c.l.b16 %v420
        %v1087 = vunpack.c.h.b16 %v420
        %v1088 = vunpack.c.l.b16 %v421
        %v1089 = vunpack.c.h.b16 %v421
        %v1090 = vunpack.c.l.b16 %v422
        %v1091 = vunpack.c.h.b16 %v422
        %v1092 = vunpack.c.l.b16 %v423
        %v1093 = vunpack.c.h.b16 %v423
        %v1094 = vunpack.c.l.b16 %v424
        %v1095 = vunpack.c.h.b16 %v424
        %v1096 = vunpack.c.l.b16 %v425
        %v1097 = vunpack.c.h.b16 %v425
        %v1098 = vunpack.c.l.b16 %v426
        %v1099 = vunpack.c.h.b16 %v426
        %v1100 = vunpack.c.l.b16 %v427
        %v1101 = vunpack.c.h.b16 %v427
        %v1102 = vunpack.c.l.b16 %v428
        %v1103 = vunpack.c.h.b16 %v428
        %v1104 = vunpack.c.l.b16 %v429
        %v1105 = vunpack.c.h.b16 %v429
        %v1106 = vunpack.c.l.b16 %v430
        %v1107 = vunpack.c.h.b16 %v430
        %v1108 = vunpack.c.l.b16 %v431
        %v1109 = vunpack.c.h.b16 %v431
        %v1110 = vunpack.c.l.b16 %v432
        %v1111 = vunpack.c.h.b16 %v432
        %v1112 = vunpack.c.l.b16 %v433
        %v1113 = vunpack.c.h.b16 %v433
        %v1114 = vunpack.c.l.b16 %v434
        %v1115 = vunpack.c.h.b16 %v434
        %v1116 = vunpack.c.l.b16 %v435
        %v1117 = vunpack.c.h.b16 %v435
        %v1118 = vunpack.c.l.b16 %v436
        %v1119 = vunpack.c.h.b16 %v436
        %v1120 = vunpack.c.l.b16 %v437
        %v1121 = vunpack.c.h.b16 %v437
        %v1122 = vunpack.c.l.b16 %v438
        %v1123 = vunpack.c.h.b16 %v438
        %v1124 = vunpack.c.l.b16 %v439
        %v1125 = vunpack.c.h.b16 %v439
        %v1126 = vunpack.c.l.b16 %v440
        %v1127 = vunpack.c.h.b16 %v440
        %v1128 = vunpack.c.l.b16 %v441
        %v1129 = vunpack.c.h.b16 %v441
        %v1130 = vunpack.c.l.b16 %v442
        %v1131 = vunpack.c.h.b16 %v442
        %v1132 = vunpack.c.l.b16 %v443
        %v1133 = vunpack.c.h.b16 %v443
        %v1134 = vunpack.c.l.b16 %v444
        %v1135 = vunpack.c.h.b16 %v444
        %v1136 = vunpack.c.l.b16 %v445
        %v1137 = vunpack.c.h.b16 %v445
        %v1138 = vunpack.c.l.b16 %v446
        %v1139 = vunpack.c.h.b16 %v446
        %v1140 = vunpack.c.l.b16 %v447
        %v1141 = vunpack.c.h.b16 %v447
        %v1142 = vunpack.c.l.b16 %v448
        %v1143 = vunpack.c.h.b16 %v448
        %v1144 = vunpack.c.l.b16 %v449
        %v1145 = vunpack.c.h.b16 %v449
        %v1146 = vunpack.c.l.b16 %v450
        %v1147 = vunpack.c.h.b16 %v450
        %v1148 = vunpack.c.l.b16 %v451
        %v1149 = vunpack.c.h.b16 %v451
        %v1150 = vunpack.c.l.b16 %v452
        %v1151 = vunpack.c.h.b16 %v452
        %v1152 = vunpack.c.l.b16 %v453
        %v1153 = vunpack.c.h.b16 %v453
        %v1154 = vunpack.c.l.b16 %v454
        %v1155 = vunpack.c.h.b16 %v454
        %v1156 = vunpack.c.l.b16 %v455
        %v1157 = vunpack.c.h.b16 %v455
        %v1158 = vunpack.c.l.b16 %v456
        %v1159 = vunpack.c.h.b16 %v456
        %v1160 = vunpack.c.l.b16 %v457
        %v1161 = vunpack.c.h.b16 %v457
        %v1162 = vunpack.c.l.b16 %v458
        %v1163 = vunpack.c.h.b16 %v458
        %v1164 = vunpack.c.l.b16 %v459
        %v1165 = vunpack.c.h.b16 %v459
        %v1166 = vunpack.c.l.b16 %v460
        %v1167 = vunpack.c.h.b16 %v460
        %v1168 = vunpack.c.l.b16 %v461
        %v1169 = vunpack.c.h.b16 %v461
        %v1170 = vunpack.c.l.b16 %v462
        %v1171 = vunpack.c.h.b16 %v462
        %v1172 = vunpack.c.l.b16 %v463
        %v1173 = vunpack.c.h.b16 %v463
        %v1174 = vunpack.c.l.b16 %v464
        %v1175 = vunpack.c.h.b16 %v464
        %v1176 = vunpack.c.l.b16 %v465
        %v1177 = vunpack.c.h.b16 %v465
        %v1178 = vunpack.c.l.b16 %v466
        %v1179 = vunpack.c.h.b16 %v466
        %v1180 = vunpack.c.l.b16 %v467
        %v1181 = vunpack.c.h.b16 %v467
        %v1182 = vunpack.c.l.b16 %v468
        %v1183 = vunpack.c.h.b16 %v468
        %v1184 = vunpack.c.l.b16 %v469
        %v1185 = vunpack.c.h.b16 %v469
        %v1186 = vunpack.c.l.b16 %v470
        %v1187 = vunpack.c.h.b16 %v470
        %v1188 = vunpack.c.l.b16 %v471
        %v1189 = vunpack.c.h.b16 %v471
        %v1190 = vunpack.c.l.b16 %v472
        %v1191 = vunpack.c.h.b16 %v472
        %v1192 = vunpack.c.l.b16 %v473
        %v1193 = vunpack.c.h.b16 %v473
        %v1194 = vunpack.c.l.b16 %v474
        %v1195 = vunpack.c.h.b16 %v474
        %v1196 = vunpack.c.l.b16 %v475
        %v1197 = vunpack.c.h.b16 %v475
        %v1198 = vunpack.c.l.b16 %v476
        %v1199 = vunpack.c.h.b16 %v476
        %v1200 = vunpack.c.l.b16 %v477
        %v1201 = vunpack.c.h.b16 %v477
        %v1202 = vunpack.c.l.b16 %v478
        %v1203 = vunpack.c.h.b16 %v478
        %v1204 = vunpack.c.l.b16 %v479
        %v1205 = vunpack.c.h.b16 %v479
        %v1206 = vunpack.c.l.b16 %v480
        %v1207 = vunpack.c.h.b16 %v480
        %v1208 = vunpack.c.l.b16 %v481
        %v1209 = vunpack.c.h.b16 %v481
        %v1210 = vunpack.c.l.b16 %v482
        %v1211 = vunpack.c.h.b16 %v482
        %v1212 = vunpack.c.l.b16 %v483
        %v1213 = vunpack.c.h.b16 %v483
        %v1214 = vunpack.c.l.b16 %v484
        %v1215 = vunpack.c.h.b16 %v484
        %v1216 = vunpack.c.l.b16 %v485
        %v1217 = vunpack.c.h.b16 %v485
        %v1218 = vunpack.c.l.b16 %v486
        %v1219 = vunpack.c.h.b16 %v486
        %v1220 = vunpack.c.l.b16 %v487
        %v1221 = vunpack.c.h.b16 %v487
        %v1222 = vunpack.c.l.b16 %v488
        %v1223 = vunpack.c.h.b16 %v488
        %v1224 = vunpack.c.l.b16 %v489
        %v1225 = vunpack.c.h.b16 %v489
        %v1226 = vunpack.c.l.b16 %v490
        %v1227 = vunpack.c.h.b16 %v490
        %v1228 = vunpack.c.l.b16 %v491
        %v1229 = vunpack.c.h.b16 %v491
        %v1230 = vunpack.c.l.b16 %v492
        %v1231 = vunpack.c.h.b16 %v492
        %v1232 = vunpack.c.l.b16 %v493
        %v1233 = vunpack.c.h.b16 %v493
        %v1234 = vunpack.c.l.b16 %v494
        %v1235 = vunpack.c.h.b16 %v494
        %v1236 = vunpack.c.l.b16 %v495
        %v1237 = vunpack.c.h.b16 %v495
        %v1238 = vunpack.c.l.b16 %v496
        %v1239 = vunpack.c.h.b16 %v496
        %v1240 = vunpack.c.l.b16 %v497
        %v1241 = vunpack.c.h.b16 %v497
        %v1242 = vunpack.c.l.b16 %v498
        %v1243 = vunpack.c.h.b16 %v498
        %v1244 = vunpack.c.l.b16 %v499
        %v1245 = vunpack.c.h.b16 %v499
        %v1246 = vunpack.c.l.b16 %v500
        %v1247 = vunpack.c.h.b16 %v500
        %v1248 = vunpack.c.l.b16 %v501
        %v1249 = vunpack.c.h.b16 %v501
        %v1250 = vunpack.c.l.b16 %v502
        %v1251 = vunpack.c.h.b16 %v502
        %v1252 = vunpack.c.l.b16 %v503
        %v1253 = vunpack.c.h.b16 %v503
        %v1254 = vunpack.c.l.b16 %v504
        %v1255 = vunpack.c.h.b16 %v504
        %v1256 = vunpack.c.l.b16 %v505
        %v1257 = vunpack.c.h.b16 %v505
        %v1258 = vunpack.c.l.b16 %v506
        %v1259 = vunpack.c.h.b16 %v506
        %v1260 = vunpack.c.l.b16 %v507
        %v1261 = vunpack.c.h.b16 %v507
        %v1262 = vunpack.c.l.b16 %v508
        %v1263 = vunpack.c.h.b16 %v508
        %v1264 = vunpack.c.l.b16 %v509
        %v1265 = vunpack.c.h.b16 %v509
        %v1266 = vunpack.c.l.b16 %v510
        %v1267 = vunpack.c.h.b16 %v510
        %v1268 = vunpack.c.l.b16 %v511
        %v1269 = vunpack.c.h.b16 %v511
        %v1270 = vunpack.c.l.b16 %v512
        %v1271 = vunpack.c.h.b16 %v512
        %v1272 = vunpack.c.l.b16 %v513
        %v1273 = vunpack.c.h.b16 %v513
        %v1274 = vunpack.c.l.b16 %v514
        %v1275 = vunpack.c.h.b16 %v514
        %v1276 = vunpack.c.l.b16 %v515
        %v1277 = vunpack.c.h.b16 %v515
        %v1278 = vunpack.c.l.b16 %v516
        %v1279 = vunpack.c.h.b16 %v516
        %v1280 = vunpack.c.l.b16 %v517
        %v1281 = vunpack.c.h.b16 %v517
        %v1282 = vunpack.c.l.b16 %v518
        %v1283 = vunpack.c.h.b16 %v518
        %v1284 = vunpack.c.l.b16 %v519
        %v1285 = vunpack.c.h.b16 %v519
        %v1286 = vunpack.c.l.b16 %v520
        %v1287 = vunpack.c.h.b16 %v520
        %v1288 = vunpack.c.l.b16 %v521
        %v1289 = vunpack.c.h.b16 %v521
        %v1290 = vunpack.c.l.b16 %v522
        %v1291 = vunpack.c.h.b16 %v522
        %v1292 = vunpack.c.l.b16 %v523
        %v1293 = vunpack.c.h.b16 %v523
        %v1294 = vunpack.c.l.b16 %v524
        %v1295 = vunpack.c.h.b16 %v524
        %v1296 = vunpack.c.l.b16 %v525
        %v1297 = vunpack.c.h.b16 %v525
        %v1298 = vunpack.c.l.b16 %v526
        %v1299 = vunpack.c.h.b16 %v526
        %v1300 = vunpack.c.l.b16 %v527
        %v1301 = vunpack.c.h.b16 %v527
        %v1302 = vunpack.c.l.b16 %v528
        %v1303 = vunpack.c.h.b16 %v528
        %v1304 = vunpack.c.l.b16 %v529
        %v1305 = vunpack.c.h.b16 %v529
        %v1306 = vunpack.c.l.b16 %v530
        %v1307 = vunpack.c.h.b16 %v530
        %v1308 = vunpack.c.l.b16 %v531
        %v1309 = vunpack.c.h.b16 %v531
        %v1310 = vunpack.c.l.b16 %v532
        %v1311 = vunpack.c.h.b16 %v532
        %v1312 = vunpack.c.l.b16 %v533
        %v1313 = vunpack.c.h.b16 %v533
        %v1314 = vunpack.c.l.b16 %v534
        %v1315 = vunpack.c.h.b16 %v534
        %v1316 = vunpack.c.l.b16 %v535
        %v1317 = vunpack.c.h.b16 %v535
        %v1318 = vunpack.c.l.b16 %v536
        %v1319 = vunpack.c.h.b16 %v536
        %v1320 = vunpack.c.l.b16 %v537
        %v1321 = vunpack.c.h.b16 %v537
        %v1322 = vunpack.c.l.b16 %v538
        %v1323 = vunpack.c.h.b16 %v538
        %v1324 = vunpack.c.l.b16 %v539
        %v1325 = vunpack.c.h.b16 %v539
        %v1326 = vunpack.c.l.b16 %v540
        %v1327 = vunpack.c.h.b16 %v540
        %v1328 = vunpack.c.l.b16 %v541
        %v1329 = vunpack.c.h.b16 %v541
        %v1330 = vunpack.c.l.b16 %v542
        %v1331 = vunpack.c.h.b16 %v542
        %v1332 = vunpack.c.l.b16 %v543
        %v1333 = vunpack.c.h.b16 %v543
        %v1334 = vunpack.c.l.b16 %v544
        %v1335 = vunpack.c.h.b16 %v544
        %v1336 = vunpack.c.l.b16 %v545
        %v1337 = vunpack.c.h.b16 %v545
        %v1338 = vunpack.c.l.b16 %v546
        %v1339 = vunpack.c.h.b16 %v546
        %v1340 = vunpack.c.l.b16 %v547
        %v1341 = vunpack.c.h.b16 %v547
        %v1342 = vunpack.c.l.b16 %v548
        %v1343 = vunpack.c.h.b16 %v548
        %v1344 = vunpack.c.l.b16 %v549
        %v1345 = vunpack.c.h.b16 %v549
        %v1346 = vunpack.c.l.b16 %v550
        %v1347 = vunpack.c.h.b16 %v550
        %v1348 = vunpack.c.l.b16 %v551
        %v1349 = vunpack.c.h.b16 %v551
        %v1350 = vunpack.c.l.b16 %v552
        %v1351 = vunpack.c.h.b16 %v552
        %v1352 = vunpack.c.l.b16 %v553
        %v1353 = vunpack.c.h.b16 %v553
        %v1354 = vunpack.c.l.b16 %v554
        %v1355 = vunpack.c.h.b16 %v554
        %v1356 = vunpack.c.l.b16 %v555
        %v1357 = vunpack.c.h.b16 %v555
        %v1358 = vunpack.c.l.b16 %v556
        %v1359 = vunpack.c.h.b16 %v556
        %v1360 = vunpack.c.l.b16 %v557
        %v1361 = vunpack.c.h.b16 %v557
        %v1362 = vunpack.c.l.b16 %v558
        %v1363 = vunpack.c.h.b16 %v558
        %v1364 = vunpack.c.l.b16 %v559
        %v1365 = vunpack.c.h.b16 %v559
        %v1366 = vunpack.c.l.b16 %v560
        %v1367 = vunpack.c.h.b16 %v560
        %v1368 = vunpack.c.l.b16 %v561
        %v1369 = vunpack.c.h.b16 %v561
        %v1370 = vunpack.c.l.b16 %v562
        %v1371 = vunpack.c.h.b16 %v562
        %v1372 = vunpack.c.l.b16 %v563
        %v1373 = vunpack.c.h.b16 %v563
        %v1374 = vunpack.c.l.b16 %v564
        %v1375 = vunpack.c.h.b16 %v564
        %v1376 = vunpack.c.l.b16 %v565
        %v1377 = vunpack.c.h.b16 %v565
        %v1378 = vunpack.c.l.b16 %v566
        %v1379 = vunpack.c.h.b16 %v566
        %v1380 = vunpack.c.l.b16 %v567
        %v1381 = vunpack.c.h.b16 %v567
        %v1382 = vunpack.c.l.b16 %v568
        %v1383 = vunpack.c.h.b16 %v568
        %v1384 = vunpack.c.l.b16 %v569
        %v1385 = vunpack.c.h.b16 %v569
        %v1386 = vunpack.c.l.b16 %v570
        %v1387 = vunpack.c.h.b16 %v570
        %v1388 = vunpack.c.l.b16 %v571
        %v1389 = vunpack.c.h.b16 %v571
        %v1390 = vunpack.c.l.b16 %v572
        %v1391 = vunpack.c.h.b16 %v572
        %v1392 = vunpack.c.l.b16 %v573
        %v1393 = vunpack.c.h.b16 %v573
        %v1394 = vunpack.c.l.b16 %v574
        %v1395 = vunpack.c.h.b16 %v574
        %v1396 = vunpack.c.l.b16 %v575
        %v1397 = vunpack.c.h.b16 %v575
        %v1398 = vunpack.c.l.b16 %v576
        %v1399 = vunpack.c.h.b16 %v576
        %v1400 = vunpack.c.l.b16 %v577
        %v1401 = vunpack.c.h.b16 %v577
        %v1402 = vunpack.c.l.b16 %v578
        %v1403 = vunpack.c.h.b16 %v578
        %v1404 = vunpack.c.l.b16 %v579
        %v1405 = vunpack.c.h.b16 %v579
        %v1406 = vunpack.c.l.b16 %v580
        %v1407 = vunpack.c.h.b16 %v580
        %v1408 = vunpack.c.l.b16 %v581
        %v1409 = vunpack.c.h.b16 %v581
        %v1410 = vunpack.c.l.b16 %v582
        %v1411 = vunpack.c.h.b16 %v582
        %v1412 = vunpack.c.l.b16 %v583
        %v1413 = vunpack.c.h.b16 %v583
        %v1414 = vunpack.c.l.b16 %v584
        %v1415 = vunpack.c.h.b16 %v584
        %v1416 = vunpack.c.l.b16 %v585
        %v1417 = vunpack.c.h.b16 %v585
        %v1418 = vunpack.c.l.b16 %v586
        %v1419 = vunpack.c.h.b16 %v586
        %v1420 = vunpack.c.l.b16 %v587
        %v1421 = vunpack.c.h.b16 %v587
        %v1422 = vunpack.c.l.b16 %v588
        %v1423 = vunpack.c.h.b16 %v588
        %v1424 = vunpack.c.l.b16 %v589
        %v1425 = vunpack.c.h.b16 %v589
        %v1426 = vunpack.c.l.b16 %v590
        %v1427 = vunpack.c.h.b16 %v590
        %v1428 = vunpack.c.l.b16 %v591
        %v1429 = vunpack.c.h.b16 %v591
        %v1430 = vunpack.c.l.b16 %v592
        %v1431 = vunpack.c.h.b16 %v592
        %v1432 = vunpack.c.l.b16 %v593
        %v1433 = vunpack.c.h.b16 %v593
        %v1434 = vunpack.c.l.b16 %v594
        %v1435 = vunpack.c.h.b16 %v594
        %v1436 = vunpack.c.l.b16 %v595
        %v1437 = vunpack.c.h.b16 %v595
        %v1438 = vunpack.c.l.b16 %v596
        %v1439 = vunpack.c.h.b16 %v596
        %v1440 = vunpack.c.l.b16 %v597
        %v1441 = vunpack.c.h.b16 %v597
        %v1442 = vunpack.c.l.b16 %v598
        %v1443 = vunpack.c.h.b16 %v598
        %v1444 = vunpack.c.l.b16 %v599
        %v1445 = vunpack.c.h.b16 %v599
        %v1446 = vunpack.c.l.b16 %v600
        %v1447 = vunpack.c.h.b16 %v600
        %v1448 = vunpack.c.l.b16 %v601
        %v1449 = vunpack.c.h.b16 %v601
        %v1450 = vunpack.c.l.b16 %v602
        %v1451 = vunpack.c.h.b16 %v602
        %v1452 = vunpack.c.l.b16 %v603
        %v1453 = vunpack.c.h.b16 %v603
        %v1454 = vunpack.c.l.b16 %v604
        %v1455 = vunpack.c.h.b16 %v604
        %v1456 = vunpack.c.l.b16 %v605
        %v1457 = vunpack.c.h.b16 %v605
        %v1458 = vunpack.c.l.b16 %v606
        %v1459 = vunpack.c.h.b16 %v606
        %v1460 = vunpack.c.l.b16 %v607
        %v1461 = vunpack.c.h.b16 %v607
        %v1462 = vunpack.c.l.b16 %v608
        %v1463 = vunpack.c.h.b16 %v608
        %v1464 = vunpack.c.l.b16 %v609
        %v1465 = vunpack.c.h.b16 %v609
        %v1466 = vunpack.c.l.b16 %v610
        %v1467 = vunpack.c.h.b16 %v610
        %v1468 = vunpack.c.l.b16 %v611
        %v1469 = vunpack.c.h.b16 %v611
        %v1470 = vunpack.c.l.b16 %v612
        %v1471 = vunpack.c.h.b16 %v612
        %v1472 = vunpack.c.l.b16 %v613
        %v1473 = vunpack.c.h.b16 %v613
        %v1474 = vunpack.c.l.b16 %v614
        %v1475 = vunpack.c.h.b16 %v614
        %v1476 = vunpack.c.l.b16 %v615
        %v1477 = vunpack.c.h.b16 %v615
        %v1478 = vunpack.c.l.b16 %v616
        %v1479 = vunpack.c.h.b16 %v616
        %v1480 = vunpack.c.l.b16 %v617
        %v1481 = vunpack.c.h.b16 %v617
        %v1482 = vunpack.c.l.b16 %v618
        %v1483 = vunpack.c.h.b16 %v618
        %v1484 = vunpack.c.l.b16 %v619
        %v1485 = vunpack.c.h.b16 %v619
        %v1486 = vunpack.c.l.b16 %v620
        %v1487 = vunpack.c.h.b16 %v620
        %v1488 = vunpack.c.l.b16 %v621
        %v1489 = vunpack.c.h.b16 %v621
        %v1490 = vunpack.c.l.b16 %v622
        %v1491 = vunpack.c.h.b16 %v622
        %v1492 = vunpack.c.l.b16 %v623
        %v1493 = vunpack.c.h.b16 %v623
        %v1494 = vunpack.c.l.b16 %v624
        %v1495 = vunpack.c.h.b16 %v624
        %v1496 = vunpack.c.l.b16 %v625
        %v1497 = vunpack.c.h.b16 %v625
        %v1498 = vunpack.c.l.b16 %v626
        %v1499 = vunpack.c.h.b16 %v626
        %v1500 = vunpack.c.l.b16 %v627
        %v1501 = vunpack.c.h.b16 %v627
        %v1502 = vunpack.c.l.b16 %v628
        %v1503 = vunpack.c.h.b16 %v628
        %v1504 = vunpack.c.l.b16 %v629
        %v1505 = vunpack.c.h.b16 %v629
        %v1506 = vunpack.c.l.b16 %v630
        %v1507 = vunpack.c.h.b16 %v630
        %v1508 = vunpack.c.l.b16 %v631
        %v1509 = vunpack.c.h.b16 %v631
        %v1510 = vunpack.c.l.b16 %v632
        %v1511 = vunpack.c.h.b16 %v632
        %v1512 = vunpack.c.l.b16 %v633
        %v1513 = vunpack.c.h.b16 %v633
        %v1514 = vunpack.c.l.b16 %v634
        %v1515 = vunpack.c.h.b16 %v634
        %v1516 = vunpack.c.l.b16 %v635
        %v1517 = vunpack.c.h.b16 %v635
        %v1518 = vunpack.c.l.b16 %v636
        %v1519 = vunpack.c.h.b16 %v636
        %v1520 = vunpack.c.l.b16 %v637
        %v1521 = vunpack.c.h.b16 %v637
        %v1522 = vunpack.c.l.b16 %v638
        %v1523 = vunpack.c.h.b16 %v638
        %v1524 = vunpack.c.l.b16 %v639
        %v1525 = vunpack.c.h.b16 %v639
        %v1526 = vunpack.c.l.b16 %v640
        %v1527 = vunpack.c.h.b16 %v640
        %v1528 = vunpack.c.l.b16 %v641
        %v1529 = vunpack.c.h.b16 %v641
        %v1530 = vunpack.c.l.b16 %v642
        %v1531 = vunpack.c.h.b16 %v642
        %v1532 = vunpack.c.l.b16 %v643
        %v1533 = vunpack.c.h.b16 %v643
        %v1534 = vunpack.c.l.b16 %v644
        %v1535 = vunpack.c.h.b16 %v644
        %v1536 = vunpack.c.l.b16 %v645
        %v1537 = vunpack.c.h.b16 %v645
        %v1538 = vunpack.c.l.b16 %v646
        %v1539 = vunpack.c.h.b16 %v646
        %v1540 = vunpack.c.l.b16 %v647
        %v1541 = vunpack.c.h.b16 %v647
        %v1542 = vunpack.c.l.b16 %v648
        %v1543 = vunpack.c.h.b16 %v648
        %v1544 = vunpack.c.l.b16 %v649
        %v1545 = vunpack.c.h.b16 %v649
        %v1546 = vunpack.c.l.b16 %v650
        %v1547 = vunpack.c.h.b16 %v650
        %v1548 = vunpack.c.l.b16 %v651
        %v1549 = vunpack.c.h.b16 %v651
        %v1550 = vunpack.c.l.b16 %v652
        %v1551 = vunpack.c.h.b16 %v652
        %v1552 = vunpack.c.l.b16 %v653
        %v1553 = vunpack.c.h.b16 %v653
        %v1554 = vunpack.c.l.b16 %v654
        %v1555 = vunpack.c.h.b16 %v654
        %v1556 = vunpack.c.l.b16 %v655
        %v1557 = vunpack.c.h.b16 %v655
        %v1558 = vpack.c.b16 %v1050, %v1046
        %v1559 = vpack.c.b16 %v1051, %v1047
        %v1560 = vpack.c.b16 %v1052, %v1048
        %v1561 = vpack.c.b16 %v1053, %v1049
        %v1562 = vpack.c.b16 %v1058, %v1054
        %v1563 = vpack.c.b16 %v1059, %v1055
        %v1564 = vpack.c.b16 %v1060, %v1056
        %v1565 = vpack.c.b16 %v1061, %v1057
        %v1566 = vpack.c.b16 %v1066, %v1062
        %v1567 = vpack.c.b16 %v1067, %v1063
        %v1568 = vpack.c.b16 %v1068, %v1064
        %v1569 = vpack.c.b16 %v1069, %v1065
        %v1570 = vpack.c.b16 %v1074, %v1070
        %v1571 = vpack.c.b16 %v1075, %v1071
        %v1572 = vpack.c.b16 %v1076, %v1072
        %v1573 = vpack.c.b16 %v1077, %v1073
        %v1574 = vpack.c.b16 %v1082, %v1078
        %v1575 = vpack.c.b16 %v1083, %v1079
        %v1576 = vpack.c.b16 %v1084, %v1080
        %v1577 = vpack.c.b16 %v1085, %v1081
        %v1578 = vpack.c.b16 %v1090, %v1086
        %v1579 = vpack.c.b16 %v1091, %v1087
        %v1580 = vpack.c.b16 %v1092, %v1088
        %v1581 = vpack.c.b16 %v1093, %v1089
        %v1582 = vpack.c.b16 %v1098, %v1094
        %v1583 = vpack.c.b16 %v1099, %v1095
        %v1584 = vpack.c.b16 %v1100, %v1096
        %v1585 = vpack.c.b16 %v1101, %v1097
        %v1586 = vpack.c.b16 %v1106, %v1102
        %v1587 = vpack.c.b16 %v1107, %v1103
        %v1588 = vpack.c.b16 %v1108, %v1104
        %v1589 = vpack.c.b16 %v1109, %v1105
        %v1590 = vpack.c.b16 %v1114, %v1110
        %v1591 = vpack.c.b16 %v1115, %v1111
        %v1592 = vpack.c.b16 %v1116, %v1112
        %v1593 = vpack.c.b16 %v1117, %v1113
        %v1594 = vpack.c.b16 %v1122, %v1118
        %v1595 = vpack.c.b16 %v1123, %v1119
        %v1596 = vpack.c.b16 %v1124, %v1120
        %v1597 = vpack.c.b16 %v1125, %v1121
        %v1598 = vpack.c.b16 %v1130, %v1126
        %v1599 = vpack.c.b16 %v1131, %v1127
        %v1600 = vpack.c.b16 %v1132, %v1128
        %v1601 = vpack.c.b16 %v1133, %v1129
        %v1602 = vpack.c.b16 %v1138, %v1134
        %v1603 = vpack.c.b16 %v1139, %v1135
        %v1604 = vpack.c.b16 %v1140, %v1136
        %v1605 = vpack.c.b16 %v1141, %v1137
        %v1606 = vpack.c.b16 %v1146, %v1142
        %v1607 = vpack.c.b16 %v1147, %v1143
        %v1608 = vpack.c.b16 %v1148, %v1144
        %v1609 = vpack.c.b16 %v1149, %v1145
        %v1610 = vpack.c.b16 %v1154, %v1150
        %v1611 = vpack.c.b16 %v1155, %v1151
        %v1612 = vpack.c.b16 %v1156, %v1152
        %v1613 = vpack.c.b16 %v1157, %v1153
        %v1614 = vpack.c.b16 %v1162, %v1158
        %v1615 = vpack.c.b16 %v1163, %v1159
        %v1616 = vpack.c.b16 %v1164, %v1160
        %v1617 = vpack.c.b16 %v1165, %v1161
        %v1618 = vpack.c.b16 %v1170, %v1166
        %v1619 = vpack.c.b16 %v1171, %v1167
        %v1620 = vpack.c.b16 %v1172, %v1168
        %v1621 = vpack.c.b16 %v1173, %v1169
        %v1622 = vpack.c.b16 %v1178, %v1174
        %v1623 = vpack.c.b16 %v1179, %v1175
        %v1624 = vpack.c.b16 %v1180, %v1176
        %v1625 = vpack.c.b16 %v1181, %v1177
        %v1626 = vpack.c.b16 %v1186, %v1182
        %v1627 = vpack.c.b16 %v1187, %v1183
        %v1628 = vpack.c.b16 %v1188, %v1184
        %v1629 = vpack.c.b16 %v1189, %v1185
        %v1630 = vpack.c.b16 %v1194, %v1190
        %v1631 = vpack.c.b16 %v1195, %v1191
        %v1632 = vpack.c.b16 %v1196, %v1192
        %v1633 = vpack.c.b16 %v1197, %v1193
        %v1634 = vpack.c.b16 %v1202, %v1198
        %v1635 = vpack.c.b16 %v1203, %v1199
        %v1636 = vpack.c.b16 %v1204, %v1200
        %v1637 = vpack.c.b16 %v1205, %v1201
        %v1638 = vpack.c.b16 %v1210, %v1206
        %v1639 = vpack.c.b16 %v1211, %v1207
        %v1640 = vpack.c.b16 %v1212, %v1208
        %v1641 = vpack.c.b16 %v1213, %v1209
        %v1642 = vpack.c.b16 %v1218, %v1214
        %v1643 = vpack.c.b16 %v1219, %v1215
        %v1644 = vpack.c.b16 %v1220, %v1216
        %v1645 = vpack.c.b16 %v1221, %v1217
        %v1646 = vpack.c.b16 %v1226, %v1222
        %v1647 = vpack.c.b16 %v1227, %v1223
        %v1648 = vpack.c.b16 %v1228, %v1224
        %v1649 = vpack.c.b16 %v1229, %v1225
        %v1650 = vpack.c.b16 %v1234, %v1230
        %v1651 = vpack.c.b16 %v1235, %v1231
        %v1652 = vpack.c.b16 %v1236, %v1232
        %v1653 = vpack.c.b16 %v1237, %v1233
        %v1654 = vpack.c.b16 %v1242, %v1238
        %v1655 = vpack.c.b16 %v1243, %v1239
        %v1656 = vpack.c.b16 %v1244, %v1240
        %v1657 = vpack.c.b16 %v1245, %v1241
        %v1658 = vpack.c.b16 %v1250, %v1246
        %v1659 = vpack.c.b16 %v1251, %v1247
        %v1660 = vpack.c.b16 %v1252, %v1248
        %v1661 = vpack.c.b16 %v1253, %v1249
        %v1662 = vpack.c.b16 %v1258, %v1254
        %v1663 = vpack.c.b16 %v1259, %v1255
        %v1664 = vpack.c.b16 %v1260, %v1256
        %v1665 = vpack.c.b16 %v1261, %v1257
        %v1666 = vpack.c.b16 %v1266, %v1262
        %v1667 = vpack.c.b16 %v1267, %v1263
        %v1668 = vpack.c.b16 %v1268, %v1264
        %v1669 = vpack.c.b16 %v1269, %v1265
        %v1670 = vpack.c.b16 %v1274, %v1270
        %v1671 = vpack.c.b16 %v1275, %v1271
        %v1672 = vpack.c.b16 %v1276, %v1272
        %v1673 = vpack.c.b16 %v1277, %v1273
        %v1674 = vpack.c.b16 %v1282, %v1278
        %v1675 = vpack.c.b16 %v1283, %v1279
        %v1676 = vpack.c.b16 %v1284, %v1280
        %v1677 = vpack.c.b16 %v1285, %v1281
        %v1678 = vpack.c.b16 %v1290, %v1286
        %v1679 = vpack.c.b16 %v1291, %v1287
        %v1680 = vpack.c.b16 %v1292, %v1288
        %v1681 = vpack.c.b16 %v1293, %v1289
        %v1682 = vpack.c.b16 %v1298, %v1294
        %v1683 = vpack.c.b16 %v1299, %v1295
        %v1684 = vpack.c.b16 %v1300, %v1296
        %v1685 = vpack.c.b16 %v1301, %v1297
        %v1686 = vpack.c.b16 %v1306, %v1302
        %v1687 = vpack.c.b16 %v1307, %v1303
        %v1688 = vpack.c.b16 %v1308, %v1304
        %v1689 = vpack.c.b16 %v1309, %v1305
        %v1690 = vpack.c.b16 %v1314, %v1310
        %v1691 = vpack.c.b16 %v1315, %v1311
        %v1692 = vpack.c.b16 %v1316, %v1312
        %v1693 = vpack.c.b16 %v1317, %v1313
        %v1694 = vpack.c.b16 %v1322, %v1318
        %v1695 = vpack.c.b16 %v1323, %v1319
        %v1696 = vpack.c.b16 %v1324, %v1320
        %v1697 = vpack.c.b16 %v1325, %v1321
        %v1698 = vpack.c.b16 %v1330, %v1326
        %v1699 = vpack.c.b16 %v1331, %v1327
        %v1700 = vpack.c.b16 %v1332, %v1328
        %v1701 = vpack.c.b16 %v1333, %v1329
        %v1702 = vpack.c.b16 %v1338, %v1334
        %v1703 = vpack.c.b16 %v1339, %v1335
        %v1704 = vpack.c.b16 %v1340, %v1336
        %v1705 = vpack.c.b16 %v1341, %v1337
        %v1706 = vpack.c.b16 %v1346, %v1342
        %v1707 = vpack.c.b16 %v1347, %v1343
        %v1708 = vpack.c.b16 %v1348, %v1344
        %v1709 = vpack.c.b16 %v1349, %v1345
        %v1710 = vpack.c.b16 %v1354, %v1350
        %v1711 = vpack.c.b16 %v1355, %v1351
        %v1712 = vpack.c.b16 %v1356, %v1352
        %v1713 = vpack.c.b16 %v1357, %v1353
        %v1714 = vpack.c.b16 %v1362, %v1358
        %v1715 = vpack.c.b16 %v1363, %v1359
        %v1716 = vpack.c.b16 %v1364, %v1360
        %v1717 = vpack.c.b16 %v1365, %v1361
        %v1718 = vpack.c.b16 %v1370, %v1366
        %v1719 = vpack.c.b16 %v1371, %v1367
        %v1720 = vpack.c.b16 %v1372, %v1368
        %v1721 = vpack.c.b16 %v1373, %v1369
        %v1722 = vpack.c.b16 %v1378, %v1374
        %v1723 = vpack.c.b16 %v1379, %v1375
        %v1724 = vpack.c.b16 %v1380, %v1376
        %v1725 = vpack.c.b16 %v1381, %v1377
        %v1726 = vpack.c.b16 %v1386, %v1382
        %v1727 = vpack.c.b16 %v1387, %v1383
        %v1728 = vpack.c.b16 %v1388, %v1384
        %v1729 = vpack.c.b16 %v1389, %v1385
        %v1730 = vpack.c.b16 %v1394, %v1390
        %v1731 = vpack.c.b16 %v1395, %v1391
        %v1732 = vpack.c.b16 %v1396, %v1392
        %v1733 = vpack.c.b16 %v1397, %v1393
        %v1734 = vpack.c.b16 %v1402, %v1398
        %v1735 = vpack.c.b16 %v1403, %v1399
        %v1736 = vpack.c.b16 %v1404, %v1400
        %v1737 = vpack.c.b16 %v1405, %v1401
        %v1738 = vpack.c.b16 %v1410, %v1406
        %v1739 = vpack.c.b16 %v1411, %v1407
        %v1740 = vpack.c.b16 %v1412, %v1408
        %v1741 = vpack.c.b16 %v1413, %v1409
        %v1742 = vpack.c.b16 %v1418, %v1414
        %v1743 = vpack.c.b16 %v1419, %v1415
        %v1744 = vpack.c.b16 %v1420, %v1416
        %v1745 = vpack.c.b16 %v1421, %v1417
        %v1746 = vpack.c.b16 %v1426, %v1422
        %v1747 = vpack.c.b16 %v1427, %v1423
        %v1748 = vpack.c.b16 %v1428, %v1424
        %v1749 = vpack.c.b16 %v1429, %v1425
        %v1750 = vpack.c.b16 %v1434, %v1430
        %v1751 = vpack.c.b16 %v1435, %v1431
        %v1752 = vpack.c.b16 %v1436, %v1432
        %v1753 = vpack.c.b16 %v1437, %v1433
        %v1754 = vpack.c.b16 %v1442, %v1438
        %v1755 = vpack.c.b16 %v1443, %v1439
        %v1756 = vpack.c.b16 %v1444, %v1440
        %v1757 = vpack.c.b16 %v1445, %v1441
        %v1758 = vpack.c.b16 %v1450, %v1446
        %v1759 = vpack.c.b16 %v1451, %v1447
        %v1760 = vpack.c.b16 %v1452, %v1448
        %v1761 = vpack.c.b16 %v1453, %v1449
        %v1762 = vpack.c.b16 %v1458, %v1454
        %v1763 = vpack.c.b16 %v1459, %v1455
        %v1764 = vpack.c.b16 %v1460, %v1456
        %v1765 = vpack.c.b16 %v1461, %v1457
        %v1766 = vpack.c.b16 %v1466, %v1462
        %v1767 = vpack.c.b16 %v1467, %v1463
        %v1768 = vpack.c.b16 %v1468, %v1464
        %v1769 = vpack.c.b16 %v1469, %v1465
        %v1770 = vpack.c.b16 %v1474, %v1470
        %v1771 = vpack.c.b16 %v1475, %v1471
        %v1772 = vpack.c.b16 %v1476, %v1472
        %v1773 = vpack.c.b16 %v1477, %v1473
        %v1774 = vpack.c.b16 %v1482, %v1478
        %v1775 = vpack.c.b16 %v1483, %v1479
        %v1776 = vpack.c.b16 %v1484, %v1480
        %v1777 = vpack.c.b16 %v1485, %v1481
        %v1778 = vpack.c.b16 %v1490, %v1486
        %v1779 = vpack.c.b16 %v1491, %v1487
        %v1780 = vpack.c.b16 %v1492, %v1488
        %v1781 = vpack.c.b16 %v1493, %v1489
        %v1782 = vpack.c.b16 %v1498, %v1494
        %v1783 = vpack.c.b16 %v1499, %v1495
        %v1784 = vpack.c.b16 %v1500, %v1496
        %v1785 = vpack.c.b16 %v1501, %v1497
        %v1786 = vpack.c.b16 %v1506, %v1502
        %v1787 = vpack.c.b16 %v1507, %v1503
        %v1788 = vpack.c.b16 %v1508, %v1504
        %v1789 = vpack.c.b16 %v1509, %v1505
        %v1790 = vpack.c.b16 %v1514, %v1510
        %v1791 = vpack.c.b16 %v1515, %v1511
        %v1792 = vpack.c.b16 %v1516, %v1512
        %v1793 = vpack.c.b16 %v1517, %v1513
        %v1794 = vpack.c.b16 %v1522, %v1518
        %v1795 = vpack.c.b16 %v1523, %v1519
        %v1796 = vpack.c.b16 %v1524, %v1520
        %v1797 = vpack.c.b16 %v1525, %v1521
        %v1798 = vpack.c.b16 %v1530, %v1526
        %v1799 = vpack.c.b16 %v1531, %v1527
        %v1800 = vpack.c.b16 %v1532, %v1528
        %v1801 = vpack.c.b16 %v1533, %v1529
        %v1802 = vpack.c.b16 %v1538, %v1534
        %v1803 = vpack.c.b16 %v1539, %v1535
        %v1804 = vpack.c.b16 %v1540, %v1536
        %v1805 = vpack.c.b16 %v1541, %v1537
        %v1806 = vpack.c.b16 %v1546, %v1542
        %v1807 = vpack.c.b16 %v1547, %v1543
        %v1808 = vpack.c.b16 %v1548, %v1544
        %v1809 = vpack.c.b16 %v1549, %v1545
        %v1810 = vpack.c.b16 %v1554, %v1550
        %v1811 = vpack.c.b16 %v1555, %v1551
        %v1812 = vpack.c.b16 %v1556, %v1552
        %v1813 = vpack.c.b16 %v1557, %v1553
        %2070 = vmatprep.subr.bf16.mxu0 %v1559
        %2071 = vmatpush1.bf16.xpose.msra.mxu0 %v1558
        %2072 = vmatprep.subr.bf16.mxu0 %v1563
        %2073 = vmatpush1.bf16.xpose.msra.mxu0 %v1562
        %2074 = vmatprep.subr.bf16.mxu0 %v1567
        %2075 = vmatpush1.bf16.xpose.msra.mxu0 %v1566
        %2076 = vmatprep.subr.bf16.mxu0 %v1571
        %2077 = vmatpush1.bf16.xpose.msra.mxu0 %v1570
        %2078 = vmatprep.subr.bf16.mxu0 %v1575
        %2079 = vmatpush1.bf16.xpose.msra.mxu0 %v1574
        %2080 = vmatprep.subr.bf16.mxu0 %v1579
        %2081 = vmatpush1.bf16.xpose.msra.mxu0 %v1578
        %2082 = vmatprep.subr.bf16.mxu0 %v1583
        %2083 = vmatpush1.bf16.xpose.msra.mxu0 %v1582
        %2084 = vmatprep.subr.bf16.mxu0 %v1587
        %2085 = vmatpush1.bf16.xpose.msra.mxu0 %v1586
        %2086 = vmatprep.subr.bf16.mxu0 %v1591
        %2087 = vmatpush1.bf16.xpose.msra.mxu0 %v1590
        %2088 = vmatprep.subr.bf16.mxu0 %v1595
        %2089 = vmatpush1.bf16.xpose.msra.mxu0 %v1594
        %2090 = vmatprep.subr.bf16.mxu0 %v1599
        %2091 = vmatpush1.bf16.xpose.msra.mxu0 %v1598
        %2092 = vmatprep.subr.bf16.mxu0 %v1603
        %2093 = vmatpush1.bf16.xpose.msra.mxu0 %v1602
        %2094 = vmatprep.subr.bf16.mxu0 %v1607
        %2095 = vmatpush1.bf16.xpose.msra.mxu0 %v1606
        %2096 = vmatprep.subr.bf16.mxu0 %v1611
        %2097 = vmatpush1.bf16.xpose.msra.mxu0 %v1610
        %2098 = vmatprep.subr.bf16.mxu0 %v1615
        %2099 = vmatpush1.bf16.xpose.msra.mxu0 %v1614
        %2100 = vmatprep.subr.bf16.mxu0 %v1619
        %2101 = vmatpush1.bf16.xpose.msra.mxu0 %v1618
        %2102 = vmatprep.mubr.bf16.mxu0 %v735
        %2103 = vmatmul.mubr.bf16.gmra.mrb[0].mxu0 %v734
        %v2104 = vpop.f32.mrb[0].mxu0
        %v2105 = vadd.f32 0.0, %v2104
        %v2106 = vpop.f32.mrb[0].mxu0
        %v2107 = vadd.f32 0.0, %v2106
        %v2108 = vpop.f32.mrb[0].mxu0
        %v2109 = vadd.f32 0.0, %v2108
        %v2110 = vpop.f32.mrb[0].mxu0
        %v2111 = vadd.f32 0.0, %v2110
        %2112 = vmatprep.mubr.bf16.mxu0 %v739
        %2113 = vmatmul.mubr.bf16.gmra.mrb[0].mxu0 %v738
        %v2114 = vpop.f32.mrb[0].mxu0
        %v2115 = vadd.f32 0.0, %v2114
        %v2116 = vpop.f32.mrb[0].mxu0
        %v2117 = vadd.f32 0.0, %v2116
        %v2118 = vpop.f32.mrb[0].mxu0
        %v2119 = vadd.f32 0.0, %v2118
        %v2120 = vpop.f32.mrb[0].mxu0
        %v2121 = vadd.f32 0.0, %v2120
        %2122 = vmatprep.mubr.bf16.mxu0 %v743
        %2123 = vmatmul.mubr.bf16.gmra.mrb[0].mxu0 %v742
        %v2124 = vpop.f32.mrb[0].mxu0
        %v2125 = vadd.f32 0.0, %v2124
        %v2126 = vpop.f32.mrb[0].mxu0
        %v2127 = vadd.f32 0.0, %v2126
        %v2128 = vpop.f32.mrb[0].mxu0
        %v2129 = vadd.f32 0.0, %v2128
        %v2130 = vpop.f32.mrb[0].mxu0
        %v2131 = vadd.f32 0.0, %v2130
        %2132 = vmatprep.mubr.bf16.mxu0 %v747
        %2133 = vmatmul.mubr.bf16.gmra.mrb[0].mxu0 %v746
        %v2134 = vpop.f32.mrb[0].mxu0
        %v2135 = vadd.f32 0.0, %v2134
        %v2136 = vpop.f32.mrb[0].mxu0
        %v2137 = vadd.f32 0.0, %v2136
        %v2138 = vpop.f32.mrb[0].mxu0
        %v2139 = vadd.f32 0.0, %v2138
        %v2140 = vpop.f32.mrb[0].mxu0
        %v2141 = vadd.f32 0.0, %v2140
        %2142 = vmatprep.mubr.bf16.mxu0 %v751
        %2143 = vmatmul.mubr.bf16.gmra.mrb[0].mxu0 %v750
        %v2144 = vpop.f32.mrb[0].mxu0
        %v2145 = vadd.f32 0.0, %v2144
        %v2146 = vpop.f32.mrb[0].mxu0
        %v2147 = vadd.f32 0.0, %v2146
        %v2148 = vpop.f32.mrb[0].mxu0
        %v2149 = vadd.f32 0.0, %v2148
        %v2150 = vpop.f32.mrb[0].mxu0
        %v2151 = vadd.f32 0.0, %v2150
        %2152 = vmatprep.mubr.bf16.mxu0 %v755
        %2153 = vmatmul.mubr.bf16.gmra.mrb[0].mxu0 %v754
        %v2154 = vpop.f32.mrb[0].mxu0
        %v2155 = vadd.f32 0.0, %v2154
        %v2156 = vpop.f32.mrb[0].mxu0
        %v2157 = vadd.f32 0.0, %v2156
        %v2158 = vpop.f32.mrb[0].mxu0
        %v2159 = vadd.f32 0.0, %v2158
        %v2160 = vpop.f32.mrb[0].mxu0
        %v2161 = vadd.f32 0.0, %v2160
        %2162 = vmatprep.mubr.bf16.mxu0 %v759
        %2163 = vmatmul.mubr.bf16.gmra.mrb[0].mxu0 %v758
        %v2164 = vpop.f32.mrb[0].mxu0
        %v2165 = vadd.f32 0.0, %v2164
        %v2166 = vpop.f32.mrb[0].mxu0
        %v2167 = vadd.f32 0.0, %v2166
        %v2168 = vpop.f32.mrb[0].mxu0
        %v2169 = vpop.f32.mrb[0].mxu0
        %2170 = vdwg.mxu0
        %2171 = vmatprep.subr.bf16.mxu0 %v1561
        %2172 = vmatpush1.bf16.xpose.msra.mxu0 %v1560
        %2173 = vmatprep.subr.bf16.mxu0 %v1565
        %2174 = vmatpush1.bf16.xpose.msra.mxu0 %v1564
        %2175 = vmatprep.subr.bf16.mxu0 %v1569
        %2176 = vmatpush1.bf16.xpose.msra.mxu0 %v1568
        %2177 = vmatprep.subr.bf16.mxu0 %v1573
        %2178 = vmatpush1.bf16.xpose.msra.mxu0 %v1572
        %2179 = vmatprep.subr.bf16.mxu0 %v1577
        %2180 = vmatpush1.bf16.xpose.msra.mxu0 %v1576
        %2181 = vmatprep.subr.bf16.mxu0 %v1581
        %2182 = vmatpush1.bf16.xpose.msra.mxu0 %v1580
        %2183 = vmatprep.subr.bf16.mxu0 %v1585
        %2184 = vmatpush1.bf16.xpose.msra.mxu0 %v1584
        %2185 = vmatprep.subr.bf16.mxu0 %v1589
        %2186 = vmatpush1.bf16.xpose.msra.mxu0 %v1588
        %2187 = vmatprep.subr.bf16.mxu0 %v1593
        %2188 = vmatpush1.bf16.xpose.msra.mxu0 %v1592
        %2189 = vmatprep.subr.bf16.mxu0 %v1597
        %2190 = vmatpush1.bf16.xpose.msra.mxu0 %v1596
        %2191 = vmatprep.subr.bf16.mxu0 %v1601
        %2192 = vmatpush1.bf16.xpose.msra.mxu0 %v1600
        %2193 = vmatprep.subr.bf16.mxu0 %v1605
        %2194 = vmatpush1.bf16.xpose.msra.mxu0 %v1604
        %2195 = vmatprep.subr.bf16.mxu0 %v1609
        %2196 = vmatpush1.bf16.xpose.msra.mxu0 %v1608
        %2197 = vmatprep.subr.bf16.mxu0 %v1613
        %2198 = vmatpush1.bf16.xpose.msra.mxu0 %v1612
        %2199 = vmatprep.subr.bf16.mxu0 %v1617
        %2200 = vmatpush1.bf16.xpose.msra.mxu0 %v1616
        %2201 = vmatprep.subr.bf16.mxu0 %v1621
        %2202 = vmatpush1.bf16.xpose.msra.mxu0 %v1620
        %2203 = vmatprep.mubr.bf16.mxu0 %v737
        %2204 = vmatmul.mubr.bf16.gmra.mrb[0].mxu0 %v736
        %v2205 = vpop.f32.mrb[0].mxu0
        %v2206 = vadd.f32 %v2105, %v2205
        %v2207 = vpop.f32.mrb[0].mxu0
        %v2208 = vadd.f32 %v2107, %v2207
        %v2209 = vpop.f32.mrb[0].mxu0
        %v2210 = vadd.f32 %v2109, %v2209
        %v2211 = vpop.f32.mrb[0].mxu0
        %v2212 = vadd.f32 %v2111, %v2211
        %2213 = vmatprep.mubr.bf16.mxu0 %v741
        %2214 = vmatmul.mubr.bf16.gmra.mrb[0].mxu0 %v740
        %v2215 = vpop.f32.mrb[0].mxu0
        %v2216 = vadd.f32 %v2115, %v2215
        %v2217 = vpop.f32.mrb[0].mxu0
        %v2218 = vadd.f32 %v2117, %v2217
        %v2219 = vpop.f32.mrb[0].mxu0
        %v2220 = vadd.f32 %v2119, %v2219
        %v2221 = vpop.f32.mrb[0].mxu0
        %v2222 = vadd.f32 %v2121, %v2221
        %2223 = vmatprep.mubr.bf16.mxu0 %v745
        %2224 = vmatmul.mubr.bf16.gmra.mrb[0].mxu0 %v744
        %v2225 = vpop.f32.mrb[0].mxu0
        %v2226 = vadd.f32 %v2125, %v2225
        %v2227 = vpop.f32.mrb[0].mxu0
        %v2228 = vadd.f32 %v2127, %v2227
        %v2229 = vpop.f32.mrb[0].mxu0
        %v2230 = vadd.f32 %v2129, %v2229
        %v2231 = vpop.f32.mrb[0].mxu0
        %v2232 = vadd.f32 %v2131, %v2231
        %2233 = vmatprep.mubr.bf16.mxu0 %v749
        %2234 = vmatmul.mubr.bf16.gmra.mrb[0].mxu0 %v748
        %v2235 = vpop.f32.mrb[0].mxu0
        %v2236 = vadd.f32 %v2135, %v2235
        %v2237 = vpop.f32.mrb[0].mxu0
        %v2238 = vadd.f32 %v2137, %v2237
        %v2239 = vpop.f32.mrb[0].mxu0
        %v2240 = vadd.f32 %v2139, %v2239
        %v2241 = vpop.f32.mrb[0].mxu0
        %v2242 = vadd.f32 %v2141, %v2241
        %2243 = vmatprep.mubr.bf16.mxu0 %v753
        %2244 = vmatmul.mubr.bf16.gmra.mrb[0].mxu0 %v752
        %v2245 = vpop.f32.mrb[0].mxu0
        %v2246 = vadd.f32 %v2145, %v2245
        %v2247 = vpop.f32.mrb[0].mxu0
        %v2248 = vadd.f32 %v2147, %v2247
        %v2249 = vpop.f32.mrb[0].mxu0
        %v2250 = vadd.f32 %v2149, %v2249
        %v2251 = vpop.f32.mrb[0].mxu0
        %v2252 = vadd.f32 %v2151, %v2251
        %2253 = vmatprep.mubr.bf16.mxu0 %v757
        %2254 = vmatmul.mubr.bf16.gmra.mrb[0].mxu0 %v756
        %v2255 = vpop.f32.mrb[0].mxu0
        %v2256 = vadd.f32 %v2155, %v2255
        %v2257 = vpop.f32.mrb[0].mxu0
        %v2258 = vadd.f32 %v2157, %v2257
        %v2259 = vpop.f32.mrb[0].mxu0
        %v2260 = vadd.f32 %v2159, %v2259
        %v2261 = vpop.f32.mrb[0].mxu0
        %v2262 = vadd.f32 %v2161, %v2261
        %2263 = vmatprep.mubr.bf16.mxu0 %v761
        %2264 = vmatmul.mubr.bf16.gmra.mrb[0].mxu0 %v760
        %v2265 = vpop.f32.mrb[0].mxu0
        %v2266 = vadd.f32 %v2165, %v2265
        %v2267 = vpop.f32.mrb[0].mxu0
        %v2268 = vadd.f32 %v2167, %v2267
        %v2269 = vpop.f32.mrb[0].mxu0
        %v2270 = vpop.f32.mrb[0].mxu0
        %2271 = vdwg.mxu0
        %2272 = vmatprep.subr.bf16.mxu0 %v1623
        %2273 = vmatpush1.bf16.xpose.msra.mxu0 %v1622
        %2274 = vmatprep.subr.bf16.mxu0 %v1627
        %2275 = vmatpush1.bf16.xpose.msra.mxu0 %v1626
        %2276 = vmatprep.subr.bf16.mxu0 %v1631
        %2277 = vmatpush1.bf16.xpose.msra.mxu0 %v1630
        %2278 = vmatprep.subr.bf16.mxu0 %v1635
        %2279 = vmatpush1.bf16.xpose.msra.mxu0 %v1634
        %2280 = vmatprep.subr.bf16.mxu0 %v1639
        %2281 = vmatpush1.bf16.xpose.msra.mxu0 %v1638
        %2282 = vmatprep.subr.bf16.mxu0 %v1643
        %2283 = vmatpush1.bf16.xpose.msra.mxu0 %v1642
        %2284 = vmatprep.subr.bf16.mxu0 %v1647
        %2285 = vmatpush1.bf16.xpose.msra.mxu0 %v1646
        %2286 = vmatprep.subr.bf16.mxu0 %v1651
        %2287 = vmatpush1.bf16.xpose.msra.mxu0 %v1650
        %2288 = vmatprep.subr.bf16.mxu0 %v1655
        %2289 = vmatpush1.bf16.xpose.msra.mxu0 %v1654
        %2290 = vmatprep.subr.bf16.mxu0 %v1659
        %2291 = vmatpush1.bf16.xpose.msra.mxu0 %v1658
        %2292 = vmatprep.subr.bf16.mxu0 %v1663
        %2293 = vmatpush1.bf16.xpose.msra.mxu0 %v1662
        %2294 = vmatprep.subr.bf16.mxu0 %v1667
        %2295 = vmatpush1.bf16.xpose.msra.mxu0 %v1666
        %2296 = vmatprep.subr.bf16.mxu0 %v1671
        %2297 = vmatpush1.bf16.xpose.msra.mxu0 %v1670
        %2298 = vmatprep.subr.bf16.mxu0 %v1675
        %2299 = vmatpush1.bf16.xpose.msra.mxu0 %v1674
        %2300 = vmatprep.subr.bf16.mxu0 %v1679
        %2301 = vmatpush1.bf16.xpose.msra.mxu0 %v1678
        %2302 = vmatprep.subr.bf16.mxu0 %v1683
        %2303 = vmatpush1.bf16.xpose.msra.mxu0 %v1682
        %2304 = vmatprep.mubr.bf16.mxu0 %v735
        %2305 = vmatmul.mubr.bf16.gmra.mrb[0].mxu0 %v734
        %v2306 = vpop.f32.mrb[0].mxu0
        %v2307 = vadd.f32 0.0, %v2306
        %v2308 = vpop.f32.mrb[0].mxu0
        %v2309 = vadd.f32 0.0, %v2308
        %v2310 = vpop.f32.mrb[0].mxu0
        %v2311 = vadd.f32 0.0, %v2310
        %v2312 = vpop.f32.mrb[0].mxu0
        %v2313 = vadd.f32 0.0, %v2312
        %2314 = vmatprep.mubr.bf16.mxu0 %v739
        %2315 = vmatmul.mubr.bf16.gmra.mrb[0].mxu0 %v738
        %v2316 = vpop.f32.mrb[0].mxu0
        %v2317 = vadd.f32 0.0, %v2316
        %v2318 = vpop.f32.mrb[0].mxu0
        %v2319 = vadd.f32 0.0, %v2318
        %v2320 = vpop.f32.mrb[0].mxu0
        %v2321 = vadd.f32 0.0, %v2320
        %v2322 = vpop.f32.mrb[0].mxu0
        %v2323 = vadd.f32 0.0, %v2322
        %2324 = vmatprep.mubr.bf16.mxu0 %v743
        %2325 = vmatmul.mubr.bf16.gmra.mrb[0].mxu0 %v742
        %v2326 = vpop.f32.mrb[0].mxu0
        %v2327 = vadd.f32 0.0, %v2326
        %v2328 = vpop.f32.mrb[0].mxu0
        %v2329 = vadd.f32 0.0, %v2328
        %v2330 = vpop.f32.mrb[0].mxu0
        %v2331 = vadd.f32 0.0, %v2330
        %v2332 = vpop.f32.mrb[0].mxu0
        %v2333 = vadd.f32 0.0, %v2332
        %2334 = vmatprep.mubr.bf16.mxu0 %v747
        %2335 = vmatmul.mubr.bf16.gmra.mrb[0].mxu0 %v746
        %v2336 = vpop.f32.mrb[0].mxu0
        %v2337 = vadd.f32 0.0, %v2336
        %v2338 = vpop.f32.mrb[0].mxu0
        %v2339 = vadd.f32 0.0, %v2338
        %v2340 = vpop.f32.mrb[0].mxu0
        %v2341 = vadd.f32 0.0, %v2340
        %v2342 = vpop.f32.mrb[0].mxu0
        %v2343 = vadd.f32 0.0, %v2342
        %2344 = vmatprep.mubr.bf16.mxu0 %v751
        %2345 = vmatmul.mubr.bf16.gmra.mrb[0].mxu0 %v750
        %v2346 = vpop.f32.mrb[0].mxu0
        %v2347 = vadd.f32 0.0, %v2346
        %v2348 = vpop.f32.mrb[0].mxu0
        %v2349 = vadd.f32 0.0, %v2348
        %v2350 = vpop.f32.mrb[0].mxu0
        %v2351 = vadd.f32 0.0, %v2350
        %v2352 = vpop.f32.mrb[0].mxu0
        %v2353 = vadd.f32 0.0, %v2352
        %2354 = vmatprep.mubr.bf16.mxu0 %v755
        %2355 = vmatmul.mubr.bf16.gmra.mrb[0].mxu0 %v754
        %v2356 = vpop.f32.mrb[0].mxu0
        %v2357 = vadd.f32 0.0, %v2356
        %v2358 = vpop.f32.mrb[0].mxu0
        %v2359 = vadd.f32 0.0, %v2358
        %v2360 = vpop.f32.mrb[0].mxu0
        %v2361 = vadd.f32 0.0, %v2360
        %v2362 = vpop.f32.mrb[0].mxu0
        %v2363 = vadd.f32 0.0, %v2362
        %2364 = vmatprep.mubr.bf16.mxu0 %v759
        %2365 = vmatmul.mubr.bf16.gmra.mrb[0].mxu0 %v758
        %v2366 = vpop.f32.mrb[0].mxu0
        %v2367 = vadd.f32 0.0, %v2366
        %v2368 = vpop.f32.mrb[0].mxu0
        %v2369 = vadd.f32 0.0, %v2368
        %v2370 = vpop.f32.mrb[0].mxu0
        %v2371 = vpop.f32.mrb[0].mxu0
        %2372 = vdwg.mxu0
        %2373 = vmatprep.subr.bf16.mxu0 %v1625
        %2374 = vmatpush1.bf16.xpose.msra.mxu0 %v1624
        %2375 = vmatprep.subr.bf16.mxu0 %v1629
        %2376 = vmatpush1.bf16.xpose.msra.mxu0 %v1628
        %2377 = vmatprep.subr.bf16.mxu0 %v1633
        %2378 = vmatpush1.bf16.xpose.msra.mxu0 %v1632
        %2379 = vmatprep.subr.bf16.mxu0 %v1637
        %2380 = vmatpush1.bf16.xpose.msra.mxu0 %v1636
        %2381 = vmatprep.subr.bf16.mxu0 %v1641
        %2382 = vmatpush1.bf16.xpose.msra.mxu0 %v1640
        %2383 = vmatprep.subr.bf16.mxu0 %v1645
        %2384 = vmatpush1.bf16.xpose.msra.mxu0 %v1644
        %2385 = vmatprep.subr.bf16.mxu0 %v1649
        %2386 = vmatpush1.bf16.xpose.msra.mxu0 %v1648
        %2387 = vmatprep.subr.bf16.mxu0 %v1653
        %2388 = vmatpush1.bf16.xpose.msra.mxu0 %v1652
        %2389 = vmatprep.subr.bf16.mxu0 %v1657
        %2390 = vmatpush1.bf16.xpose.msra.mxu0 %v1656
        %2391 = vmatprep.subr.bf16.mxu0 %v1661
        %2392 = vmatpush1.bf16.xpose.msra.mxu0 %v1660
        %2393 = vmatprep.subr.bf16.mxu0 %v1665
        %2394 = vmatpush1.bf16.xpose.msra.mxu0 %v1664
        %2395 = vmatprep.subr.bf16.mxu0 %v1669
        %2396 = vmatpush1.bf16.xpose.msra.mxu0 %v1668
        %2397 = vmatprep.subr.bf16.mxu0 %v1673
        %2398 = vmatpush1.bf16.xpose.msra.mxu0 %v1672
        %2399 = vmatprep.subr.bf16.mxu0 %v1677
        %2400 = vmatpush1.bf16.xpose.msra.mxu0 %v1676
        %2401 = vmatprep.subr.bf16.mxu0 %v1681
        %2402 = vmatpush1.bf16.xpose.msra.mxu0 %v1680
        %2403 = vmatprep.subr.bf16.mxu0 %v1685
        %2404 = vmatpush1.bf16.xpose.msra.mxu0 %v1684
        %2405 = vmatprep.mubr.bf16.mxu0 %v737
        %2406 = vmatmul.mubr.bf16.gmra.mrb[0].mxu0 %v736
        %v2407 = vpop.f32.mrb[0].mxu0
        %v2408 = vadd.f32 %v2307, %v2407
        %v2409 = vpop.f32.mrb[0].mxu0
        %v2410 = vadd.f32 %v2309, %v2409
        %v2411 = vpop.f32.mrb[0].mxu0
        %v2412 = vadd.f32 %v2311, %v2411
        %v2413 = vpop.f32.mrb[0].mxu0
        %v2414 = vadd.f32 %v2313, %v2413
        %2415 = vmatprep.mubr.bf16.mxu0 %v741
        %2416 = vmatmul.mubr.bf16.gmra.mrb[0].mxu0 %v740
        %v2417 = vpop.f32.mrb[0].mxu0
        %v2418 = vadd.f32 %v2317, %v2417
        %v2419 = vpop.f32.mrb[0].mxu0
        %v2420 = vadd.f32 %v2319, %v2419
        %v2421 = vpop.f32.mrb[0].mxu0
        %v2422 = vadd.f32 %v2321, %v2421
        %v2423 = vpop.f32.mrb[0].mxu0
        %v2424 = vadd.f32 %v2323, %v2423
        %2425 = vmatprep.mubr.bf16.mxu0 %v745
        %2426 = vmatmul.mubr.bf16.gmra.mrb[0].mxu0 %v744
        %v2427 = vpop.f32.mrb[0].mxu0
        %v2428 = vadd.f32 %v2327, %v2427
        %v2429 = vpop.f32.mrb[0].mxu0
        %v2430 = vadd.f32 %v2329, %v2429
        %v2431 = vpop.f32.mrb[0].mxu0
        %v2432 = vadd.f32 %v2331, %v2431
        %v2433 = vpop.f32.mrb[0].mxu0
        %v2434 = vadd.f32 %v2333, %v2433
        %2435 = vmatprep.mubr.bf16.mxu0 %v749
        %2436 = vmatmul.mubr.bf16.gmra.mrb[0].mxu0 %v748
        %v2437 = vpop.f32.mrb[0].mxu0
        %v2438 = vadd.f32 %v2337, %v2437
        %v2439 = vpop.f32.mrb[0].mxu0
        %v2440 = vadd.f32 %v2339, %v2439
        %v2441 = vpop.f32.mrb[0].mxu0
        %v2442 = vadd.f32 %v2341, %v2441
        %v2443 = vpop.f32.mrb[0].mxu0
        %v2444 = vadd.f32 %v2343, %v2443
        %2445 = vmatprep.mubr.bf16.mxu0 %v753
        %2446 = vmatmul.mubr.bf16.gmra.mrb[0].mxu0 %v752
        %v2447 = vpop.f32.mrb[0].mxu0
        %v2448 = vadd.f32 %v2347, %v2447
        %v2449 = vpop.f32.mrb[0].mxu0
        %v2450 = vadd.f32 %v2349, %v2449
        %v2451 = vpop.f32.mrb[0].mxu0
        %v2452 = vadd.f32 %v2351, %v2451
        %v2453 = vpop.f32.mrb[0].mxu0
        %v2454 = vadd.f32 %v2353, %v2453
        %2455 = vmatprep.mubr.bf16.mxu0 %v757
        %2456 = vmatmul.mubr.bf16.gmra.mrb[0].mxu0 %v756
        %v2457 = vpop.f32.mrb[0].mxu0
        %v2458 = vadd.f32 %v2357, %v2457
        %v2459 = vpop.f32.mrb[0].mxu0
        %v2460 = vadd.f32 %v2359, %v2459
        %v2461 = vpop.f32.mrb[0].mxu0
        %v2462 = vadd.f32 %v2361, %v2461
        %v2463 = vpop.f32.mrb[0].mxu0
        %v2464 = vadd.f32 %v2363, %v2463
        %2465 = vmatprep.mubr.bf16.mxu0 %v761
        %2466 = vmatmul.mubr.bf16.gmra.mrb[0].mxu0 %v760
        %v2467 = vpop.f32.mrb[0].mxu0
        %v2468 = vadd.f32 %v2367, %v2467
        %v2469 = vpop.f32.mrb[0].mxu0
        %v2470 = vadd.f32 %v2369, %v2469
        %v2471 = vpop.f32.mrb[0].mxu0
        %v2472 = vpop.f32.mrb[0].mxu0
        %2473 = vdwg.mxu0
        %2474 = vmatprep.subr.bf16.mxu0 %v1687
        %2475 = vmatpush1.bf16.xpose.msra.mxu0 %v1686
        %2476 = vmatprep.subr.bf16.mxu0 %v1691
        %2477 = vmatpush1.bf16.xpose.msra.mxu0 %v1690
        %2478 = vmatprep.subr.bf16.mxu0 %v1695
        %2479 = vmatpush1.bf16.xpose.msra.mxu0 %v1694
        %2480 = vmatprep.subr.bf16.mxu0 %v1699
        %2481 = vmatpush1.bf16.xpose.msra.mxu0 %v1698
        %2482 = vmatprep.subr.bf16.mxu0 %v1703
        %2483 = vmatpush1.bf16.xpose.msra.mxu0 %v1702
        %2484 = vmatprep.subr.bf16.mxu0 %v1707
        %2485 = vmatpush1.bf16.xpose.msra.mxu0 %v1706
        %2486 = vmatprep.subr.bf16.mxu0 %v1711
        %2487 = vmatpush1.bf16.xpose.msra.mxu0 %v1710
        %2488 = vmatprep.subr.bf16.mxu0 %v1715
        %2489 = vmatpush1.bf16.xpose.msra.mxu0 %v1714
        %2490 = vmatprep.subr.bf16.mxu0 %v1719
        %2491 = vmatpush1.bf16.xpose.msra.mxu0 %v1718
        %2492 = vmatprep.subr.bf16.mxu0 %v1723
        %2493 = vmatpush1.bf16.xpose.msra.mxu0 %v1722
        %2494 = vmatprep.subr.bf16.mxu0 %v1727
        %2495 = vmatpush1.bf16.xpose.msra.mxu0 %v1726
        %2496 = vmatprep.subr.bf16.mxu0 %v1731
        %2497 = vmatpush1.bf16.xpose.msra.mxu0 %v1730
        %2498 = vmatprep.subr.bf16.mxu0 %v1735
        %2499 = vmatpush1.bf16.xpose.msra.mxu0 %v1734
        %2500 = vmatprep.subr.bf16.mxu0 %v1739
        %2501 = vmatpush1.bf16.xpose.msra.mxu0 %v1738
        %2502 = vmatprep.subr.bf16.mxu0 %v1743
        %2503 = vmatpush1.bf16.xpose.msra.mxu0 %v1742
        %2504 = vmatprep.subr.bf16.mxu0 %v1747
        %2505 = vmatpush1.bf16.xpose.msra.mxu0 %v1746
        %2506 = vmatprep.mubr.bf16.mxu0 %v735
        %2507 = vmatmul.mubr.bf16.gmra.mrb[0].mxu0 %v734
        %v2508 = vpop.f32.mrb[0].mxu0
        %v2509 = vadd.f32 0.0, %v2508
        %v2510 = vpop.f32.mrb[0].mxu0
        %v2511 = vadd.f32 0.0, %v2510
        %v2512 = vpop.f32.mrb[0].mxu0
        %v2513 = vadd.f32 0.0, %v2512
        %v2514 = vpop.f32.mrb[0].mxu0
        %v2515 = vadd.f32 0.0, %v2514
        %2516 = vmatprep.mubr.bf16.mxu0 %v739
        %2517 = vmatmul.mubr.bf16.gmra.mrb[0].mxu0 %v738
        %v2518 = vpop.f32.mrb[0].mxu0
        %v2519 = vadd.f32 0.0, %v2518
        %v2520 = vpop.f32.mrb[0].mxu0
        %v2521 = vadd.f32 0.0, %v2520
        %v2522 = vpop.f32.mrb[0].mxu0
        %v2523 = vadd.f32 0.0, %v2522
        %v2524 = vpop.f32.mrb[0].mxu0
        %v2525 = vadd.f32 0.0, %v2524
        %2526 = vmatprep.mubr.bf16.mxu0 %v743
        %2527 = vmatmul.mubr.bf16.gmra.mrb[0].mxu0 %v742
        %v2528 = vpop.f32.mrb[0].mxu0
        %v2529 = vadd.f32 0.0, %v2528
        %v2530 = vpop.f32.mrb[0].mxu0
        %v2531 = vadd.f32 0.0, %v2530
        %v2532 = vpop.f32.mrb[0].mxu0
        %v2533 = vadd.f32 0.0, %v2532
        %v2534 = vpop.f32.mrb[0].mxu0
        %v2535 = vadd.f32 0.0, %v2534
        %2536 = vmatprep.mubr.bf16.mxu0 %v747
        %2537 = vmatmul.mubr.bf16.gmra.mrb[0].mxu0 %v746
        %v2538 = vpop.f32.mrb[0].mxu0
        %v2539 = vadd.f32 0.0, %v2538
        %v2540 = vpop.f32.mrb[0].mxu0
        %v2541 = vadd.f32 0.0, %v2540
        %v2542 = vpop.f32.mrb[0].mxu0
        %v2543 = vadd.f32 0.0, %v2542
        %v2544 = vpop.f32.mrb[0].mxu0
        %v2545 = vadd.f32 0.0, %v2544
        %2546 = vmatprep.mubr.bf16.mxu0 %v751
        %2547 = vmatmul.mubr.bf16.gmra.mrb[0].mxu0 %v750
        %v2548 = vpop.f32.mrb[0].mxu0
        %v2549 = vadd.f32 0.0, %v2548
        %v2550 = vpop.f32.mrb[0].mxu0
        %v2551 = vadd.f32 0.0, %v2550
        %v2552 = vpop.f32.mrb[0].mxu0
        %v2553 = vadd.f32 0.0, %v2552
        %v2554 = vpop.f32.mrb[0].mxu0
        %v2555 = vadd.f32 0.0, %v2554
        %2556 = vmatprep.mubr.bf16.mxu0 %v755
        %2557 = vmatmul.mubr.bf16.gmra.mrb[0].mxu0 %v754
        %v2558 = vpop.f32.mrb[0].mxu0
        %v2559 = vadd.f32 0.0, %v2558
        %v2560 = vpop.f32.mrb[0].mxu0
        %v2561 = vadd.f32 0.0, %v2560
        %v2562 = vpop.f32.mrb[0].mxu0
        %v2563 = vadd.f32 0.0, %v2562
        %v2564 = vpop.f32.mrb[0].mxu0
        %v2565 = vadd.f32 0.0, %v2564
        %2566 = vmatprep.mubr.bf16.mxu0 %v759
        %2567 = vmatmul.mubr.bf16.gmra.mrb[0].mxu0 %v758
        %v2568 = vpop.f32.mrb[0].mxu0
        %v2569 = vadd.f32 0.0, %v2568
        %v2570 = vpop.f32.mrb[0].mxu0
        %v2571 = vadd.f32 0.0, %v2570
        %v2572 = vpop.f32.mrb[0].mxu0
        %v2573 = vpop.f32.mrb[0].mxu0
        %2574 = vdwg.mxu0
        %2575 = vmatprep.subr.bf16.mxu0 %v1689
        %2576 = vmatpush1.bf16.xpose.msra.mxu0 %v1688
        %2577 = vmatprep.subr.bf16.mxu0 %v1693
        %2578 = vmatpush1.bf16.xpose.msra.mxu0 %v1692
        %2579 = vmatprep.subr.bf16.mxu0 %v1697
        %2580 = vmatpush1.bf16.xpose.msra.mxu0 %v1696
        %2581 = vmatprep.subr.bf16.mxu0 %v1701
        %2582 = vmatpush1.bf16.xpose.msra.mxu0 %v1700
        %2583 = vmatprep.subr.bf16.mxu0 %v1705
        %2584 = vmatpush1.bf16.xpose.msra.mxu0 %v1704
        %2585 = vmatprep.subr.bf16.mxu0 %v1709
        %2586 = vmatpush1.bf16.xpose.msra.mxu0 %v1708
        %2587 = vmatprep.subr.bf16.mxu0 %v1713
        %2588 = vmatpush1.bf16.xpose.msra.mxu0 %v1712
        %2589 = vmatprep.subr.bf16.mxu0 %v1717
        %2590 = vmatpush1.bf16.xpose.msra.mxu0 %v1716
        %2591 = vmatprep.subr.bf16.mxu0 %v1721
        %2592 = vmatpush1.bf16.xpose.msra.mxu0 %v1720
        %2593 = vmatprep.subr.bf16.mxu0 %v1725
        %2594 = vmatpush1.bf16.xpose.msra.mxu0 %v1724
        %2595 = vmatprep.subr.bf16.mxu0 %v1729
        %2596 = vmatpush1.bf16.xpose.msra.mxu0 %v1728
        %2597 = vmatprep.subr.bf16.mxu0 %v1733
        %2598 = vmatpush1.bf16.xpose.msra.mxu0 %v1732
        %2599 = vmatprep.subr.bf16.mxu0 %v1737
        %2600 = vmatpush1.bf16.xpose.msra.mxu0 %v1736
        %2601 = vmatprep.subr.bf16.mxu0 %v1741
        %2602 = vmatpush1.bf16.xpose.msra.mxu0 %v1740
        %2603 = vmatprep.subr.bf16.mxu0 %v1745
        %2604 = vmatpush1.bf16.xpose.msra.mxu0 %v1744
        %2605 = vmatprep.subr.bf16.mxu0 %v1749
        %2606 = vmatpush1.bf16.xpose.msra.mxu0 %v1748
        %2607 = vmatprep.mubr.bf16.mxu0 %v737
        %2608 = vmatmul.mubr.bf16.gmra.mrb[0].mxu0 %v736
        %v2609 = vpop.f32.mrb[0].mxu0
        %v2610 = vadd.f32 %v2509, %v2609
        %v2611 = vpop.f32.mrb[0].mxu0
        %v2612 = vadd.f32 %v2511, %v2611
        %v2613 = vpop.f32.mrb[0].mxu0
        %v2614 = vadd.f32 %v2513, %v2613
        %v2615 = vpop.f32.mrb[0].mxu0
        %v2616 = vadd.f32 %v2515, %v2615
        %2617 = vmatprep.mubr.bf16.mxu0 %v741
        %2618 = vmatmul.mubr.bf16.gmra.mrb[0].mxu0 %v740
        %v2619 = vpop.f32.mrb[0].mxu0
        %v2620 = vadd.f32 %v2519, %v2619
        %v2621 = vpop.f32.mrb[0].mxu0
        %v2622 = vadd.f32 %v2521, %v2621
        %v2623 = vpop.f32.mrb[0].mxu0
        %v2624 = vadd.f32 %v2523, %v2623
        %v2625 = vpop.f32.mrb[0].mxu0
        %v2626 = vadd.f32 %v2525, %v2625
        %2627 = vmatprep.mubr.bf16.mxu0 %v745
        %2628 = vmatmul.mubr.bf16.gmra.mrb[0].mxu0 %v744
        %v2629 = vpop.f32.mrb[0].mxu0
        %v2630 = vadd.f32 %v2529, %v2629
        %v2631 = vpop.f32.mrb[0].mxu0
        %v2632 = vadd.f32 %v2531, %v2631
        %v2633 = vpop.f32.mrb[0].mxu0
        %v2634 = vadd.f32 %v2533, %v2633
        %v2635 = vpop.f32.mrb[0].mxu0
        %v2636 = vadd.f32 %v2535, %v2635
        %2637 = vmatprep.mubr.bf16.mxu0 %v749
        %2638 = vmatmul.mubr.bf16.gmra.mrb[0].mxu0 %v748
        %v2639 = vpop.f32.mrb[0].mxu0
        %v2640 = vadd.f32 %v2539, %v2639
        %v2641 = vpop.f32.mrb[0].mxu0
        %v2642 = vadd.f32 %v2541, %v2641
        %v2643 = vpop.f32.mrb[0].mxu0
        %v2644 = vadd.f32 %v2543, %v2643
        %v2645 = vpop.f32.mrb[0].mxu0
        %v2646 = vadd.f32 %v2545, %v2645
        %2647 = vmatprep.mubr.bf16.mxu0 %v753
        %2648 = vmatmul.mubr.bf16.gmra.mrb[0].mxu0 %v752
        %v2649 = vpop.f32.mrb[0].mxu0
        %v2650 = vadd.f32 %v2549, %v2649
        %v2651 = vpop.f32.mrb[0].mxu0
        %v2652 = vadd.f32 %v2551, %v2651
        %v2653 = vpop.f32.mrb[0].mxu0
        %v2654 = vadd.f32 %v2553, %v2653
        %v2655 = vpop.f32.mrb[0].mxu0
        %v2656 = vadd.f32 %v2555, %v2655
        %2657 = vmatprep.mubr.bf16.mxu0 %v757
        %2658 = vmatmul.mubr.bf16.gmra.mrb[0].mxu0 %v756
        %v2659 = vpop.f32.mrb[0].mxu0
        %v2660 = vadd.f32 %v2559, %v2659
        %v2661 = vpop.f32.mrb[0].mxu0
        %v2662 = vadd.f32 %v2561, %v2661
        %v2663 = vpop.f32.mrb[0].mxu0
        %v2664 = vadd.f32 %v2563, %v2663
        %v2665 = vpop.f32.mrb[0].mxu0
        %v2666 = vadd.f32 %v2565, %v2665
        %2667 = vmatprep.mubr.bf16.mxu0 %v761
        %2668 = vmatmul.mubr.bf16.gmra.mrb[0].mxu0 %v760
        %v2669 = vpop.f32.mrb[0].mxu0
        %v2670 = vadd.f32 %v2569, %v2669
        %v2671 = vpop.f32.mrb[0].mxu0
        %v2672 = vadd.f32 %v2571, %v2671
        %v2673 = vpop.f32.mrb[0].mxu0
        %v2674 = vpop.f32.mrb[0].mxu0
        %2675 = vdwg.mxu0
        %2676 = vmatprep.subr.bf16.mxu0 %v1751
        %2677 = vmatpush1.bf16.xpose.msra.mxu0 %v1750
        %2678 = vmatprep.subr.bf16.mxu0 %v1755
        %2679 = vmatpush1.bf16.xpose.msra.mxu0 %v1754
        %2680 = vmatprep.subr.bf16.mxu0 %v1759
        %2681 = vmatpush1.bf16.xpose.msra.mxu0 %v1758
        %2682 = vmatprep.subr.bf16.mxu0 %v1763
        %2683 = vmatpush1.bf16.xpose.msra.mxu0 %v1762
        %2684 = vmatprep.subr.bf16.mxu0 %v1767
        %2685 = vmatpush1.bf16.xpose.msra.mxu0 %v1766
        %2686 = vmatprep.subr.bf16.mxu0 %v1771
        %2687 = vmatpush1.bf16.xpose.msra.mxu0 %v1770
        %2688 = vmatprep.subr.bf16.mxu0 %v1775
        %2689 = vmatpush1.bf16.xpose.msra.mxu0 %v1774
        %2690 = vmatprep.subr.bf16.mxu0 %v1779
        %2691 = vmatpush1.bf16.xpose.msra.mxu0 %v1778
        %2692 = vmatprep.subr.bf16.mxu0 %v1783
        %2693 = vmatpush1.bf16.xpose.msra.mxu0 %v1782
        %2694 = vmatprep.subr.bf16.mxu0 %v1787
        %2695 = vmatpush1.bf16.xpose.msra.mxu0 %v1786
        %2696 = vmatprep.subr.bf16.mxu0 %v1791
        %2697 = vmatpush1.bf16.xpose.msra.mxu0 %v1790
        %2698 = vmatprep.subr.bf16.mxu0 %v1795
        %2699 = vmatpush1.bf16.xpose.msra.mxu0 %v1794
        %2700 = vmatprep.subr.bf16.mxu0 %v1799
        %2701 = vmatpush1.bf16.xpose.msra.mxu0 %v1798
        %2702 = vmatprep.subr.bf16.mxu0 %v1803
        %2703 = vmatpush1.bf16.xpose.msra.mxu0 %v1802
        %2704 = vmatprep.subr.bf16.mxu0 %v1807
        %2705 = vmatpush1.bf16.xpose.msra.mxu0 %v1806
        %2706 = vmatprep.subr.bf16.mxu0 %v1811
        %2707 = vmatpush1.bf16.xpose.msra.mxu0 %v1810
        %2708 = vmatprep.mubr.bf16.mxu0 %v735
        %2709 = vmatmul.mubr.bf16.gmra.mrb[0].mxu0 %v734
        %v2710 = vpop.f32.mrb[0].mxu0
        %v2711 = vadd.f32 0.0, %v2710
        %v2712 = vpop.f32.mrb[0].mxu0
        %v2713 = vadd.f32 0.0, %v2712
        %v2714 = vpop.f32.mrb[0].mxu0
        %v2715 = vadd.f32 0.0, %v2714
        %v2716 = vpop.f32.mrb[0].mxu0
        %v2717 = vadd.f32 0.0, %v2716
        %2718 = vmatprep.mubr.bf16.mxu0 %v739
        %2719 = vmatmul.mubr.bf16.gmra.mrb[0].mxu0 %v738
        %v2720 = vpop.f32.mrb[0].mxu0
        %v2721 = vadd.f32 0.0, %v2720
        %v2722 = vpop.f32.mrb[0].mxu0
        %v2723 = vadd.f32 0.0, %v2722
        %v2724 = vpop.f32.mrb[0].mxu0
        %v2725 = vadd.f32 0.0, %v2724
        %v2726 = vpop.f32.mrb[0].mxu0
        %v2727 = vadd.f32 0.0, %v2726
        %2728 = vmatprep.mubr.bf16.mxu0 %v743
        %2729 = vmatmul.mubr.bf16.gmra.mrb[0].mxu0 %v742
        %v2730 = vpop.f32.mrb[0].mxu0
        %v2731 = vadd.f32 0.0, %v2730
        %v2732 = vpop.f32.mrb[0].mxu0
        %v2733 = vadd.f32 0.0, %v2732
        %v2734 = vpop.f32.mrb[0].mxu0
        %v2735 = vadd.f32 0.0, %v2734
        %v2736 = vpop.f32.mrb[0].mxu0
        %v2737 = vadd.f32 0.0, %v2736
        %2738 = vmatprep.mubr.bf16.mxu0 %v747
        %2739 = vmatmul.mubr.bf16.gmra.mrb[0].mxu0 %v746
        %v2740 = vpop.f32.mrb[0].mxu0
        %v2741 = vadd.f32 0.0, %v2740
        %v2742 = vpop.f32.mrb[0].mxu0
        %v2743 = vadd.f32 0.0, %v2742
        %v2744 = vpop.f32.mrb[0].mxu0
        %v2745 = vadd.f32 0.0, %v2744
        %v2746 = vpop.f32.mrb[0].mxu0
        %v2747 = vadd.f32 0.0, %v2746
        %2748 = vmatprep.mubr.bf16.mxu0 %v751
        %2749 = vmatmul.mubr.bf16.gmra.mrb[0].mxu0 %v750
        %v2750 = vpop.f32.mrb[0].mxu0
        %v2751 = vadd.f32 0.0, %v2750
        %v2752 = vpop.f32.mrb[0].mxu0
        %v2753 = vadd.f32 0.0, %v2752
        %v2754 = vpop.f32.mrb[0].mxu0
        %v2755 = vadd.f32 0.0, %v2754
        %v2756 = vpop.f32.mrb[0].mxu0
        %v2757 = vadd.f32 0.0, %v2756
        %2758 = vmatprep.mubr.bf16.mxu0 %v755
        %2759 = vmatmul.mubr.bf16.gmra.mrb[0].mxu0 %v754
        %v2760 = vpop.f32.mrb[0].mxu0
        %v2761 = vadd.f32 0.0, %v2760
        %v2762 = vpop.f32.mrb[0].mxu0
        %v2763 = vadd.f32 0.0, %v2762
        %v2764 = vpop.f32.mrb[0].mxu0
        %v2765 = vadd.f32 0.0, %v2764
        %v2766 = vpop.f32.mrb[0].mxu0
        %v2767 = vadd.f32 0.0, %v2766
        %2768 = vmatprep.mubr.bf16.mxu0 %v759
        %2769 = vmatmul.mubr.bf16.gmra.mrb[0].mxu0 %v758
        %v2770 = vpop.f32.mrb[0].mxu0
        %v2771 = vadd.f32 0.0, %v2770
        %v2772 = vpop.f32.mrb[0].mxu0
        %v2773 = vadd.f32 0.0, %v2772
        %v2774 = vpop.f32.mrb[0].mxu0
        %v2775 = vpop.f32.mrb[0].mxu0
        %2776 = vdwg.mxu0
        %2777 = vmatprep.subr.bf16.mxu0 %v1753
        %2778 = vmatpush1.bf16.xpose.msra.mxu0 %v1752
        %2779 = vmatprep.subr.bf16.mxu0 %v1757
        %2780 = vmatpush1.bf16.xpose.msra.mxu0 %v1756
        %2781 = vmatprep.subr.bf16.mxu0 %v1761
        %2782 = vmatpush1.bf16.xpose.msra.mxu0 %v1760
        %2783 = vmatprep.subr.bf16.mxu0 %v1765
        %2784 = vmatpush1.bf16.xpose.msra.mxu0 %v1764
        %2785 = vmatprep.subr.bf16.mxu0 %v1769
        %2786 = vmatpush1.bf16.xpose.msra.mxu0 %v1768
        %2787 = vmatprep.subr.bf16.mxu0 %v1773
        %2788 = vmatpush1.bf16.xpose.msra.mxu0 %v1772
        %2789 = vmatprep.subr.bf16.mxu0 %v1777
        %2790 = vmatpush1.bf16.xpose.msra.mxu0 %v1776
        %2791 = vmatprep.subr.bf16.mxu0 %v1781
        %2792 = vmatpush1.bf16.xpose.msra.mxu0 %v1780
        %2793 = vmatprep.subr.bf16.mxu0 %v1785
        %2794 = vmatpush1.bf16.xpose.msra.mxu0 %v1784
        %2795 = vmatprep.subr.bf16.mxu0 %v1789
        %2796 = vmatpush1.bf16.xpose.msra.mxu0 %v1788
        %2797 = vmatprep.subr.bf16.mxu0 %v1793
        %2798 = vmatpush1.bf16.xpose.msra.mxu0 %v1792
        %2799 = vmatprep.subr.bf16.mxu0 %v1797
        %2800 = vmatpush1.bf16.xpose.msra.mxu0 %v1796
        %2801 = vmatprep.subr.bf16.mxu0 %v1801
        %2802 = vmatpush1.bf16.xpose.msra.mxu0 %v1800
        %2803 = vmatprep.subr.bf16.mxu0 %v1805
        %2804 = vmatpush1.bf16.xpose.msra.mxu0 %v1804
        %2805 = vmatprep.subr.bf16.mxu0 %v1809
        %2806 = vmatpush1.bf16.xpose.msra.mxu0 %v1808
        %2807 = vmatprep.subr.bf16.mxu0 %v1813
        %2808 = vmatpush1.bf16.xpose.msra.mxu0 %v1812
        %2809 = vmatprep.mubr.bf16.mxu0 %v737
        %2810 = vmatmul.mubr.bf16.gmra.mrb[0].mxu0 %v736
        %v2811 = vpop.f32.mrb[0].mxu0
        %v2812 = vadd.f32 %v2711, %v2811
        %v2813 = vpop.f32.mrb[0].mxu0
        %v2814 = vadd.f32 %v2713, %v2813
        %v2815 = vpop.f32.mrb[0].mxu0
        %v2816 = vadd.f32 %v2715, %v2815
        %v2817 = vpop.f32.mrb[0].mxu0
        %v2818 = vadd.f32 %v2717, %v2817
        %2819 = vmatprep.mubr.bf16.mxu0 %v741
        %2820 = vmatmul.mubr.bf16.gmra.mrb[0].mxu0 %v740
        %v2821 = vpop.f32.mrb[0].mxu0
        %v2822 = vadd.f32 %v2721, %v2821
        %v2823 = vpop.f32.mrb[0].mxu0
        %v2824 = vadd.f32 %v2723, %v2823
        %v2825 = vpop.f32.mrb[0].mxu0
        %v2826 = vadd.f32 %v2725, %v2825
        %v2827 = vpop.f32.mrb[0].mxu0
        %v2828 = vadd.f32 %v2727, %v2827
        %2829 = vmatprep.mubr.bf16.mxu0 %v745
        %2830 = vmatmul.mubr.bf16.gmra.mrb[0].mxu0 %v744
        %v2831 = vpop.f32.mrb[0].mxu0
        %v2832 = vadd.f32 %v2731, %v2831
        %v2833 = vpop.f32.mrb[0].mxu0
        %v2834 = vadd.f32 %v2733, %v2833
        %v2835 = vpop.f32.mrb[0].mxu0
        %v2836 = vadd.f32 %v2735, %v2835
        %v2837 = vpop.f32.mrb[0].mxu0
        %v2838 = vadd.f32 %v2737, %v2837
        %2839 = vmatprep.mubr.bf16.mxu0 %v749
        %2840 = vmatmul.mubr.bf16.gmra.mrb[0].mxu0 %v748
        %v2841 = vpop.f32.mrb[0].mxu0
        %v2842 = vadd.f32 %v2741, %v2841
        %v2843 = vpop.f32.mrb[0].mxu0
        %v2844 = vadd.f32 %v2743, %v2843
        %v2845 = vpop.f32.mrb[0].mxu0
        %v2846 = vadd.f32 %v2745, %v2845
        %v2847 = vpop.f32.mrb[0].mxu0
        %v2848 = vadd.f32 %v2747, %v2847
        %2849 = vmatprep.mubr.bf16.mxu0 %v753
        %2850 = vmatmul.mubr.bf16.gmra.mrb[0].mxu0 %v752
        %v2851 = vpop.f32.mrb[0].mxu0
        %v2852 = vadd.f32 %v2751, %v2851
        %v2853 = vpop.f32.mrb[0].mxu0
        %v2854 = vadd.f32 %v2753, %v2853
        %v2855 = vpop.f32.mrb[0].mxu0
        %v2856 = vadd.f32 %v2755, %v2855
        %v2857 = vpop.f32.mrb[0].mxu0
        %v2858 = vadd.f32 %v2757, %v2857
        %2859 = vmatprep.mubr.bf16.mxu0 %v757
        %2860 = vmatmul.mubr.bf16.gmra.mrb[0].mxu0 %v756
        %v2861 = vpop.f32.mrb[0].mxu0
        %v2862 = vadd.f32 %v2761, %v2861
        %v2863 = vpop.f32.mrb[0].mxu0
        %v2864 = vadd.f32 %v2763, %v2863
        %v2865 = vpop.f32.mrb[0].mxu0
        %v2866 = vadd.f32 %v2765, %v2865
        %v2867 = vpop.f32.mrb[0].mxu0
        %v2868 = vadd.f32 %v2767, %v2867
        %2869 = vmatprep.mubr.bf16.mxu0 %v761
        %2870 = vmatmul.mubr.bf16.gmra.mrb[0].mxu0 %v760
        %v2871 = vpop.f32.mrb[0].mxu0
        %v2872 = vadd.f32 %v2771, %v2871
        %v2873 = vpop.f32.mrb[0].mxu0
        %v2874 = vadd.f32 %v2773, %v2873
        %v2875 = vpop.f32.mrb[0].mxu0
        %v2876 = vpop.f32.mrb[0].mxu0
        %2877 = vdwg.mxu0
        %v2878 = vadd.f32 %v2206, %v2210
        %v2879 = vadd.f32 %v2878, %v2216
        %v2880 = vadd.f32 %v2879, %v2220
        %v2881 = vadd.f32 %v2880, %v2226
        %v2882 = vadd.f32 %v2881, %v2230
        %v2883 = vadd.f32 %v2882, %v2236
        %v2884 = vadd.f32 %v2883, %v2240
        %v2885 = vadd.f32 %v2884, %v2246
        %v2886 = vadd.f32 %v2885, %v2250
        %v2887 = vadd.f32 %v2886, %v2256
        %v2888 = vadd.f32 %v2887, %v2260
        %vm2889 = vcmask 1041408
        %v2890 = vsel %vm2889, %v2266, 0.0
        %v2891 = vadd.f32 %v2888, %v2890
        %v2892 = vrot.slane %v2891, 4
        %v2893 = vadd.f32 %v2891, %v2892
        %v2894 = vrot.slane %v2893, 2
        %v2895 = vadd.f32 %v2893, %v2894
        %v2896 = vrot.slane %v2895, 1
        %v2897 = vadd.f32 %v2895, %v2896
        %v2898 = vadd.f32 %v2208, %v2212
        %v2899 = vadd.f32 %v2898, %v2218
        %v2900 = vadd.f32 %v2899, %v2222
        %v2901 = vadd.f32 %v2900, %v2228
        %v2902 = vadd.f32 %v2901, %v2232
        %v2903 = vadd.f32 %v2902, %v2238
        %v2904 = vadd.f32 %v2903, %v2242
        %v2905 = vadd.f32 %v2904, %v2248
        %v2906 = vadd.f32 %v2905, %v2252
        %v2907 = vadd.f32 %v2906, %v2258
        %v2908 = vadd.f32 %v2907, %v2262
        %v2909 = vsel %vm2889, %v2268, 0.0
        %v2910 = vadd.f32 %v2908, %v2909
        %v2911 = vrot.slane %v2910, 4
        %v2912 = vadd.f32 %v2910, %v2911
        %v2913 = vrot.slane %v2912, 2
        %v2914 = vadd.f32 %v2912, %v2913
        %v2915 = vrot.slane %v2914, 1
        %v2916 = vadd.f32 %v2914, %v2915
        %v2917 = vadd.f32 %v2408, %v2412
        %v2918 = vadd.f32 %v2917, %v2418
        %v2919 = vadd.f32 %v2918, %v2422
        %v2920 = vadd.f32 %v2919, %v2428
        %v2921 = vadd.f32 %v2920, %v2432
        %v2922 = vadd.f32 %v2921, %v2438
        %v2923 = vadd.f32 %v2922, %v2442
        %v2924 = vadd.f32 %v2923, %v2448
        %v2925 = vadd.f32 %v2924, %v2452
        %v2926 = vadd.f32 %v2925, %v2458
        %v2927 = vadd.f32 %v2926, %v2462
        %v2928 = vsel %vm2889, %v2468, 0.0
        %v2929 = vadd.f32 %v2927, %v2928
        %v2930 = vrot.slane %v2929, 4
        %v2931 = vadd.f32 %v2929, %v2930
        %v2932 = vrot.slane %v2931, 2
        %v2933 = vadd.f32 %v2931, %v2932
        %v2934 = vrot.slane %v2933, 1
        %v2935 = vadd.f32 %v2933, %v2934
        %v2936 = vadd.f32 %v2410, %v2414
        %v2937 = vadd.f32 %v2936, %v2420
        %v2938 = vadd.f32 %v2937, %v2424
        %v2939 = vadd.f32 %v2938, %v2430
        %v2940 = vadd.f32 %v2939, %v2434
        %v2941 = vadd.f32 %v2940, %v2440
        %v2942 = vadd.f32 %v2941, %v2444
        %v2943 = vadd.f32 %v2942, %v2450
        %v2944 = vadd.f32 %v2943, %v2454
        %v2945 = vadd.f32 %v2944, %v2460
        %v2946 = vadd.f32 %v2945, %v2464
        %v2947 = vsel %vm2889, %v2470, 0.0
        %v2948 = vadd.f32 %v2946, %v2947
        %v2949 = vrot.slane %v2948, 4
        %v2950 = vadd.f32 %v2948, %v2949
        %v2951 = vrot.slane %v2950, 2
        %v2952 = vadd.f32 %v2950, %v2951
        %v2953 = vrot.slane %v2952, 1
        %v2954 = vadd.f32 %v2952, %v2953
        %v2955 = vadd.f32 %v2610, %v2614
        %v2956 = vadd.f32 %v2955, %v2620
        %v2957 = vadd.f32 %v2956, %v2624
        %v2958 = vadd.f32 %v2957, %v2630
        %v2959 = vadd.f32 %v2958, %v2634
        %v2960 = vadd.f32 %v2959, %v2640
        %v2961 = vadd.f32 %v2960, %v2644
        %v2962 = vadd.f32 %v2961, %v2650
        %v2963 = vadd.f32 %v2962, %v2654
        %v2964 = vadd.f32 %v2963, %v2660
        %v2965 = vadd.f32 %v2964, %v2664
        %v2966 = vsel %vm2889, %v2670, 0.0
        %v2967 = vadd.f32 %v2965, %v2966
        %v2968 = vrot.slane %v2967, 4
        %v2969 = vadd.f32 %v2967, %v2968
        %v2970 = vrot.slane %v2969, 2
        %v2971 = vadd.f32 %v2969, %v2970
        %v2972 = vrot.slane %v2971, 1
        %v2973 = vadd.f32 %v2971, %v2972
        %v2974 = vadd.f32 %v2612, %v2616
        %v2975 = vadd.f32 %v2974, %v2622
        %v2976 = vadd.f32 %v2975, %v2626
        %v2977 = vadd.f32 %v2976, %v2632
        %v2978 = vadd.f32 %v2977, %v2636
        %v2979 = vadd.f32 %v2978, %v2642
        %v2980 = vadd.f32 %v2979, %v2646
        %v2981 = vadd.f32 %v2980, %v2652
        %v2982 = vadd.f32 %v2981, %v2656
        %v2983 = vadd.f32 %v2982, %v2662
        %v2984 = vadd.f32 %v2983, %v2666
        %v2985 = vsel %vm2889, %v2672, 0.0
        %v2986 = vadd.f32 %v2984, %v2985
        %v2987 = vrot.slane %v2986, 4
        %v2988 = vadd.f32 %v2986, %v2987
        %v2989 = vrot.slane %v2988, 2
        %v2990 = vadd.f32 %v2988, %v2989
        %v2991 = vrot.slane %v2990, 1
        %v2992 = vadd.f32 %v2990, %v2991
        %v2993 = vadd.f32 %v2812, %v2816
        %v2994 = vadd.f32 %v2993, %v2822
        %v2995 = vadd.f32 %v2994, %v2826
        %v2996 = vadd.f32 %v2995, %v2832
        %v2997 = vadd.f32 %v2996, %v2836
        %v2998 = vadd.f32 %v2997, %v2842
        %v2999 = vadd.f32 %v2998, %v2846
        %v3000 = vadd.f32 %v2999, %v2852
        %v3001 = vadd.f32 %v3000, %v2856
        %v3002 = vadd.f32 %v3001, %v2862
        %v3003 = vadd.f32 %v3002, %v2866
        %v3004 = vsel %vm2889, %v2872, 0.0
        %v3005 = vadd.f32 %v3003, %v3004
        %v3006 = vrot.slane %v3005, 4
        %v3007 = vadd.f32 %v3005, %v3006
        %v3008 = vrot.slane %v3007, 2
        %v3009 = vadd.f32 %v3007, %v3008
        %v3010 = vrot.slane %v3009, 1
        %v3011 = vadd.f32 %v3009, %v3010
        %v3012 = vadd.f32 %v2814, %v2818
        %v3013 = vadd.f32 %v3012, %v2824
        %v3014 = vadd.f32 %v3013, %v2828
        %v3015 = vadd.f32 %v3014, %v2834
        %v3016 = vadd.f32 %v3015, %v2838
        %v3017 = vadd.f32 %v3016, %v2844
        %v3018 = vadd.f32 %v3017, %v2848
        %v3019 = vadd.f32 %v3018, %v2854
        %v3020 = vadd.f32 %v3019, %v2858
        %v3021 = vadd.f32 %v3020, %v2864
        %v3022 = vadd.f32 %v3021, %v2868
        %v3023 = vsel %vm2889, %v2874, 0.0
        %v3024 = vadd.f32 %v3022, %v3023
        %v3025 = vrot.slane %v3024, 4
        %v3026 = vadd.f32 %v3024, %v3025
        %v3027 = vrot.slane %v3026, 2
        %v3028 = vadd.f32 %v3026, %v3027
        %v3029 = vrot.slane %v3028, 1
        %v3030 = vadd.f32 %v3028, %v3029
        %v3031 = vmul.f32 %v2897, 0.010204081
        %v3032 = vmul.f32 %v2916, 0.010204081
        %v3033 = vmul.f32 %v2935, 0.010204081
        %v3034 = vmul.f32 %v2954, 0.010204081
        %v3035 = vmul.f32 %v2973, 0.010204081
        %v3036 = vmul.f32 %v2992, 0.010204081
        %v3037 = vmul.f32 %v3011, 0.010204081
        %v3038 = vmul.f32 %v3030, 0.010204081
        %v3039 = vmul.f32 %v2206, %v2206
        %v3040 = vmul.f32 %v2208, %v2208
        %v3041 = vmul.f32 %v2408, %v2408
        %v3042 = vmul.f32 %v2410, %v2410
        %v3043 = vmul.f32 %v2610, %v2610
        %v3044 = vmul.f32 %v2612, %v2612
        %v3045 = vmul.f32 %v2812, %v2812
        %v3046 = vmul.f32 %v2814, %v2814
        %v3047 = vmul.f32 %v2210, %v2210
        %v3048 = vmul.f32 %v2212, %v2212
        %v3049 = vmul.f32 %v2412, %v2412
        %v3050 = vmul.f32 %v2414, %v2414
        %v3051 = vmul.f32 %v2614, %v2614
        %v3052 = vmul.f32 %v2616, %v2616
        %v3053 = vmul.f32 %v2816, %v2816
        %v3054 = vmul.f32 %v2818, %v2818
        %v3055 = vmul.f32 %v2216, %v2216
        %v3056 = vmul.f32 %v2218, %v2218
        %v3057 = vmul.f32 %v2418, %v2418
        %v3058 = vmul.f32 %v2420, %v2420
        %v3059 = vmul.f32 %v2620, %v2620
        %v3060 = vmul.f32 %v2622, %v2622
        %v3061 = vmul.f32 %v2822, %v2822
        %v3062 = vmul.f32 %v2824, %v2824
        %v3063 = vmul.f32 %v2220, %v2220
        %v3064 = vmul.f32 %v2222, %v2222
        %v3065 = vmul.f32 %v2422, %v2422
        %v3066 = vmul.f32 %v2424, %v2424
        %v3067 = vmul.f32 %v2624, %v2624
        %v3068 = vmul.f32 %v2626, %v2626
        %v3069 = vmul.f32 %v2826, %v2826
        %v3070 = vmul.f32 %v2828, %v2828
        %v3071 = vmul.f32 %v2226, %v2226
        %v3072 = vmul.f32 %v2228, %v2228
        %v3073 = vmul.f32 %v2428, %v2428
        %v3074 = vmul.f32 %v2430, %v2430
        %v3075 = vmul.f32 %v2630, %v2630
        %v3076 = vmul.f32 %v2632, %v2632
        %v3077 = vmul.f32 %v2832, %v2832
        %v3078 = vmul.f32 %v2834, %v2834
        %v3079 = vmul.f32 %v2230, %v2230
        %v3080 = vmul.f32 %v2232, %v2232
        %v3081 = vmul.f32 %v2432, %v2432
        %v3082 = vmul.f32 %v2434, %v2434
        %v3083 = vmul.f32 %v2634, %v2634
        %v3084 = vmul.f32 %v2636, %v2636
        %v3085 = vmul.f32 %v2836, %v2836
        %v3086 = vmul.f32 %v2838, %v2838
        %v3087 = vmul.f32 %v2236, %v2236
        %v3088 = vmul.f32 %v2238, %v2238
        %v3089 = vmul.f32 %v2438, %v2438
        %v3090 = vmul.f32 %v2440, %v2440
        %v3091 = vmul.f32 %v2640, %v2640
        %v3092 = vmul.f32 %v2642, %v2642
        %v3093 = vmul.f32 %v2842, %v2842
        %v3094 = vmul.f32 %v2844, %v2844
        %v3095 = vmul.f32 %v2240, %v2240
        %v3096 = vmul.f32 %v2242, %v2242
        %v3097 = vmul.f32 %v2442, %v2442
        %v3098 = vmul.f32 %v2444, %v2444
        %v3099 = vmul.f32 %v2644, %v2644
        %v3100 = vmul.f32 %v2646, %v2646
        %v3101 = vmul.f32 %v2846, %v2846
        %v3102 = vmul.f32 %v2848, %v2848
        %v3103 = vmul.f32 %v2246, %v2246
        %v3104 = vmul.f32 %v2248, %v2248
        %v3105 = vmul.f32 %v2448, %v2448
        %v3106 = vmul.f32 %v2450, %v2450
        %v3107 = vmul.f32 %v2650, %v2650
        %v3108 = vmul.f32 %v2652, %v2652
        %v3109 = vmul.f32 %v2852, %v2852
        %v3110 = vmul.f32 %v2854, %v2854
        %v3111 = vmul.f32 %v2250, %v2250
        %v3112 = vmul.f32 %v2252, %v2252
        %v3113 = vmul.f32 %v2452, %v2452
        %v3114 = vmul.f32 %v2454, %v2454
        %v3115 = vmul.f32 %v2654, %v2654
        %v3116 = vmul.f32 %v2656, %v2656
        %v3117 = vmul.f32 %v2856, %v2856
        %v3118 = vmul.f32 %v2858, %v2858
        %v3119 = vmul.f32 %v2256, %v2256
        %v3120 = vmul.f32 %v2258, %v2258
        %v3121 = vmul.f32 %v2458, %v2458
        %v3122 = vmul.f32 %v2460, %v2460
        %v3123 = vmul.f32 %v2660, %v2660
        %v3124 = vmul.f32 %v2662, %v2662
        %v3125 = vmul.f32 %v2862, %v2862
        %v3126 = vmul.f32 %v2864, %v2864
        %v3127 = vmul.f32 %v2260, %v2260
        %v3128 = vmul.f32 %v2262, %v2262
        %v3129 = vmul.f32 %v2462, %v2462
        %v3130 = vmul.f32 %v2464, %v2464
        %v3131 = vmul.f32 %v2664, %v2664
        %v3132 = vmul.f32 %v2666, %v2666
        %v3133 = vmul.f32 %v2866, %v2866
        %v3134 = vmul.f32 %v2868, %v2868
        %v3135 = vmul.f32 %v2266, %v2266
        %v3136 = vmul.f32 %v2268, %v2268
        %v3137 = vmul.f32 %v2468, %v2468
        %v3138 = vmul.f32 %v2470, %v2470
        %v3139 = vmul.f32 %v2670, %v2670
        %v3140 = vmul.f32 %v2672, %v2672
        %v3141 = vmul.f32 %v2872, %v2872
        %v3142 = vmul.f32 %v2874, %v2874
        %v3143 = vadd.f32 %v3039, %v3047
        %v3144 = vadd.f32 %v3143, %v3055
        %v3145 = vadd.f32 %v3144, %v3063
        %v3146 = vadd.f32 %v3145, %v3071
        %v3147 = vadd.f32 %v3146, %v3079
        %v3148 = vadd.f32 %v3147, %v3087
        %v3149 = vadd.f32 %v3148, %v3095
        %v3150 = vadd.f32 %v3149, %v3103
        %v3151 = vadd.f32 %v3150, %v3111
        %v3152 = vadd.f32 %v3151, %v3119
        %v3153 = vadd.f32 %v3152, %v3127
        %v3154 = vsel %vm2889, %v3135, 0.0
        %v3155 = vadd.f32 %v3153, %v3154
        %v3156 = vrot.slane %v3155, 4
        %v3157 = vadd.f32 %v3155, %v3156
        %v3158 = vrot.slane %v3157, 2
        %v3159 = vadd.f32 %v3157, %v3158
        %v3160 = vrot.slane %v3159, 1
        %v3161 = vadd.f32 %v3159, %v3160
        %v3162 = vadd.f32 %v3040, %v3048
        %v3163 = vadd.f32 %v3162, %v3056
        %v3164 = vadd.f32 %v3163, %v3064
        %v3165 = vadd.f32 %v3164, %v3072
        %v3166 = vadd.f32 %v3165, %v3080
        %v3167 = vadd.f32 %v3166, %v3088
        %v3168 = vadd.f32 %v3167, %v3096
        %v3169 = vadd.f32 %v3168, %v3104
        %v3170 = vadd.f32 %v3169, %v3112
        %v3171 = vadd.f32 %v3170, %v3120
        %v3172 = vadd.f32 %v3171, %v3128
        %v3173 = vsel %vm2889, %v3136, 0.0
        %v3174 = vadd.f32 %v3172, %v3173
        %v3175 = vrot.slane %v3174, 4
        %v3176 = vadd.f32 %v3174, %v3175
        %v3177 = vrot.slane %v3176, 2
        %v3178 = vadd.f32 %v3176, %v3177
        %v3179 = vrot.slane %v3178, 1
        %v3180 = vadd.f32 %v3178, %v3179
        %v3181 = vadd.f32 %v3041, %v3049
        %v3182 = vadd.f32 %v3181, %v3057
        %v3183 = vadd.f32 %v3182, %v3065
        %v3184 = vadd.f32 %v3183, %v3073
        %v3185 = vadd.f32 %v3184, %v3081
        %v3186 = vadd.f32 %v3185, %v3089
        %v3187 = vadd.f32 %v3186, %v3097
        %v3188 = vadd.f32 %v3187, %v3105
        %v3189 = vadd.f32 %v3188, %v3113
        %v3190 = vadd.f32 %v3189, %v3121
        %v3191 = vadd.f32 %v3190, %v3129
        %v3192 = vsel %vm2889, %v3137, 0.0
        %v3193 = vadd.f32 %v3191, %v3192
        %v3194 = vrot.slane %v3193, 4
        %v3195 = vadd.f32 %v3193, %v3194
        %v3196 = vrot.slane %v3195, 2
        %v3197 = vadd.f32 %v3195, %v3196
        %v3198 = vrot.slane %v3197, 1
        %v3199 = vadd.f32 %v3197, %v3198
        %v3200 = vadd.f32 %v3042, %v3050
        %v3201 = vadd.f32 %v3200, %v3058
        %v3202 = vadd.f32 %v3201, %v3066
        %v3203 = vadd.f32 %v3202, %v3074
        %v3204 = vadd.f32 %v3203, %v3082
        %v3205 = vadd.f32 %v3204, %v3090
        %v3206 = vadd.f32 %v3205, %v3098
        %v3207 = vadd.f32 %v3206, %v3106
        %v3208 = vadd.f32 %v3207, %v3114
        %v3209 = vadd.f32 %v3208, %v3122
        %v3210 = vadd.f32 %v3209, %v3130
        %v3211 = vsel %vm2889, %v3138, 0.0
        %v3212 = vadd.f32 %v3210, %v3211
        %v3213 = vrot.slane %v3212, 4
        %v3214 = vadd.f32 %v3212, %v3213
        %v3215 = vrot.slane %v3214, 2
        %v3216 = vadd.f32 %v3214, %v3215
        %v3217 = vrot.slane %v3216, 1
        %v3218 = vadd.f32 %v3216, %v3217
        %v3219 = vadd.f32 %v3043, %v3051
        %v3220 = vadd.f32 %v3219, %v3059
        %v3221 = vadd.f32 %v3220, %v3067
        %v3222 = vadd.f32 %v3221, %v3075
        %v3223 = vadd.f32 %v3222, %v3083
        %v3224 = vadd.f32 %v3223, %v3091
        %v3225 = vadd.f32 %v3224, %v3099
        %v3226 = vadd.f32 %v3225, %v3107
        %v3227 = vadd.f32 %v3226, %v3115
        %v3228 = vadd.f32 %v3227, %v3123
        %v3229 = vadd.f32 %v3228, %v3131
        %v3230 = vsel %vm2889, %v3139, 0.0
        %v3231 = vadd.f32 %v3229, %v3230
        %v3232 = vrot.slane %v3231, 4
        %v3233 = vadd.f32 %v3231, %v3232
        %v3234 = vrot.slane %v3233, 2
        %v3235 = vadd.f32 %v3233, %v3234
        %v3236 = vrot.slane %v3235, 1
        %v3237 = vadd.f32 %v3235, %v3236
        %v3238 = vadd.f32 %v3044, %v3052
        %v3239 = vadd.f32 %v3238, %v3060
        %v3240 = vadd.f32 %v3239, %v3068
        %v3241 = vadd.f32 %v3240, %v3076
        %v3242 = vadd.f32 %v3241, %v3084
        %v3243 = vadd.f32 %v3242, %v3092
        %v3244 = vadd.f32 %v3243, %v3100
        %v3245 = vadd.f32 %v3244, %v3108
        %v3246 = vadd.f32 %v3245, %v3116
        %v3247 = vadd.f32 %v3246, %v3124
        %v3248 = vadd.f32 %v3247, %v3132
        %v3249 = vsel %vm2889, %v3140, 0.0
        %v3250 = vadd.f32 %v3248, %v3249
        %v3251 = vrot.slane %v3250, 4
        %v3252 = vadd.f32 %v3250, %v3251
        %v3253 = vrot.slane %v3252, 2
        %v3254 = vadd.f32 %v3252, %v3253
        %v3255 = vrot.slane %v3254, 1
        %v3256 = vadd.f32 %v3254, %v3255
        %v3257 = vadd.f32 %v3045, %v3053
        %v3258 = vadd.f32 %v3257, %v3061
        %v3259 = vadd.f32 %v3258, %v3069
        %v3260 = vadd.f32 %v3259, %v3077
        %v3261 = vadd.f32 %v3260, %v3085
        %v3262 = vadd.f32 %v3261, %v3093
        %v3263 = vadd.f32 %v3262, %v3101
        %v3264 = vadd.f32 %v3263, %v3109
        %v3265 = vadd.f32 %v3264, %v3117
        %v3266 = vadd.f32 %v3265, %v3125
        %v3267 = vadd.f32 %v3266, %v3133
        %v3268 = vsel %vm2889, %v3141, 0.0
        %v3269 = vadd.f32 %v3267, %v3268
        %v3270 = vrot.slane %v3269, 4
        %v3271 = vadd.f32 %v3269, %v3270
        %v3272 = vrot.slane %v3271, 2
        %v3273 = vadd.f32 %v3271, %v3272
        %v3274 = vrot.slane %v3273, 1
        %v3275 = vadd.f32 %v3273, %v3274
        %v3276 = vadd.f32 %v3046, %v3054
        %v3277 = vadd.f32 %v3276, %v3062
        %v3278 = vadd.f32 %v3277, %v3070
        %v3279 = vadd.f32 %v3278, %v3078
        %v3280 = vadd.f32 %v3279, %v3086
        %v3281 = vadd.f32 %v3280, %v3094
        %v3282 = vadd.f32 %v3281, %v3102
        %v3283 = vadd.f32 %v3282, %v3110
        %v3284 = vadd.f32 %v3283, %v3118
        %v3285 = vadd.f32 %v3284, %v3126
        %v3286 = vadd.f32 %v3285, %v3134
        %v3287 = vsel %vm2889, %v3142, 0.0
        %v3288 = vadd.f32 %v3286, %v3287
        %v3289 = vrot.slane %v3288, 4
        %v3290 = vadd.f32 %v3288, %v3289
        %v3291 = vrot.slane %v3290, 2
        %v3292 = vadd.f32 %v3290, %v3291
        %v3293 = vrot.slane %v3292, 1
        %v3294 = vadd.f32 %v3292, %v3293
        %v3295 = vmul.f32 %v3161, 0.010204081
        %v3296 = vmul.f32 %v3180, 0.010204081
        %v3297 = vmul.f32 %v3199, 0.010204081
        %v3298 = vmul.f32 %v3218, 0.010204081
        %v3299 = vmul.f32 %v3237, 0.010204081
        %v3300 = vmul.f32 %v3256, 0.010204081
        %v3301 = vmul.f32 %v3275, 0.010204081
        %v3302 = vmul.f32 %v3294, 0.010204081
        %v3303 = vmul.f32 %v3031, %v3031
        %v3304 = vmul.f32 %v3032, %v3032
        %v3305 = vmul.f32 %v3033, %v3033
        %v3306 = vmul.f32 %v3034, %v3034
        %v3307 = vmul.f32 %v3035, %v3035
        %v3308 = vmul.f32 %v3036, %v3036
        %v3309 = vmul.f32 %v3037, %v3037
        %v3310 = vmul.f32 %v3038, %v3038
        %v3311 = vsub.f32 %v3295, %v3303
        %v3312 = vsub.f32 %v3296, %v3304
        %v3313 = vsub.f32 %v3297, %v3305
        %v3314 = vsub.f32 %v3298, %v3306
        %v3315 = vsub.f32 %v3299, %v3307
        %v3316 = vsub.f32 %v3300, %v3308
        %v3317 = vsub.f32 %v3301, %v3309
        %v3318 = vsub.f32 %v3302, %v3310
        %v3319 = vadd.f32 %v3311, 1e-05
        %v3320 = vadd.f32 %v3312, 1e-05
        %v3321 = vadd.f32 %v3313, 1e-05
        %v3322 = vadd.f32 %v3314, 1e-05
        %v3323 = vadd.f32 %v3315, 1e-05
        %v3324 = vadd.f32 %v3316, 1e-05
        %v3325 = vadd.f32 %v3317, 1e-05
        %v3326 = vadd.f32 %v3318, 1e-05
        %v3327 = vrsqrt.pop %v3319
        %v3328 = vrsqrt.pop %v3320
        %v3329 = vrsqrt.pop %v3321
        %v3330 = vrsqrt.pop %v3322
        %v3331 = vrsqrt.pop %v3323
        %v3332 = vrsqrt.pop %v3324
        %v3333 = vrsqrt.pop %v3325
        %v3334 = vrsqrt.pop %v3326
        %v3335 = vld [vmem:[%s310] sm:$0xff]
        %v3337 = vlaneseq
        %v3338 = vshrl.u32 %v3337, 7
        %v3339 = vsub.s32 0, %v3338
        %v3340 = vrot.slane %v3335, %v3339
        %v3341 = vlaneseq
        %v3342 = vshrl.u32 %v3341, 7
        %v3343 = vsub.s32 1, %v3342
        %v3344 = vrot.slane %v3335, %v3343
        %v3345 = vlaneseq
        %v3346 = vshrl.u32 %v3345, 7
        %v3347 = vsub.s32 2, %v3346
        %v3348 = vrot.slane %v3335, %v3347
        %v3349 = vlaneseq
        %v3350 = vshrl.u32 %v3349, 7
        %v3351 = vsub.s32 3, %v3350
        %v3352 = vrot.slane %v3335, %v3351
        %v3353 = vlaneseq
        %v3354 = vshrl.u32 %v3353, 7
        %v3355 = vsub.s32 4, %v3354
        %v3356 = vrot.slane %v3335, %v3355
        %v3357 = vlaneseq
        %v3358 = vshrl.u32 %v3357, 7
        %v3359 = vsub.s32 5, %v3358
        %v3360 = vrot.slane %v3335, %v3359
        %v3361 = vlaneseq
        %v3362 = vshrl.u32 %v3361, 7
        %v3363 = vsub.s32 6, %v3362
        %v3364 = vrot.slane %v3335, %v3363
        %v3365 = vlaneseq
        %v3366 = vshrl.u32 %v3365, 7
        %v3367 = vsub.s32 7, %v3366
        %v3368 = vrot.slane %v3335, %v3367
        %v3377 = vmul.f32 %v3327, %v3340
        %v3378 = vmul.f32 %v3328, %v3344
        %v3379 = vmul.f32 %v3329, %v3348
        %v3380 = vmul.f32 %v3330, %v3352
        %v3381 = vmul.f32 %v3331, %v3356
        %v3382 = vmul.f32 %v3332, %v3360
        %v3383 = vmul.f32 %v3333, %v3364
        %v3384 = vmul.f32 %v3334, %v3368
        %v3385 = vld [vmem:[%s319] sm:$0xff]
        %v3386 = vmul.f32 %v3031, %v3377
        %v3387 = vmul.f32 %v3032, %v3378
        %v3388 = vmul.f32 %v3033, %v3379
        %v3389 = vmul.f32 %v3034, %v3380
        %v3390 = vmul.f32 %v3035, %v3381
        %v3391 = vmul.f32 %v3036, %v3382
        %v3392 = vmul.f32 %v3037, %v3383
        %v3393 = vmul.f32 %v3038, %v3384
        %v3402 = vcombine.low %v3386, %v3387
        %v3403 = vcombine.low %v3388, %v3389
        %v3404 = vcombine.low %v3390, %v3391
        %v3405 = vcombine.low %v3392, %v3393
        %v3407 = vunpack.c.l.s4 1966171168
        %v3408 = vunpack.c.0.s8 %v3407
        %v3409 = vlaneseq
        %v3410 = vshrl.u32 %v3409, 7
        %v3411 = vsub.s32 %v3408, %v3410
        %v3412 = vrot.slane %v3402, %v3411
        %v3414 = vunpack.c.l.s4 1966171168
        %v3415 = vunpack.c.0.s8 %v3414
        %v3416 = vlaneseq
        %v3417 = vshrl.u32 %v3416, 7
        %v3418 = vsub.s32 %v3415, %v3417
        %v3419 = vrot.slane %v3403, %v3418
        %v3421 = vunpack.c.l.s4 1966171168
        %v3422 = vunpack.c.0.s8 %v3421
        %v3423 = vlaneseq
        %v3424 = vshrl.u32 %v3423, 7
        %v3425 = vsub.s32 %v3422, %v3424
        %v3426 = vrot.slane %v3404, %v3425
        %v3428 = vunpack.c.l.s4 1966171168
        %v3429 = vunpack.c.0.s8 %v3428
        %v3430 = vlaneseq
        %v3431 = vshrl.u32 %v3430, 7
        %v3432 = vsub.s32 %v3429, %v3431
        %v3433 = vrot.slane %v3405, %v3432
        %v3434 = vcombine.low %v3412, %v3419
        %v3435 = vcombine.low %v3426, %v3433
        %v3437 = vunpack.c.l.s4 1966171168
        %v3438 = vunpack.c.0.s8 %v3437
        %v3439 = vlaneseq
        %v3440 = vshrl.u32 %v3439, 7
        %v3441 = vsub.s32 %v3438, %v3440
        %v3442 = vrot.slane %v3434, %v3441
        %v3444 = vunpack.c.l.s4 1966171168
        %v3445 = vunpack.c.0.s8 %v3444
        %v3446 = vlaneseq
        %v3447 = vshrl.u32 %v3446, 7
        %v3448 = vsub.s32 %v3445, %v3447
        %v3449 = vrot.slane %v3435, %v3448
        %v3450 = vcombine.low %v3442, %v3449
        %v3452 = vsub.f32 %v3385, %v3450
        %v3453 = vlaneseq
        %v3454 = vshrl.u32 %v3453, 7
        %v3455 = vsub.s32 0, %v3454
        %v3456 = vrot.slane %v3377, %v3455
        %v3457 = vlaneseq
        %v3458 = vshrl.u32 %v3457, 7
        %v3459 = vsub.s32 0, %v3458
        %v3460 = vrot.slane %v3378, %v3459
        %v3461 = vlaneseq
        %v3462 = vshrl.u32 %v3461, 7
        %v3463 = vsub.s32 0, %v3462
        %v3464 = vrot.slane %v3379, %v3463
        %v3465 = vlaneseq
        %v3466 = vshrl.u32 %v3465, 7
        %v3467 = vsub.s32 0, %v3466
        %v3468 = vrot.slane %v3380, %v3467
        %v3469 = vlaneseq
        %v3470 = vshrl.u32 %v3469, 7
        %v3471 = vsub.s32 0, %v3470
        %v3472 = vrot.slane %v3381, %v3471
        %v3473 = vlaneseq
        %v3474 = vshrl.u32 %v3473, 7
        %v3475 = vsub.s32 0, %v3474
        %v3476 = vrot.slane %v3382, %v3475
        %v3477 = vlaneseq
        %v3478 = vshrl.u32 %v3477, 7
        %v3479 = vsub.s32 0, %v3478
        %v3480 = vrot.slane %v3383, %v3479
        %v3481 = vlaneseq
        %v3482 = vshrl.u32 %v3481, 7
        %v3483 = vsub.s32 0, %v3482
        %v3484 = vrot.slane %v3384, %v3483
        %v3485 = vmul.f32 %v2206, %v3456
        %v3486 = vmul.f32 %v2208, %v3460
        %v3487 = vmul.f32 %v2408, %v3464
        %v3488 = vmul.f32 %v2410, %v3468
        %v3489 = vmul.f32 %v2610, %v3472
        %v3490 = vmul.f32 %v2612, %v3476
        %v3491 = vmul.f32 %v2812, %v3480
        %v3492 = vmul.f32 %v2814, %v3484
        %v3493 = vmul.f32 %v2210, %v3456
        %v3494 = vmul.f32 %v2212, %v3460
        %v3495 = vmul.f32 %v2412, %v3464
        %v3496 = vmul.f32 %v2414, %v3468
        %v3497 = vmul.f32 %v2614, %v3472
        %v3498 = vmul.f32 %v2616, %v3476
        %v3499 = vmul.f32 %v2816, %v3480
        %v3500 = vmul.f32 %v2818, %v3484
        %v3501 = vmul.f32 %v2216, %v3456
        %v3502 = vmul.f32 %v2218, %v3460
        %v3503 = vmul.f32 %v2418, %v3464
        %v3504 = vmul.f32 %v2420, %v3468
        %v3505 = vmul.f32 %v2620, %v3472
        %v3506 = vmul.f32 %v2622, %v3476
        %v3507 = vmul.f32 %v2822, %v3480
        %v3508 = vmul.f32 %v2824, %v3484
        %v3509 = vmul.f32 %v2220, %v3456
        %v3510 = vmul.f32 %v2222, %v3460
        %v3511 = vmul.f32 %v2422, %v3464
        %v3512 = vmul.f32 %v2424, %v3468
        %v3513 = vmul.f32 %v2624, %v3472
        %v3514 = vmul.f32 %v2626, %v3476
        %v3515 = vmul.f32 %v2826, %v3480
        %v3516 = vmul.f32 %v2828, %v3484
        %v3517 = vmul.f32 %v2226, %v3456
        %v3518 = vmul.f32 %v2228, %v3460
        %v3519 = vmul.f32 %v2428, %v3464
        %v3520 = vmul.f32 %v2430, %v3468
        %v3521 = vmul.f32 %v2630, %v3472
        %v3522 = vmul.f32 %v2632, %v3476
        %v3523 = vmul.f32 %v2832, %v3480
        %v3524 = vmul.f32 %v2834, %v3484
        %v3525 = vmul.f32 %v2230, %v3456
        %v3526 = vmul.f32 %v2232, %v3460
        %v3527 = vmul.f32 %v2432, %v3464
        %v3528 = vmul.f32 %v2434, %v3468
        %v3529 = vmul.f32 %v2634, %v3472
        %v3530 = vmul.f32 %v2636, %v3476
        %v3531 = vmul.f32 %v2836, %v3480
        %v3532 = vmul.f32 %v2838, %v3484
        %v3533 = vmul.f32 %v2236, %v3456
        %v3534 = vmul.f32 %v2238, %v3460
        %v3535 = vmul.f32 %v2438, %v3464
        %v3536 = vmul.f32 %v2440, %v3468
        %v3537 = vmul.f32 %v2640, %v3472
        %v3538 = vmul.f32 %v2642, %v3476
        %v3539 = vmul.f32 %v2842, %v3480
        %v3540 = vmul.f32 %v2844, %v3484
        %v3541 = vmul.f32 %v2240, %v3456
        %v3542 = vmul.f32 %v2242, %v3460
        %v3543 = vmul.f32 %v2442, %v3464
        %v3544 = vmul.f32 %v2444, %v3468
        %v3545 = vmul.f32 %v2644, %v3472
        %v3546 = vmul.f32 %v2646, %v3476
        %v3547 = vmul.f32 %v2846, %v3480
        %v3548 = vmul.f32 %v2848, %v3484
        %v3549 = vmul.f32 %v2246, %v3456
        %v3550 = vmul.f32 %v2248, %v3460
        %v3551 = vmul.f32 %v2448, %v3464
        %v3552 = vmul.f32 %v2450, %v3468
        %v3553 = vmul.f32 %v2650, %v3472
        %v3554 = vmul.f32 %v2652, %v3476
        %v3555 = vmul.f32 %v2852, %v3480
        %v3556 = vmul.f32 %v2854, %v3484
        %v3557 = vmul.f32 %v2250, %v3456
        %v3558 = vmul.f32 %v2252, %v3460
        %v3559 = vmul.f32 %v2452, %v3464
        %v3560 = vmul.f32 %v2454, %v3468
        %v3561 = vmul.f32 %v2654, %v3472
        %v3562 = vmul.f32 %v2656, %v3476
        %v3563 = vmul.f32 %v2856, %v3480
        %v3564 = vmul.f32 %v2858, %v3484
        %v3565 = vmul.f32 %v2256, %v3456
        %v3566 = vmul.f32 %v2258, %v3460
        %v3567 = vmul.f32 %v2458, %v3464
        %v3568 = vmul.f32 %v2460, %v3468
        %v3569 = vmul.f32 %v2660, %v3472
        %v3570 = vmul.f32 %v2662, %v3476
        %v3571 = vmul.f32 %v2862, %v3480
        %v3572 = vmul.f32 %v2864, %v3484
        %v3573 = vmul.f32 %v2260, %v3456
        %v3574 = vmul.f32 %v2262, %v3460
        %v3575 = vmul.f32 %v2462, %v3464
        %v3576 = vmul.f32 %v2464, %v3468
        %v3577 = vmul.f32 %v2664, %v3472
        %v3578 = vmul.f32 %v2666, %v3476
        %v3579 = vmul.f32 %v2866, %v3480
        %v3580 = vmul.f32 %v2868, %v3484
        %v3581 = vmul.f32 %v2266, %v3456
        %v3582 = vmul.f32 %v2268, %v3460
        %v3583 = vmul.f32 %v2468, %v3464
        %v3584 = vmul.f32 %v2470, %v3468
        %v3585 = vmul.f32 %v2670, %v3472
        %v3586 = vmul.f32 %v2672, %v3476
        %v3587 = vmul.f32 %v2872, %v3480
        %v3588 = vmul.f32 %v2874, %v3484
        %v3590 = vlaneseq
        %v3591 = vshrl.u32 %v3590, 7
        %v3592 = vsub.s32 0, %v3591
        %v3593 = vrot.slane %v3452, %v3592
        %v3594 = vlaneseq
        %v3595 = vshrl.u32 %v3594, 7
        %v3596 = vsub.s32 1, %v3595
        %v3597 = vrot.slane %v3452, %v3596
        %v3598 = vlaneseq
        %v3599 = vshrl.u32 %v3598, 7
        %v3600 = vsub.s32 2, %v3599
        %v3601 = vrot.slane %v3452, %v3600
        %v3602 = vlaneseq
        %v3603 = vshrl.u32 %v3602, 7
        %v3604 = vsub.s32 3, %v3603
        %v3605 = vrot.slane %v3452, %v3604
        %v3606 = vlaneseq
        %v3607 = vshrl.u32 %v3606, 7
        %v3608 = vsub.s32 4, %v3607
        %v3609 = vrot.slane %v3452, %v3608
        %v3610 = vlaneseq
        %v3611 = vshrl.u32 %v3610, 7
        %v3612 = vsub.s32 5, %v3611
        %v3613 = vrot.slane %v3452, %v3612
        %v3614 = vlaneseq
        %v3615 = vshrl.u32 %v3614, 7
        %v3616 = vsub.s32 6, %v3615
        %v3617 = vrot.slane %v3452, %v3616
        %v3618 = vlaneseq
        %v3619 = vshrl.u32 %v3618, 7
        %v3620 = vsub.s32 7, %v3619
        %v3621 = vrot.slane %v3452, %v3620
        %v3630 = vadd.f32 %v3485, %v3593
        %v3631 = vadd.f32 %v3486, %v3597
        %v3632 = vadd.f32 %v3487, %v3601
        %v3633 = vadd.f32 %v3488, %v3605
        %v3634 = vadd.f32 %v3489, %v3609
        %v3635 = vadd.f32 %v3490, %v3613
        %v3636 = vadd.f32 %v3491, %v3617
        %v3637 = vadd.f32 %v3492, %v3621
        %v3638 = vadd.f32 %v3493, %v3593
        %v3639 = vadd.f32 %v3494, %v3597
        %v3640 = vadd.f32 %v3495, %v3601
        %v3641 = vadd.f32 %v3496, %v3605
        %v3642 = vadd.f32 %v3497, %v3609
        %v3643 = vadd.f32 %v3498, %v3613
        %v3644 = vadd.f32 %v3499, %v3617
        %v3645 = vadd.f32 %v3500, %v3621
        %v3646 = vadd.f32 %v3501, %v3593
        %v3647 = vadd.f32 %v3502, %v3597
        %v3648 = vadd.f32 %v3503, %v3601
        %v3649 = vadd.f32 %v3504, %v3605
        %v3650 = vadd.f32 %v3505, %v3609
        %v3651 = vadd.f32 %v3506, %v3613
        %v3652 = vadd.f32 %v3507, %v3617
        %v3653 = vadd.f32 %v3508, %v3621
        %v3654 = vadd.f32 %v3509, %v3593
        %v3655 = vadd.f32 %v3510, %v3597
        %v3656 = vadd.f32 %v3511, %v3601
        %v3657 = vadd.f32 %v3512, %v3605
        %v3658 = vadd.f32 %v3513, %v3609
        %v3659 = vadd.f32 %v3514, %v3613
        %v3660 = vadd.f32 %v3515, %v3617
        %v3661 = vadd.f32 %v3516, %v3621
        %v3662 = vadd.f32 %v3517, %v3593
        %v3663 = vadd.f32 %v3518, %v3597
        %v3664 = vadd.f32 %v3519, %v3601
        %v3665 = vadd.f32 %v3520, %v3605
        %v3666 = vadd.f32 %v3521, %v3609
        %v3667 = vadd.f32 %v3522, %v3613
        %v3668 = vadd.f32 %v3523, %v3617
        %v3669 = vadd.f32 %v3524, %v3621
        %v3670 = vadd.f32 %v3525, %v3593
        %v3671 = vadd.f32 %v3526, %v3597
        %v3672 = vadd.f32 %v3527, %v3601
        %v3673 = vadd.f32 %v3528, %v3605
        %v3674 = vadd.f32 %v3529, %v3609
        %v3675 = vadd.f32 %v3530, %v3613
        %v3676 = vadd.f32 %v3531, %v3617
        %v3677 = vadd.f32 %v3532, %v3621
        %v3678 = vadd.f32 %v3533, %v3593
        %v3679 = vadd.f32 %v3534, %v3597
        %v3680 = vadd.f32 %v3535, %v3601
        %v3681 = vadd.f32 %v3536, %v3605
        %v3682 = vadd.f32 %v3537, %v3609
        %v3683 = vadd.f32 %v3538, %v3613
        %v3684 = vadd.f32 %v3539, %v3617
        %v3685 = vadd.f32 %v3540, %v3621
        %v3686 = vadd.f32 %v3541, %v3593
        %v3687 = vadd.f32 %v3542, %v3597
        %v3688 = vadd.f32 %v3543, %v3601
        %v3689 = vadd.f32 %v3544, %v3605
        %v3690 = vadd.f32 %v3545, %v3609
        %v3691 = vadd.f32 %v3546, %v3613
        %v3692 = vadd.f32 %v3547, %v3617
        %v3693 = vadd.f32 %v3548, %v3621
        %v3694 = vadd.f32 %v3549, %v3593
        %v3695 = vadd.f32 %v3550, %v3597
        %v3696 = vadd.f32 %v3551, %v3601
        %v3697 = vadd.f32 %v3552, %v3605
        %v3698 = vadd.f32 %v3553, %v3609
        %v3699 = vadd.f32 %v3554, %v3613
        %v3700 = vadd.f32 %v3555, %v3617
        %v3701 = vadd.f32 %v3556, %v3621
        %v3702 = vadd.f32 %v3557, %v3593
        %v3703 = vadd.f32 %v3558, %v3597
        %v3704 = vadd.f32 %v3559, %v3601
        %v3705 = vadd.f32 %v3560, %v3605
        %v3706 = vadd.f32 %v3561, %v3609
        %v3707 = vadd.f32 %v3562, %v3613
        %v3708 = vadd.f32 %v3563, %v3617
        %v3709 = vadd.f32 %v3564, %v3621
        %v3710 = vadd.f32 %v3565, %v3593
        %v3711 = vadd.f32 %v3566, %v3597
        %v3712 = vadd.f32 %v3567, %v3601
        %v3713 = vadd.f32 %v3568, %v3605
        %v3714 = vadd.f32 %v3569, %v3609
        %v3715 = vadd.f32 %v3570, %v3613
        %v3716 = vadd.f32 %v3571, %v3617
        %v3717 = vadd.f32 %v3572, %v3621
        %v3718 = vadd.f32 %v3573, %v3593
        %v3719 = vadd.f32 %v3574, %v3597
        %v3720 = vadd.f32 %v3575, %v3601
        %v3721 = vadd.f32 %v3576, %v3605
        %v3722 = vadd.f32 %v3577, %v3609
        %v3723 = vadd.f32 %v3578, %v3613
        %v3724 = vadd.f32 %v3579, %v3617
        %v3725 = vadd.f32 %v3580, %v3621
        %v3726 = vadd.f32 %v3581, %v3593
        %v3727 = vadd.f32 %v3582, %v3597
        %v3728 = vadd.f32 %v3583, %v3601
        %v3729 = vadd.f32 %v3584, %v3605
        %v3730 = vadd.f32 %v3585, %v3609
        %v3731 = vadd.f32 %v3586, %v3613
        %v3732 = vadd.f32 %v3587, %v3617
        %v3733 = vadd.f32 %v3588, %v3621
        %v3734 = vmax.f32 %v3630, 0.0
        %v3735 = vmax.f32 %v3631, 0.0
        %v3736 = vmax.f32 %v3632, 0.0
        %v3737 = vmax.f32 %v3633, 0.0
        %v3738 = vmax.f32 %v3634, 0.0
        %v3739 = vmax.f32 %v3635, 0.0
        %v3740 = vmax.f32 %v3636, 0.0
        %v3741 = vmax.f32 %v3637, 0.0
        %v3742 = vmax.f32 %v3638, 0.0
        %v3743 = vmax.f32 %v3639, 0.0
        %v3744 = vmax.f32 %v3640, 0.0
        %v3745 = vmax.f32 %v3641, 0.0
        %v3746 = vmax.f32 %v3642, 0.0
        %v3747 = vmax.f32 %v3643, 0.0
        %v3748 = vmax.f32 %v3644, 0.0
        %v3749 = vmax.f32 %v3645, 0.0
        %v3750 = vmax.f32 %v3646, 0.0
        %v3751 = vmax.f32 %v3647, 0.0
        %v3752 = vmax.f32 %v3648, 0.0
        %v3753 = vmax.f32 %v3649, 0.0
        %v3754 = vmax.f32 %v3650, 0.0
        %v3755 = vmax.f32 %v3651, 0.0
        %v3756 = vmax.f32 %v3652, 0.0
        %v3757 = vmax.f32 %v3653, 0.0
        %v3758 = vmax.f32 %v3654, 0.0
        %v3759 = vmax.f32 %v3655, 0.0
        %v3760 = vmax.f32 %v3656, 0.0
        %v3761 = vmax.f32 %v3657, 0.0
        %v3762 = vmax.f32 %v3658, 0.0
        %v3763 = vmax.f32 %v3659, 0.0
        %v3764 = vmax.f32 %v3660, 0.0
        %v3765 = vmax.f32 %v3661, 0.0
        %v3766 = vmax.f32 %v3662, 0.0
        %v3767 = vmax.f32 %v3663, 0.0
        %v3768 = vmax.f32 %v3664, 0.0
        %v3769 = vmax.f32 %v3665, 0.0
        %v3770 = vmax.f32 %v3666, 0.0
        %v3771 = vmax.f32 %v3667, 0.0
        %v3772 = vmax.f32 %v3668, 0.0
        %v3773 = vmax.f32 %v3669, 0.0
        %v3774 = vmax.f32 %v3670, 0.0
        %v3775 = vmax.f32 %v3671, 0.0
        %v3776 = vmax.f32 %v3672, 0.0
        %v3777 = vmax.f32 %v3673, 0.0
        %v3778 = vmax.f32 %v3674, 0.0
        %v3779 = vmax.f32 %v3675, 0.0
        %v3780 = vmax.f32 %v3676, 0.0
        %v3781 = vmax.f32 %v3677, 0.0
        %v3782 = vmax.f32 %v3678, 0.0
        %v3783 = vmax.f32 %v3679, 0.0
        %v3784 = vmax.f32 %v3680, 0.0
        %v3785 = vmax.f32 %v3681, 0.0
        %v3786 = vmax.f32 %v3682, 0.0
        %v3787 = vmax.f32 %v3683, 0.0
        %v3788 = vmax.f32 %v3684, 0.0
        %v3789 = vmax.f32 %v3685, 0.0
        %v3790 = vmax.f32 %v3686, 0.0
        %v3791 = vmax.f32 %v3687, 0.0
        %v3792 = vmax.f32 %v3688, 0.0
        %v3793 = vmax.f32 %v3689, 0.0
        %v3794 = vmax.f32 %v3690, 0.0
        %v3795 = vmax.f32 %v3691, 0.0
        %v3796 = vmax.f32 %v3692, 0.0
        %v3797 = vmax.f32 %v3693, 0.0
        %v3798 = vmax.f32 %v3694, 0.0
        %v3799 = vmax.f32 %v3695, 0.0
        %v3800 = vmax.f32 %v3696, 0.0
        %v3801 = vmax.f32 %v3697, 0.0
        %v3802 = vmax.f32 %v3698, 0.0
        %v3803 = vmax.f32 %v3699, 0.0
        %v3804 = vmax.f32 %v3700, 0.0
        %v3805 = vmax.f32 %v3701, 0.0
        %v3806 = vmax.f32 %v3702, 0.0
        %v3807 = vmax.f32 %v3703, 0.0
        %v3808 = vmax.f32 %v3704, 0.0
        %v3809 = vmax.f32 %v3705, 0.0
        %v3810 = vmax.f32 %v3706, 0.0
        %v3811 = vmax.f32 %v3707, 0.0
        %v3812 = vmax.f32 %v3708, 0.0
        %v3813 = vmax.f32 %v3709, 0.0
        %v3814 = vmax.f32 %v3710, 0.0
        %v3815 = vmax.f32 %v3711, 0.0
        %v3816 = vmax.f32 %v3712, 0.0
        %v3817 = vmax.f32 %v3713, 0.0
        %v3818 = vmax.f32 %v3714, 0.0
        %v3819 = vmax.f32 %v3715, 0.0
        %v3820 = vmax.f32 %v3716, 0.0
        %v3821 = vmax.f32 %v3717, 0.0
        %v3822 = vmax.f32 %v3718, 0.0
        %v3823 = vmax.f32 %v3719, 0.0
        %v3824 = vmax.f32 %v3720, 0.0
        %v3825 = vmax.f32 %v3721, 0.0
        %v3826 = vmax.f32 %v3722, 0.0
        %v3827 = vmax.f32 %v3723, 0.0
        %v3828 = vmax.f32 %v3724, 0.0
        %v3829 = vmax.f32 %v3725, 0.0
        %v3830 = vmax.f32 %v3726, 0.0
        %v3831 = vmax.f32 %v3727, 0.0
        %v3832 = vmax.f32 %v3728, 0.0
        %v3833 = vmax.f32 %v3729, 0.0
        %v3834 = vmax.f32 %v3730, 0.0
        %v3835 = vmax.f32 %v3731, 0.0
        %v3836 = vmax.f32 %v3732, 0.0
        %v3837 = vmax.f32 %v3733, 0.0
        %v3838 = vlaneseq
        %v3839 = vand.u32 %v3838, 127
        %v3840 = vlaneseq
        %v3841 = vshrl.u32 %v3840, 7
        %v3842 = vmul.u32 %v3841, 49
        %vm3843 = vcmp.ge.s32.totalorder %v3839, %v3842
        %v3844 = vadd.s32 %v3841, 1
        %v3845 = vmul.u32 %v3844, 49
        %vm3846 = vcmp.lt.s32.totalorder %v3839, %v3845
        %vm3847 = vmand %vm3843, %vm3846
        %v3848 = vsel %vm3847, 0.020408163, 0.0
        %vm3849 = vcmask 801792
        %v3851 = vsel %vm3849, %v3848, 0
        %v3854 = vsel %vm2889, %v3830, 0
        %v3857 = vsel %vm2889, %v3831, 0
        %v3860 = vsel %vm2889, %v3832, 0
        %v3863 = vsel %vm2889, %v3833, 0
        %v3866 = vsel %vm2889, %v3834, 0
        %v3869 = vsel %vm2889, %v3835, 0
        %v3872 = vsel %vm2889, %v3836, 0
        %v3875 = vsel %vm2889, %v3837, 0
        %3877 = vmatprep.subr.mxu0 %v3735
        %3878 = vmatpush1.msra.mxu0 %v3734
        %3879 = vmatprep.subr.mxu0 %v3743
        %3880 = vmatpush1.msra.mxu0 %v3742
        %3881 = vmatprep.subr.mxu0 %v3751
        %3882 = vmatpush1.msra.mxu0 %v3750
        %3883 = vmatprep.subr.mxu0 %v3759
        %3884 = vmatpush1.msra.mxu0 %v3758
        %3885 = vmatprep.subr.mxu0 %v3767
        %3886 = vmatpush1.msra.mxu0 %v3766
        %3887 = vmatprep.subr.mxu0 %v3775
        %3888 = vmatpush1.msra.mxu0 %v3774
        %3889 = vmatprep.subr.mxu0 %v3783
        %3890 = vmatpush1.msra.mxu0 %v3782
        %3891 = vmatprep.subr.mxu0 %v3791
        %3892 = vmatpush1.msra.mxu0 %v3790
        %3893 = vmatprep.subr.mxu0 %v3799
        %3894 = vmatpush1.msra.mxu0 %v3798
        %3895 = vmatprep.subr.mxu0 %v3807
        %3896 = vmatpush1.msra.mxu0 %v3806
        %3897 = vmatprep.subr.mxu0 %v3815
        %3898 = vmatpush1.msra.mxu0 %v3814
        %3899 = vmatprep.subr.mxu0 %v3823
        %3900 = vmatpush1.msra.mxu0 %v3822
        %3901 = vmatprep.subr.mxu0 %v3857
        %3902 = vmatpush1.msra.mxu0 %v3854
        %3903 = vmatprep.subr.mxu0 0.0
        %3904 = vmatpush1.msra.mxu0 0.0
        %3905 = vmatprep.subr.mxu0 0.0
        %3906 = vmatpush1.msra.mxu0 0.0
        %3907 = vmatprep.subr.mxu0 0.0
        %3908 = vmatpush1.msra.mxu0 0.0
        %3909 = vmatprep.subr.mxu0 0.0
        %3910 = vmatpush1.msra.mxu0 0.0
        %3911 = vmatprep.subr.mxu0 0.0
        %3912 = vmatpush1.msra.mxu0 0.0
        %3913 = vmatprep.subr.mxu0 0.0
        %3914 = vmatpush1.msra.mxu0 0.0
        %3915 = vmatprep.subr.mxu0 0.0
        %3916 = vmatpush1.msra.mxu0 0.0
        %3917 = vmatprep.subr.mxu0 0.0
        %3918 = vmatpush1.msra.mxu0 0.0
        %3919 = vmatprep.subr.mxu0 0.0
        %3920 = vmatpush1.msra.mxu0 0.0
        %3921 = vmatprep.subr.mxu0 0.0
        %3922 = vmatpush1.msra.mxu0 0.0
        %3923 = vmatprep.subr.mxu0 0.0
        %3924 = vmatpush1.msra.mxu0 0.0
        %3925 = vmatprep.subr.mxu0 0.0
        %3926 = vmatpush1.msra.mxu0 0.0
        %3927 = vmatprep.subr.mxu0 0.0
        %3928 = vmatpush1.msra.mxu0 0.0
        %3929 = vmatprep.subr.mxu0 0.0
        %3930 = vmatpush1.msra.mxu0 0.0
        %3931 = vmatprep.subr.mxu0 0.0
        %3932 = vmatpush1.msra.mxu0 0.0
        %3933 = vmatprep.subr.mxu0 0.0
        %3934 = vmatpush1.msra.mxu0 0.0
        %3935 = vmatprep.subr.mxu0 0.0
        %3936 = vmatpush1.msra.mxu0 0.0
        %3937 = vmatprep.subr.mxu0 0.0
        %3938 = vmatpush1.msra.mxu0 0.0
        %3939 = vmatprep.subr.mxu0 0.0
        %3940 = vmatpush1.msra.mxu0 0.0
        %3941 = vmatprep.mubr.f32.mxu0 0.0
        %3942 = vmatmul.mubr.f32.gmra.mrb[0].mxu0 %v3851
        %v3943 = vpop.f32.mrb[0].mxu0
        %v3944 = vadd.f32 0.0, %v3943
        %v3945 = vpop.f32.mrb[0].mxu0
        %v3946 = vadd.f32 0.0, %v3945
        %3947 = vdwg.mxu0
        %3948 = vmatprep.subr.mxu0 %v3737
        %3949 = vmatpush1.msra.mxu0 %v3736
        %3950 = vmatprep.subr.mxu0 %v3745
        %3951 = vmatpush1.msra.mxu0 %v3744
        %3952 = vmatprep.subr.mxu0 %v3753
        %3953 = vmatpush1.msra.mxu0 %v3752
        %3954 = vmatprep.subr.mxu0 %v3761
        %3955 = vmatpush1.msra.mxu0 %v3760
        %3956 = vmatprep.subr.mxu0 %v3769
        %3957 = vmatpush1.msra.mxu0 %v3768
        %3958 = vmatprep.subr.mxu0 %v3777
        %3959 = vmatpush1.msra.mxu0 %v3776
        %3960 = vmatprep.subr.mxu0 %v3785
        %3961 = vmatpush1.msra.mxu0 %v3784
        %3962 = vmatprep.subr.mxu0 %v3793
        %3963 = vmatpush1.msra.mxu0 %v3792
        %3964 = vmatprep.subr.mxu0 %v3801
        %3965 = vmatpush1.msra.mxu0 %v3800
        %3966 = vmatprep.subr.mxu0 %v3809
        %3967 = vmatpush1.msra.mxu0 %v3808
        %3968 = vmatprep.subr.mxu0 %v3817
        %3969 = vmatpush1.msra.mxu0 %v3816
        %3970 = vmatprep.subr.mxu0 %v3825
        %3971 = vmatpush1.msra.mxu0 %v3824
        %3972 = vmatprep.subr.mxu0 %v3863
        %3973 = vmatpush1.msra.mxu0 %v3860
        %3974 = vmatprep.subr.mxu0 0.0
        %3975 = vmatpush1.msra.mxu0 0.0
        %3976 = vmatprep.subr.mxu0 0.0
        %3977 = vmatpush1.msra.mxu0 0.0
        %3978 = vmatprep.subr.mxu0 0.0
        %3979 = vmatpush1.msra.mxu0 0.0
        %3980 = vmatprep.subr.mxu0 0.0
        %3981 = vmatpush1.msra.mxu0 0.0
        %3982 = vmatprep.subr.mxu0 0.0
        %3983 = vmatpush1.msra.mxu0 0.0
        %3984 = vmatprep.subr.mxu0 0.0
        %3985 = vmatpush1.msra.mxu0 0.0
        %3986 = vmatprep.subr.mxu0 0.0
        %3987 = vmatpush1.msra.mxu0 0.0
        %3988 = vmatprep.subr.mxu0 0.0
        %3989 = vmatpush1.msra.mxu0 0.0
        %3990 = vmatprep.subr.mxu0 0.0
        %3991 = vmatpush1.msra.mxu0 0.0
        %3992 = vmatprep.subr.mxu0 0.0
        %3993 = vmatpush1.msra.mxu0 0.0
        %3994 = vmatprep.subr.mxu0 0.0
        %3995 = vmatpush1.msra.mxu0 0.0
        %3996 = vmatprep.subr.mxu0 0.0
        %3997 = vmatpush1.msra.mxu0 0.0
        %3998 = vmatprep.subr.mxu0 0.0
        %3999 = vmatpush1.msra.mxu0 0.0
        %4000 = vmatprep.subr.mxu0 0.0
        %4001 = vmatpush1.msra.mxu0 0.0
        %4002 = vmatprep.subr.mxu0 0.0
        %4003 = vmatpush1.msra.mxu0 0.0
        %4004 = vmatprep.subr.mxu0 0.0
        %4005 = vmatpush1.msra.mxu0 0.0
        %4006 = vmatprep.subr.mxu0 0.0
        %4007 = vmatpush1.msra.mxu0 0.0
        %4008 = vmatprep.subr.mxu0 0.0
        %4009 = vmatpush1.msra.mxu0 0.0
        %4010 = vmatprep.subr.mxu0 0.0
        %4011 = vmatpush1.msra.mxu0 0.0
        %4012 = vmatprep.mubr.f32.mxu0 0.0
        %4013 = vmatmul.mubr.f32.gmra.mrb[0].mxu0 %v3851
        %v4014 = vpop.f32.mrb[0].mxu0
        %v4015 = vadd.f32 0.0, %v4014
        %v4016 = vpop.f32.mrb[0].mxu0
        %v4017 = vadd.f32 0.0, %v4016
        %4018 = vdwg.mxu0
        %4019 = vmatprep.subr.mxu0 %v3739
        %4020 = vmatpush1.msra.mxu0 %v3738
        %4021 = vmatprep.subr.mxu0 %v3747
        %4022 = vmatpush1.msra.mxu0 %v3746
        %4023 = vmatprep.subr.mxu0 %v3755
        %4024 = vmatpush1.msra.mxu0 %v3754
        %4025 = vmatprep.subr.mxu0 %v3763
        %4026 = vmatpush1.msra.mxu0 %v3762
        %4027 = vmatprep.subr.mxu0 %v3771
        %4028 = vmatpush1.msra.mxu0 %v3770
        %4029 = vmatprep.subr.mxu0 %v3779
        %4030 = vmatpush1.msra.mxu0 %v3778
        %4031 = vmatprep.subr.mxu0 %v3787
        %4032 = vmatpush1.msra.mxu0 %v3786
        %4033 = vmatprep.subr.mxu0 %v3795
        %4034 = vmatpush1.msra.mxu0 %v3794
        %4035 = vmatprep.subr.mxu0 %v3803
        %4036 = vmatpush1.msra.mxu0 %v3802
        %4037 = vmatprep.subr.mxu0 %v3811
        %4038 = vmatpush1.msra.mxu0 %v3810
        %4039 = vmatprep.subr.mxu0 %v3819
        %4040 = vmatpush1.msra.mxu0 %v3818
        %4041 = vmatprep.subr.mxu0 %v3827
        %4042 = vmatpush1.msra.mxu0 %v3826
        %4043 = vmatprep.subr.mxu0 %v3869
        %4044 = vmatpush1.msra.mxu0 %v3866
        %4045 = vmatprep.subr.mxu0 0.0
        %4046 = vmatpush1.msra.mxu0 0.0
        %4047 = vmatprep.subr.mxu0 0.0
        %4048 = vmatpush1.msra.mxu0 0.0
        %4049 = vmatprep.subr.mxu0 0.0
        %4050 = vmatpush1.msra.mxu0 0.0
        %4051 = vmatprep.subr.mxu0 0.0
        %4052 = vmatpush1.msra.mxu0 0.0
        %4053 = vmatprep.subr.mxu0 0.0
        %4054 = vmatpush1.msra.mxu0 0.0
        %4055 = vmatprep.subr.mxu0 0.0
        %4056 = vmatpush1.msra.mxu0 0.0
        %4057 = vmatprep.subr.mxu0 0.0
        %4058 = vmatpush1.msra.mxu0 0.0
        %4059 = vmatprep.subr.mxu0 0.0
        %4060 = vmatpush1.msra.mxu0 0.0
        %4061 = vmatprep.subr.mxu0 0.0
        %4062 = vmatpush1.msra.mxu0 0.0
        %4063 = vmatprep.subr.mxu0 0.0
        %4064 = vmatpush1.msra.mxu0 0.0
        %4065 = vmatprep.subr.mxu0 0.0
        %4066 = vmatpush1.msra.mxu0 0.0
        %4067 = vmatprep.subr.mxu0 0.0
        %4068 = vmatpush1.msra.mxu0 0.0
        %4069 = vmatprep.subr.mxu0 0.0
        %4070 = vmatpush1.msra.mxu0 0.0
        %4071 = vmatprep.subr.mxu0 0.0
        %4072 = vmatpush1.msra.mxu0 0.0
        %4073 = vmatprep.subr.mxu0 0.0
        %4074 = vmatpush1.msra.mxu0 0.0
        %4075 = vmatprep.subr.mxu0 0.0
        %4076 = vmatpush1.msra.mxu0 0.0
        %4077 = vmatprep.subr.mxu0 0.0
        %4078 = vmatpush1.msra.mxu0 0.0
        %4079 = vmatprep.subr.mxu0 0.0
        %4080 = vmatpush1.msra.mxu0 0.0
        %4081 = vmatprep.subr.mxu0 0.0
        %4082 = vmatpush1.msra.mxu0 0.0
        %4083 = vmatprep.mubr.f32.mxu0 0.0
        %4084 = vmatmul.mubr.f32.gmra.mrb[0].mxu0 %v3851
        %v4085 = vpop.f32.mrb[0].mxu0
        %v4086 = vadd.f32 0.0, %v4085
        %v4087 = vpop.f32.mrb[0].mxu0
        %v4088 = vadd.f32 0.0, %v4087
        %4089 = vdwg.mxu0
        %4090 = vmatprep.subr.mxu0 %v3741
        %4091 = vmatpush1.msra.mxu0 %v3740
        %4092 = vmatprep.subr.mxu0 %v3749
        %4093 = vmatpush1.msra.mxu0 %v3748
        %4094 = vmatprep.subr.mxu0 %v3757
        %4095 = vmatpush1.msra.mxu0 %v3756
        %4096 = vmatprep.subr.mxu0 %v3765
        %4097 = vmatpush1.msra.mxu0 %v3764
        %4098 = vmatprep.subr.mxu0 %v3773
        %4099 = vmatpush1.msra.mxu0 %v3772
        %4100 = vmatprep.subr.mxu0 %v3781
        %4101 = vmatpush1.msra.mxu0 %v3780
        %4102 = vmatprep.subr.mxu0 %v3789
        %4103 = vmatpush1.msra.mxu0 %v3788
        %4104 = vmatprep.subr.mxu0 %v3797
        %4105 = vmatpush1.msra.mxu0 %v3796
        %4106 = vmatprep.subr.mxu0 %v3805
        %4107 = vmatpush1.msra.mxu0 %v3804
        %4108 = vmatprep.subr.mxu0 %v3813
        %4109 = vmatpush1.msra.mxu0 %v3812
        %4110 = vmatprep.subr.mxu0 %v3821
        %4111 = vmatpush1.msra.mxu0 %v3820
        %4112 = vmatprep.subr.mxu0 %v3829
        %4113 = vmatpush1.msra.mxu0 %v3828
        %4114 = vmatprep.subr.mxu0 %v3875
        %4115 = vmatpush1.msra.mxu0 %v3872
        %4116 = vmatprep.subr.mxu0 0.0
        %4117 = vmatpush1.msra.mxu0 0.0
        %4118 = vmatprep.subr.mxu0 0.0
        %4119 = vmatpush1.msra.mxu0 0.0
        %4120 = vmatprep.subr.mxu0 0.0
        %4121 = vmatpush1.msra.mxu0 0.0
        %4122 = vmatprep.subr.mxu0 0.0
        %4123 = vmatpush1.msra.mxu0 0.0
        %4124 = vmatprep.subr.mxu0 0.0
        %4125 = vmatpush1.msra.mxu0 0.0
        %4126 = vmatprep.subr.mxu0 0.0
        %4127 = vmatpush1.msra.mxu0 0.0
        %4128 = vmatprep.subr.mxu0 0.0
        %4129 = vmatpush1.msra.mxu0 0.0
        %4130 = vmatprep.subr.mxu0 0.0
        %4131 = vmatpush1.msra.mxu0 0.0
        %4132 = vmatprep.subr.mxu0 0.0
        %4133 = vmatpush1.msra.mxu0 0.0
        %4134 = vmatprep.subr.mxu0 0.0
        %4135 = vmatpush1.msra.mxu0 0.0
        %4136 = vmatprep.subr.mxu0 0.0
        %4137 = vmatpush1.msra.mxu0 0.0
        %4138 = vmatprep.subr.mxu0 0.0
        %4139 = vmatpush1.msra.mxu0 0.0
        %4140 = vmatprep.subr.mxu0 0.0
        %4141 = vmatpush1.msra.mxu0 0.0
        %4142 = vmatprep.subr.mxu0 0.0
        %4143 = vmatpush1.msra.mxu0 0.0
        %4144 = vmatprep.subr.mxu0 0.0
        %4145 = vmatpush1.msra.mxu0 0.0
        %4146 = vmatprep.subr.mxu0 0.0
        %4147 = vmatpush1.msra.mxu0 0.0
        %4148 = vmatprep.subr.mxu0 0.0
        %4149 = vmatpush1.msra.mxu0 0.0
        %4150 = vmatprep.subr.mxu0 0.0
        %4151 = vmatpush1.msra.mxu0 0.0
        %4152 = vmatprep.subr.mxu0 0.0
        %4153 = vmatpush1.msra.mxu0 0.0
        %4154 = vmatprep.mubr.f32.mxu0 0.0
        %4155 = vmatmul.mubr.f32.gmra.mrb[0].mxu0 %v3851
        %v4156 = vpop.f32.mrb[0].mxu0
        %v4157 = vadd.f32 0.0, %v4156
        %v4158 = vpop.f32.mrb[0].mxu0
        %v4159 = vadd.f32 0.0, %v4158
        %4160 = vdwg.mxu0
        %v4161 = vpack.c.bf16 %v3944, %v3944
        %v4162 = vpack.c.bf16 %v3946, %v3946
        %v4163 = vpack.c.bf16 %v4015, %v4015
        %v4164 = vpack.c.bf16 %v4017, %v4017
        %v4165 = vpack.c.bf16 %v4086, %v4086
        %v4166 = vpack.c.bf16 %v4088, %v4088
        %v4167 = vpack.c.bf16 %v4157, %v4157
        %v4168 = vpack.c.bf16 %v4159, %v4159
        %v4169 = vld [vmem:[%s328] sm:$0xff]
        %v4170 = vld [vmem:[%s328 + $0x8] sm:$0xff]
        %v4171 = vld [vmem:[%s328 + $0x10] sm:$0xff]
        %v4172 = vld [vmem:[%s328 + $0x18] sm:$0xff]
        %v4173 = vld [vmem:[%s328 + $0x20] sm:$0xff]
        %v4174 = vld [vmem:[%s328 + $0x28] sm:$0xff]
        %v4175 = vld [vmem:[%s328 + $0x30] sm:$0xff]
        %v4176 = vld [vmem:[%s328 + $0x38] sm:$0xff]
        %v4177 = vld [vmem:[%s328 + $0x40] sm:$0xff]
        %v4178 = vld [vmem:[%s328 + $0x48] sm:$0xff]
        %v4179 = vld [vmem:[%s328 + $0x50] sm:$0xff]
        %v4180 = vld [vmem:[%s328 + $0x58] sm:$0xff]
        %v4181 = vld [vmem:[%s328 + $0x60] sm:$0xff]
        %v4182 = vld [vmem:[%s328 + $0x68] sm:$0xff]
        %v4183 = vld [vmem:[%s328 + $0x70] sm:$0xff]
        %v4184 = vld [vmem:[%s328 + $0x78] sm:$0xff]
        %v4185 = vld [vmem:[%s328 + $0x80] sm:$0xff]
        %v4186 = vld [vmem:[%s328 + $0x88] sm:$0xff]
        %v4187 = vld [vmem:[%s328 + $0x90] sm:$0xff]
        %v4188 = vld [vmem:[%s328 + $0x98] sm:$0xff]
        %v4189 = vld [vmem:[%s328 + $0xa0] sm:$0xff]
        %v4190 = vld [vmem:[%s328 + $0xa8] sm:$0xff]
        %v4191 = vld [vmem:[%s328 + $0xb0] sm:$0xff]
        %v4192 = vld [vmem:[%s328 + $0xb8] sm:$0xff]
        %v4193 = vld [vmem:[%s328 + $0xc0] sm:$0xff]
        %v4194 = vld [vmem:[%s328 + $0xc8] sm:$0xff]
        %v4195 = vld [vmem:[%s328 + $0xd0] sm:$0xff]
        %v4196 = vld [vmem:[%s328 + $0xd8] sm:$0xff]
        %v4197 = vld [vmem:[%s328 + $0xe0] sm:$0xff]
        %v4198 = vld [vmem:[%s328 + $0xe8] sm:$0xff]
        %v4199 = vld [vmem:[%s328 + $0xf0] sm:$0xff]
        %v4200 = vld [vmem:[%s328 + $0xf8] sm:$0xff]
        %v4201 = vld [vmem:[%s328 + $0x100] sm:$0xff]
        %v4202 = vld [vmem:[%s328 + $0x108] sm:$0xff]
        %v4203 = vld [vmem:[%s328 + $0x110] sm:$0xff]
        %v4204 = vld [vmem:[%s328 + $0x118] sm:$0xff]
        %v4205 = vld [vmem:[%s328 + $0x120] sm:$0xff]
        %v4206 = vld [vmem:[%s328 + $0x128] sm:$0xff]
        %v4207 = vld [vmem:[%s328 + $0x130] sm:$0xff]
        %v4208 = vld [vmem:[%s328 + $0x138] sm:$0xff]
        %v4209 = vld [vmem:[%s328 + $0x140] sm:$0xff]
        %v4210 = vld [vmem:[%s328 + $0x148] sm:$0xff]
        %v4211 = vld [vmem:[%s328 + $0x150] sm:$0xff]
        %v4212 = vld [vmem:[%s328 + $0x158] sm:$0xff]
        %v4213 = vld [vmem:[%s328 + $0x160] sm:$0xff]
        %v4214 = vld [vmem:[%s328 + $0x168] sm:$0xff]
        %v4215 = vld [vmem:[%s328 + $0x170] sm:$0xff]
        %v4216 = vld [vmem:[%s328 + $0x178] sm:$0xff]
        %v4217 = vld [vmem:[%s328 + $0x180] sm:$0xff]
        %v4218 = vld [vmem:[%s328 + $0x188] sm:$0xff]
        %v4219 = vld [vmem:[%s328 + $0x190] sm:$0xff]
        %v4220 = vld [vmem:[%s328 + $0x198] sm:$0xff]
        %v4221 = vld [vmem:[%s328 + $0x1a0] sm:$0xff]
        %v4222 = vld [vmem:[%s328 + $0x1a8] sm:$0xff]
        %v4223 = vld [vmem:[%s328 + $0x1b0] sm:$0xff]
        %v4224 = vld [vmem:[%s328 + $0x1b8] sm:$0xff]
        %v4225 = vld [vmem:[%s328 + $0x1c0] sm:$0xff]
        %v4226 = vld [vmem:[%s328 + $0x1c8] sm:$0xff]
        %v4227 = vld [vmem:[%s328 + $0x1d0] sm:$0xff]
        %v4228 = vld [vmem:[%s328 + $0x1d8] sm:$0xff]
        %v4229 = vld [vmem:[%s328 + $0x1e0] sm:$0xff]
        %v4230 = vld [vmem:[%s328 + $0x1e8] sm:$0xff]
        %v4231 = vld [vmem:[%s328 + $0x1f0] sm:$0xff]
        %v4232 = vld [vmem:[%s328 + $0x1f8] sm:$0xff]
        %v4233 = vld [vmem:[%s328 + $0x200] sm:$0xff]
        %v4234 = vld [vmem:[%s328 + $0x208] sm:$0xff]
        %v4235 = vld [vmem:[%s328 + $0x210] sm:$0xff]
        %v4236 = vld [vmem:[%s328 + $0x218] sm:$0xff]
        %v4237 = vld [vmem:[%s328 + $0x220] sm:$0xff]
        %v4238 = vld [vmem:[%s328 + $0x228] sm:$0xff]
        %v4239 = vld [vmem:[%s328 + $0x230] sm:$0xff]
        %v4240 = vld [vmem:[%s328 + $0x238] sm:$0xff]
        %v4241 = vld [vmem:[%s328 + $0x240] sm:$0xff]
        %v4242 = vld [vmem:[%s328 + $0x248] sm:$0xff]
        %v4243 = vld [vmem:[%s328 + $0x250] sm:$0xff]
        %v4244 = vld [vmem:[%s328 + $0x258] sm:$0xff]
        %v4245 = vld [vmem:[%s328 + $0x260] sm:$0xff]
        %v4246 = vld [vmem:[%s328 + $0x268] sm:$0xff]
        %v4247 = vld [vmem:[%s328 + $0x270] sm:$0xff]
        %v4248 = vld [vmem:[%s328 + $0x278] sm:$0xff]
        %v4249 = vld [vmem:[%s328 + $0x280] sm:$0xff]
        %v4250 = vld [vmem:[%s328 + $0x288] sm:$0xff]
        %v4251 = vld [vmem:[%s328 + $0x290] sm:$0xff]
        %v4252 = vld [vmem:[%s328 + $0x298] sm:$0xff]
        %v4253 = vld [vmem:[%s328 + $0x2a0] sm:$0xff]
        %v4254 = vld [vmem:[%s328 + $0x2a8] sm:$0xff]
        %v4255 = vld [vmem:[%s328 + $0x2b0] sm:$0xff]
        %v4256 = vld [vmem:[%s328 + $0x2b8] sm:$0xff]
        %v4257 = vld [vmem:[%s328 + $0x2c0] sm:$0xff]
        %v4258 = vld [vmem:[%s328 + $0x2c8] sm:$0xff]
        %v4259 = vld [vmem:[%s328 + $0x2d0] sm:$0xff]
        %v4260 = vld [vmem:[%s328 + $0x2d8] sm:$0xff]
        %v4261 = vld [vmem:[%s328 + $0x2e0] sm:$0xff]
        %v4262 = vld [vmem:[%s328 + $0x2e8] sm:$0xff]
        %v4263 = vld [vmem:[%s328 + $0x2f0] sm:$0xff]
        %v4264 = vld [vmem:[%s328 + $0x2f8] sm:$0xff]
        %v4265 = vld [vmem:[%s328 + $0x300] sm:$0xff]
        %v4266 = vld [vmem:[%s328 + $0x308] sm:$0xff]
        %v4267 = vld [vmem:[%s328 + $0x310] sm:$0xff]
        %v4268 = vld [vmem:[%s328 + $0x318] sm:$0xff]
        %v4269 = vld [vmem:[%s328 + $0x320] sm:$0xff]
        %v4270 = vld [vmem:[%s328 + $0x328] sm:$0xff]
        %v4271 = vld [vmem:[%s328 + $0x330] sm:$0xff]
        %v4272 = vld [vmem:[%s328 + $0x338] sm:$0xff]
        %v4273 = vld [vmem:[%s328 + $0x340] sm:$0xff]
        %v4274 = vld [vmem:[%s328 + $0x348] sm:$0xff]
        %v4275 = vld [vmem:[%s328 + $0x350] sm:$0xff]
        %v4276 = vld [vmem:[%s328 + $0x358] sm:$0xff]
        %v4277 = vld [vmem:[%s328 + $0x360] sm:$0xff]
        %v4278 = vld [vmem:[%s328 + $0x368] sm:$0xff]
        %v4279 = vld [vmem:[%s328 + $0x370] sm:$0xff]
        %v4280 = vld [vmem:[%s328 + $0x378] sm:$0xff]
        %v4281 = vld [vmem:[%s328 + $0x380] sm:$0xff]
        %v4282 = vld [vmem:[%s328 + $0x388] sm:$0xff]
        %v4283 = vld [vmem:[%s328 + $0x390] sm:$0xff]
        %v4284 = vld [vmem:[%s328 + $0x398] sm:$0xff]
        %v4285 = vld [vmem:[%s328 + $0x3a0] sm:$0xff]
        %v4286 = vld [vmem:[%s328 + $0x3a8] sm:$0xff]
        %v4287 = vld [vmem:[%s328 + $0x3b0] sm:$0xff]
        %v4288 = vld [vmem:[%s328 + $0x3b8] sm:$0xff]
        %v4289 = vld [vmem:[%s328 + $0x3c0] sm:$0xff]
        %v4290 = vld [vmem:[%s328 + $0x3c8] sm:$0xff]
        %v4291 = vld [vmem:[%s328 + $0x3d0] sm:$0xff]
        %v4292 = vld [vmem:[%s328 + $0x3d8] sm:$0xff]
        %v4293 = vld [vmem:[%s328 + $0x3e0] sm:$0xff]
        %v4294 = vld [vmem:[%s328 + $0x3e8] sm:$0xff]
        %v4295 = vld [vmem:[%s328 + $0x3f0] sm:$0xff]
        %v4296 = vld [vmem:[%s328 + $0x3f8] sm:$0xff]
        %v4297 = vld [vmem:[%s328 + $0x400] sm:$0xff]
        %v4298 = vld [vmem:[%s328 + $0x408] sm:$0xff]
        %v4299 = vld [vmem:[%s328 + $0x410] sm:$0xff]
        %v4300 = vld [vmem:[%s328 + $0x418] sm:$0xff]
        %v4301 = vld [vmem:[%s328 + $0x420] sm:$0xff]
        %v4302 = vld [vmem:[%s328 + $0x428] sm:$0xff]
        %v4303 = vld [vmem:[%s328 + $0x430] sm:$0xff]
        %v4304 = vld [vmem:[%s328 + $0x438] sm:$0xff]
        %v4305 = vld [vmem:[%s328 + $0x440] sm:$0xff]
        %v4306 = vld [vmem:[%s328 + $0x448] sm:$0xff]
        %v4307 = vld [vmem:[%s328 + $0x450] sm:$0xff]
        %v4308 = vld [vmem:[%s328 + $0x458] sm:$0xff]
        %v4309 = vld [vmem:[%s328 + $0x460] sm:$0xff]
        %v4310 = vld [vmem:[%s328 + $0x468] sm:$0xff]
        %v4311 = vld [vmem:[%s328 + $0x470] sm:$0xff]
        %v4312 = vld [vmem:[%s328 + $0x478] sm:$0xff]
        %v4313 = vld [vmem:[%s328 + $0x480] sm:$0xff]
        %v4314 = vld [vmem:[%s328 + $0x488] sm:$0xff]
        %v4315 = vld [vmem:[%s328 + $0x490] sm:$0xff]
        %v4316 = vld [vmem:[%s328 + $0x498] sm:$0xff]
        %v4317 = vld [vmem:[%s328 + $0x4a0] sm:$0xff]
        %v4318 = vld [vmem:[%s328 + $0x4a8] sm:$0xff]
        %v4319 = vld [vmem:[%s328 + $0x4b0] sm:$0xff]
        %v4320 = vld [vmem:[%s328 + $0x4b8] sm:$0xff]
        %v4321 = vld [vmem:[%s328 + $0x4c0] sm:$0xff]
        %v4322 = vld [vmem:[%s328 + $0x4c8] sm:$0xff]
        %v4323 = vld [vmem:[%s328 + $0x4d0] sm:$0xff]
        %v4324 = vld [vmem:[%s328 + $0x4d8] sm:$0xff]
        %v4325 = vld [vmem:[%s328 + $0x4e0] sm:$0xff]
        %v4326 = vld [vmem:[%s328 + $0x4e8] sm:$0xff]
        %v4327 = vld [vmem:[%s328 + $0x4f0] sm:$0xff]
        %v4328 = vld [vmem:[%s328 + $0x4f8] sm:$0xff]
        %v4329 = vld [vmem:[%s328 + $0x500] sm:$0xff]
        %v4330 = vld [vmem:[%s328 + $0x508] sm:$0xff]
        %v4331 = vld [vmem:[%s328 + $0x510] sm:$0xff]
        %v4332 = vld [vmem:[%s328 + $0x518] sm:$0xff]
        %v4333 = vld [vmem:[%s328 + $0x520] sm:$0xff]
        %v4334 = vld [vmem:[%s328 + $0x528] sm:$0xff]
        %v4335 = vld [vmem:[%s328 + $0x530] sm:$0xff]
        %v4336 = vld [vmem:[%s328 + $0x538] sm:$0xff]
        %v4337 = vld [vmem:[%s328 + $0x540] sm:$0xff]
        %v4338 = vld [vmem:[%s328 + $0x548] sm:$0xff]
        %v4339 = vld [vmem:[%s328 + $0x550] sm:$0xff]
        %v4340 = vld [vmem:[%s328 + $0x558] sm:$0xff]
        %v4341 = vld [vmem:[%s328 + $0x560] sm:$0xff]
        %v4342 = vld [vmem:[%s328 + $0x568] sm:$0xff]
        %v4343 = vld [vmem:[%s328 + $0x570] sm:$0xff]
        %v4344 = vld [vmem:[%s328 + $0x578] sm:$0xff]
        %v4345 = vld [vmem:[%s328 + $0x580] sm:$0xff]
        %v4346 = vld [vmem:[%s328 + $0x588] sm:$0xff]
        %v4347 = vld [vmem:[%s328 + $0x590] sm:$0xff]
        %v4348 = vld [vmem:[%s328 + $0x598] sm:$0xff]
        %v4349 = vld [vmem:[%s328 + $0x5a0] sm:$0xff]
        %v4350 = vld [vmem:[%s328 + $0x5a8] sm:$0xff]
        %v4351 = vld [vmem:[%s328 + $0x5b0] sm:$0xff]
        %v4352 = vld [vmem:[%s328 + $0x5b8] sm:$0xff]
        %v4353 = vld [vmem:[%s328 + $0x5c0] sm:$0xff]
        %v4354 = vld [vmem:[%s328 + $0x5c8] sm:$0xff]
        %v4355 = vld [vmem:[%s328 + $0x5d0] sm:$0xff]
        %v4356 = vld [vmem:[%s328 + $0x5d8] sm:$0xff]
        %v4357 = vld [vmem:[%s328 + $0x5e0] sm:$0xff]
        %v4358 = vld [vmem:[%s328 + $0x5e8] sm:$0xff]
        %v4359 = vld [vmem:[%s328 + $0x5f0] sm:$0xff]
        %v4360 = vld [vmem:[%s328 + $0x5f8] sm:$0xff]
        %v4361 = vld [vmem:[%s328 + $0x600] sm:$0xff]
        %v4362 = vld [vmem:[%s328 + $0x608] sm:$0xff]
        %v4363 = vld [vmem:[%s328 + $0x610] sm:$0xff]
        %v4364 = vld [vmem:[%s328 + $0x618] sm:$0xff]
        %v4365 = vld [vmem:[%s328 + $0x620] sm:$0xff]
        %v4366 = vld [vmem:[%s328 + $0x628] sm:$0xff]
        %v4367 = vld [vmem:[%s328 + $0x630] sm:$0xff]
        %v4368 = vld [vmem:[%s328 + $0x638] sm:$0xff]
        %v4369 = vld [vmem:[%s328 + $0x640] sm:$0xff]
        %v4370 = vld [vmem:[%s328 + $0x648] sm:$0xff]
        %v4371 = vld [vmem:[%s328 + $0x650] sm:$0xff]
        %v4372 = vld [vmem:[%s328 + $0x658] sm:$0xff]
        %v4373 = vld [vmem:[%s328 + $0x660] sm:$0xff]
        %v4374 = vld [vmem:[%s328 + $0x668] sm:$0xff]
        %v4375 = vld [vmem:[%s328 + $0x670] sm:$0xff]
        %v4376 = vld [vmem:[%s328 + $0x678] sm:$0xff]
        %v4377 = vld [vmem:[%s328 + $0x680] sm:$0xff]
        %v4378 = vld [vmem:[%s328 + $0x688] sm:$0xff]
        %v4379 = vld [vmem:[%s328 + $0x690] sm:$0xff]
        %v4380 = vld [vmem:[%s328 + $0x698] sm:$0xff]
        %v4381 = vld [vmem:[%s328 + $0x6a0] sm:$0xff]
        %v4382 = vld [vmem:[%s328 + $0x6a8] sm:$0xff]
        %v4383 = vld [vmem:[%s328 + $0x6b0] sm:$0xff]
        %v4384 = vld [vmem:[%s328 + $0x6b8] sm:$0xff]
        %v4385 = vld [vmem:[%s328 + $0x6c0] sm:$0xff]
        %v4386 = vld [vmem:[%s328 + $0x6c8] sm:$0xff]
        %v4387 = vld [vmem:[%s328 + $0x6d0] sm:$0xff]
        %v4388 = vld [vmem:[%s328 + $0x6d8] sm:$0xff]
        %v4389 = vld [vmem:[%s328 + $0x6e0] sm:$0xff]
        %v4390 = vld [vmem:[%s328 + $0x6e8] sm:$0xff]
        %v4391 = vld [vmem:[%s328 + $0x6f0] sm:$0xff]
        %v4392 = vld [vmem:[%s328 + $0x6f8] sm:$0xff]
        %v4393 = vld [vmem:[%s328 + $0x700] sm:$0xff]
        %v4394 = vld [vmem:[%s328 + $0x708] sm:$0xff]
        %v4395 = vld [vmem:[%s328 + $0x710] sm:$0xff]
        %v4396 = vld [vmem:[%s328 + $0x718] sm:$0xff]
        %v4397 = vld [vmem:[%s328 + $0x720] sm:$0xff]
        %v4398 = vld [vmem:[%s328 + $0x728] sm:$0xff]
        %v4399 = vld [vmem:[%s328 + $0x730] sm:$0xff]
        %v4400 = vld [vmem:[%s328 + $0x738] sm:$0xff]
        %v4401 = vld [vmem:[%s328 + $0x740] sm:$0xff]
        %v4402 = vld [vmem:[%s328 + $0x748] sm:$0xff]
        %v4403 = vld [vmem:[%s328 + $0x750] sm:$0xff]
        %v4404 = vld [vmem:[%s328 + $0x758] sm:$0xff]
        %v4405 = vld [vmem:[%s328 + $0x760] sm:$0xff]
        %v4406 = vld [vmem:[%s328 + $0x768] sm:$0xff]
        %v4407 = vld [vmem:[%s328 + $0x770] sm:$0xff]
        %v4408 = vld [vmem:[%s328 + $0x778] sm:$0xff]
        %v4409 = vld [vmem:[%s328 + $0x780] sm:$0xff]
        %v4410 = vld [vmem:[%s328 + $0x788] sm:$0xff]
        %v4411 = vld [vmem:[%s328 + $0x790] sm:$0xff]
        %v4412 = vld [vmem:[%s328 + $0x798] sm:$0xff]
        %v4413 = vld [vmem:[%s328 + $0x7a0] sm:$0xff]
        %v4414 = vld [vmem:[%s328 + $0x7a8] sm:$0xff]
        %v4415 = vld [vmem:[%s328 + $0x7b0] sm:$0xff]
        %v4416 = vld [vmem:[%s328 + $0x7b8] sm:$0xff]
        %v4417 = vld [vmem:[%s328 + $0x7c0] sm:$0xff]
        %v4418 = vld [vmem:[%s328 + $0x7c8] sm:$0xff]
        %v4419 = vld [vmem:[%s328 + $0x7d0] sm:$0xff]
        %v4420 = vld [vmem:[%s328 + $0x7d8] sm:$0xff]
        %v4421 = vld [vmem:[%s328 + $0x7e0] sm:$0xff]
        %v4422 = vld [vmem:[%s328 + $0x7e8] sm:$0xff]
        %v4423 = vld [vmem:[%s328 + $0x7f0] sm:$0xff]
        %v4424 = vld [vmem:[%s328 + $0x7f8] sm:$0xff]
        %v4425 = vld [vmem:[%s328 + $0x800] sm:$0xff]
        %v4426 = vld [vmem:[%s328 + $0x808] sm:$0xff]
        %v4427 = vld [vmem:[%s328 + $0x810] sm:$0xff]
        %v4428 = vld [vmem:[%s328 + $0x818] sm:$0xff]
        %v4429 = vld [vmem:[%s328 + $0x820] sm:$0xff]
        %v4430 = vld [vmem:[%s328 + $0x828] sm:$0xff]
        %v4431 = vld [vmem:[%s328 + $0x830] sm:$0xff]
        %v4432 = vld [vmem:[%s328 + $0x838] sm:$0xff]
        %v4433 = vld [vmem:[%s328 + $0x840] sm:$0xff]
        %v4434 = vld [vmem:[%s328 + $0x848] sm:$0xff]
        %v4435 = vld [vmem:[%s328 + $0x850] sm:$0xff]
        %v4436 = vld [vmem:[%s328 + $0x858] sm:$0xff]
        %v4437 = vld [vmem:[%s328 + $0x860] sm:$0xff]
        %v4438 = vld [vmem:[%s328 + $0x868] sm:$0xff]
        %v4439 = vld [vmem:[%s328 + $0x870] sm:$0xff]
        %v4440 = vld [vmem:[%s328 + $0x878] sm:$0xff]
        %v4441 = vld [vmem:[%s328 + $0x880] sm:$0xff]
        %v4442 = vld [vmem:[%s328 + $0x888] sm:$0xff]
        %v4443 = vld [vmem:[%s328 + $0x890] sm:$0xff]
        %v4444 = vld [vmem:[%s328 + $0x898] sm:$0xff]
        %v4445 = vld [vmem:[%s328 + $0x8a0] sm:$0xff]
        %v4446 = vld [vmem:[%s328 + $0x8a8] sm:$0xff]
        %v4447 = vld [vmem:[%s328 + $0x8b0] sm:$0xff]
        %v4448 = vld [vmem:[%s328 + $0x8b8] sm:$0xff]
        %v4449 = vld [vmem:[%s328 + $0x8c0] sm:$0xff]
        %v4450 = vld [vmem:[%s328 + $0x8c8] sm:$0xff]
        %v4451 = vld [vmem:[%s328 + $0x8d0] sm:$0xff]
        %v4452 = vld [vmem:[%s328 + $0x8d8] sm:$0xff]
        %v4453 = vld [vmem:[%s328 + $0x8e0] sm:$0xff]
        %v4454 = vld [vmem:[%s328 + $0x8e8] sm:$0xff]
        %v4455 = vld [vmem:[%s328 + $0x8f0] sm:$0xff]
        %v4456 = vld [vmem:[%s328 + $0x8f8] sm:$0xff]
        %v4457 = vld [vmem:[%s328 + $0x900] sm:$0xff]
        %v4458 = vld [vmem:[%s328 + $0x908] sm:$0xff]
        %v4459 = vld [vmem:[%s328 + $0x910] sm:$0xff]
        %v4460 = vld [vmem:[%s328 + $0x918] sm:$0xff]
        %v4461 = vld [vmem:[%s328 + $0x920] sm:$0xff]
        %v4462 = vld [vmem:[%s328 + $0x928] sm:$0xff]
        %v4463 = vld [vmem:[%s328 + $0x930] sm:$0xff]
        %v4464 = vld [vmem:[%s328 + $0x938] sm:$0xff]
        %v4465 = vld [vmem:[%s328 + $0x940] sm:$0xff]
        %v4466 = vld [vmem:[%s328 + $0x948] sm:$0xff]
        %v4467 = vld [vmem:[%s328 + $0x950] sm:$0xff]
        %v4468 = vld [vmem:[%s328 + $0x958] sm:$0xff]
        %v4469 = vld [vmem:[%s328 + $0x960] sm:$0xff]
        %v4470 = vld [vmem:[%s328 + $0x968] sm:$0xff]
        %v4471 = vld [vmem:[%s328 + $0x970] sm:$0xff]
        %v4472 = vld [vmem:[%s328 + $0x978] sm:$0xff]
        %v4473 = vld [vmem:[%s328 + $0x980] sm:$0xff]
        %v4474 = vld [vmem:[%s328 + $0x988] sm:$0xff]
        %v4475 = vld [vmem:[%s328 + $0x990] sm:$0xff]
        %v4476 = vld [vmem:[%s328 + $0x998] sm:$0xff]
        %v4477 = vld [vmem:[%s328 + $0x9a0] sm:$0xff]
        %v4478 = vld [vmem:[%s328 + $0x9a8] sm:$0xff]
        %v4479 = vld [vmem:[%s328 + $0x9b0] sm:$0xff]
        %v4480 = vld [vmem:[%s328 + $0x9b8] sm:$0xff]
        %v4481 = vld [vmem:[%s328 + $0x9c0] sm:$0xff]
        %v4482 = vld [vmem:[%s328 + $0x9c8] sm:$0xff]
        %v4483 = vld [vmem:[%s328 + $0x9d0] sm:$0xff]
        %v4484 = vld [vmem:[%s328 + $0x9d8] sm:$0xff]
        %v4485 = vld [vmem:[%s328 + $0x9e0] sm:$0xff]
        %v4486 = vld [vmem:[%s328 + $0x9e8] sm:$0xff]
        %v4487 = vld [vmem:[%s328 + $0x9f0] sm:$0xff]
        %v4488 = vld [vmem:[%s328 + $0x9f8] sm:$0xff]
        %v4489 = vld [vmem:[%s328 + $0xa00] sm:$0xff]
        %v4490 = vld [vmem:[%s328 + $0xa08] sm:$0xff]
        %v4491 = vld [vmem:[%s328 + $0xa10] sm:$0xff]
        %v4492 = vld [vmem:[%s328 + $0xa18] sm:$0xff]
        %v4493 = vld [vmem:[%s328 + $0xa20] sm:$0xff]
        %v4494 = vld [vmem:[%s328 + $0xa28] sm:$0xff]
        %v4495 = vld [vmem:[%s328 + $0xa30] sm:$0xff]
        %v4496 = vld [vmem:[%s328 + $0xa38] sm:$0xff]
        %v4497 = vld [vmem:[%s328 + $0xa40] sm:$0xff]
        %v4498 = vld [vmem:[%s328 + $0xa48] sm:$0xff]
        %v4499 = vld [vmem:[%s328 + $0xa50] sm:$0xff]
        %v4500 = vld [vmem:[%s328 + $0xa58] sm:$0xff]
        %v4501 = vld [vmem:[%s328 + $0xa60] sm:$0xff]
        %v4502 = vld [vmem:[%s328 + $0xa68] sm:$0xff]
        %v4503 = vld [vmem:[%s328 + $0xa70] sm:$0xff]
        %v4504 = vld [vmem:[%s328 + $0xa78] sm:$0xff]
        %v4505 = vld [vmem:[%s328 + $0xa80] sm:$0xff]
        %v4506 = vld [vmem:[%s328 + $0xa88] sm:$0xff]
        %v4507 = vld [vmem:[%s328 + $0xa90] sm:$0xff]
        %v4508 = vld [vmem:[%s328 + $0xa98] sm:$0xff]
        %v4509 = vld [vmem:[%s328 + $0xaa0] sm:$0xff]
        %v4510 = vld [vmem:[%s328 + $0xaa8] sm:$0xff]
        %v4511 = vld [vmem:[%s328 + $0xab0] sm:$0xff]
        %v4512 = vld [vmem:[%s328 + $0xab8] sm:$0xff]
        %v4513 = vld [vmem:[%s328 + $0xac0] sm:$0xff]
        %v4514 = vld [vmem:[%s328 + $0xac8] sm:$0xff]
        %v4515 = vld [vmem:[%s328 + $0xad0] sm:$0xff]
        %v4516 = vld [vmem:[%s328 + $0xad8] sm:$0xff]
        %v4517 = vld [vmem:[%s328 + $0xae0] sm:$0xff]
        %v4518 = vld [vmem:[%s328 + $0xae8] sm:$0xff]
        %v4519 = vld [vmem:[%s328 + $0xaf0] sm:$0xff]
        %v4520 = vld [vmem:[%s328 + $0xaf8] sm:$0xff]
        %v4521 = vld [vmem:[%s328 + $0xb00] sm:$0xff]
        %v4522 = vld [vmem:[%s328 + $0xb08] sm:$0xff]
        %v4523 = vld [vmem:[%s328 + $0xb10] sm:$0xff]
        %v4524 = vld [vmem:[%s328 + $0xb18] sm:$0xff]
        %v4525 = vld [vmem:[%s328 + $0xb20] sm:$0xff]
        %v4526 = vld [vmem:[%s328 + $0xb28] sm:$0xff]
        %v4527 = vld [vmem:[%s328 + $0xb30] sm:$0xff]
        %v4528 = vld [vmem:[%s328 + $0xb38] sm:$0xff]
        %v4529 = vld [vmem:[%s328 + $0xb40] sm:$0xff]
        %v4530 = vld [vmem:[%s328 + $0xb48] sm:$0xff]
        %v4531 = vld [vmem:[%s328 + $0xb50] sm:$0xff]
        %v4532 = vld [vmem:[%s328 + $0xb58] sm:$0xff]
        %v4533 = vld [vmem:[%s328 + $0xb60] sm:$0xff]
        %v4534 = vld [vmem:[%s328 + $0xb68] sm:$0xff]
        %v4535 = vld [vmem:[%s328 + $0xb70] sm:$0xff]
        %v4536 = vld [vmem:[%s328 + $0xb78] sm:$0xff]
        %v4537 = vld [vmem:[%s328 + $0xb80] sm:$0xff]
        %v4538 = vld [vmem:[%s328 + $0xb88] sm:$0xff]
        %v4539 = vld [vmem:[%s328 + $0xb90] sm:$0xff]
        %v4540 = vld [vmem:[%s328 + $0xb98] sm:$0xff]
        %v4541 = vld [vmem:[%s328 + $0xba0] sm:$0xff]
        %v4542 = vld [vmem:[%s328 + $0xba8] sm:$0xff]
        %v4543 = vld [vmem:[%s328 + $0xbb0] sm:$0xff]
        %v4544 = vld [vmem:[%s328 + $0xbb8] sm:$0xff]
        %v4545 = vld [vmem:[%s328 + $0xbc0] sm:$0xff]
        %v4546 = vld [vmem:[%s328 + $0xbc8] sm:$0xff]
        %v4547 = vld [vmem:[%s328 + $0xbd0] sm:$0xff]
        %v4548 = vld [vmem:[%s328 + $0xbd8] sm:$0xff]
        %v4549 = vld [vmem:[%s328 + $0xbe0] sm:$0xff]
        %v4550 = vld [vmem:[%s328 + $0xbe8] sm:$0xff]
        %v4551 = vld [vmem:[%s328 + $0xbf0] sm:$0xff]
        %v4552 = vld [vmem:[%s328 + $0xbf8] sm:$0xff]
        %v4553 = vld [vmem:[%s328 + $0xc00] sm:$0xff]
        %v4554 = vld [vmem:[%s328 + $0xc08] sm:$0xff]
        %v4555 = vld [vmem:[%s328 + $0xc10] sm:$0xff]
        %v4556 = vld [vmem:[%s328 + $0xc18] sm:$0xff]
        %v4557 = vld [vmem:[%s328 + $0xc20] sm:$0xff]
        %v4558 = vld [vmem:[%s328 + $0xc28] sm:$0xff]
        %v4559 = vld [vmem:[%s328 + $0xc30] sm:$0xff]
        %v4560 = vld [vmem:[%s328 + $0xc38] sm:$0xff]
        %v4561 = vld [vmem:[%s328 + $0xc40] sm:$0xff]
        %v4562 = vld [vmem:[%s328 + $0xc48] sm:$0xff]
        %v4563 = vld [vmem:[%s328 + $0xc50] sm:$0xff]
        %v4564 = vld [vmem:[%s328 + $0xc58] sm:$0xff]
        %v4565 = vld [vmem:[%s328 + $0xc60] sm:$0xff]
        %v4566 = vld [vmem:[%s328 + $0xc68] sm:$0xff]
        %v4567 = vld [vmem:[%s328 + $0xc70] sm:$0xff]
        %v4568 = vld [vmem:[%s328 + $0xc78] sm:$0xff]
        %v4569 = vld [vmem:[%s328 + $0xc80] sm:$0xff]
        %v4570 = vld [vmem:[%s328 + $0xc88] sm:$0xff]
        %v4571 = vld [vmem:[%s328 + $0xc90] sm:$0xff]
        %v4572 = vld [vmem:[%s328 + $0xc98] sm:$0xff]
        %v4573 = vld [vmem:[%s328 + $0xca0] sm:$0xff]
        %v4574 = vld [vmem:[%s328 + $0xca8] sm:$0xff]
        %v4575 = vld [vmem:[%s328 + $0xcb0] sm:$0xff]
        %v4576 = vld [vmem:[%s328 + $0xcb8] sm:$0xff]
        %v4577 = vld [vmem:[%s328 + $0xcc0] sm:$0xff]
        %v4578 = vld [vmem:[%s328 + $0xcc8] sm:$0xff]
        %v4579 = vld [vmem:[%s328 + $0xcd0] sm:$0xff]
        %v4580 = vld [vmem:[%s328 + $0xcd8] sm:$0xff]
        %v4581 = vld [vmem:[%s328 + $0xce0] sm:$0xff]
        %v4582 = vld [vmem:[%s328 + $0xce8] sm:$0xff]
        %v4583 = vld [vmem:[%s328 + $0xcf0] sm:$0xff]
        %v4584 = vld [vmem:[%s328 + $0xcf8] sm:$0xff]
        %v4585 = vld [vmem:[%s328 + $0xd00] sm:$0xff]
        %v4586 = vld [vmem:[%s328 + $0xd08] sm:$0xff]
        %v4587 = vld [vmem:[%s328 + $0xd10] sm:$0xff]
        %v4588 = vld [vmem:[%s328 + $0xd18] sm:$0xff]
        %v4589 = vld [vmem:[%s328 + $0xd20] sm:$0xff]
        %v4590 = vld [vmem:[%s328 + $0xd28] sm:$0xff]
        %v4591 = vld [vmem:[%s328 + $0xd30] sm:$0xff]
        %v4592 = vld [vmem:[%s328 + $0xd38] sm:$0xff]
        %v4593 = vld [vmem:[%s328 + $0xd40] sm:$0xff]
        %v4594 = vld [vmem:[%s328 + $0xd48] sm:$0xff]
        %v4595 = vld [vmem:[%s328 + $0xd50] sm:$0xff]
        %v4596 = vld [vmem:[%s328 + $0xd58] sm:$0xff]
        %v4597 = vld [vmem:[%s328 + $0xd60] sm:$0xff]
        %v4598 = vld [vmem:[%s328 + $0xd68] sm:$0xff]
        %v4599 = vld [vmem:[%s328 + $0xd70] sm:$0xff]
        %v4600 = vld [vmem:[%s328 + $0xd78] sm:$0xff]
        %v4601 = vld [vmem:[%s328 + $0xd80] sm:$0xff]
        %v4602 = vld [vmem:[%s328 + $0xd88] sm:$0xff]
        %v4603 = vld [vmem:[%s328 + $0xd90] sm:$0xff]
        %v4604 = vld [vmem:[%s328 + $0xd98] sm:$0xff]
        %v4605 = vld [vmem:[%s328 + $0xda0] sm:$0xff]
        %v4606 = vld [vmem:[%s328 + $0xda8] sm:$0xff]
        %v4607 = vld [vmem:[%s328 + $0xdb0] sm:$0xff]
        %v4608 = vld [vmem:[%s328 + $0xdb8] sm:$0xff]
        %v4609 = vld [vmem:[%s328 + $0xdc0] sm:$0xff]
        %v4610 = vld [vmem:[%s328 + $0xdc8] sm:$0xff]
        %v4611 = vld [vmem:[%s328 + $0xdd0] sm:$0xff]
        %v4612 = vld [vmem:[%s328 + $0xdd8] sm:$0xff]
        %v4613 = vld [vmem:[%s328 + $0xde0] sm:$0xff]
        %v4614 = vld [vmem:[%s328 + $0xde8] sm:$0xff]
        %v4615 = vld [vmem:[%s328 + $0xdf0] sm:$0xff]
        %v4616 = vld [vmem:[%s328 + $0xdf8] sm:$0xff]
        %v4617 = vld [vmem:[%s328 + $0xe00] sm:$0xff]
        %v4618 = vld [vmem:[%s328 + $0xe08] sm:$0xff]
        %v4619 = vld [vmem:[%s328 + $0xe10] sm:$0xff]
        %v4620 = vld [vmem:[%s328 + $0xe18] sm:$0xff]
        %v4621 = vld [vmem:[%s328 + $0xe20] sm:$0xff]
        %v4622 = vld [vmem:[%s328 + $0xe28] sm:$0xff]
        %v4623 = vld [vmem:[%s328 + $0xe30] sm:$0xff]
        %v4624 = vld [vmem:[%s328 + $0xe38] sm:$0xff]
        %v4625 = vld [vmem:[%s328 + $0xe40] sm:$0xff]
        %v4626 = vld [vmem:[%s328 + $0xe48] sm:$0xff]
        %v4627 = vld [vmem:[%s328 + $0xe50] sm:$0xff]
        %v4628 = vld [vmem:[%s328 + $0xe58] sm:$0xff]
        %v4629 = vld [vmem:[%s328 + $0xe60] sm:$0xff]
        %v4630 = vld [vmem:[%s328 + $0xe68] sm:$0xff]
        %v4631 = vld [vmem:[%s328 + $0xe70] sm:$0xff]
        %v4632 = vld [vmem:[%s328 + $0xe78] sm:$0xff]
        %v4633 = vld [vmem:[%s328 + $0xe80] sm:$0xff]
        %v4634 = vld [vmem:[%s328 + $0xe88] sm:$0xff]
        %v4635 = vld [vmem:[%s328 + $0xe90] sm:$0xff]
        %v4636 = vld [vmem:[%s328 + $0xe98] sm:$0xff]
        %v4637 = vld [vmem:[%s328 + $0xea0] sm:$0xff]
        %v4638 = vld [vmem:[%s328 + $0xea8] sm:$0xff]
        %v4639 = vld [vmem:[%s328 + $0xeb0] sm:$0xff]
        %v4640 = vld [vmem:[%s328 + $0xeb8] sm:$0xff]
        %v4641 = vld [vmem:[%s328 + $0xec0] sm:$0xff]
        %v4642 = vld [vmem:[%s328 + $0xec8] sm:$0xff]
        %v4643 = vld [vmem:[%s328 + $0xed0] sm:$0xff]
        %v4644 = vld [vmem:[%s328 + $0xed8] sm:$0xff]
        %v4645 = vld [vmem:[%s328 + $0xee0] sm:$0xff]
        %v4646 = vld [vmem:[%s328 + $0xee8] sm:$0xff]
        %v4647 = vld [vmem:[%s328 + $0xef0] sm:$0xff]
        %v4648 = vld [vmem:[%s328 + $0xef8] sm:$0xff]
        %v4649 = vld [vmem:[%s328 + $0xf00] sm:$0xff]
        %v4650 = vld [vmem:[%s328 + $0xf08] sm:$0xff]
        %v4651 = vld [vmem:[%s328 + $0xf10] sm:$0xff]
        %v4652 = vld [vmem:[%s328 + $0xf18] sm:$0xff]
        %v4653 = vld [vmem:[%s328 + $0xf20] sm:$0xff]
        %v4654 = vld [vmem:[%s328 + $0xf28] sm:$0xff]
        %v4655 = vld [vmem:[%s328 + $0xf30] sm:$0xff]
        %v4656 = vld [vmem:[%s328 + $0xf38] sm:$0xff]
        %v4657 = vld [vmem:[%s328 + $0xf40] sm:$0xff]
        %v4658 = vld [vmem:[%s328 + $0xf48] sm:$0xff]
        %v4659 = vld [vmem:[%s328 + $0xf50] sm:$0xff]
        %v4660 = vld [vmem:[%s328 + $0xf58] sm:$0xff]
        %v4661 = vld [vmem:[%s328 + $0xf60] sm:$0xff]
        %v4662 = vld [vmem:[%s328 + $0xf68] sm:$0xff]
        %v4663 = vld [vmem:[%s328 + $0xf70] sm:$0xff]
        %v4664 = vld [vmem:[%s328 + $0xf78] sm:$0xff]
        %v4665 = vld [vmem:[%s328 + $0xf80] sm:$0xff]
        %v4666 = vld [vmem:[%s328 + $0xf88] sm:$0xff]
        %v4667 = vld [vmem:[%s328 + $0xf90] sm:$0xff]
        %v4668 = vld [vmem:[%s328 + $0xf98] sm:$0xff]
        %v4669 = vld [vmem:[%s328 + $0xfa0] sm:$0xff]
        %v4670 = vld [vmem:[%s328 + $0xfa8] sm:$0xff]
        %v4671 = vld [vmem:[%s328 + $0xfb0] sm:$0xff]
        %v4672 = vld [vmem:[%s328 + $0xfb8] sm:$0xff]
        %v4673 = vld [vmem:[%s328 + $0xfc0] sm:$0xff]
        %v4674 = vld [vmem:[%s328 + $0xfc8] sm:$0xff]
        %v4675 = vld [vmem:[%s328 + $0xfd0] sm:$0xff]
        %v4676 = vld [vmem:[%s328 + $0xfd8] sm:$0xff]
        %v4677 = vld [vmem:[%s328 + $0xfe0] sm:$0xff]
        %v4678 = vld [vmem:[%s328 + $0xfe8] sm:$0xff]
        %v4679 = vld [vmem:[%s328 + $0xff0] sm:$0xff]
        %v4680 = vld [vmem:[%s328 + $0xff8] sm:$0xff]
        %v5193 = vunpack.c.l.b16 %v4169
        %v5194 = vunpack.c.h.b16 %v4169
        %v5195 = vunpack.c.l.b16 %v4170
        %v5196 = vunpack.c.h.b16 %v4170
        %v5197 = vunpack.c.l.b16 %v4171
        %v5198 = vunpack.c.h.b16 %v4171
        %v5199 = vunpack.c.l.b16 %v4172
        %v5200 = vunpack.c.h.b16 %v4172
        %v5201 = vunpack.c.l.b16 %v4173
        %v5202 = vunpack.c.h.b16 %v4173
        %v5203 = vunpack.c.l.b16 %v4174
        %v5204 = vunpack.c.h.b16 %v4174
        %v5205 = vunpack.c.l.b16 %v4175
        %v5206 = vunpack.c.h.b16 %v4175
        %v5207 = vunpack.c.l.b16 %v4176
        %v5208 = vunpack.c.h.b16 %v4176
        %v5209 = vunpack.c.l.b16 %v4177
        %v5210 = vunpack.c.h.b16 %v4177
        %v5211 = vunpack.c.l.b16 %v4178
        %v5212 = vunpack.c.h.b16 %v4178
        %v5213 = vunpack.c.l.b16 %v4179
        %v5214 = vunpack.c.h.b16 %v4179
        %v5215 = vunpack.c.l.b16 %v4180
        %v5216 = vunpack.c.h.b16 %v4180
        %v5217 = vunpack.c.l.b16 %v4181
        %v5218 = vunpack.c.h.b16 %v4181
        %v5219 = vunpack.c.l.b16 %v4182
        %v5220 = vunpack.c.h.b16 %v4182
        %v5221 = vunpack.c.l.b16 %v4183
        %v5222 = vunpack.c.h.b16 %v4183
        %v5223 = vunpack.c.l.b16 %v4184
        %v5224 = vunpack.c.h.b16 %v4184
        %v5225 = vunpack.c.l.b16 %v4185
        %v5226 = vunpack.c.h.b16 %v4185
        %v5227 = vunpack.c.l.b16 %v4186
        %v5228 = vunpack.c.h.b16 %v4186
        %v5229 = vunpack.c.l.b16 %v4187
        %v5230 = vunpack.c.h.b16 %v4187
        %v5231 = vunpack.c.l.b16 %v4188
        %v5232 = vunpack.c.h.b16 %v4188
        %v5233 = vunpack.c.l.b16 %v4189
        %v5234 = vunpack.c.h.b16 %v4189
        %v5235 = vunpack.c.l.b16 %v4190
        %v5236 = vunpack.c.h.b16 %v4190
        %v5237 = vunpack.c.l.b16 %v4191
        %v5238 = vunpack.c.h.b16 %v4191
        %v5239 = vunpack.c.l.b16 %v4192
        %v5240 = vunpack.c.h.b16 %v4192
        %v5241 = vunpack.c.l.b16 %v4193
        %v5242 = vunpack.c.h.b16 %v4193
        %v5243 = vunpack.c.l.b16 %v4194
        %v5244 = vunpack.c.h.b16 %v4194
        %v5245 = vunpack.c.l.b16 %v4195
        %v5246 = vunpack.c.h.b16 %v4195
        %v5247 = vunpack.c.l.b16 %v4196
        %v5248 = vunpack.c.h.b16 %v4196
        %v5249 = vunpack.c.l.b16 %v4197
        %v5250 = vunpack.c.h.b16 %v4197
        %v5251 = vunpack.c.l.b16 %v4198
        %v5252 = vunpack.c.h.b16 %v4198
        %v5253 = vunpack.c.l.b16 %v4199
        %v5254 = vunpack.c.h.b16 %v4199
        %v5255 = vunpack.c.l.b16 %v4200
        %v5256 = vunpack.c.h.b16 %v4200
        %v5257 = vunpack.c.l.b16 %v4201
        %v5258 = vunpack.c.h.b16 %v4201
        %v5259 = vunpack.c.l.b16 %v4202
        %v5260 = vunpack.c.h.b16 %v4202
        %v5261 = vunpack.c.l.b16 %v4203
        %v5262 = vunpack.c.h.b16 %v4203
        %v5263 = vunpack.c.l.b16 %v4204
        %v5264 = vunpack.c.h.b16 %v4204
        %v5265 = vunpack.c.l.b16 %v4205
        %v5266 = vunpack.c.h.b16 %v4205
        %v5267 = vunpack.c.l.b16 %v4206
        %v5268 = vunpack.c.h.b16 %v4206
        %v5269 = vunpack.c.l.b16 %v4207
        %v5270 = vunpack.c.h.b16 %v4207
        %v5271 = vunpack.c.l.b16 %v4208
        %v5272 = vunpack.c.h.b16 %v4208
        %v5273 = vunpack.c.l.b16 %v4209
        %v5274 = vunpack.c.h.b16 %v4209
        %v5275 = vunpack.c.l.b16 %v4210
        %v5276 = vunpack.c.h.b16 %v4210
        %v5277 = vunpack.c.l.b16 %v4211
        %v5278 = vunpack.c.h.b16 %v4211
        %v5279 = vunpack.c.l.b16 %v4212
        %v5280 = vunpack.c.h.b16 %v4212
        %v5281 = vunpack.c.l.b16 %v4213
        %v5282 = vunpack.c.h.b16 %v4213
        %v5283 = vunpack.c.l.b16 %v4214
        %v5284 = vunpack.c.h.b16 %v4214
        %v5285 = vunpack.c.l.b16 %v4215
        %v5286 = vunpack.c.h.b16 %v4215
        %v5287 = vunpack.c.l.b16 %v4216
        %v5288 = vunpack.c.h.b16 %v4216
        %v5289 = vunpack.c.l.b16 %v4217
        %v5290 = vunpack.c.h.b16 %v4217
        %v5291 = vunpack.c.l.b16 %v4218
        %v5292 = vunpack.c.h.b16 %v4218
        %v5293 = vunpack.c.l.b16 %v4219
        %v5294 = vunpack.c.h.b16 %v4219
        %v5295 = vunpack.c.l.b16 %v4220
        %v5296 = vunpack.c.h.b16 %v4220
        %v5297 = vunpack.c.l.b16 %v4221
        %v5298 = vunpack.c.h.b16 %v4221
        %v5299 = vunpack.c.l.b16 %v4222
        %v5300 = vunpack.c.h.b16 %v4222
        %v5301 = vunpack.c.l.b16 %v4223
        %v5302 = vunpack.c.h.b16 %v4223
        %v5303 = vunpack.c.l.b16 %v4224
        %v5304 = vunpack.c.h.b16 %v4224
        %v5305 = vunpack.c.l.b16 %v4225
        %v5306 = vunpack.c.h.b16 %v4225
        %v5307 = vunpack.c.l.b16 %v4226
        %v5308 = vunpack.c.h.b16 %v4226
        %v5309 = vunpack.c.l.b16 %v4227
        %v5310 = vunpack.c.h.b16 %v4227
        %v5311 = vunpack.c.l.b16 %v4228
        %v5312 = vunpack.c.h.b16 %v4228
        %v5313 = vunpack.c.l.b16 %v4229
        %v5314 = vunpack.c.h.b16 %v4229
        %v5315 = vunpack.c.l.b16 %v4230
        %v5316 = vunpack.c.h.b16 %v4230
        %v5317 = vunpack.c.l.b16 %v4231
        %v5318 = vunpack.c.h.b16 %v4231
        %v5319 = vunpack.c.l.b16 %v4232
        %v5320 = vunpack.c.h.b16 %v4232
        %v5321 = vunpack.c.l.b16 %v4233
        %v5322 = vunpack.c.h.b16 %v4233
        %v5323 = vunpack.c.l.b16 %v4234
        %v5324 = vunpack.c.h.b16 %v4234
        %v5325 = vunpack.c.l.b16 %v4235
        %v5326 = vunpack.c.h.b16 %v4235
        %v5327 = vunpack.c.l.b16 %v4236
        %v5328 = vunpack.c.h.b16 %v4236
        %v5329 = vunpack.c.l.b16 %v4237
        %v5330 = vunpack.c.h.b16 %v4237
        %v5331 = vunpack.c.l.b16 %v4238
        %v5332 = vunpack.c.h.b16 %v4238
        %v5333 = vunpack.c.l.b16 %v4239
        %v5334 = vunpack.c.h.b16 %v4239
        %v5335 = vunpack.c.l.b16 %v4240
        %v5336 = vunpack.c.h.b16 %v4240
        %v5337 = vunpack.c.l.b16 %v4241
        %v5338 = vunpack.c.h.b16 %v4241
        %v5339 = vunpack.c.l.b16 %v4242
        %v5340 = vunpack.c.h.b16 %v4242
        %v5341 = vunpack.c.l.b16 %v4243
        %v5342 = vunpack.c.h.b16 %v4243
        %v5343 = vunpack.c.l.b16 %v4244
        %v5344 = vunpack.c.h.b16 %v4244
        %v5345 = vunpack.c.l.b16 %v4245
        %v5346 = vunpack.c.h.b16 %v4245
        %v5347 = vunpack.c.l.b16 %v4246
        %v5348 = vunpack.c.h.b16 %v4246
        %v5349 = vunpack.c.l.b16 %v4247
        %v5350 = vunpack.c.h.b16 %v4247
        %v5351 = vunpack.c.l.b16 %v4248
        %v5352 = vunpack.c.h.b16 %v4248
        %v5353 = vunpack.c.l.b16 %v4249
        %v5354 = vunpack.c.h.b16 %v4249
        %v5355 = vunpack.c.l.b16 %v4250
        %v5356 = vunpack.c.h.b16 %v4250
        %v5357 = vunpack.c.l.b16 %v4251
        %v5358 = vunpack.c.h.b16 %v4251
        %v5359 = vunpack.c.l.b16 %v4252
        %v5360 = vunpack.c.h.b16 %v4252
        %v5361 = vunpack.c.l.b16 %v4253
        %v5362 = vunpack.c.h.b16 %v4253
        %v5363 = vunpack.c.l.b16 %v4254
        %v5364 = vunpack.c.h.b16 %v4254
        %v5365 = vunpack.c.l.b16 %v4255
        %v5366 = vunpack.c.h.b16 %v4255
        %v5367 = vunpack.c.l.b16 %v4256
        %v5368 = vunpack.c.h.b16 %v4256
        %v5369 = vunpack.c.l.b16 %v4257
        %v5370 = vunpack.c.h.b16 %v4257
        %v5371 = vunpack.c.l.b16 %v4258
        %v5372 = vunpack.c.h.b16 %v4258
        %v5373 = vunpack.c.l.b16 %v4259
        %v5374 = vunpack.c.h.b16 %v4259
        %v5375 = vunpack.c.l.b16 %v4260
        %v5376 = vunpack.c.h.b16 %v4260
        %v5377 = vunpack.c.l.b16 %v4261
        %v5378 = vunpack.c.h.b16 %v4261
        %v5379 = vunpack.c.l.b16 %v4262
        %v5380 = vunpack.c.h.b16 %v4262
        %v5381 = vunpack.c.l.b16 %v4263
        %v5382 = vunpack.c.h.b16 %v4263
        %v5383 = vunpack.c.l.b16 %v4264
        %v5384 = vunpack.c.h.b16 %v4264
        %v5385 = vunpack.c.l.b16 %v4265
        %v5386 = vunpack.c.h.b16 %v4265
        %v5387 = vunpack.c.l.b16 %v4266
        %v5388 = vunpack.c.h.b16 %v4266
        %v5389 = vunpack.c.l.b16 %v4267
        %v5390 = vunpack.c.h.b16 %v4267
        %v5391 = vunpack.c.l.b16 %v4268
        %v5392 = vunpack.c.h.b16 %v4268
        %v5393 = vunpack.c.l.b16 %v4269
        %v5394 = vunpack.c.h.b16 %v4269
        %v5395 = vunpack.c.l.b16 %v4270
        %v5396 = vunpack.c.h.b16 %v4270
        %v5397 = vunpack.c.l.b16 %v4271
        %v5398 = vunpack.c.h.b16 %v4271
        %v5399 = vunpack.c.l.b16 %v4272
        %v5400 = vunpack.c.h.b16 %v4272
        %v5401 = vunpack.c.l.b16 %v4273
        %v5402 = vunpack.c.h.b16 %v4273
        %v5403 = vunpack.c.l.b16 %v4274
        %v5404 = vunpack.c.h.b16 %v4274
        %v5405 = vunpack.c.l.b16 %v4275
        %v5406 = vunpack.c.h.b16 %v4275
        %v5407 = vunpack.c.l.b16 %v4276
        %v5408 = vunpack.c.h.b16 %v4276
        %v5409 = vunpack.c.l.b16 %v4277
        %v5410 = vunpack.c.h.b16 %v4277
        %v5411 = vunpack.c.l.b16 %v4278
        %v5412 = vunpack.c.h.b16 %v4278
        %v5413 = vunpack.c.l.b16 %v4279
        %v5414 = vunpack.c.h.b16 %v4279
        %v5415 = vunpack.c.l.b16 %v4280
        %v5416 = vunpack.c.h.b16 %v4280
        %v5417 = vunpack.c.l.b16 %v4281
        %v5418 = vunpack.c.h.b16 %v4281
        %v5419 = vunpack.c.l.b16 %v4282
        %v5420 = vunpack.c.h.b16 %v4282
        %v5421 = vunpack.c.l.b16 %v4283
        %v5422 = vunpack.c.h.b16 %v4283
        %v5423 = vunpack.c.l.b16 %v4284
        %v5424 = vunpack.c.h.b16 %v4284
        %v5425 = vunpack.c.l.b16 %v4285
        %v5426 = vunpack.c.h.b16 %v4285
        %v5427 = vunpack.c.l.b16 %v4286
        %v5428 = vunpack.c.h.b16 %v4286
        %v5429 = vunpack.c.l.b16 %v4287
        %v5430 = vunpack.c.h.b16 %v4287
        %v5431 = vunpack.c.l.b16 %v4288
        %v5432 = vunpack.c.h.b16 %v4288
        %v5433 = vunpack.c.l.b16 %v4289
        %v5434 = vunpack.c.h.b16 %v4289
        %v5435 = vunpack.c.l.b16 %v4290
        %v5436 = vunpack.c.h.b16 %v4290
        %v5437 = vunpack.c.l.b16 %v4291
        %v5438 = vunpack.c.h.b16 %v4291
        %v5439 = vunpack.c.l.b16 %v4292
        %v5440 = vunpack.c.h.b16 %v4292
        %v5441 = vunpack.c.l.b16 %v4293
        %v5442 = vunpack.c.h.b16 %v4293
        %v5443 = vunpack.c.l.b16 %v4294
        %v5444 = vunpack.c.h.b16 %v4294
        %v5445 = vunpack.c.l.b16 %v4295
        %v5446 = vunpack.c.h.b16 %v4295
        %v5447 = vunpack.c.l.b16 %v4296
        %v5448 = vunpack.c.h.b16 %v4296
        %v5449 = vunpack.c.l.b16 %v4297
        %v5450 = vunpack.c.h.b16 %v4297
        %v5451 = vunpack.c.l.b16 %v4298
        %v5452 = vunpack.c.h.b16 %v4298
        %v5453 = vunpack.c.l.b16 %v4299
        %v5454 = vunpack.c.h.b16 %v4299
        %v5455 = vunpack.c.l.b16 %v4300
        %v5456 = vunpack.c.h.b16 %v4300
        %v5457 = vunpack.c.l.b16 %v4301
        %v5458 = vunpack.c.h.b16 %v4301
        %v5459 = vunpack.c.l.b16 %v4302
        %v5460 = vunpack.c.h.b16 %v4302
        %v5461 = vunpack.c.l.b16 %v4303
        %v5462 = vunpack.c.h.b16 %v4303
        %v5463 = vunpack.c.l.b16 %v4304
        %v5464 = vunpack.c.h.b16 %v4304
        %v5465 = vunpack.c.l.b16 %v4305
        %v5466 = vunpack.c.h.b16 %v4305
        %v5467 = vunpack.c.l.b16 %v4306
        %v5468 = vunpack.c.h.b16 %v4306
        %v5469 = vunpack.c.l.b16 %v4307
        %v5470 = vunpack.c.h.b16 %v4307
        %v5471 = vunpack.c.l.b16 %v4308
        %v5472 = vunpack.c.h.b16 %v4308
        %v5473 = vunpack.c.l.b16 %v4309
        %v5474 = vunpack.c.h.b16 %v4309
        %v5475 = vunpack.c.l.b16 %v4310
        %v5476 = vunpack.c.h.b16 %v4310
        %v5477 = vunpack.c.l.b16 %v4311
        %v5478 = vunpack.c.h.b16 %v4311
        %v5479 = vunpack.c.l.b16 %v4312
        %v5480 = vunpack.c.h.b16 %v4312
        %v5481 = vunpack.c.l.b16 %v4313
        %v5482 = vunpack.c.h.b16 %v4313
        %v5483 = vunpack.c.l.b16 %v4314
        %v5484 = vunpack.c.h.b16 %v4314
        %v5485 = vunpack.c.l.b16 %v4315
        %v5486 = vunpack.c.h.b16 %v4315
        %v5487 = vunpack.c.l.b16 %v4316
        %v5488 = vunpack.c.h.b16 %v4316
        %v5489 = vunpack.c.l.b16 %v4317
        %v5490 = vunpack.c.h.b16 %v4317
        %v5491 = vunpack.c.l.b16 %v4318
        %v5492 = vunpack.c.h.b16 %v4318
        %v5493 = vunpack.c.l.b16 %v4319
        %v5494 = vunpack.c.h.b16 %v4319
        %v5495 = vunpack.c.l.b16 %v4320
        %v5496 = vunpack.c.h.b16 %v4320
        %v5497 = vunpack.c.l.b16 %v4321
        %v5498 = vunpack.c.h.b16 %v4321
        %v5499 = vunpack.c.l.b16 %v4322
        %v5500 = vunpack.c.h.b16 %v4322
        %v5501 = vunpack.c.l.b16 %v4323
        %v5502 = vunpack.c.h.b16 %v4323
        %v5503 = vunpack.c.l.b16 %v4324
        %v5504 = vunpack.c.h.b16 %v4324
        %v5505 = vunpack.c.l.b16 %v4325
        %v5506 = vunpack.c.h.b16 %v4325
        %v5507 = vunpack.c.l.b16 %v4326
        %v5508 = vunpack.c.h.b16 %v4326
        %v5509 = vunpack.c.l.b16 %v4327
        %v5510 = vunpack.c.h.b16 %v4327
        %v5511 = vunpack.c.l.b16 %v4328
        %v5512 = vunpack.c.h.b16 %v4328
        %v5513 = vunpack.c.l.b16 %v4329
        %v5514 = vunpack.c.h.b16 %v4329
        %v5515 = vunpack.c.l.b16 %v4330
        %v5516 = vunpack.c.h.b16 %v4330
        %v5517 = vunpack.c.l.b16 %v4331
        %v5518 = vunpack.c.h.b16 %v4331
        %v5519 = vunpack.c.l.b16 %v4332
        %v5520 = vunpack.c.h.b16 %v4332
        %v5521 = vunpack.c.l.b16 %v4333
        %v5522 = vunpack.c.h.b16 %v4333
        %v5523 = vunpack.c.l.b16 %v4334
        %v5524 = vunpack.c.h.b16 %v4334
        %v5525 = vunpack.c.l.b16 %v4335
        %v5526 = vunpack.c.h.b16 %v4335
        %v5527 = vunpack.c.l.b16 %v4336
        %v5528 = vunpack.c.h.b16 %v4336
        %v5529 = vunpack.c.l.b16 %v4337
        %v5530 = vunpack.c.h.b16 %v4337
        %v5531 = vunpack.c.l.b16 %v4338
        %v5532 = vunpack.c.h.b16 %v4338
        %v5533 = vunpack.c.l.b16 %v4339
        %v5534 = vunpack.c.h.b16 %v4339
        %v5535 = vunpack.c.l.b16 %v4340
        %v5536 = vunpack.c.h.b16 %v4340
        %v5537 = vunpack.c.l.b16 %v4341
        %v5538 = vunpack.c.h.b16 %v4341
        %v5539 = vunpack.c.l.b16 %v4342
        %v5540 = vunpack.c.h.b16 %v4342
        %v5541 = vunpack.c.l.b16 %v4343
        %v5542 = vunpack.c.h.b16 %v4343
        %v5543 = vunpack.c.l.b16 %v4344
        %v5544 = vunpack.c.h.b16 %v4344
        %v5545 = vunpack.c.l.b16 %v4345
        %v5546 = vunpack.c.h.b16 %v4345
        %v5547 = vunpack.c.l.b16 %v4346
        %v5548 = vunpack.c.h.b16 %v4346
        %v5549 = vunpack.c.l.b16 %v4347
        %v5550 = vunpack.c.h.b16 %v4347
        %v5551 = vunpack.c.l.b16 %v4348
        %v5552 = vunpack.c.h.b16 %v4348
        %v5553 = vunpack.c.l.b16 %v4349
        %v5554 = vunpack.c.h.b16 %v4349
        %v5555 = vunpack.c.l.b16 %v4350
        %v5556 = vunpack.c.h.b16 %v4350
        %v5557 = vunpack.c.l.b16 %v4351
        %v5558 = vunpack.c.h.b16 %v4351
        %v5559 = vunpack.c.l.b16 %v4352
        %v5560 = vunpack.c.h.b16 %v4352
        %v5561 = vunpack.c.l.b16 %v4353
        %v5562 = vunpack.c.h.b16 %v4353
        %v5563 = vunpack.c.l.b16 %v4354
        %v5564 = vunpack.c.h.b16 %v4354
        %v5565 = vunpack.c.l.b16 %v4355
        %v5566 = vunpack.c.h.b16 %v4355
        %v5567 = vunpack.c.l.b16 %v4356
        %v5568 = vunpack.c.h.b16 %v4356
        %v5569 = vunpack.c.l.b16 %v4357
        %v5570 = vunpack.c.h.b16 %v4357
        %v5571 = vunpack.c.l.b16 %v4358
        %v5572 = vunpack.c.h.b16 %v4358
        %v5573 = vunpack.c.l.b16 %v4359
        %v5574 = vunpack.c.h.b16 %v4359
        %v5575 = vunpack.c.l.b16 %v4360
        %v5576 = vunpack.c.h.b16 %v4360
        %v5577 = vunpack.c.l.b16 %v4361
        %v5578 = vunpack.c.h.b16 %v4361
        %v5579 = vunpack.c.l.b16 %v4362
        %v5580 = vunpack.c.h.b16 %v4362
        %v5581 = vunpack.c.l.b16 %v4363
        %v5582 = vunpack.c.h.b16 %v4363
        %v5583 = vunpack.c.l.b16 %v4364
        %v5584 = vunpack.c.h.b16 %v4364
        %v5585 = vunpack.c.l.b16 %v4365
        %v5586 = vunpack.c.h.b16 %v4365
        %v5587 = vunpack.c.l.b16 %v4366
        %v5588 = vunpack.c.h.b16 %v4366
        %v5589 = vunpack.c.l.b16 %v4367
        %v5590 = vunpack.c.h.b16 %v4367
        %v5591 = vunpack.c.l.b16 %v4368
        %v5592 = vunpack.c.h.b16 %v4368
        %v5593 = vunpack.c.l.b16 %v4369
        %v5594 = vunpack.c.h.b16 %v4369
        %v5595 = vunpack.c.l.b16 %v4370
        %v5596 = vunpack.c.h.b16 %v4370
        %v5597 = vunpack.c.l.b16 %v4371
        %v5598 = vunpack.c.h.b16 %v4371
        %v5599 = vunpack.c.l.b16 %v4372
        %v5600 = vunpack.c.h.b16 %v4372
        %v5601 = vunpack.c.l.b16 %v4373
        %v5602 = vunpack.c.h.b16 %v4373
        %v5603 = vunpack.c.l.b16 %v4374
        %v5604 = vunpack.c.h.b16 %v4374
        %v5605 = vunpack.c.l.b16 %v4375
        %v5606 = vunpack.c.h.b16 %v4375
        %v5607 = vunpack.c.l.b16 %v4376
        %v5608 = vunpack.c.h.b16 %v4376
        %v5609 = vunpack.c.l.b16 %v4377
        %v5610 = vunpack.c.h.b16 %v4377
        %v5611 = vunpack.c.l.b16 %v4378
        %v5612 = vunpack.c.h.b16 %v4378
        %v5613 = vunpack.c.l.b16 %v4379
        %v5614 = vunpack.c.h.b16 %v4379
        %v5615 = vunpack.c.l.b16 %v4380
        %v5616 = vunpack.c.h.b16 %v4380
        %v5617 = vunpack.c.l.b16 %v4381
        %v5618 = vunpack.c.h.b16 %v4381
        %v5619 = vunpack.c.l.b16 %v4382
        %v5620 = vunpack.c.h.b16 %v4382
        %v5621 = vunpack.c.l.b16 %v4383
        %v5622 = vunpack.c.h.b16 %v4383
        %v5623 = vunpack.c.l.b16 %v4384
        %v5624 = vunpack.c.h.b16 %v4384
        %v5625 = vunpack.c.l.b16 %v4385
        %v5626 = vunpack.c.h.b16 %v4385
        %v5627 = vunpack.c.l.b16 %v4386
        %v5628 = vunpack.c.h.b16 %v4386
        %v5629 = vunpack.c.l.b16 %v4387
        %v5630 = vunpack.c.h.b16 %v4387
        %v5631 = vunpack.c.l.b16 %v4388
        %v5632 = vunpack.c.h.b16 %v4388
        %v5633 = vunpack.c.l.b16 %v4389
        %v5634 = vunpack.c.h.b16 %v4389
        %v5635 = vunpack.c.l.b16 %v4390
        %v5636 = vunpack.c.h.b16 %v4390
        %v5637 = vunpack.c.l.b16 %v4391
        %v5638 = vunpack.c.h.b16 %v4391
        %v5639 = vunpack.c.l.b16 %v4392
        %v5640 = vunpack.c.h.b16 %v4392
        %v5641 = vunpack.c.l.b16 %v4393
        %v5642 = vunpack.c.h.b16 %v4393
        %v5643 = vunpack.c.l.b16 %v4394
        %v5644 = vunpack.c.h.b16 %v4394
        %v5645 = vunpack.c.l.b16 %v4395
        %v5646 = vunpack.c.h.b16 %v4395
        %v5647 = vunpack.c.l.b16 %v4396
        %v5648 = vunpack.c.h.b16 %v4396
        %v5649 = vunpack.c.l.b16 %v4397
        %v5650 = vunpack.c.h.b16 %v4397
        %v5651 = vunpack.c.l.b16 %v4398
        %v5652 = vunpack.c.h.b16 %v4398
        %v5653 = vunpack.c.l.b16 %v4399
        %v5654 = vunpack.c.h.b16 %v4399
        %v5655 = vunpack.c.l.b16 %v4400
        %v5656 = vunpack.c.h.b16 %v4400
        %v5657 = vunpack.c.l.b16 %v4401
        %v5658 = vunpack.c.h.b16 %v4401
        %v5659 = vunpack.c.l.b16 %v4402
        %v5660 = vunpack.c.h.b16 %v4402
        %v5661 = vunpack.c.l.b16 %v4403
        %v5662 = vunpack.c.h.b16 %v4403
        %v5663 = vunpack.c.l.b16 %v4404
        %v5664 = vunpack.c.h.b16 %v4404
        %v5665 = vunpack.c.l.b16 %v4405
        %v5666 = vunpack.c.h.b16 %v4405
        %v5667 = vunpack.c.l.b16 %v4406
        %v5668 = vunpack.c.h.b16 %v4406
        %v5669 = vunpack.c.l.b16 %v4407
        %v5670 = vunpack.c.h.b16 %v4407
        %v5671 = vunpack.c.l.b16 %v4408
        %v5672 = vunpack.c.h.b16 %v4408
        %v5673 = vunpack.c.l.b16 %v4409
        %v5674 = vunpack.c.h.b16 %v4409
        %v5675 = vunpack.c.l.b16 %v4410
        %v5676 = vunpack.c.h.b16 %v4410
        %v5677 = vunpack.c.l.b16 %v4411
        %v5678 = vunpack.c.h.b16 %v4411
        %v5679 = vunpack.c.l.b16 %v4412
        %v5680 = vunpack.c.h.b16 %v4412
        %v5681 = vunpack.c.l.b16 %v4413
        %v5682 = vunpack.c.h.b16 %v4413
        %v5683 = vunpack.c.l.b16 %v4414
        %v5684 = vunpack.c.h.b16 %v4414
        %v5685 = vunpack.c.l.b16 %v4415
        %v5686 = vunpack.c.h.b16 %v4415
        %v5687 = vunpack.c.l.b16 %v4416
        %v5688 = vunpack.c.h.b16 %v4416
        %v5689 = vunpack.c.l.b16 %v4417
        %v5690 = vunpack.c.h.b16 %v4417
        %v5691 = vunpack.c.l.b16 %v4418
        %v5692 = vunpack.c.h.b16 %v4418
        %v5693 = vunpack.c.l.b16 %v4419
        %v5694 = vunpack.c.h.b16 %v4419
        %v5695 = vunpack.c.l.b16 %v4420
        %v5696 = vunpack.c.h.b16 %v4420
        %v5697 = vunpack.c.l.b16 %v4421
        %v5698 = vunpack.c.h.b16 %v4421
        %v5699 = vunpack.c.l.b16 %v4422
        %v5700 = vunpack.c.h.b16 %v4422
        %v5701 = vunpack.c.l.b16 %v4423
        %v5702 = vunpack.c.h.b16 %v4423
        %v5703 = vunpack.c.l.b16 %v4424
        %v5704 = vunpack.c.h.b16 %v4424
        %v5705 = vunpack.c.l.b16 %v4425
        %v5706 = vunpack.c.h.b16 %v4425
        %v5707 = vunpack.c.l.b16 %v4426
        %v5708 = vunpack.c.h.b16 %v4426
        %v5709 = vunpack.c.l.b16 %v4427
        %v5710 = vunpack.c.h.b16 %v4427
        %v5711 = vunpack.c.l.b16 %v4428
        %v5712 = vunpack.c.h.b16 %v4428
        %v5713 = vunpack.c.l.b16 %v4429
        %v5714 = vunpack.c.h.b16 %v4429
        %v5715 = vunpack.c.l.b16 %v4430
        %v5716 = vunpack.c.h.b16 %v4430
        %v5717 = vunpack.c.l.b16 %v4431
        %v5718 = vunpack.c.h.b16 %v4431
        %v5719 = vunpack.c.l.b16 %v4432
        %v5720 = vunpack.c.h.b16 %v4432
        %v5721 = vunpack.c.l.b16 %v4433
        %v5722 = vunpack.c.h.b16 %v4433
        %v5723 = vunpack.c.l.b16 %v4434
        %v5724 = vunpack.c.h.b16 %v4434
        %v5725 = vunpack.c.l.b16 %v4435
        %v5726 = vunpack.c.h.b16 %v4435
        %v5727 = vunpack.c.l.b16 %v4436
        %v5728 = vunpack.c.h.b16 %v4436
        %v5729 = vunpack.c.l.b16 %v4437
        %v5730 = vunpack.c.h.b16 %v4437
        %v5731 = vunpack.c.l.b16 %v4438
        %v5732 = vunpack.c.h.b16 %v4438
        %v5733 = vunpack.c.l.b16 %v4439
        %v5734 = vunpack.c.h.b16 %v4439
        %v5735 = vunpack.c.l.b16 %v4440
        %v5736 = vunpack.c.h.b16 %v4440
        %v5737 = vunpack.c.l.b16 %v4441
        %v5738 = vunpack.c.h.b16 %v4441
        %v5739 = vunpack.c.l.b16 %v4442
        %v5740 = vunpack.c.h.b16 %v4442
        %v5741 = vunpack.c.l.b16 %v4443
        %v5742 = vunpack.c.h.b16 %v4443
        %v5743 = vunpack.c.l.b16 %v4444
        %v5744 = vunpack.c.h.b16 %v4444
        %v5745 = vunpack.c.l.b16 %v4445
        %v5746 = vunpack.c.h.b16 %v4445
        %v5747 = vunpack.c.l.b16 %v4446
        %v5748 = vunpack.c.h.b16 %v4446
        %v5749 = vunpack.c.l.b16 %v4447
        %v5750 = vunpack.c.h.b16 %v4447
        %v5751 = vunpack.c.l.b16 %v4448
        %v5752 = vunpack.c.h.b16 %v4448
        %v5753 = vunpack.c.l.b16 %v4449
        %v5754 = vunpack.c.h.b16 %v4449
        %v5755 = vunpack.c.l.b16 %v4450
        %v5756 = vunpack.c.h.b16 %v4450
        %v5757 = vunpack.c.l.b16 %v4451
        %v5758 = vunpack.c.h.b16 %v4451
        %v5759 = vunpack.c.l.b16 %v4452
        %v5760 = vunpack.c.h.b16 %v4452
        %v5761 = vunpack.c.l.b16 %v4453
        %v5762 = vunpack.c.h.b16 %v4453
        %v5763 = vunpack.c.l.b16 %v4454
        %v5764 = vunpack.c.h.b16 %v4454
        %v5765 = vunpack.c.l.b16 %v4455
        %v5766 = vunpack.c.h.b16 %v4455
        %v5767 = vunpack.c.l.b16 %v4456
        %v5768 = vunpack.c.h.b16 %v4456
        %v5769 = vunpack.c.l.b16 %v4457
        %v5770 = vunpack.c.h.b16 %v4457
        %v5771 = vunpack.c.l.b16 %v4458
        %v5772 = vunpack.c.h.b16 %v4458
        %v5773 = vunpack.c.l.b16 %v4459
        %v5774 = vunpack.c.h.b16 %v4459
        %v5775 = vunpack.c.l.b16 %v4460
        %v5776 = vunpack.c.h.b16 %v4460
        %v5777 = vunpack.c.l.b16 %v4461
        %v5778 = vunpack.c.h.b16 %v4461
        %v5779 = vunpack.c.l.b16 %v4462
        %v5780 = vunpack.c.h.b16 %v4462
        %v5781 = vunpack.c.l.b16 %v4463
        %v5782 = vunpack.c.h.b16 %v4463
        %v5783 = vunpack.c.l.b16 %v4464
        %v5784 = vunpack.c.h.b16 %v4464
        %v5785 = vunpack.c.l.b16 %v4465
        %v5786 = vunpack.c.h.b16 %v4465
        %v5787 = vunpack.c.l.b16 %v4466
        %v5788 = vunpack.c.h.b16 %v4466
        %v5789 = vunpack.c.l.b16 %v4467
        %v5790 = vunpack.c.h.b16 %v4467
        %v5791 = vunpack.c.l.b16 %v4468
        %v5792 = vunpack.c.h.b16 %v4468
        %v5793 = vunpack.c.l.b16 %v4469
        %v5794 = vunpack.c.h.b16 %v4469
        %v5795 = vunpack.c.l.b16 %v4470
        %v5796 = vunpack.c.h.b16 %v4470
        %v5797 = vunpack.c.l.b16 %v4471
        %v5798 = vunpack.c.h.b16 %v4471
        %v5799 = vunpack.c.l.b16 %v4472
        %v5800 = vunpack.c.h.b16 %v4472
        %v5801 = vunpack.c.l.b16 %v4473
        %v5802 = vunpack.c.h.b16 %v4473
        %v5803 = vunpack.c.l.b16 %v4474
        %v5804 = vunpack.c.h.b16 %v4474
        %v5805 = vunpack.c.l.b16 %v4475
        %v5806 = vunpack.c.h.b16 %v4475
        %v5807 = vunpack.c.l.b16 %v4476
        %v5808 = vunpack.c.h.b16 %v4476
        %v5809 = vunpack.c.l.b16 %v4477
        %v5810 = vunpack.c.h.b16 %v4477
        %v5811 = vunpack.c.l.b16 %v4478
        %v5812 = vunpack.c.h.b16 %v4478
        %v5813 = vunpack.c.l.b16 %v4479
        %v5814 = vunpack.c.h.b16 %v4479
        %v5815 = vunpack.c.l.b16 %v4480
        %v5816 = vunpack.c.h.b16 %v4480
        %v5817 = vunpack.c.l.b16 %v4481
        %v5818 = vunpack.c.h.b16 %v4481
        %v5819 = vunpack.c.l.b16 %v4482
        %v5820 = vunpack.c.h.b16 %v4482
        %v5821 = vunpack.c.l.b16 %v4483
        %v5822 = vunpack.c.h.b16 %v4483
        %v5823 = vunpack.c.l.b16 %v4484
        %v5824 = vunpack.c.h.b16 %v4484
        %v5825 = vunpack.c.l.b16 %v4485
        %v5826 = vunpack.c.h.b16 %v4485
        %v5827 = vunpack.c.l.b16 %v4486
        %v5828 = vunpack.c.h.b16 %v4486
        %v5829 = vunpack.c.l.b16 %v4487
        %v5830 = vunpack.c.h.b16 %v4487
        %v5831 = vunpack.c.l.b16 %v4488
        %v5832 = vunpack.c.h.b16 %v4488
        %v5833 = vunpack.c.l.b16 %v4489
        %v5834 = vunpack.c.h.b16 %v4489
        %v5835 = vunpack.c.l.b16 %v4490
        %v5836 = vunpack.c.h.b16 %v4490
        %v5837 = vunpack.c.l.b16 %v4491
        %v5838 = vunpack.c.h.b16 %v4491
        %v5839 = vunpack.c.l.b16 %v4492
        %v5840 = vunpack.c.h.b16 %v4492
        %v5841 = vunpack.c.l.b16 %v4493
        %v5842 = vunpack.c.h.b16 %v4493
        %v5843 = vunpack.c.l.b16 %v4494
        %v5844 = vunpack.c.h.b16 %v4494
        %v5845 = vunpack.c.l.b16 %v4495
        %v5846 = vunpack.c.h.b16 %v4495
        %v5847 = vunpack.c.l.b16 %v4496
        %v5848 = vunpack.c.h.b16 %v4496
        %v5849 = vunpack.c.l.b16 %v4497
        %v5850 = vunpack.c.h.b16 %v4497
        %v5851 = vunpack.c.l.b16 %v4498
        %v5852 = vunpack.c.h.b16 %v4498
        %v5853 = vunpack.c.l.b16 %v4499
        %v5854 = vunpack.c.h.b16 %v4499
        %v5855 = vunpack.c.l.b16 %v4500
        %v5856 = vunpack.c.h.b16 %v4500
        %v5857 = vunpack.c.l.b16 %v4501
        %v5858 = vunpack.c.h.b16 %v4501
        %v5859 = vunpack.c.l.b16 %v4502
        %v5860 = vunpack.c.h.b16 %v4502
        %v5861 = vunpack.c.l.b16 %v4503
        %v5862 = vunpack.c.h.b16 %v4503
        %v5863 = vunpack.c.l.b16 %v4504
        %v5864 = vunpack.c.h.b16 %v4504
        %v5865 = vunpack.c.l.b16 %v4505
        %v5866 = vunpack.c.h.b16 %v4505
        %v5867 = vunpack.c.l.b16 %v4506
        %v5868 = vunpack.c.h.b16 %v4506
        %v5869 = vunpack.c.l.b16 %v4507
        %v5870 = vunpack.c.h.b16 %v4507
        %v5871 = vunpack.c.l.b16 %v4508
        %v5872 = vunpack.c.h.b16 %v4508
        %v5873 = vunpack.c.l.b16 %v4509
        %v5874 = vunpack.c.h.b16 %v4509
        %v5875 = vunpack.c.l.b16 %v4510
        %v5876 = vunpack.c.h.b16 %v4510
        %v5877 = vunpack.c.l.b16 %v4511
        %v5878 = vunpack.c.h.b16 %v4511
        %v5879 = vunpack.c.l.b16 %v4512
        %v5880 = vunpack.c.h.b16 %v4512
        %v5881 = vunpack.c.l.b16 %v4513
        %v5882 = vunpack.c.h.b16 %v4513
        %v5883 = vunpack.c.l.b16 %v4514
        %v5884 = vunpack.c.h.b16 %v4514
        %v5885 = vunpack.c.l.b16 %v4515
        %v5886 = vunpack.c.h.b16 %v4515
        %v5887 = vunpack.c.l.b16 %v4516
        %v5888 = vunpack.c.h.b16 %v4516
        %v5889 = vunpack.c.l.b16 %v4517
        %v5890 = vunpack.c.h.b16 %v4517
        %v5891 = vunpack.c.l.b16 %v4518
        %v5892 = vunpack.c.h.b16 %v4518
        %v5893 = vunpack.c.l.b16 %v4519
        %v5894 = vunpack.c.h.b16 %v4519
        %v5895 = vunpack.c.l.b16 %v4520
        %v5896 = vunpack.c.h.b16 %v4520
        %v5897 = vunpack.c.l.b16 %v4521
        %v5898 = vunpack.c.h.b16 %v4521
        %v5899 = vunpack.c.l.b16 %v4522
        %v5900 = vunpack.c.h.b16 %v4522
        %v5901 = vunpack.c.l.b16 %v4523
        %v5902 = vunpack.c.h.b16 %v4523
        %v5903 = vunpack.c.l.b16 %v4524
        %v5904 = vunpack.c.h.b16 %v4524
        %v5905 = vunpack.c.l.b16 %v4525
        %v5906 = vunpack.c.h.b16 %v4525
        %v5907 = vunpack.c.l.b16 %v4526
        %v5908 = vunpack.c.h.b16 %v4526
        %v5909 = vunpack.c.l.b16 %v4527
        %v5910 = vunpack.c.h.b16 %v4527
        %v5911 = vunpack.c.l.b16 %v4528
        %v5912 = vunpack.c.h.b16 %v4528
        %v5913 = vunpack.c.l.b16 %v4529
        %v5914 = vunpack.c.h.b16 %v4529
        %v5915 = vunpack.c.l.b16 %v4530
        %v5916 = vunpack.c.h.b16 %v4530
        %v5917 = vunpack.c.l.b16 %v4531
        %v5918 = vunpack.c.h.b16 %v4531
        %v5919 = vunpack.c.l.b16 %v4532
        %v5920 = vunpack.c.h.b16 %v4532
        %v5921 = vunpack.c.l.b16 %v4533
        %v5922 = vunpack.c.h.b16 %v4533
        %v5923 = vunpack.c.l.b16 %v4534
        %v5924 = vunpack.c.h.b16 %v4534
        %v5925 = vunpack.c.l.b16 %v4535
        %v5926 = vunpack.c.h.b16 %v4535
        %v5927 = vunpack.c.l.b16 %v4536
        %v5928 = vunpack.c.h.b16 %v4536
        %v5929 = vunpack.c.l.b16 %v4537
        %v5930 = vunpack.c.h.b16 %v4537
        %v5931 = vunpack.c.l.b16 %v4538
        %v5932 = vunpack.c.h.b16 %v4538
        %v5933 = vunpack.c.l.b16 %v4539
        %v5934 = vunpack.c.h.b16 %v4539
        %v5935 = vunpack.c.l.b16 %v4540
        %v5936 = vunpack.c.h.b16 %v4540
        %v5937 = vunpack.c.l.b16 %v4541
        %v5938 = vunpack.c.h.b16 %v4541
        %v5939 = vunpack.c.l.b16 %v4542
        %v5940 = vunpack.c.h.b16 %v4542
        %v5941 = vunpack.c.l.b16 %v4543
        %v5942 = vunpack.c.h.b16 %v4543
        %v5943 = vunpack.c.l.b16 %v4544
        %v5944 = vunpack.c.h.b16 %v4544
        %v5945 = vunpack.c.l.b16 %v4545
        %v5946 = vunpack.c.h.b16 %v4545
        %v5947 = vunpack.c.l.b16 %v4546
        %v5948 = vunpack.c.h.b16 %v4546
        %v5949 = vunpack.c.l.b16 %v4547
        %v5950 = vunpack.c.h.b16 %v4547
        %v5951 = vunpack.c.l.b16 %v4548
        %v5952 = vunpack.c.h.b16 %v4548
        %v5953 = vunpack.c.l.b16 %v4549
        %v5954 = vunpack.c.h.b16 %v4549
        %v5955 = vunpack.c.l.b16 %v4550
        %v5956 = vunpack.c.h.b16 %v4550
        %v5957 = vunpack.c.l.b16 %v4551
        %v5958 = vunpack.c.h.b16 %v4551
        %v5959 = vunpack.c.l.b16 %v4552
        %v5960 = vunpack.c.h.b16 %v4552
        %v5961 = vunpack.c.l.b16 %v4553
        %v5962 = vunpack.c.h.b16 %v4553
        %v5963 = vunpack.c.l.b16 %v4554
        %v5964 = vunpack.c.h.b16 %v4554
        %v5965 = vunpack.c.l.b16 %v4555
        %v5966 = vunpack.c.h.b16 %v4555
        %v5967 = vunpack.c.l.b16 %v4556
        %v5968 = vunpack.c.h.b16 %v4556
        %v5969 = vunpack.c.l.b16 %v4557
        %v5970 = vunpack.c.h.b16 %v4557
        %v5971 = vunpack.c.l.b16 %v4558
        %v5972 = vunpack.c.h.b16 %v4558
        %v5973 = vunpack.c.l.b16 %v4559
        %v5974 = vunpack.c.h.b16 %v4559
        %v5975 = vunpack.c.l.b16 %v4560
        %v5976 = vunpack.c.h.b16 %v4560
        %v5977 = vunpack.c.l.b16 %v4561
        %v5978 = vunpack.c.h.b16 %v4561
        %v5979 = vunpack.c.l.b16 %v4562
        %v5980 = vunpack.c.h.b16 %v4562
        %v5981 = vunpack.c.l.b16 %v4563
        %v5982 = vunpack.c.h.b16 %v4563
        %v5983 = vunpack.c.l.b16 %v4564
        %v5984 = vunpack.c.h.b16 %v4564
        %v5985 = vunpack.c.l.b16 %v4565
        %v5986 = vunpack.c.h.b16 %v4565
        %v5987 = vunpack.c.l.b16 %v4566
        %v5988 = vunpack.c.h.b16 %v4566
        %v5989 = vunpack.c.l.b16 %v4567
        %v5990 = vunpack.c.h.b16 %v4567
        %v5991 = vunpack.c.l.b16 %v4568
        %v5992 = vunpack.c.h.b16 %v4568
        %v5993 = vunpack.c.l.b16 %v4569
        %v5994 = vunpack.c.h.b16 %v4569
        %v5995 = vunpack.c.l.b16 %v4570
        %v5996 = vunpack.c.h.b16 %v4570
        %v5997 = vunpack.c.l.b16 %v4571
        %v5998 = vunpack.c.h.b16 %v4571
        %v5999 = vunpack.c.l.b16 %v4572
        %v6000 = vunpack.c.h.b16 %v4572
        %v6001 = vunpack.c.l.b16 %v4573
        %v6002 = vunpack.c.h.b16 %v4573
        %v6003 = vunpack.c.l.b16 %v4574
        %v6004 = vunpack.c.h.b16 %v4574
        %v6005 = vunpack.c.l.b16 %v4575
        %v6006 = vunpack.c.h.b16 %v4575
        %v6007 = vunpack.c.l.b16 %v4576
        %v6008 = vunpack.c.h.b16 %v4576
        %v6009 = vunpack.c.l.b16 %v4577
        %v6010 = vunpack.c.h.b16 %v4577
        %v6011 = vunpack.c.l.b16 %v4578
        %v6012 = vunpack.c.h.b16 %v4578
        %v6013 = vunpack.c.l.b16 %v4579
        %v6014 = vunpack.c.h.b16 %v4579
        %v6015 = vunpack.c.l.b16 %v4580
        %v6016 = vunpack.c.h.b16 %v4580
        %v6017 = vunpack.c.l.b16 %v4581
        %v6018 = vunpack.c.h.b16 %v4581
        %v6019 = vunpack.c.l.b16 %v4582
        %v6020 = vunpack.c.h.b16 %v4582
        %v6021 = vunpack.c.l.b16 %v4583
        %v6022 = vunpack.c.h.b16 %v4583
        %v6023 = vunpack.c.l.b16 %v4584
        %v6024 = vunpack.c.h.b16 %v4584
        %v6025 = vunpack.c.l.b16 %v4585
        %v6026 = vunpack.c.h.b16 %v4585
        %v6027 = vunpack.c.l.b16 %v4586
        %v6028 = vunpack.c.h.b16 %v4586
        %v6029 = vunpack.c.l.b16 %v4587
        %v6030 = vunpack.c.h.b16 %v4587
        %v6031 = vunpack.c.l.b16 %v4588
        %v6032 = vunpack.c.h.b16 %v4588
        %v6033 = vunpack.c.l.b16 %v4589
        %v6034 = vunpack.c.h.b16 %v4589
        %v6035 = vunpack.c.l.b16 %v4590
        %v6036 = vunpack.c.h.b16 %v4590
        %v6037 = vunpack.c.l.b16 %v4591
        %v6038 = vunpack.c.h.b16 %v4591
        %v6039 = vunpack.c.l.b16 %v4592
        %v6040 = vunpack.c.h.b16 %v4592
        %v6041 = vunpack.c.l.b16 %v4593
        %v6042 = vunpack.c.h.b16 %v4593
        %v6043 = vunpack.c.l.b16 %v4594
        %v6044 = vunpack.c.h.b16 %v4594
        %v6045 = vunpack.c.l.b16 %v4595
        %v6046 = vunpack.c.h.b16 %v4595
        %v6047 = vunpack.c.l.b16 %v4596
        %v6048 = vunpack.c.h.b16 %v4596
        %v6049 = vunpack.c.l.b16 %v4597
        %v6050 = vunpack.c.h.b16 %v4597
        %v6051 = vunpack.c.l.b16 %v4598
        %v6052 = vunpack.c.h.b16 %v4598
        %v6053 = vunpack.c.l.b16 %v4599
        %v6054 = vunpack.c.h.b16 %v4599
        %v6055 = vunpack.c.l.b16 %v4600
        %v6056 = vunpack.c.h.b16 %v4600
        %v6057 = vunpack.c.l.b16 %v4601
        %v6058 = vunpack.c.h.b16 %v4601
        %v6059 = vunpack.c.l.b16 %v4602
        %v6060 = vunpack.c.h.b16 %v4602
        %v6061 = vunpack.c.l.b16 %v4603
        %v6062 = vunpack.c.h.b16 %v4603
        %v6063 = vunpack.c.l.b16 %v4604
        %v6064 = vunpack.c.h.b16 %v4604
        %v6065 = vunpack.c.l.b16 %v4605
        %v6066 = vunpack.c.h.b16 %v4605
        %v6067 = vunpack.c.l.b16 %v4606
        %v6068 = vunpack.c.h.b16 %v4606
        %v6069 = vunpack.c.l.b16 %v4607
        %v6070 = vunpack.c.h.b16 %v4607
        %v6071 = vunpack.c.l.b16 %v4608
        %v6072 = vunpack.c.h.b16 %v4608
        %v6073 = vunpack.c.l.b16 %v4609
        %v6074 = vunpack.c.h.b16 %v4609
        %v6075 = vunpack.c.l.b16 %v4610
        %v6076 = vunpack.c.h.b16 %v4610
        %v6077 = vunpack.c.l.b16 %v4611
        %v6078 = vunpack.c.h.b16 %v4611
        %v6079 = vunpack.c.l.b16 %v4612
        %v6080 = vunpack.c.h.b16 %v4612
        %v6081 = vunpack.c.l.b16 %v4613
        %v6082 = vunpack.c.h.b16 %v4613
        %v6083 = vunpack.c.l.b16 %v4614
        %v6084 = vunpack.c.h.b16 %v4614
        %v6085 = vunpack.c.l.b16 %v4615
        %v6086 = vunpack.c.h.b16 %v4615
        %v6087 = vunpack.c.l.b16 %v4616
        %v6088 = vunpack.c.h.b16 %v4616
        %v6089 = vunpack.c.l.b16 %v4617
        %v6090 = vunpack.c.h.b16 %v4617
        %v6091 = vunpack.c.l.b16 %v4618
        %v6092 = vunpack.c.h.b16 %v4618
        %v6093 = vunpack.c.l.b16 %v4619
        %v6094 = vunpack.c.h.b16 %v4619
        %v6095 = vunpack.c.l.b16 %v4620
        %v6096 = vunpack.c.h.b16 %v4620
        %v6097 = vunpack.c.l.b16 %v4621
        %v6098 = vunpack.c.h.b16 %v4621
        %v6099 = vunpack.c.l.b16 %v4622
        %v6100 = vunpack.c.h.b16 %v4622
        %v6101 = vunpack.c.l.b16 %v4623
        %v6102 = vunpack.c.h.b16 %v4623
        %v6103 = vunpack.c.l.b16 %v4624
        %v6104 = vunpack.c.h.b16 %v4624
        %v6105 = vunpack.c.l.b16 %v4625
        %v6106 = vunpack.c.h.b16 %v4625
        %v6107 = vunpack.c.l.b16 %v4626
        %v6108 = vunpack.c.h.b16 %v4626
        %v6109 = vunpack.c.l.b16 %v4627
        %v6110 = vunpack.c.h.b16 %v4627
        %v6111 = vunpack.c.l.b16 %v4628
        %v6112 = vunpack.c.h.b16 %v4628
        %v6113 = vunpack.c.l.b16 %v4629
        %v6114 = vunpack.c.h.b16 %v4629
        %v6115 = vunpack.c.l.b16 %v4630
        %v6116 = vunpack.c.h.b16 %v4630
        %v6117 = vunpack.c.l.b16 %v4631
        %v6118 = vunpack.c.h.b16 %v4631
        %v6119 = vunpack.c.l.b16 %v4632
        %v6120 = vunpack.c.h.b16 %v4632
        %v6121 = vunpack.c.l.b16 %v4633
        %v6122 = vunpack.c.h.b16 %v4633
        %v6123 = vunpack.c.l.b16 %v4634
        %v6124 = vunpack.c.h.b16 %v4634
        %v6125 = vunpack.c.l.b16 %v4635
        %v6126 = vunpack.c.h.b16 %v4635
        %v6127 = vunpack.c.l.b16 %v4636
        %v6128 = vunpack.c.h.b16 %v4636
        %v6129 = vunpack.c.l.b16 %v4637
        %v6130 = vunpack.c.h.b16 %v4637
        %v6131 = vunpack.c.l.b16 %v4638
        %v6132 = vunpack.c.h.b16 %v4638
        %v6133 = vunpack.c.l.b16 %v4639
        %v6134 = vunpack.c.h.b16 %v4639
        %v6135 = vunpack.c.l.b16 %v4640
        %v6136 = vunpack.c.h.b16 %v4640
        %v6137 = vunpack.c.l.b16 %v4641
        %v6138 = vunpack.c.h.b16 %v4641
        %v6139 = vunpack.c.l.b16 %v4642
        %v6140 = vunpack.c.h.b16 %v4642
        %v6141 = vunpack.c.l.b16 %v4643
        %v6142 = vunpack.c.h.b16 %v4643
        %v6143 = vunpack.c.l.b16 %v4644
        %v6144 = vunpack.c.h.b16 %v4644
        %v6145 = vunpack.c.l.b16 %v4645
        %v6146 = vunpack.c.h.b16 %v4645
        %v6147 = vunpack.c.l.b16 %v4646
        %v6148 = vunpack.c.h.b16 %v4646
        %v6149 = vunpack.c.l.b16 %v4647
        %v6150 = vunpack.c.h.b16 %v4647
        %v6151 = vunpack.c.l.b16 %v4648
        %v6152 = vunpack.c.h.b16 %v4648
        %v6153 = vunpack.c.l.b16 %v4649
        %v6154 = vunpack.c.h.b16 %v4649
        %v6155 = vunpack.c.l.b16 %v4650
        %v6156 = vunpack.c.h.b16 %v4650
        %v6157 = vunpack.c.l.b16 %v4651
        %v6158 = vunpack.c.h.b16 %v4651
        %v6159 = vunpack.c.l.b16 %v4652
        %v6160 = vunpack.c.h.b16 %v4652
        %v6161 = vunpack.c.l.b16 %v4653
        %v6162 = vunpack.c.h.b16 %v4653
        %v6163 = vunpack.c.l.b16 %v4654
        %v6164 = vunpack.c.h.b16 %v4654
        %v6165 = vunpack.c.l.b16 %v4655
        %v6166 = vunpack.c.h.b16 %v4655
        %v6167 = vunpack.c.l.b16 %v4656
        %v6168 = vunpack.c.h.b16 %v4656
        %v6169 = vunpack.c.l.b16 %v4657
        %v6170 = vunpack.c.h.b16 %v4657
        %v6171 = vunpack.c.l.b16 %v4658
        %v6172 = vunpack.c.h.b16 %v4658
        %v6173 = vunpack.c.l.b16 %v4659
        %v6174 = vunpack.c.h.b16 %v4659
        %v6175 = vunpack.c.l.b16 %v4660
        %v6176 = vunpack.c.h.b16 %v4660
        %v6177 = vunpack.c.l.b16 %v4661
        %v6178 = vunpack.c.h.b16 %v4661
        %v6179 = vunpack.c.l.b16 %v4662
        %v6180 = vunpack.c.h.b16 %v4662
        %v6181 = vunpack.c.l.b16 %v4663
        %v6182 = vunpack.c.h.b16 %v4663
        %v6183 = vunpack.c.l.b16 %v4664
        %v6184 = vunpack.c.h.b16 %v4664
        %v6185 = vunpack.c.l.b16 %v4665
        %v6186 = vunpack.c.h.b16 %v4665
        %v6187 = vunpack.c.l.b16 %v4666
        %v6188 = vunpack.c.h.b16 %v4666
        %v6189 = vunpack.c.l.b16 %v4667
        %v6190 = vunpack.c.h.b16 %v4667
        %v6191 = vunpack.c.l.b16 %v4668
        %v6192 = vunpack.c.h.b16 %v4668
        %v6193 = vunpack.c.l.b16 %v4669
        %v6194 = vunpack.c.h.b16 %v4669
        %v6195 = vunpack.c.l.b16 %v4670
        %v6196 = vunpack.c.h.b16 %v4670
        %v6197 = vunpack.c.l.b16 %v4671
        %v6198 = vunpack.c.h.b16 %v4671
        %v6199 = vunpack.c.l.b16 %v4672
        %v6200 = vunpack.c.h.b16 %v4672
        %v6201 = vunpack.c.l.b16 %v4673
        %v6202 = vunpack.c.h.b16 %v4673
        %v6203 = vunpack.c.l.b16 %v4674
        %v6204 = vunpack.c.h.b16 %v4674
        %v6205 = vunpack.c.l.b16 %v4675
        %v6206 = vunpack.c.h.b16 %v4675
        %v6207 = vunpack.c.l.b16 %v4676
        %v6208 = vunpack.c.h.b16 %v4676
        %v6209 = vunpack.c.l.b16 %v4677
        %v6210 = vunpack.c.h.b16 %v4677
        %v6211 = vunpack.c.l.b16 %v4678
        %v6212 = vunpack.c.h.b16 %v4678
        %v6213 = vunpack.c.l.b16 %v4679
        %v6214 = vunpack.c.h.b16 %v4679
        %v6215 = vunpack.c.l.b16 %v4680
        %v6216 = vunpack.c.h.b16 %v4680
        %v6217 = vpack.c.b16 %v5201, %v5193
        %v6218 = vpack.c.b16 %v5202, %v5194
        %v6219 = vpack.c.b16 %v5203, %v5195
        %v6220 = vpack.c.b16 %v5204, %v5196
        %v6221 = vpack.c.b16 %v5205, %v5197
        %v6222 = vpack.c.b16 %v5206, %v5198
        %v6223 = vpack.c.b16 %v5207, %v5199
        %v6224 = vpack.c.b16 %v5208, %v5200
        %v6225 = vpack.c.b16 %v5217, %v5209
        %v6226 = vpack.c.b16 %v5218, %v5210
        %v6227 = vpack.c.b16 %v5219, %v5211
        %v6228 = vpack.c.b16 %v5220, %v5212
        %v6229 = vpack.c.b16 %v5221, %v5213
        %v6230 = vpack.c.b16 %v5222, %v5214
        %v6231 = vpack.c.b16 %v5223, %v5215
        %v6232 = vpack.c.b16 %v5224, %v5216
        %v6233 = vpack.c.b16 %v5233, %v5225
        %v6234 = vpack.c.b16 %v5234, %v5226
        %v6235 = vpack.c.b16 %v5235, %v5227
        %v6236 = vpack.c.b16 %v5236, %v5228
        %v6237 = vpack.c.b16 %v5237, %v5229
        %v6238 = vpack.c.b16 %v5238, %v5230
        %v6239 = vpack.c.b16 %v5239, %v5231
        %v6240 = vpack.c.b16 %v5240, %v5232
        %v6241 = vpack.c.b16 %v5249, %v5241
        %v6242 = vpack.c.b16 %v5250, %v5242
        %v6243 = vpack.c.b16 %v5251, %v5243
        %v6244 = vpack.c.b16 %v5252, %v5244
        %v6245 = vpack.c.b16 %v5253, %v5245
        %v6246 = vpack.c.b16 %v5254, %v5246
        %v6247 = vpack.c.b16 %v5255, %v5247
        %v6248 = vpack.c.b16 %v5256, %v5248
        %v6249 = vpack.c.b16 %v5265, %v5257
        %v6250 = vpack.c.b16 %v5266, %v5258
        %v6251 = vpack.c.b16 %v5267, %v5259
        %v6252 = vpack.c.b16 %v5268, %v5260
        %v6253 = vpack.c.b16 %v5269, %v5261
        %v6254 = vpack.c.b16 %v5270, %v5262
        %v6255 = vpack.c.b16 %v5271, %v5263
        %v6256 = vpack.c.b16 %v5272, %v5264
        %v6257 = vpack.c.b16 %v5281, %v5273
        %v6258 = vpack.c.b16 %v5282, %v5274
        %v6259 = vpack.c.b16 %v5283, %v5275
        %v6260 = vpack.c.b16 %v5284, %v5276
        %v6261 = vpack.c.b16 %v5285, %v5277
        %v6262 = vpack.c.b16 %v5286, %v5278
        %v6263 = vpack.c.b16 %v5287, %v5279
        %v6264 = vpack.c.b16 %v5288, %v5280
        %v6265 = vpack.c.b16 %v5297, %v5289
        %v6266 = vpack.c.b16 %v5298, %v5290
        %v6267 = vpack.c.b16 %v5299, %v5291
        %v6268 = vpack.c.b16 %v5300, %v5292
        %v6269 = vpack.c.b16 %v5301, %v5293
        %v6270 = vpack.c.b16 %v5302, %v5294
        %v6271 = vpack.c.b16 %v5303, %v5295
        %v6272 = vpack.c.b16 %v5304, %v5296
        %v6273 = vpack.c.b16 %v5313, %v5305
        %v6274 = vpack.c.b16 %v5314, %v5306
        %v6275 = vpack.c.b16 %v5315, %v5307
        %v6276 = vpack.c.b16 %v5316, %v5308
        %v6277 = vpack.c.b16 %v5317, %v5309
        %v6278 = vpack.c.b16 %v5318, %v5310
        %v6279 = vpack.c.b16 %v5319, %v5311
        %v6280 = vpack.c.b16 %v5320, %v5312
        %v6281 = vpack.c.b16 %v5329, %v5321
        %v6282 = vpack.c.b16 %v5330, %v5322
        %v6283 = vpack.c.b16 %v5331, %v5323
        %v6284 = vpack.c.b16 %v5332, %v5324
        %v6285 = vpack.c.b16 %v5333, %v5325
        %v6286 = vpack.c.b16 %v5334, %v5326
        %v6287 = vpack.c.b16 %v5335, %v5327
        %v6288 = vpack.c.b16 %v5336, %v5328
        %v6289 = vpack.c.b16 %v5345, %v5337
        %v6290 = vpack.c.b16 %v5346, %v5338
        %v6291 = vpack.c.b16 %v5347, %v5339
        %v6292 = vpack.c.b16 %v5348, %v5340
        %v6293 = vpack.c.b16 %v5349, %v5341
        %v6294 = vpack.c.b16 %v5350, %v5342
        %v6295 = vpack.c.b16 %v5351, %v5343
        %v6296 = vpack.c.b16 %v5352, %v5344
        %v6297 = vpack.c.b16 %v5361, %v5353
        %v6298 = vpack.c.b16 %v5362, %v5354
        %v6299 = vpack.c.b16 %v5363, %v5355
        %v6300 = vpack.c.b16 %v5364, %v5356
        %v6301 = vpack.c.b16 %v5365, %v5357
        %v6302 = vpack.c.b16 %v5366, %v5358
        %v6303 = vpack.c.b16 %v5367, %v5359
        %v6304 = vpack.c.b16 %v5368, %v5360
        %v6305 = vpack.c.b16 %v5377, %v5369
        %v6306 = vpack.c.b16 %v5378, %v5370
        %v6307 = vpack.c.b16 %v5379, %v5371
        %v6308 = vpack.c.b16 %v5380, %v5372
        %v6309 = vpack.c.b16 %v5381, %v5373
        %v6310 = vpack.c.b16 %v5382, %v5374
        %v6311 = vpack.c.b16 %v5383, %v5375
        %v6312 = vpack.c.b16 %v5384, %v5376
        %v6313 = vpack.c.b16 %v5393, %v5385
        %v6314 = vpack.c.b16 %v5394, %v5386
        %v6315 = vpack.c.b16 %v5395, %v5387
        %v6316 = vpack.c.b16 %v5396, %v5388
        %v6317 = vpack.c.b16 %v5397, %v5389
        %v6318 = vpack.c.b16 %v5398, %v5390
        %v6319 = vpack.c.b16 %v5399, %v5391
        %v6320 = vpack.c.b16 %v5400, %v5392
        %v6321 = vpack.c.b16 %v5409, %v5401
        %v6322 = vpack.c.b16 %v5410, %v5402
        %v6323 = vpack.c.b16 %v5411, %v5403
        %v6324 = vpack.c.b16 %v5412, %v5404
        %v6325 = vpack.c.b16 %v5413, %v5405
        %v6326 = vpack.c.b16 %v5414, %v5406
        %v6327 = vpack.c.b16 %v5415, %v5407
        %v6328 = vpack.c.b16 %v5416, %v5408
        %v6329 = vpack.c.b16 %v5425, %v5417
        %v6330 = vpack.c.b16 %v5426, %v5418
        %v6331 = vpack.c.b16 %v5427, %v5419
        %v6332 = vpack.c.b16 %v5428, %v5420
        %v6333 = vpack.c.b16 %v5429, %v5421
        %v6334 = vpack.c.b16 %v5430, %v5422
        %v6335 = vpack.c.b16 %v5431, %v5423
        %v6336 = vpack.c.b16 %v5432, %v5424
        %v6337 = vpack.c.b16 %v5441, %v5433
        %v6338 = vpack.c.b16 %v5442, %v5434
        %v6339 = vpack.c.b16 %v5443, %v5435
        %v6340 = vpack.c.b16 %v5444, %v5436
        %v6341 = vpack.c.b16 %v5445, %v5437
        %v6342 = vpack.c.b16 %v5446, %v5438
        %v6343 = vpack.c.b16 %v5447, %v5439
        %v6344 = vpack.c.b16 %v5448, %v5440
        %v6345 = vpack.c.b16 %v5457, %v5449
        %v6346 = vpack.c.b16 %v5458, %v5450
        %v6347 = vpack.c.b16 %v5459, %v5451
        %v6348 = vpack.c.b16 %v5460, %v5452
        %v6349 = vpack.c.b16 %v5461, %v5453
        %v6350 = vpack.c.b16 %v5462, %v5454
        %v6351 = vpack.c.b16 %v5463, %v5455
        %v6352 = vpack.c.b16 %v5464, %v5456
        %v6353 = vpack.c.b16 %v5473, %v5465
        %v6354 = vpack.c.b16 %v5474, %v5466
        %v6355 = vpack.c.b16 %v5475, %v5467
        %v6356 = vpack.c.b16 %v5476, %v5468
        %v6357 = vpack.c.b16 %v5477, %v5469
        %v6358 = vpack.c.b16 %v5478, %v5470
        %v6359 = vpack.c.b16 %v5479, %v5471
        %v6360 = vpack.c.b16 %v5480, %v5472
        %v6361 = vpack.c.b16 %v5489, %v5481
        %v6362 = vpack.c.b16 %v5490, %v5482
        %v6363 = vpack.c.b16 %v5491, %v5483
        %v6364 = vpack.c.b16 %v5492, %v5484
        %v6365 = vpack.c.b16 %v5493, %v5485
        %v6366 = vpack.c.b16 %v5494, %v5486
        %v6367 = vpack.c.b16 %v5495, %v5487
        %v6368 = vpack.c.b16 %v5496, %v5488
        %v6369 = vpack.c.b16 %v5505, %v5497
        %v6370 = vpack.c.b16 %v5506, %v5498
        %v6371 = vpack.c.b16 %v5507, %v5499
        %v6372 = vpack.c.b16 %v5508, %v5500
        %v6373 = vpack.c.b16 %v5509, %v5501
        %v6374 = vpack.c.b16 %v5510, %v5502
        %v6375 = vpack.c.b16 %v5511, %v5503
        %v6376 = vpack.c.b16 %v5512, %v5504
        %v6377 = vpack.c.b16 %v5521, %v5513
        %v6378 = vpack.c.b16 %v5522, %v5514
        %v6379 = vpack.c.b16 %v5523, %v5515
        %v6380 = vpack.c.b16 %v5524, %v5516
        %v6381 = vpack.c.b16 %v5525, %v5517
        %v6382 = vpack.c.b16 %v5526, %v5518
        %v6383 = vpack.c.b16 %v5527, %v5519
        %v6384 = vpack.c.b16 %v5528, %v5520
        %v6385 = vpack.c.b16 %v5537, %v5529
        %v6386 = vpack.c.b16 %v5538, %v5530
        %v6387 = vpack.c.b16 %v5539, %v5531
        %v6388 = vpack.c.b16 %v5540, %v5532
        %v6389 = vpack.c.b16 %v5541, %v5533
        %v6390 = vpack.c.b16 %v5542, %v5534
        %v6391 = vpack.c.b16 %v5543, %v5535
        %v6392 = vpack.c.b16 %v5544, %v5536
        %v6393 = vpack.c.b16 %v5553, %v5545
        %v6394 = vpack.c.b16 %v5554, %v5546
        %v6395 = vpack.c.b16 %v5555, %v5547
        %v6396 = vpack.c.b16 %v5556, %v5548
        %v6397 = vpack.c.b16 %v5557, %v5549
        %v6398 = vpack.c.b16 %v5558, %v5550
        %v6399 = vpack.c.b16 %v5559, %v5551
        %v6400 = vpack.c.b16 %v5560, %v5552
        %v6401 = vpack.c.b16 %v5569, %v5561
        %v6402 = vpack.c.b16 %v5570, %v5562
        %v6403 = vpack.c.b16 %v5571, %v5563
        %v6404 = vpack.c.b16 %v5572, %v5564
        %v6405 = vpack.c.b16 %v5573, %v5565
        %v6406 = vpack.c.b16 %v5574, %v5566
        %v6407 = vpack.c.b16 %v5575, %v5567
        %v6408 = vpack.c.b16 %v5576, %v5568
        %v6409 = vpack.c.b16 %v5585, %v5577
        %v6410 = vpack.c.b16 %v5586, %v5578
        %v6411 = vpack.c.b16 %v5587, %v5579
        %v6412 = vpack.c.b16 %v5588, %v5580
        %v6413 = vpack.c.b16 %v5589, %v5581
        %v6414 = vpack.c.b16 %v5590, %v5582
        %v6415 = vpack.c.b16 %v5591, %v5583
        %v6416 = vpack.c.b16 %v5592, %v5584
        %v6417 = vpack.c.b16 %v5601, %v5593
        %v6418 = vpack.c.b16 %v5602, %v5594
        %v6419 = vpack.c.b16 %v5603, %v5595
        %v6420 = vpack.c.b16 %v5604, %v5596
        %v6421 = vpack.c.b16 %v5605, %v5597
        %v6422 = vpack.c.b16 %v5606, %v5598
        %v6423 = vpack.c.b16 %v5607, %v5599
        %v6424 = vpack.c.b16 %v5608, %v5600
        %v6425 = vpack.c.b16 %v5617, %v5609
        %v6426 = vpack.c.b16 %v5618, %v5610
        %v6427 = vpack.c.b16 %v5619, %v5611
        %v6428 = vpack.c.b16 %v5620, %v5612
        %v6429 = vpack.c.b16 %v5621, %v5613
        %v6430 = vpack.c.b16 %v5622, %v5614
        %v6431 = vpack.c.b16 %v5623, %v5615
        %v6432 = vpack.c.b16 %v5624, %v5616
        %v6433 = vpack.c.b16 %v5633, %v5625
        %v6434 = vpack.c.b16 %v5634, %v5626
        %v6435 = vpack.c.b16 %v5635, %v5627
        %v6436 = vpack.c.b16 %v5636, %v5628
        %v6437 = vpack.c.b16 %v5637, %v5629
        %v6438 = vpack.c.b16 %v5638, %v5630
        %v6439 = vpack.c.b16 %v5639, %v5631
        %v6440 = vpack.c.b16 %v5640, %v5632
        %v6441 = vpack.c.b16 %v5649, %v5641
        %v6442 = vpack.c.b16 %v5650, %v5642
        %v6443 = vpack.c.b16 %v5651, %v5643
        %v6444 = vpack.c.b16 %v5652, %v5644
        %v6445 = vpack.c.b16 %v5653, %v5645
        %v6446 = vpack.c.b16 %v5654, %v5646
        %v6447 = vpack.c.b16 %v5655, %v5647
        %v6448 = vpack.c.b16 %v5656, %v5648
        %v6449 = vpack.c.b16 %v5665, %v5657
        %v6450 = vpack.c.b16 %v5666, %v5658
        %v6451 = vpack.c.b16 %v5667, %v5659
        %v6452 = vpack.c.b16 %v5668, %v5660
        %v6453 = vpack.c.b16 %v5669, %v5661
        %v6454 = vpack.c.b16 %v5670, %v5662
        %v6455 = vpack.c.b16 %v5671, %v5663
        %v6456 = vpack.c.b16 %v5672, %v5664
        %v6457 = vpack.c.b16 %v5681, %v5673
        %v6458 = vpack.c.b16 %v5682, %v5674
        %v6459 = vpack.c.b16 %v5683, %v5675
        %v6460 = vpack.c.b16 %v5684, %v5676
        %v6461 = vpack.c.b16 %v5685, %v5677
        %v6462 = vpack.c.b16 %v5686, %v5678
        %v6463 = vpack.c.b16 %v5687, %v5679
        %v6464 = vpack.c.b16 %v5688, %v5680
        %v6465 = vpack.c.b16 %v5697, %v5689
        %v6466 = vpack.c.b16 %v5698, %v5690
        %v6467 = vpack.c.b16 %v5699, %v5691
        %v6468 = vpack.c.b16 %v5700, %v5692
        %v6469 = vpack.c.b16 %v5701, %v5693
        %v6470 = vpack.c.b16 %v5702, %v5694
        %v6471 = vpack.c.b16 %v5703, %v5695
        %v6472 = vpack.c.b16 %v5704, %v5696
        %v6473 = vpack.c.b16 %v5713, %v5705
        %v6474 = vpack.c.b16 %v5714, %v5706
        %v6475 = vpack.c.b16 %v5715, %v5707
        %v6476 = vpack.c.b16 %v5716, %v5708
        %v6477 = vpack.c.b16 %v5717, %v5709
        %v6478 = vpack.c.b16 %v5718, %v5710
        %v6479 = vpack.c.b16 %v5719, %v5711
        %v6480 = vpack.c.b16 %v5720, %v5712
        %v6481 = vpack.c.b16 %v5729, %v5721
        %v6482 = vpack.c.b16 %v5730, %v5722
        %v6483 = vpack.c.b16 %v5731, %v5723
        %v6484 = vpack.c.b16 %v5732, %v5724
        %v6485 = vpack.c.b16 %v5733, %v5725
        %v6486 = vpack.c.b16 %v5734, %v5726
        %v6487 = vpack.c.b16 %v5735, %v5727
        %v6488 = vpack.c.b16 %v5736, %v5728
        %v6489 = vpack.c.b16 %v5745, %v5737
        %v6490 = vpack.c.b16 %v5746, %v5738
        %v6491 = vpack.c.b16 %v5747, %v5739
        %v6492 = vpack.c.b16 %v5748, %v5740
        %v6493 = vpack.c.b16 %v5749, %v5741
        %v6494 = vpack.c.b16 %v5750, %v5742
        %v6495 = vpack.c.b16 %v5751, %v5743
        %v6496 = vpack.c.b16 %v5752, %v5744
        %v6497 = vpack.c.b16 %v5761, %v5753
        %v6498 = vpack.c.b16 %v5762, %v5754
        %v6499 = vpack.c.b16 %v5763, %v5755
        %v6500 = vpack.c.b16 %v5764, %v5756
        %v6501 = vpack.c.b16 %v5765, %v5757
        %v6502 = vpack.c.b16 %v5766, %v5758
        %v6503 = vpack.c.b16 %v5767, %v5759
        %v6504 = vpack.c.b16 %v5768, %v5760
        %v6505 = vpack.c.b16 %v5777, %v5769
        %v6506 = vpack.c.b16 %v5778, %v5770
        %v6507 = vpack.c.b16 %v5779, %v5771
        %v6508 = vpack.c.b16 %v5780, %v5772
        %v6509 = vpack.c.b16 %v5781, %v5773
        %v6510 = vpack.c.b16 %v5782, %v5774
        %v6511 = vpack.c.b16 %v5783, %v5775
        %v6512 = vpack.c.b16 %v5784, %v5776
        %v6513 = vpack.c.b16 %v5793, %v5785
        %v6514 = vpack.c.b16 %v5794, %v5786
        %v6515 = vpack.c.b16 %v5795, %v5787
        %v6516 = vpack.c.b16 %v5796, %v5788
        %v6517 = vpack.c.b16 %v5797, %v5789
        %v6518 = vpack.c.b16 %v5798, %v5790
        %v6519 = vpack.c.b16 %v5799, %v5791
        %v6520 = vpack.c.b16 %v5800, %v5792
        %v6521 = vpack.c.b16 %v5809, %v5801
        %v6522 = vpack.c.b16 %v5810, %v5802
        %v6523 = vpack.c.b16 %v5811, %v5803
        %v6524 = vpack.c.b16 %v5812, %v5804
        %v6525 = vpack.c.b16 %v5813, %v5805
        %v6526 = vpack.c.b16 %v5814, %v5806
        %v6527 = vpack.c.b16 %v5815, %v5807
        %v6528 = vpack.c.b16 %v5816, %v5808
        %v6529 = vpack.c.b16 %v5825, %v5817
        %v6530 = vpack.c.b16 %v5826, %v5818
        %v6531 = vpack.c.b16 %v5827, %v5819
        %v6532 = vpack.c.b16 %v5828, %v5820
        %v6533 = vpack.c.b16 %v5829, %v5821
        %v6534 = vpack.c.b16 %v5830, %v5822
        %v6535 = vpack.c.b16 %v5831, %v5823
        %v6536 = vpack.c.b16 %v5832, %v5824
        %v6537 = vpack.c.b16 %v5841, %v5833
        %v6538 = vpack.c.b16 %v5842, %v5834
        %v6539 = vpack.c.b16 %v5843, %v5835
        %v6540 = vpack.c.b16 %v5844, %v5836
        %v6541 = vpack.c.b16 %v5845, %v5837
        %v6542 = vpack.c.b16 %v5846, %v5838
        %v6543 = vpack.c.b16 %v5847, %v5839
        %v6544 = vpack.c.b16 %v5848, %v5840
        %v6545 = vpack.c.b16 %v5857, %v5849
        %v6546 = vpack.c.b16 %v5858, %v5850
        %v6547 = vpack.c.b16 %v5859, %v5851
        %v6548 = vpack.c.b16 %v5860, %v5852
        %v6549 = vpack.c.b16 %v5861, %v5853
        %v6550 = vpack.c.b16 %v5862, %v5854
        %v6551 = vpack.c.b16 %v5863, %v5855
        %v6552 = vpack.c.b16 %v5864, %v5856
        %v6553 = vpack.c.b16 %v5873, %v5865
        %v6554 = vpack.c.b16 %v5874, %v5866
        %v6555 = vpack.c.b16 %v5875, %v5867
        %v6556 = vpack.c.b16 %v5876, %v5868
        %v6557 = vpack.c.b16 %v5877, %v5869
        %v6558 = vpack.c.b16 %v5878, %v5870
        %v6559 = vpack.c.b16 %v5879, %v5871
        %v6560 = vpack.c.b16 %v5880, %v5872
        %v6561 = vpack.c.b16 %v5889, %v5881
        %v6562 = vpack.c.b16 %v5890, %v5882
        %v6563 = vpack.c.b16 %v5891, %v5883
        %v6564 = vpack.c.b16 %v5892, %v5884
        %v6565 = vpack.c.b16 %v5893, %v5885
        %v6566 = vpack.c.b16 %v5894, %v5886
        %v6567 = vpack.c.b16 %v5895, %v5887
        %v6568 = vpack.c.b16 %v5896, %v5888
        %v6569 = vpack.c.b16 %v5905, %v5897
        %v6570 = vpack.c.b16 %v5906, %v5898
        %v6571 = vpack.c.b16 %v5907, %v5899
        %v6572 = vpack.c.b16 %v5908, %v5900
        %v6573 = vpack.c.b16 %v5909, %v5901
        %v6574 = vpack.c.b16 %v5910, %v5902
        %v6575 = vpack.c.b16 %v5911, %v5903
        %v6576 = vpack.c.b16 %v5912, %v5904
        %v6577 = vpack.c.b16 %v5921, %v5913
        %v6578 = vpack.c.b16 %v5922, %v5914
        %v6579 = vpack.c.b16 %v5923, %v5915
        %v6580 = vpack.c.b16 %v5924, %v5916
        %v6581 = vpack.c.b16 %v5925, %v5917
        %v6582 = vpack.c.b16 %v5926, %v5918
        %v6583 = vpack.c.b16 %v5927, %v5919
        %v6584 = vpack.c.b16 %v5928, %v5920
        %v6585 = vpack.c.b16 %v5937, %v5929
        %v6586 = vpack.c.b16 %v5938, %v5930
        %v6587 = vpack.c.b16 %v5939, %v5931
        %v6588 = vpack.c.b16 %v5940, %v5932
        %v6589 = vpack.c.b16 %v5941, %v5933
        %v6590 = vpack.c.b16 %v5942, %v5934
        %v6591 = vpack.c.b16 %v5943, %v5935
        %v6592 = vpack.c.b16 %v5944, %v5936
        %v6593 = vpack.c.b16 %v5953, %v5945
        %v6594 = vpack.c.b16 %v5954, %v5946
        %v6595 = vpack.c.b16 %v5955, %v5947
        %v6596 = vpack.c.b16 %v5956, %v5948
        %v6597 = vpack.c.b16 %v5957, %v5949
        %v6598 = vpack.c.b16 %v5958, %v5950
        %v6599 = vpack.c.b16 %v5959, %v5951
        %v6600 = vpack.c.b16 %v5960, %v5952
        %v6601 = vpack.c.b16 %v5969, %v5961
        %v6602 = vpack.c.b16 %v5970, %v5962
        %v6603 = vpack.c.b16 %v5971, %v5963
        %v6604 = vpack.c.b16 %v5972, %v5964
        %v6605 = vpack.c.b16 %v5973, %v5965
        %v6606 = vpack.c.b16 %v5974, %v5966
        %v6607 = vpack.c.b16 %v5975, %v5967
        %v6608 = vpack.c.b16 %v5976, %v5968
        %v6609 = vpack.c.b16 %v5985, %v5977
        %v6610 = vpack.c.b16 %v5986, %v5978
        %v6611 = vpack.c.b16 %v5987, %v5979
        %v6612 = vpack.c.b16 %v5988, %v5980
        %v6613 = vpack.c.b16 %v5989, %v5981
        %v6614 = vpack.c.b16 %v5990, %v5982
        %v6615 = vpack.c.b16 %v5991, %v5983
        %v6616 = vpack.c.b16 %v5992, %v5984
        %v6617 = vpack.c.b16 %v6001, %v5993
        %v6618 = vpack.c.b16 %v6002, %v5994
        %v6619 = vpack.c.b16 %v6003, %v5995
        %v6620 = vpack.c.b16 %v6004, %v5996
        %v6621 = vpack.c.b16 %v6005, %v5997
        %v6622 = vpack.c.b16 %v6006, %v5998
        %v6623 = vpack.c.b16 %v6007, %v5999
        %v6624 = vpack.c.b16 %v6008, %v6000
        %v6625 = vpack.c.b16 %v6017, %v6009
        %v6626 = vpack.c.b16 %v6018, %v6010
        %v6627 = vpack.c.b16 %v6019, %v6011
        %v6628 = vpack.c.b16 %v6020, %v6012
        %v6629 = vpack.c.b16 %v6021, %v6013
        %v6630 = vpack.c.b16 %v6022, %v6014
        %v6631 = vpack.c.b16 %v6023, %v6015
        %v6632 = vpack.c.b16 %v6024, %v6016
        %v6633 = vpack.c.b16 %v6033, %v6025
        %v6634 = vpack.c.b16 %v6034, %v6026
        %v6635 = vpack.c.b16 %v6035, %v6027
        %v6636 = vpack.c.b16 %v6036, %v6028
        %v6637 = vpack.c.b16 %v6037, %v6029
        %v6638 = vpack.c.b16 %v6038, %v6030
        %v6639 = vpack.c.b16 %v6039, %v6031
        %v6640 = vpack.c.b16 %v6040, %v6032
        %v6641 = vpack.c.b16 %v6049, %v6041
        %v6642 = vpack.c.b16 %v6050, %v6042
        %v6643 = vpack.c.b16 %v6051, %v6043
        %v6644 = vpack.c.b16 %v6052, %v6044
        %v6645 = vpack.c.b16 %v6053, %v6045
        %v6646 = vpack.c.b16 %v6054, %v6046
        %v6647 = vpack.c.b16 %v6055, %v6047
        %v6648 = vpack.c.b16 %v6056, %v6048
        %v6649 = vpack.c.b16 %v6065, %v6057
        %v6650 = vpack.c.b16 %v6066, %v6058
        %v6651 = vpack.c.b16 %v6067, %v6059
        %v6652 = vpack.c.b16 %v6068, %v6060
        %v6653 = vpack.c.b16 %v6069, %v6061
        %v6654 = vpack.c.b16 %v6070, %v6062
        %v6655 = vpack.c.b16 %v6071, %v6063
        %v6656 = vpack.c.b16 %v6072, %v6064
        %v6657 = vpack.c.b16 %v6081, %v6073
        %v6658 = vpack.c.b16 %v6082, %v6074
        %v6659 = vpack.c.b16 %v6083, %v6075
        %v6660 = vpack.c.b16 %v6084, %v6076
        %v6661 = vpack.c.b16 %v6085, %v6077
        %v6662 = vpack.c.b16 %v6086, %v6078
        %v6663 = vpack.c.b16 %v6087, %v6079
        %v6664 = vpack.c.b16 %v6088, %v6080
        %v6665 = vpack.c.b16 %v6097, %v6089
        %v6666 = vpack.c.b16 %v6098, %v6090
        %v6667 = vpack.c.b16 %v6099, %v6091
        %v6668 = vpack.c.b16 %v6100, %v6092
        %v6669 = vpack.c.b16 %v6101, %v6093
        %v6670 = vpack.c.b16 %v6102, %v6094
        %v6671 = vpack.c.b16 %v6103, %v6095
        %v6672 = vpack.c.b16 %v6104, %v6096
        %v6673 = vpack.c.b16 %v6113, %v6105
        %v6674 = vpack.c.b16 %v6114, %v6106
        %v6675 = vpack.c.b16 %v6115, %v6107
        %v6676 = vpack.c.b16 %v6116, %v6108
        %v6677 = vpack.c.b16 %v6117, %v6109
        %v6678 = vpack.c.b16 %v6118, %v6110
        %v6679 = vpack.c.b16 %v6119, %v6111
        %v6680 = vpack.c.b16 %v6120, %v6112
        %v6681 = vpack.c.b16 %v6129, %v6121
        %v6682 = vpack.c.b16 %v6130, %v6122
        %v6683 = vpack.c.b16 %v6131, %v6123
        %v6684 = vpack.c.b16 %v6132, %v6124
        %v6685 = vpack.c.b16 %v6133, %v6125
        %v6686 = vpack.c.b16 %v6134, %v6126
        %v6687 = vpack.c.b16 %v6135, %v6127
        %v6688 = vpack.c.b16 %v6136, %v6128
        %v6689 = vpack.c.b16 %v6145, %v6137
        %v6690 = vpack.c.b16 %v6146, %v6138
        %v6691 = vpack.c.b16 %v6147, %v6139
        %v6692 = vpack.c.b16 %v6148, %v6140
        %v6693 = vpack.c.b16 %v6149, %v6141
        %v6694 = vpack.c.b16 %v6150, %v6142
        %v6695 = vpack.c.b16 %v6151, %v6143
        %v6696 = vpack.c.b16 %v6152, %v6144
        %v6697 = vpack.c.b16 %v6161, %v6153
        %v6698 = vpack.c.b16 %v6162, %v6154
        %v6699 = vpack.c.b16 %v6163, %v6155
        %v6700 = vpack.c.b16 %v6164, %v6156
        %v6701 = vpack.c.b16 %v6165, %v6157
        %v6702 = vpack.c.b16 %v6166, %v6158
        %v6703 = vpack.c.b16 %v6167, %v6159
        %v6704 = vpack.c.b16 %v6168, %v6160
        %v6705 = vpack.c.b16 %v6177, %v6169
        %v6706 = vpack.c.b16 %v6178, %v6170
        %v6707 = vpack.c.b16 %v6179, %v6171
        %v6708 = vpack.c.b16 %v6180, %v6172
        %v6709 = vpack.c.b16 %v6181, %v6173
        %v6710 = vpack.c.b16 %v6182, %v6174
        %v6711 = vpack.c.b16 %v6183, %v6175
        %v6712 = vpack.c.b16 %v6184, %v6176
        %v6713 = vpack.c.b16 %v6193, %v6185
        %v6714 = vpack.c.b16 %v6194, %v6186
        %v6715 = vpack.c.b16 %v6195, %v6187
        %v6716 = vpack.c.b16 %v6196, %v6188
        %v6717 = vpack.c.b16 %v6197, %v6189
        %v6718 = vpack.c.b16 %v6198, %v6190
        %v6719 = vpack.c.b16 %v6199, %v6191
        %v6720 = vpack.c.b16 %v6200, %v6192
        %v6721 = vpack.c.b16 %v6209, %v6201
        %v6722 = vpack.c.b16 %v6210, %v6202
        %v6723 = vpack.c.b16 %v6211, %v6203
        %v6724 = vpack.c.b16 %v6212, %v6204
        %v6725 = vpack.c.b16 %v6213, %v6205
        %v6726 = vpack.c.b16 %v6214, %v6206
        %v6727 = vpack.c.b16 %v6215, %v6207
        %v6728 = vpack.c.b16 %v6216, %v6208
        %7241 = vmatprep.subr.bf16.mxu0 %v6218
        %7242 = vmatpush1.bf16.msra.mxu0 %v6217
        %7243 = vmatprep.subr.bf16.mxu0 %v6226
        %7244 = vmatpush1.bf16.msra.mxu0 %v6225
        %7245 = vmatprep.subr.bf16.mxu0 %v6234
        %7246 = vmatpush1.bf16.msra.mxu0 %v6233
        %7247 = vmatprep.subr.bf16.mxu0 %v6242
        %7248 = vmatpush1.bf16.msra.mxu0 %v6241
        %7249 = vmatprep.subr.bf16.mxu0 %v6250
        %7250 = vmatpush1.bf16.msra.mxu0 %v6249
        %7251 = vmatprep.subr.bf16.mxu0 %v6258
        %7252 = vmatpush1.bf16.msra.mxu0 %v6257
        %7253 = vmatprep.subr.bf16.mxu0 %v6266
        %7254 = vmatpush1.bf16.msra.mxu0 %v6265
        %7255 = vmatprep.subr.bf16.mxu0 %v6274
        %7256 = vmatpush1.bf16.msra.mxu0 %v6273
        %7257 = vmatprep.subr.bf16.mxu0 %v6282
        %7258 = vmatpush1.bf16.msra.mxu0 %v6281
        %7259 = vmatprep.subr.bf16.mxu0 %v6290
        %7260 = vmatpush1.bf16.msra.mxu0 %v6289
        %7261 = vmatprep.subr.bf16.mxu0 %v6298
        %7262 = vmatpush1.bf16.msra.mxu0 %v6297
        %7263 = vmatprep.subr.bf16.mxu0 %v6306
        %7264 = vmatpush1.bf16.msra.mxu0 %v6305
        %7265 = vmatprep.subr.bf16.mxu0 %v6314
        %7266 = vmatpush1.bf16.msra.mxu0 %v6313
        %7267 = vmatprep.subr.bf16.mxu0 %v6322
        %7268 = vmatpush1.bf16.msra.mxu0 %v6321
        %7269 = vmatprep.subr.bf16.mxu0 %v6330
        %7270 = vmatpush1.bf16.msra.mxu0 %v6329
        %7271 = vmatprep.subr.bf16.mxu0 %v6338
        %7272 = vmatpush1.bf16.msra.mxu0 %v6337
        %7273 = vmatprep.mubr.bf16.mxu0 %v4162
        %7274 = vmatmul.mubr.bf16.gmra.mrb[0].mxu0 %v4161
        %v7275 = vpop.f32.mrb[0].mxu0
        %v7276 = vadd.f32 0.0, %v7275
        %v7277 = vpop.f32.mrb[0].mxu0
        %v7278 = vadd.f32 0.0, %v7277
        %v7279 = vpop.f32.mrb[0].mxu0
        %v7280 = vpop.f32.mrb[0].mxu0
        %7281 = vdwg.mxu0
        %7282 = vmatprep.subr.bf16.mxu0 %v6346
        %7283 = vmatpush1.bf16.msra.mxu0 %v6345
        %7284 = vmatprep.subr.bf16.mxu0 %v6354
        %7285 = vmatpush1.bf16.msra.mxu0 %v6353
        %7286 = vmatprep.subr.bf16.mxu0 %v6362
        %7287 = vmatpush1.bf16.msra.mxu0 %v6361
        %7288 = vmatprep.subr.bf16.mxu0 %v6370
        %7289 = vmatpush1.bf16.msra.mxu0 %v6369
        %7290 = vmatprep.subr.bf16.mxu0 %v6378
        %7291 = vmatpush1.bf16.msra.mxu0 %v6377
        %7292 = vmatprep.subr.bf16.mxu0 %v6386
        %7293 = vmatpush1.bf16.msra.mxu0 %v6385
        %7294 = vmatprep.subr.bf16.mxu0 %v6394
        %7295 = vmatpush1.bf16.msra.mxu0 %v6393
        %7296 = vmatprep.subr.bf16.mxu0 %v6402
        %7297 = vmatpush1.bf16.msra.mxu0 %v6401
        %7298 = vmatprep.subr.bf16.mxu0 %v6410
        %7299 = vmatpush1.bf16.msra.mxu0 %v6409
        %7300 = vmatprep.subr.bf16.mxu0 %v6418
        %7301 = vmatpush1.bf16.msra.mxu0 %v6417
        %7302 = vmatprep.subr.bf16.mxu0 %v6426
        %7303 = vmatpush1.bf16.msra.mxu0 %v6425
        %7304 = vmatprep.subr.bf16.mxu0 %v6434
        %7305 = vmatpush1.bf16.msra.mxu0 %v6433
        %7306 = vmatprep.subr.bf16.mxu0 %v6442
        %7307 = vmatpush1.bf16.msra.mxu0 %v6441
        %7308 = vmatprep.subr.bf16.mxu0 %v6450
        %7309 = vmatpush1.bf16.msra.mxu0 %v6449
        %7310 = vmatprep.subr.bf16.mxu0 %v6458
        %7311 = vmatpush1.bf16.msra.mxu0 %v6457
        %7312 = vmatprep.subr.bf16.mxu0 %v6466
        %7313 = vmatpush1.bf16.msra.mxu0 %v6465
        %7314 = vmatprep.mubr.bf16.mxu0 %v4164
        %7315 = vmatmul.mubr.bf16.gmra.mrb[0].mxu0 %v4163
        %v7316 = vpop.f32.mrb[0].mxu0
        %v7317 = vadd.f32 %v7276, %v7316
        %v7318 = vpop.f32.mrb[0].mxu0
        %v7319 = vadd.f32 %v7278, %v7318
        %v7320 = vpop.f32.mrb[0].mxu0
        %v7321 = vpop.f32.mrb[0].mxu0
        %7322 = vdwg.mxu0
        %7323 = vmatprep.subr.bf16.mxu0 %v6474
        %7324 = vmatpush1.bf16.msra.mxu0 %v6473
        %7325 = vmatprep.subr.bf16.mxu0 %v6482
        %7326 = vmatpush1.bf16.msra.mxu0 %v6481
        %7327 = vmatprep.subr.bf16.mxu0 %v6490
        %7328 = vmatpush1.bf16.msra.mxu0 %v6489
        %7329 = vmatprep.subr.bf16.mxu0 %v6498
        %7330 = vmatpush1.bf16.msra.mxu0 %v6497
        %7331 = vmatprep.subr.bf16.mxu0 %v6506
        %7332 = vmatpush1.bf16.msra.mxu0 %v6505
        %7333 = vmatprep.subr.bf16.mxu0 %v6514
        %7334 = vmatpush1.bf16.msra.mxu0 %v6513
        %7335 = vmatprep.subr.bf16.mxu0 %v6522
        %7336 = vmatpush1.bf16.msra.mxu0 %v6521
        %7337 = vmatprep.subr.bf16.mxu0 %v6530
        %7338 = vmatpush1.bf16.msra.mxu0 %v6529
        %7339 = vmatprep.subr.bf16.mxu0 %v6538
        %7340 = vmatpush1.bf16.msra.mxu0 %v6537
        %7341 = vmatprep.subr.bf16.mxu0 %v6546
        %7342 = vmatpush1.bf16.msra.mxu0 %v6545
        %7343 = vmatprep.subr.bf16.mxu0 %v6554
        %7344 = vmatpush1.bf16.msra.mxu0 %v6553
        %7345 = vmatprep.subr.bf16.mxu0 %v6562
        %7346 = vmatpush1.bf16.msra.mxu0 %v6561
        %7347 = vmatprep.subr.bf16.mxu0 %v6570
        %7348 = vmatpush1.bf16.msra.mxu0 %v6569
        %7349 = vmatprep.subr.bf16.mxu0 %v6578
        %7350 = vmatpush1.bf16.msra.mxu0 %v6577
        %7351 = vmatprep.subr.bf16.mxu0 %v6586
        %7352 = vmatpush1.bf16.msra.mxu0 %v6585
        %7353 = vmatprep.subr.bf16.mxu0 %v6594
        %7354 = vmatpush1.bf16.msra.mxu0 %v6593
        %7355 = vmatprep.mubr.bf16.mxu0 %v4166
        %7356 = vmatmul.mubr.bf16.gmra.mrb[0].mxu0 %v4165
        %v7357 = vpop.f32.mrb[0].mxu0
        %v7358 = vadd.f32 %v7317, %v7357
        %v7359 = vpop.f32.mrb[0].mxu0
        %v7360 = vadd.f32 %v7319, %v7359
        %v7361 = vpop.f32.mrb[0].mxu0
        %v7362 = vpop.f32.mrb[0].mxu0
        %7363 = vdwg.mxu0
        %7364 = vmatprep.subr.bf16.mxu0 %v6602
        %7365 = vmatpush1.bf16.msra.mxu0 %v6601
        %7366 = vmatprep.subr.bf16.mxu0 %v6610
        %7367 = vmatpush1.bf16.msra.mxu0 %v6609
        %7368 = vmatprep.subr.bf16.mxu0 %v6618
        %7369 = vmatpush1.bf16.msra.mxu0 %v6617
        %7370 = vmatprep.subr.bf16.mxu0 %v6626
        %7371 = vmatpush1.bf16.msra.mxu0 %v6625
        %7372 = vmatprep.subr.bf16.mxu0 %v6634
        %7373 = vmatpush1.bf16.msra.mxu0 %v6633
        %7374 = vmatprep.subr.bf16.mxu0 %v6642
        %7375 = vmatpush1.bf16.msra.mxu0 %v6641
        %7376 = vmatprep.subr.bf16.mxu0 %v6650
        %7377 = vmatpush1.bf16.msra.mxu0 %v6649
        %7378 = vmatprep.subr.bf16.mxu0 %v6658
        %7379 = vmatpush1.bf16.msra.mxu0 %v6657
        %7380 = vmatprep.subr.bf16.mxu0 %v6666
        %7381 = vmatpush1.bf16.msra.mxu0 %v6665
        %7382 = vmatprep.subr.bf16.mxu0 %v6674
        %7383 = vmatpush1.bf16.msra.mxu0 %v6673
        %7384 = vmatprep.subr.bf16.mxu0 %v6682
        %7385 = vmatpush1.bf16.msra.mxu0 %v6681
        %7386 = vmatprep.subr.bf16.mxu0 %v6690
        %7387 = vmatpush1.bf16.msra.mxu0 %v6689
        %7388 = vmatprep.subr.bf16.mxu0 %v6698
        %7389 = vmatpush1.bf16.msra.mxu0 %v6697
        %7390 = vmatprep.subr.bf16.mxu0 %v6706
        %7391 = vmatpush1.bf16.msra.mxu0 %v6705
        %7392 = vmatprep.subr.bf16.mxu0 %v6714
        %7393 = vmatpush1.bf16.msra.mxu0 %v6713
        %7394 = vmatprep.subr.bf16.mxu0 %v6722
        %7395 = vmatpush1.bf16.msra.mxu0 %v6721
        %7396 = vmatprep.mubr.bf16.mxu0 %v4168
        %7397 = vmatmul.mubr.bf16.gmra.mrb[0].mxu0 %v4167
        %v7398 = vpop.f32.mrb[0].mxu0
        %v7399 = vadd.f32 %v7358, %v7398
        %v7400 = vpop.f32.mrb[0].mxu0
        %v7401 = vadd.f32 %v7360, %v7400
        %v7402 = vpop.f32.mrb[0].mxu0
        %v7403 = vpop.f32.mrb[0].mxu0
        %7404 = vdwg.mxu0
        %7405 = vmatprep.subr.bf16.mxu0 %v6220
        %7406 = vmatpush1.bf16.msra.mxu0 %v6219
        %7407 = vmatprep.subr.bf16.mxu0 %v6228
        %7408 = vmatpush1.bf16.msra.mxu0 %v6227
        %7409 = vmatprep.subr.bf16.mxu0 %v6236
        %7410 = vmatpush1.bf16.msra.mxu0 %v6235
        %7411 = vmatprep.subr.bf16.mxu0 %v6244
        %7412 = vmatpush1.bf16.msra.mxu0 %v6243
        %7413 = vmatprep.subr.bf16.mxu0 %v6252
        %7414 = vmatpush1.bf16.msra.mxu0 %v6251
        %7415 = vmatprep.subr.bf16.mxu0 %v6260
        %7416 = vmatpush1.bf16.msra.mxu0 %v6259
        %7417 = vmatprep.subr.bf16.mxu0 %v6268
        %7418 = vmatpush1.bf16.msra.mxu0 %v6267
        %7419 = vmatprep.subr.bf16.mxu0 %v6276
        %7420 = vmatpush1.bf16.msra.mxu0 %v6275
        %7421 = vmatprep.subr.bf16.mxu0 %v6284
        %7422 = vmatpush1.bf16.msra.mxu0 %v6283
        %7423 = vmatprep.subr.bf16.mxu0 %v6292
        %7424 = vmatpush1.bf16.msra.mxu0 %v6291
        %7425 = vmatprep.subr.bf16.mxu0 %v6300
        %7426 = vmatpush1.bf16.msra.mxu0 %v6299
        %7427 = vmatprep.subr.bf16.mxu0 %v6308
        %7428 = vmatpush1.bf16.msra.mxu0 %v6307
        %7429 = vmatprep.subr.bf16.mxu0 %v6316
        %7430 = vmatpush1.bf16.msra.mxu0 %v6315
        %7431 = vmatprep.subr.bf16.mxu0 %v6324
        %7432 = vmatpush1.bf16.msra.mxu0 %v6323
        %7433 = vmatprep.subr.bf16.mxu0 %v6332
        %7434 = vmatpush1.bf16.msra.mxu0 %v6331
        %7435 = vmatprep.subr.bf16.mxu0 %v6340
        %7436 = vmatpush1.bf16.msra.mxu0 %v6339
        %7437 = vmatprep.mubr.bf16.mxu0 %v4162
        %7438 = vmatmul.mubr.bf16.gmra.mrb[0].mxu0 %v4161
        %v7439 = vpop.f32.mrb[0].mxu0
        %v7440 = vadd.f32 0.0, %v7439
        %v7441 = vpop.f32.mrb[0].mxu0
        %v7442 = vadd.f32 0.0, %v7441
        %v7443 = vpop.f32.mrb[0].mxu0
        %v7444 = vpop.f32.mrb[0].mxu0
        %7445 = vdwg.mxu0
        %7446 = vmatprep.subr.bf16.mxu0 %v6348
        %7447 = vmatpush1.bf16.msra.mxu0 %v6347
        %7448 = vmatprep.subr.bf16.mxu0 %v6356
        %7449 = vmatpush1.bf16.msra.mxu0 %v6355
        %7450 = vmatprep.subr.bf16.mxu0 %v6364
        %7451 = vmatpush1.bf16.msra.mxu0 %v6363
        %7452 = vmatprep.subr.bf16.mxu0 %v6372
        %7453 = vmatpush1.bf16.msra.mxu0 %v6371
        %7454 = vmatprep.subr.bf16.mxu0 %v6380
        %7455 = vmatpush1.bf16.msra.mxu0 %v6379
        %7456 = vmatprep.subr.bf16.mxu0 %v6388
        %7457 = vmatpush1.bf16.msra.mxu0 %v6387
        %7458 = vmatprep.subr.bf16.mxu0 %v6396
        %7459 = vmatpush1.bf16.msra.mxu0 %v6395
        %7460 = vmatprep.subr.bf16.mxu0 %v6404
        %7461 = vmatpush1.bf16.msra.mxu0 %v6403
        %7462 = vmatprep.subr.bf16.mxu0 %v6412
        %7463 = vmatpush1.bf16.msra.mxu0 %v6411
        %7464 = vmatprep.subr.bf16.mxu0 %v6420
        %7465 = vmatpush1.bf16.msra.mxu0 %v6419
        %7466 = vmatprep.subr.bf16.mxu0 %v6428
        %7467 = vmatpush1.bf16.msra.mxu0 %v6427
        %7468 = vmatprep.subr.bf16.mxu0 %v6436
        %7469 = vmatpush1.bf16.msra.mxu0 %v6435
        %7470 = vmatprep.subr.bf16.mxu0 %v6444
        %7471 = vmatpush1.bf16.msra.mxu0 %v6443
        %7472 = vmatprep.subr.bf16.mxu0 %v6452
        %7473 = vmatpush1.bf16.msra.mxu0 %v6451
        %7474 = vmatprep.subr.bf16.mxu0 %v6460
        %7475 = vmatpush1.bf16.msra.mxu0 %v6459
        %7476 = vmatprep.subr.bf16.mxu0 %v6468
        %7477 = vmatpush1.bf16.msra.mxu0 %v6467
        %7478 = vmatprep.mubr.bf16.mxu0 %v4164
        %7479 = vmatmul.mubr.bf16.gmra.mrb[0].mxu0 %v4163
        %v7480 = vpop.f32.mrb[0].mxu0
        %v7481 = vadd.f32 %v7440, %v7480
        %v7482 = vpop.f32.mrb[0].mxu0
        %v7483 = vadd.f32 %v7442, %v7482
        %v7484 = vpop.f32.mrb[0].mxu0
        %v7485 = vpop.f32.mrb[0].mxu0
        %7486 = vdwg.mxu0
        %7487 = vmatprep.subr.bf16.mxu0 %v6476
        %7488 = vmatpush1.bf16.msra.mxu0 %v6475
        %7489 = vmatprep.subr.bf16.mxu0 %v6484
        %7490 = vmatpush1.bf16.msra.mxu0 %v6483
        %7491 = vmatprep.subr.bf16.mxu0 %v6492
        %7492 = vmatpush1.bf16.msra.mxu0 %v6491
        %7493 = vmatprep.subr.bf16.mxu0 %v6500
        %7494 = vmatpush1.bf16.msra.mxu0 %v6499
        %7495 = vmatprep.subr.bf16.mxu0 %v6508
        %7496 = vmatpush1.bf16.msra.mxu0 %v6507
        %7497 = vmatprep.subr.bf16.mxu0 %v6516
        %7498 = vmatpush1.bf16.msra.mxu0 %v6515
        %7499 = vmatprep.subr.bf16.mxu0 %v6524
        %7500 = vmatpush1.bf16.msra.mxu0 %v6523
        %7501 = vmatprep.subr.bf16.mxu0 %v6532
        %7502 = vmatpush1.bf16.msra.mxu0 %v6531
        %7503 = vmatprep.subr.bf16.mxu0 %v6540
        %7504 = vmatpush1.bf16.msra.mxu0 %v6539
        %7505 = vmatprep.subr.bf16.mxu0 %v6548
        %7506 = vmatpush1.bf16.msra.mxu0 %v6547
        %7507 = vmatprep.subr.bf16.mxu0 %v6556
        %7508 = vmatpush1.bf16.msra.mxu0 %v6555
        %7509 = vmatprep.subr.bf16.mxu0 %v6564
        %7510 = vmatpush1.bf16.msra.mxu0 %v6563
        %7511 = vmatprep.subr.bf16.mxu0 %v6572
        %7512 = vmatpush1.bf16.msra.mxu0 %v6571
        %7513 = vmatprep.subr.bf16.mxu0 %v6580
        %7514 = vmatpush1.bf16.msra.mxu0 %v6579
        %7515 = vmatprep.subr.bf16.mxu0 %v6588
        %7516 = vmatpush1.bf16.msra.mxu0 %v6587
        %7517 = vmatprep.subr.bf16.mxu0 %v6596
        %7518 = vmatpush1.bf16.msra.mxu0 %v6595
        %7519 = vmatprep.mubr.bf16.mxu0 %v4166
        %7520 = vmatmul.mubr.bf16.gmra.mrb[0].mxu0 %v4165
        %v7521 = vpop.f32.mrb[0].mxu0
        %v7522 = vadd.f32 %v7481, %v7521
        %v7523 = vpop.f32.mrb[0].mxu0
        %v7524 = vadd.f32 %v7483, %v7523
        %v7525 = vpop.f32.mrb[0].mxu0
        %v7526 = vpop.f32.mrb[0].mxu0
        %7527 = vdwg.mxu0
        %7528 = vmatprep.subr.bf16.mxu0 %v6604
        %7529 = vmatpush1.bf16.msra.mxu0 %v6603
        %7530 = vmatprep.subr.bf16.mxu0 %v6612
        %7531 = vmatpush1.bf16.msra.mxu0 %v6611
        %7532 = vmatprep.subr.bf16.mxu0 %v6620
        %7533 = vmatpush1.bf16.msra.mxu0 %v6619
        %7534 = vmatprep.subr.bf16.mxu0 %v6628
        %7535 = vmatpush1.bf16.msra.mxu0 %v6627
        %7536 = vmatprep.subr.bf16.mxu0 %v6636
        %7537 = vmatpush1.bf16.msra.mxu0 %v6635
        %7538 = vmatprep.subr.bf16.mxu0 %v6644
        %7539 = vmatpush1.bf16.msra.mxu0 %v6643
        %7540 = vmatprep.subr.bf16.mxu0 %v6652
        %7541 = vmatpush1.bf16.msra.mxu0 %v6651
        %7542 = vmatprep.subr.bf16.mxu0 %v6660
        %7543 = vmatpush1.bf16.msra.mxu0 %v6659
        %7544 = vmatprep.subr.bf16.mxu0 %v6668
        %7545 = vmatpush1.bf16.msra.mxu0 %v6667
        %7546 = vmatprep.subr.bf16.mxu0 %v6676
        %7547 = vmatpush1.bf16.msra.mxu0 %v6675
        %7548 = vmatprep.subr.bf16.mxu0 %v6684
        %7549 = vmatpush1.bf16.msra.mxu0 %v6683
        %7550 = vmatprep.subr.bf16.mxu0 %v6692
        %7551 = vmatpush1.bf16.msra.mxu0 %v6691
        %7552 = vmatprep.subr.bf16.mxu0 %v6700
        %7553 = vmatpush1.bf16.msra.mxu0 %v6699
        %7554 = vmatprep.subr.bf16.mxu0 %v6708
        %7555 = vmatpush1.bf16.msra.mxu0 %v6707
        %7556 = vmatprep.subr.bf16.mxu0 %v6716
        %7557 = vmatpush1.bf16.msra.mxu0 %v6715
        %7558 = vmatprep.subr.bf16.mxu0 %v6724
        %7559 = vmatpush1.bf16.msra.mxu0 %v6723
        %7560 = vmatprep.mubr.bf16.mxu0 %v4168
        %7561 = vmatmul.mubr.bf16.gmra.mrb[0].mxu0 %v4167
        %v7562 = vpop.f32.mrb[0].mxu0
        %v7563 = vadd.f32 %v7522, %v7562
        %v7564 = vpop.f32.mrb[0].mxu0
        %v7565 = vadd.f32 %v7524, %v7564
        %v7566 = vpop.f32.mrb[0].mxu0
        %v7567 = vpop.f32.mrb[0].mxu0
        %7568 = vdwg.mxu0
        %7569 = vmatprep.subr.bf16.mxu0 %v6222
        %7570 = vmatpush1.bf16.msra.mxu0 %v6221
        %7571 = vmatprep.subr.bf16.mxu0 %v6230
        %7572 = vmatpush1.bf16.msra.mxu0 %v6229
        %7573 = vmatprep.subr.bf16.mxu0 %v6238
        %7574 = vmatpush1.bf16.msra.mxu0 %v6237
        %7575 = vmatprep.subr.bf16.mxu0 %v6246
        %7576 = vmatpush1.bf16.msra.mxu0 %v6245
        %7577 = vmatprep.subr.bf16.mxu0 %v6254
        %7578 = vmatpush1.bf16.msra.mxu0 %v6253
        %7579 = vmatprep.subr.bf16.mxu0 %v6262
        %7580 = vmatpush1.bf16.msra.mxu0 %v6261
        %7581 = vmatprep.subr.bf16.mxu0 %v6270
        %7582 = vmatpush1.bf16.msra.mxu0 %v6269
        %7583 = vmatprep.subr.bf16.mxu0 %v6278
        %7584 = vmatpush1.bf16.msra.mxu0 %v6277
        %7585 = vmatprep.subr.bf16.mxu0 %v6286
        %7586 = vmatpush1.bf16.msra.mxu0 %v6285
        %7587 = vmatprep.subr.bf16.mxu0 %v6294
        %7588 = vmatpush1.bf16.msra.mxu0 %v6293
        %7589 = vmatprep.subr.bf16.mxu0 %v6302
        %7590 = vmatpush1.bf16.msra.mxu0 %v6301
        %7591 = vmatprep.subr.bf16.mxu0 %v6310
        %7592 = vmatpush1.bf16.msra.mxu0 %v6309
        %7593 = vmatprep.subr.bf16.mxu0 %v6318
        %7594 = vmatpush1.bf16.msra.mxu0 %v6317
        %7595 = vmatprep.subr.bf16.mxu0 %v6326
        %7596 = vmatpush1.bf16.msra.mxu0 %v6325
        %7597 = vmatprep.subr.bf16.mxu0 %v6334
        %7598 = vmatpush1.bf16.msra.mxu0 %v6333
        %7599 = vmatprep.subr.bf16.mxu0 %v6342
        %7600 = vmatpush1.bf16.msra.mxu0 %v6341
        %7601 = vmatprep.mubr.bf16.mxu0 %v4162
        %7602 = vmatmul.mubr.bf16.gmra.mrb[0].mxu0 %v4161
        %v7603 = vpop.f32.mrb[0].mxu0
        %v7604 = vadd.f32 0.0, %v7603
        %v7605 = vpop.f32.mrb[0].mxu0
        %v7606 = vadd.f32 0.0, %v7605
        %v7607 = vpop.f32.mrb[0].mxu0
        %v7608 = vpop.f32.mrb[0].mxu0
        %7609 = vdwg.mxu0
        %7610 = vmatprep.subr.bf16.mxu0 %v6350
        %7611 = vmatpush1.bf16.msra.mxu0 %v6349
        %7612 = vmatprep.subr.bf16.mxu0 %v6358
        %7613 = vmatpush1.bf16.msra.mxu0 %v6357
        %7614 = vmatprep.subr.bf16.mxu0 %v6366
        %7615 = vmatpush1.bf16.msra.mxu0 %v6365
        %7616 = vmatprep.subr.bf16.mxu0 %v6374
        %7617 = vmatpush1.bf16.msra.mxu0 %v6373
        %7618 = vmatprep.subr.bf16.mxu0 %v6382
        %7619 = vmatpush1.bf16.msra.mxu0 %v6381
        %7620 = vmatprep.subr.bf16.mxu0 %v6390
        %7621 = vmatpush1.bf16.msra.mxu0 %v6389
        %7622 = vmatprep.subr.bf16.mxu0 %v6398
        %7623 = vmatpush1.bf16.msra.mxu0 %v6397
        %7624 = vmatprep.subr.bf16.mxu0 %v6406
        %7625 = vmatpush1.bf16.msra.mxu0 %v6405
        %7626 = vmatprep.subr.bf16.mxu0 %v6414
        %7627 = vmatpush1.bf16.msra.mxu0 %v6413
        %7628 = vmatprep.subr.bf16.mxu0 %v6422
        %7629 = vmatpush1.bf16.msra.mxu0 %v6421
        %7630 = vmatprep.subr.bf16.mxu0 %v6430
        %7631 = vmatpush1.bf16.msra.mxu0 %v6429
        %7632 = vmatprep.subr.bf16.mxu0 %v6438
        %7633 = vmatpush1.bf16.msra.mxu0 %v6437
        %7634 = vmatprep.subr.bf16.mxu0 %v6446
        %7635 = vmatpush1.bf16.msra.mxu0 %v6445
        %7636 = vmatprep.subr.bf16.mxu0 %v6454
        %7637 = vmatpush1.bf16.msra.mxu0 %v6453
        %7638 = vmatprep.subr.bf16.mxu0 %v6462
        %7639 = vmatpush1.bf16.msra.mxu0 %v6461
        %7640 = vmatprep.subr.bf16.mxu0 %v6470
        %7641 = vmatpush1.bf16.msra.mxu0 %v6469
        %7642 = vmatprep.mubr.bf16.mxu0 %v4164
        %7643 = vmatmul.mubr.bf16.gmra.mrb[0].mxu0 %v4163
        %v7644 = vpop.f32.mrb[0].mxu0
        %v7645 = vadd.f32 %v7604, %v7644
        %v7646 = vpop.f32.mrb[0].mxu0
        %v7647 = vadd.f32 %v7606, %v7646
        %v7648 = vpop.f32.mrb[0].mxu0
        %v7649 = vpop.f32.mrb[0].mxu0
        %7650 = vdwg.mxu0
        %7651 = vmatprep.subr.bf16.mxu0 %v6478
        %7652 = vmatpush1.bf16.msra.mxu0 %v6477
        %7653 = vmatprep.subr.bf16.mxu0 %v6486
        %7654 = vmatpush1.bf16.msra.mxu0 %v6485
        %7655 = vmatprep.subr.bf16.mxu0 %v6494
        %7656 = vmatpush1.bf16.msra.mxu0 %v6493
        %7657 = vmatprep.subr.bf16.mxu0 %v6502
        %7658 = vmatpush1.bf16.msra.mxu0 %v6501
        %7659 = vmatprep.subr.bf16.mxu0 %v6510
        %7660 = vmatpush1.bf16.msra.mxu0 %v6509
        %7661 = vmatprep.subr.bf16.mxu0 %v6518
        %7662 = vmatpush1.bf16.msra.mxu0 %v6517
        %7663 = vmatprep.subr.bf16.mxu0 %v6526
        %7664 = vmatpush1.bf16.msra.mxu0 %v6525
        %7665 = vmatprep.subr.bf16.mxu0 %v6534
        %7666 = vmatpush1.bf16.msra.mxu0 %v6533
        %7667 = vmatprep.subr.bf16.mxu0 %v6542
        %7668 = vmatpush1.bf16.msra.mxu0 %v6541
        %7669 = vmatprep.subr.bf16.mxu0 %v6550
        %7670 = vmatpush1.bf16.msra.mxu0 %v6549
        %7671 = vmatprep.subr.bf16.mxu0 %v6558
        %7672 = vmatpush1.bf16.msra.mxu0 %v6557
        %7673 = vmatprep.subr.bf16.mxu0 %v6566
        %7674 = vmatpush1.bf16.msra.mxu0 %v6565
        %7675 = vmatprep.subr.bf16.mxu0 %v6574
        %7676 = vmatpush1.bf16.msra.mxu0 %v6573
        %7677 = vmatprep.subr.bf16.mxu0 %v6582
        %7678 = vmatpush1.bf16.msra.mxu0 %v6581
        %7679 = vmatprep.subr.bf16.mxu0 %v6590
        %7680 = vmatpush1.bf16.msra.mxu0 %v6589
        %7681 = vmatprep.subr.bf16.mxu0 %v6598
        %7682 = vmatpush1.bf16.msra.mxu0 %v6597
        %7683 = vmatprep.mubr.bf16.mxu0 %v4166
        %7684 = vmatmul.mubr.bf16.gmra.mrb[0].mxu0 %v4165
        %v7685 = vpop.f32.mrb[0].mxu0
        %v7686 = vadd.f32 %v7645, %v7685
        %v7687 = vpop.f32.mrb[0].mxu0
        %v7688 = vadd.f32 %v7647, %v7687
        %v7689 = vpop.f32.mrb[0].mxu0
        %v7690 = vpop.f32.mrb[0].mxu0
        %7691 = vdwg.mxu0
        %7692 = vmatprep.subr.bf16.mxu0 %v6606
        %7693 = vmatpush1.bf16.msra.mxu0 %v6605
        %7694 = vmatprep.subr.bf16.mxu0 %v6614
        %7695 = vmatpush1.bf16.msra.mxu0 %v6613
        %7696 = vmatprep.subr.bf16.mxu0 %v6622
        %7697 = vmatpush1.bf16.msra.mxu0 %v6621
        %7698 = vmatprep.subr.bf16.mxu0 %v6630
        %7699 = vmatpush1.bf16.msra.mxu0 %v6629
        %7700 = vmatprep.subr.bf16.mxu0 %v6638
        %7701 = vmatpush1.bf16.msra.mxu0 %v6637
        %7702 = vmatprep.subr.bf16.mxu0 %v6646
        %7703 = vmatpush1.bf16.msra.mxu0 %v6645
        %7704 = vmatprep.subr.bf16.mxu0 %v6654
        %7705 = vmatpush1.bf16.msra.mxu0 %v6653
        %7706 = vmatprep.subr.bf16.mxu0 %v6662
        %7707 = vmatpush1.bf16.msra.mxu0 %v6661
        %7708 = vmatprep.subr.bf16.mxu0 %v6670
        %7709 = vmatpush1.bf16.msra.mxu0 %v6669
        %7710 = vmatprep.subr.bf16.mxu0 %v6678
        %7711 = vmatpush1.bf16.msra.mxu0 %v6677
        %7712 = vmatprep.subr.bf16.mxu0 %v6686
        %7713 = vmatpush1.bf16.msra.mxu0 %v6685
        %7714 = vmatprep.subr.bf16.mxu0 %v6694
        %7715 = vmatpush1.bf16.msra.mxu0 %v6693
        %7716 = vmatprep.subr.bf16.mxu0 %v6702
        %7717 = vmatpush1.bf16.msra.mxu0 %v6701
        %7718 = vmatprep.subr.bf16.mxu0 %v6710
        %7719 = vmatpush1.bf16.msra.mxu0 %v6709
        %7720 = vmatprep.subr.bf16.mxu0 %v6718
        %7721 = vmatpush1.bf16.msra.mxu0 %v6717
        %7722 = vmatprep.subr.bf16.mxu0 %v6726
        %7723 = vmatpush1.bf16.msra.mxu0 %v6725
        %7724 = vmatprep.mubr.bf16.mxu0 %v4168
        %7725 = vmatmul.mubr.bf16.gmra.mrb[0].mxu0 %v4167
        %v7726 = vpop.f32.mrb[0].mxu0
        %v7727 = vadd.f32 %v7686, %v7726
        %v7728 = vpop.f32.mrb[0].mxu0
        %v7729 = vadd.f32 %v7688, %v7728
        %v7730 = vpop.f32.mrb[0].mxu0
        %v7731 = vpop.f32.mrb[0].mxu0
        %7732 = vdwg.mxu0
        %7733 = vmatprep.subr.bf16.mxu0 %v6224
        %7734 = vmatpush1.bf16.msra.mxu0 %v6223
        %7735 = vmatprep.subr.bf16.mxu0 %v6232
        %7736 = vmatpush1.bf16.msra.mxu0 %v6231
        %7737 = vmatprep.subr.bf16.mxu0 %v6240
        %7738 = vmatpush1.bf16.msra.mxu0 %v6239
        %7739 = vmatprep.subr.bf16.mxu0 %v6248
        %7740 = vmatpush1.bf16.msra.mxu0 %v6247
        %7741 = vmatprep.subr.bf16.mxu0 %v6256
        %7742 = vmatpush1.bf16.msra.mxu0 %v6255
        %7743 = vmatprep.subr.bf16.mxu0 %v6264
        %7744 = vmatpush1.bf16.msra.mxu0 %v6263
        %7745 = vmatprep.subr.bf16.mxu0 %v6272
        %7746 = vmatpush1.bf16.msra.mxu0 %v6271
        %7747 = vmatprep.subr.bf16.mxu0 %v6280
        %7748 = vmatpush1.bf16.msra.mxu0 %v6279
        %7749 = vmatprep.subr.bf16.mxu0 %v6288
        %7750 = vmatpush1.bf16.msra.mxu0 %v6287
        %7751 = vmatprep.subr.bf16.mxu0 %v6296
        %7752 = vmatpush1.bf16.msra.mxu0 %v6295
        %7753 = vmatprep.subr.bf16.mxu0 %v6304
        %7754 = vmatpush1.bf16.msra.mxu0 %v6303
        %7755 = vmatprep.subr.bf16.mxu0 %v6312
        %7756 = vmatpush1.bf16.msra.mxu0 %v6311
        %7757 = vmatprep.subr.bf16.mxu0 %v6320
        %7758 = vmatpush1.bf16.msra.mxu0 %v6319
        %7759 = vmatprep.subr.bf16.mxu0 %v6328
        %7760 = vmatpush1.bf16.msra.mxu0 %v6327
        %7761 = vmatprep.subr.bf16.mxu0 %v6336
        %7762 = vmatpush1.bf16.msra.mxu0 %v6335
        %7763 = vmatprep.subr.bf16.mxu0 %v6344
        %7764 = vmatpush1.bf16.msra.mxu0 %v6343
        %7765 = vmatprep.mubr.bf16.mxu0 %v4162
        %7766 = vmatmul.mubr.bf16.gmra.mrb[0].mxu0 %v4161
        %v7767 = vpop.f32.mrb[0].mxu0
        %v7768 = vadd.f32 0.0, %v7767
        %v7769 = vpop.f32.mrb[0].mxu0
        %v7770 = vadd.f32 0.0, %v7769
        %v7771 = vpop.f32.mrb[0].mxu0
        %v7772 = vpop.f32.mrb[0].mxu0
        %7773 = vdwg.mxu0
        %7774 = vmatprep.subr.bf16.mxu0 %v6352
        %7775 = vmatpush1.bf16.msra.mxu0 %v6351
        %7776 = vmatprep.subr.bf16.mxu0 %v6360
        %7777 = vmatpush1.bf16.msra.mxu0 %v6359
        %7778 = vmatprep.subr.bf16.mxu0 %v6368
        %7779 = vmatpush1.bf16.msra.mxu0 %v6367
        %7780 = vmatprep.subr.bf16.mxu0 %v6376
        %7781 = vmatpush1.bf16.msra.mxu0 %v6375
        %7782 = vmatprep.subr.bf16.mxu0 %v6384
        %7783 = vmatpush1.bf16.msra.mxu0 %v6383
        %7784 = vmatprep.subr.bf16.mxu0 %v6392
        %7785 = vmatpush1.bf16.msra.mxu0 %v6391
        %7786 = vmatprep.subr.bf16.mxu0 %v6400
        %7787 = vmatpush1.bf16.msra.mxu0 %v6399
        %7788 = vmatprep.subr.bf16.mxu0 %v6408
        %7789 = vmatpush1.bf16.msra.mxu0 %v6407
        %7790 = vmatprep.subr.bf16.mxu0 %v6416
        %7791 = vmatpush1.bf16.msra.mxu0 %v6415
        %7792 = vmatprep.subr.bf16.mxu0 %v6424
        %7793 = vmatpush1.bf16.msra.mxu0 %v6423
        %7794 = vmatprep.subr.bf16.mxu0 %v6432
        %7795 = vmatpush1.bf16.msra.mxu0 %v6431
        %7796 = vmatprep.subr.bf16.mxu0 %v6440
        %7797 = vmatpush1.bf16.msra.mxu0 %v6439
        %7798 = vmatprep.subr.bf16.mxu0 %v6448
        %7799 = vmatpush1.bf16.msra.mxu0 %v6447
        %7800 = vmatprep.subr.bf16.mxu0 %v6456
        %7801 = vmatpush1.bf16.msra.mxu0 %v6455
        %7802 = vmatprep.subr.bf16.mxu0 %v6464
        %7803 = vmatpush1.bf16.msra.mxu0 %v6463
        %7804 = vmatprep.subr.bf16.mxu0 %v6472
        %7805 = vmatpush1.bf16.msra.mxu0 %v6471
        %7806 = vmatprep.mubr.bf16.mxu0 %v4164
        %7807 = vmatmul.mubr.bf16.gmra.mrb[0].mxu0 %v4163
        %v7808 = vpop.f32.mrb[0].mxu0
        %v7809 = vadd.f32 %v7768, %v7808
        %v7810 = vpop.f32.mrb[0].mxu0
        %v7811 = vadd.f32 %v7770, %v7810
        %v7812 = vpop.f32.mrb[0].mxu0
        %v7813 = vpop.f32.mrb[0].mxu0
        %7814 = vdwg.mxu0
        %7815 = vmatprep.subr.bf16.mxu0 %v6480
        %7816 = vmatpush1.bf16.msra.mxu0 %v6479
        %7817 = vmatprep.subr.bf16.mxu0 %v6488
        %7818 = vmatpush1.bf16.msra.mxu0 %v6487
        %7819 = vmatprep.subr.bf16.mxu0 %v6496
        %7820 = vmatpush1.bf16.msra.mxu0 %v6495
        %7821 = vmatprep.subr.bf16.mxu0 %v6504
        %7822 = vmatpush1.bf16.msra.mxu0 %v6503
        %7823 = vmatprep.subr.bf16.mxu0 %v6512
        %7824 = vmatpush1.bf16.msra.mxu0 %v6511
        %7825 = vmatprep.subr.bf16.mxu0 %v6520
        %7826 = vmatpush1.bf16.msra.mxu0 %v6519
        %7827 = vmatprep.subr.bf16.mxu0 %v6528
        %7828 = vmatpush1.bf16.msra.mxu0 %v6527
        %7829 = vmatprep.subr.bf16.mxu0 %v6536
        %7830 = vmatpush1.bf16.msra.mxu0 %v6535
        %7831 = vmatprep.subr.bf16.mxu0 %v6544
        %7832 = vmatpush1.bf16.msra.mxu0 %v6543
        %7833 = vmatprep.subr.bf16.mxu0 %v6552
        %7834 = vmatpush1.bf16.msra.mxu0 %v6551
        %7835 = vmatprep.subr.bf16.mxu0 %v6560
        %7836 = vmatpush1.bf16.msra.mxu0 %v6559
        %7837 = vmatprep.subr.bf16.mxu0 %v6568
        %7838 = vmatpush1.bf16.msra.mxu0 %v6567
        %7839 = vmatprep.subr.bf16.mxu0 %v6576
        %7840 = vmatpush1.bf16.msra.mxu0 %v6575
        %7841 = vmatprep.subr.bf16.mxu0 %v6584
        %7842 = vmatpush1.bf16.msra.mxu0 %v6583
        %7843 = vmatprep.subr.bf16.mxu0 %v6592
        %7844 = vmatpush1.bf16.msra.mxu0 %v6591
        %7845 = vmatprep.subr.bf16.mxu0 %v6600
        %7846 = vmatpush1.bf16.msra.mxu0 %v6599
        %7847 = vmatprep.mubr.bf16.mxu0 %v4166
        %7848 = vmatmul.mubr.bf16.gmra.mrb[0].mxu0 %v4165
        %v7849 = vpop.f32.mrb[0].mxu0
        %v7850 = vadd.f32 %v7809, %v7849
        %v7851 = vpop.f32.mrb[0].mxu0
        %v7852 = vadd.f32 %v7811, %v7851
        %v7853 = vpop.f32.mrb[0].mxu0
        %v7854 = vpop.f32.mrb[0].mxu0
        %7855 = vdwg.mxu0
        %7856 = vmatprep.subr.bf16.mxu0 %v6608
        %7857 = vmatpush1.bf16.msra.mxu0 %v6607
        %7858 = vmatprep.subr.bf16.mxu0 %v6616
        %7859 = vmatpush1.bf16.msra.mxu0 %v6615
        %7860 = vmatprep.subr.bf16.mxu0 %v6624
        %7861 = vmatpush1.bf16.msra.mxu0 %v6623
        %7862 = vmatprep.subr.bf16.mxu0 %v6632
        %7863 = vmatpush1.bf16.msra.mxu0 %v6631
        %7864 = vmatprep.subr.bf16.mxu0 %v6640
        %7865 = vmatpush1.bf16.msra.mxu0 %v6639
        %7866 = vmatprep.subr.bf16.mxu0 %v6648
        %7867 = vmatpush1.bf16.msra.mxu0 %v6647
        %7868 = vmatprep.subr.bf16.mxu0 %v6656
        %7869 = vmatpush1.bf16.msra.mxu0 %v6655
        %7870 = vmatprep.subr.bf16.mxu0 %v6664
        %7871 = vmatpush1.bf16.msra.mxu0 %v6663
        %7872 = vmatprep.subr.bf16.mxu0 %v6672
        %7873 = vmatpush1.bf16.msra.mxu0 %v6671
        %7874 = vmatprep.subr.bf16.mxu0 %v6680
        %7875 = vmatpush1.bf16.msra.mxu0 %v6679
        %7876 = vmatprep.subr.bf16.mxu0 %v6688
        %7877 = vmatpush1.bf16.msra.mxu0 %v6687
        %7878 = vmatprep.subr.bf16.mxu0 %v6696
        %7879 = vmatpush1.bf16.msra.mxu0 %v6695
        %7880 = vmatprep.subr.bf16.mxu0 %v6704
        %7881 = vmatpush1.bf16.msra.mxu0 %v6703
        %7882 = vmatprep.subr.bf16.mxu0 %v6712
        %7883 = vmatpush1.bf16.msra.mxu0 %v6711
        %7884 = vmatprep.subr.bf16.mxu0 %v6720
        %7885 = vmatpush1.bf16.msra.mxu0 %v6719
        %7886 = vmatprep.subr.bf16.mxu0 %v6728
        %7887 = vmatpush1.bf16.msra.mxu0 %v6727
        %7888 = vmatprep.mubr.bf16.mxu0 %v4168
        %7889 = vmatmul.mubr.bf16.gmra.mrb[0].mxu0 %v4167
        %v7890 = vpop.f32.mrb[0].mxu0
        %v7891 = vadd.f32 %v7850, %v7890
        %v7892 = vpop.f32.mrb[0].mxu0
        %v7893 = vadd.f32 %v7852, %v7892
        %v7894 = vpop.f32.mrb[0].mxu0
        %v7895 = vpop.f32.mrb[0].mxu0
        %7896 = vdwg.mxu0
        %v7905 = vcombine.low %v7399, %v7401
        %v7906 = vcombine.low %v7563, %v7565
        %v7908 = vunpack.c.l.s4 1983009808
        %v7909 = vunpack.c.0.s8 %v7908
        %v7910 = vlaneseq
        %v7911 = vshrl.u32 %v7910, 7
        %v7912 = vsub.s32 %v7909, %v7911
        %v7913 = vrot.slane %v7905, %v7912
        %v7915 = vunpack.c.l.s4 1983009808
        %v7916 = vunpack.c.0.s8 %v7915
        %v7917 = vlaneseq
        %v7918 = vshrl.u32 %v7917, 7
        %v7919 = vsub.s32 %v7916, %v7918
        %v7920 = vrot.slane %v7906, %v7919
        %v7921 = vcombine.low %v7913, %v7920
        %v7922 = vcombine.low %v7727, %v7729
        %v7923 = vcombine.low %v7891, %v7893
        %v7925 = vunpack.c.l.s4 1983009808
        %v7926 = vunpack.c.0.s8 %v7925
        %v7927 = vlaneseq
        %v7928 = vshrl.u32 %v7927, 7
        %v7929 = vsub.s32 %v7926, %v7928
        %v7930 = vrot.slane %v7922, %v7929
        %v7932 = vunpack.c.l.s4 1983009808
        %v7933 = vunpack.c.0.s8 %v7932
        %v7934 = vlaneseq
        %v7935 = vshrl.u32 %v7934, 7
        %v7936 = vsub.s32 %v7933, %v7935
        %v7937 = vrot.slane %v7923, %v7936
        %v7938 = vcombine.low %v7930, %v7937
        %7941 = vst [vmem:[%s369] sm:$0xff] %v7921
        %7942 = vst [vmem:[%s369 + $0x8] sm:$0xff] %v7938
        %s7943 = sand.u32 %s159, 1
        %s7944 = scalar_lea.sflag [#allocation4], %s7943
        %s7945 = sand.u32 %s159, 1
        %s7946 = smul.addr %s7945, 16
        %s7947 = scalar_lea.vmem [#allocation11], %s7946
        // Predicated region
        $region61: #{tpu_custom_call.1} parent=39 // pred_check
          %p7948 = pneg %p169
        $region62: #{tpu_custom_call.1} parent=39 // pred_check_branch
          %7950 = sbr.rel (%p7948) target = $region64
        $region63: #{tpu_custom_call.1} parent=39 // pred_region
          %s7952 = ssub.s32 256, 256
          %7953 = vsyncadd %s7944, %s7952
          %s7954 = smul.addr %s26, 8
          %s7955 = smul.addr %s7954, 32
          %s7956 = scalar_lea.hbm %s5, %s7955
          %s7958 = sshll.u32 %s7947, 4
          %s7959 = int_to_ptr.vmem [resolvable:$true] %s7958
          %7961 = dma.vmem_to_hbm [thread:$0]  %s7959, 256, %s7956, %s7944
        $region64: #{tpu_custom_call.1} parent=39 // pred_fallthru
          _
      $region40: #{tpu_custom_call.1} parent=5 // pred_fallthru
        _
      %p7962 = scmp.le.s32.totalorder 2, %s21
      // Predicated region
      $region65: #{tpu_custom_call.1} parent=5 // pred_check
        %p7963 = pneg %p7962
      $region66: #{tpu_custom_call.1} parent=5 // pred_check_branch
        %7965 = sbr.rel (%p7963) target = $region68
      $region67: #{tpu_custom_call.1} parent=5 // pred_region
        %s7966 = ssub.s32 %s21, 2
        // Predicated region
        $region69: #{tpu_custom_call.1} parent=67 // pred_check
          %p7967 = pneg %p175
        $region70: #{tpu_custom_call.1} parent=67 // pred_check_branch
          %7969 = sbr.rel (%p7967) target = $region72
        $region71: #{tpu_custom_call.1} parent=67 // pred_region
          %s7970 = sand.u32 %s160, 1
          %s7971 = scalar_lea.sflag [#allocation4], %s7970
          %s7972 = sand.u32 %s160, 1
          %s7973 = smul.addr %s7972, 16
          %s7974 = scalar_lea.vmem [#allocation11], %s7973
          %7975 = dma.done %s7971, 256
        $region72: #{tpu_custom_call.1} parent=67 // pred_fallthru
          _
      $region68: #{tpu_custom_call.1} parent=5 // pred_fallthru
        _
    $region6: #{tpu_custom_call.1} parent=1 // loop_footer
      %s25 = sadd.s32 1, %s21
    $region7: #{tpu_custom_call.1} parent=1 // loop_footer_branch
      %20 = sbr.rel target = $region3
    $region8: #{tpu_custom_call.1} parent=1 // loop_exit
      _
    %7976 = vsyncpa [#allocation3], 1
    %s7977 = scalar_lea.sflag [#allocation3], 1
    %7978 = vsyncpa %s7977, 1
    %7979 = vsyncpa [#allocation6], 1
    %s7980 = scalar_lea.sflag [#allocation6], 1
    %7981 = vsyncpa %s7980, 1
    %7982 = vsyncpa [#allocation9], 1
    %s7983 = scalar_lea.sflag [#allocation9], 1
    %7984 = vsyncpa %s7983, 1
    %7985 = vsyncpa [#allocation4], 1
    %s7986 = scalar_lea.sflag [#allocation4], 1
    %7987 = vsyncpa %s7986, 1

</llo_original>
